<compile_context>
chip_gen: v7x
topology: tpu7x:2x2x1
jax: 0.10.0
libtpu: 0.0.40
codegen_flags: <defaults>
</compile_context>

<pallas_src>
import jax
import jax.numpy as jnp
from jax import lax
from jax.experimental import pallas as pl
from jax.experimental.pallas import tpu as pltpu

EPS = 1e-5
LANES = 128


def _round_up(x, m):
    return (x + m - 1) // m * m


def _make_conv_stats_kernel(H, W, Cin, Cp, in_affine):
    """3x3 conv (padding=1) on one batch element + per-channel sum / sumsq.

    If `in_affine`, the input is first passed through y = relu(x*scale + shift)
    (the folded BatchNorm+ReLU of the previous stage).
    """
    M = H * W
    K = 9 * Cin

    def kernel(x_ref, w_ref, scale_ref, shift_ref, z_ref, stats_ref,
               pad_ref, im_ref):
        # x_ref     : (1, H, W, Cin)   input block (bf16)
        # w_ref     : (9*Cin, Cp)      im2col weight (bf16)
        # scale/shift_ref : (1, Cin)   folded BN of previous stage (f32)
        # z_ref     : (1, H, W, Cp)    pre-BN conv output block (lane-dense)
        # stats_ref : (1, 2, Cp)       [sum, sum-of-squares] for this block
        # pad_ref   : (H+2, W+2, Cin)  spatially padded input (VMEM scratch)
        # im_ref    : (H, W, 9*Cin)    im2col patches (VMEM scratch)
        x = x_ref[0]
        if in_affine:
            x = jnp.maximum(
                x.astype(jnp.float32) * scale_ref[...] + shift_ref[...], 0.0)

        # Zero only the 1-wide halo ring, then write the interior.
        zr = jnp.zeros((1, W + 2, Cin), pad_ref.dtype)
        zc = jnp.zeros((H + 2, 1, Cin), pad_ref.dtype)
        pad_ref[0:1, :, :] = zr
        pad_ref[H + 1:H + 2, :, :] = zr
        pad_ref[:, 0:1, :] = zc
        pad_ref[:, W + 1:W + 2, :] = zc
        pad_ref[1:H + 1, 1:W + 1, :] = x.astype(pad_ref.dtype)

        # im2col: build one (M, 9*Cin) patch matrix -> single MXU matmul.
        for kh in range(3):
            for kw in range(3):
                t = kh * 3 + kw
                im_ref[:, :, t * Cin:(t + 1) * Cin] = \
                    pad_ref[kh:kh + H, kw:kw + W, :]
        patches = im_ref[...].reshape(M, K)
        acc = jnp.dot(patches, w_ref[...],
                      preferred_element_type=jnp.float32)      # (M, Cp) f32

        # Per-channel partial statistics (single pass, f32).
        s = jnp.sum(acc, axis=0, keepdims=True)                 # (1, Cp)
        ss = jnp.sum(acc * acc, axis=0, keepdims=True)          # (1, Cp)
        stats_ref[0:1, 0:1, :] = s.reshape(1, 1, Cp)
        stats_ref[0:1, 1:2, :] = ss.reshape(1, 1, Cp)

        # Lane-dense store of the pre-BN activation.
        z_ref[...] = acc.reshape(1, H, W, Cp).astype(z_ref.dtype)

    return kernel


def _conv_stats_stage(x, w_mat, scale, shift, Cp, in_affine, out_dtype):
    """Runs conv+stats over a batch grid. Returns (z_preBN, partial_stats)."""
    N, H, W, Cin = x.shape
    K = w_mat.shape[0]
    kernel = _make_conv_stats_kernel(H, W, Cin, Cp, in_affine)
    return pl.pallas_call(
        kernel,
        grid=(N,),
        in_specs=[
            pl.BlockSpec((1, H, W, Cin), lambda n: (n, 0, 0, 0)),
            pl.BlockSpec((K, Cp), lambda n: (0, 0)),
            pl.BlockSpec((1, Cin), lambda n: (0, 0)),
            pl.BlockSpec((1, Cin), lambda n: (0, 0)),
        ],
        out_specs=(
            pl.BlockSpec((1, H, W, Cp), lambda n: (n, 0, 0, 0)),
            pl.BlockSpec((1, 2, Cp), lambda n: (n, 0, 0)),
        ),
        out_shape=(
            jax.ShapeDtypeStruct((N, H, W, Cp), out_dtype),
            jax.ShapeDtypeStruct((N, 2, Cp), jnp.float32),
        ),
        scratch_shapes=[
            pltpu.VMEM((H + 2, W + 2, Cin), jnp.bfloat16),
            pltpu.VMEM((H, W, K), jnp.bfloat16),
        ],
        compiler_params=pltpu.CompilerParams(
            dimension_semantics=("parallel",)),
    )(x, w_mat, scale, shift)


def _affine_relu_kernel(z_ref, scale_ref, shift_ref, o_ref):
    # Folded BatchNorm + ReLU: y = max(z*scale + shift, 0), lane-dense store.
    o_ref[...] = jnp.maximum(
        z_ref[...].astype(jnp.float32) * scale_ref[...] + shift_ref[...],
        0.0).astype(o_ref.dtype)


def _affine_relu(z, scale, shift):
    N, H, W, Cp = z.shape
    return pl.pallas_call(
        _affine_relu_kernel,
        grid=(N,),
        in_specs=[
            pl.BlockSpec((1, H, W, Cp), lambda n: (n, 0, 0, 0)),
            pl.BlockSpec((1, Cp), lambda n: (0, 0)),
            pl.BlockSpec((1, Cp), lambda n: (0, 0)),
        ],
        out_specs=pl.BlockSpec((1, H, W, Cp), lambda n: (n, 0, 0, 0)),
        out_shape=jax.ShapeDtypeStruct((N, H, W, Cp), jnp.float32),
        compiler_params=pltpu.CompilerParams(
            dimension_semantics=("parallel",)),
    )(z, scale, shift)


def double_conv(x_nchw, params):
    """x_nchw: (N, Cin, H, W) float32. Returns (N, Cout, H, W) float32."""
    w1, b1, g1, be1, w2, b2, g2, be2 = params
    del b1, b2  # conv bias cancels exactly under train-mode BatchNorm
    N, Cin, H, W = x_nchw.shape
    Cout = w1.shape[-1]
    Cp = _round_up(Cout, LANES)          # lane-dense channel dim
    M = N * H * W

    # NCHW -> NHWC (channels on lanes); MXU operands in bf16.
    x = jnp.transpose(x_nchw, (0, 2, 3, 1)).astype(jnp.bfloat16)

    # Weights in im2col layout (9*Cin, Cp); zero-pad channels to Cp.
    w1m = jnp.pad(w1.reshape(9 * Cin, Cout),
                  ((0, 0), (0, Cp - Cout))).astype(jnp.bfloat16)
    w2m = jnp.pad(w2, ((0, 0), (0, 0), (0, Cp - Cout), (0, Cp - Cout)))
    w2m = w2m.reshape(9 * Cp, Cp).astype(jnp.bfloat16)
    g1p = jnp.pad(g1, (0, Cp - Cout))
    be1p = jnp.pad(be1, (0, Cp - Cout))
    g2p = jnp.pad(g2, (0, Cp - Cout))
    be2p = jnp.pad(be2, (0, Cp - Cout))

    def bn_fold(stats, g, be):
        # stats: (N, 2, Cp) partial [sum, sumsq] -> folded scale/shift (f32).
        s = jnp.sum(stats[:, 0, :], axis=0)
        ss = jnp.sum(stats[:, 1, :], axis=0)
        mean = s / M
        var = jnp.maximum(ss / M - mean * mean, 0.0)   # biased, train-mode BN
        scale = g * lax.rsqrt(var + EPS)
        shift = be - mean * scale
        return (scale.reshape(1, Cp).astype(jnp.float32),
                shift.reshape(1, Cp).astype(jnp.float32))

    one = jnp.ones((1, Cin), jnp.float32)
    zero = jnp.zeros((1, Cin), jnp.float32)

    # conv1 + BN1 partial stats
    z1, st1 = _conv_stats_stage(x, w1m, one, zero, Cp,
                                in_affine=False, out_dtype=jnp.bfloat16)
    sc1, sh1 = bn_fold(st1, g1p, be1p)
    # BN1+ReLU folded into conv2 input; conv2 + BN2 partial stats
    z2, st2 = _conv_stats_stage(z1, w2m, sc1, sh1, Cp,
                                in_affine=True, out_dtype=jnp.float32)
    sc2, sh2 = bn_fold(st2, g2p, be2p)
    # BN2 + ReLU
    y = _affine_relu(z2, sc2, sh2)

    # Drop channel padding, back to NCHW.
    return jnp.transpose(y[:, :, :, :Cout], (0, 3, 1, 2))


def init_params(key, in_chan, out_chan):
    """Deterministic synthetic params. Conv weights stored as (kh, kw, Cin, Cout)."""
    k1, k2, k3, k4 = jax.random.split(key, 4)
    s1 = 1.0 / jnp.sqrt(in_chan * 9.0)
    s2 = 1.0 / jnp.sqrt(out_chan * 9.0)
    w1 = jax.random.uniform(k1, (3, 3, in_chan, out_chan), jnp.float32, -s1, s1)
    b1 = jax.random.uniform(k2, (out_chan,), jnp.float32, -s1, s1)
    w2 = jax.random.uniform(k3, (3, 3, out_chan, out_chan), jnp.float32, -s2, s2)
    b2 = jax.random.uniform(k4, (out_chan,), jnp.float32, -s2, s2)
    g1 = jnp.ones((out_chan,), jnp.float32)
    be1 = jnp.zeros((out_chan,), jnp.float32)
    g2 = jnp.ones((out_chan,), jnp.float32)
    be2 = jnp.zeros((out_chan,), jnp.float32)
    return (w1, b1, g1, be1, w2, b2, g2, be2)


def reference(x_nchw, params):
    """Pure-JAX f32 reference (NCHW, like PyTorch) incl. conv bias."""
    w1, b1, g1, be1, w2, b2, g2, be2 = params

    def conv(x, w, b):
        w_oihw = jnp.transpose(w, (3, 2, 0, 1))
        y = lax.conv_general_dilated(
            x, w_oihw, window_strides=(1, 1), padding=((1, 1), (1, 1)),
            dimension_numbers=("NCHW", "OIHW", "NCHW"))
        return y + b[None, :, None, None]

    def bn_relu(x, g, be):
        mean = jnp.mean(x, axis=(0, 2, 3), keepdims=True)
        var = jnp.mean((x - mean) ** 2, axis=(0, 2, 3), keepdims=True)
        y = (x - mean) * lax.rsqrt(var + EPS)
        y = y * g[None, :, None, None] + be[None, :, None, None]
        return jnp.maximum(y, 0.0)

    y = bn_relu(conv(x_nchw, w1, b1), g1, be1)
    return bn_relu(conv(y, w2, b2), g2, be2)


if __name__ == "__main__":
    key = jax.random.PRNGKey(0)
    kx, kp = jax.random.split(key)

    N, Cin, Cout, H, W = 2, 4, 8, 16, 16
    x = jax.random.normal(kx, (N, Cin, H, W), jnp.float32)
    params = init_params(kp, Cin, Cout)

    fn = jax.jit(double_conv)
    out = jax.block_until_ready(fn(x, params))

    ref = jax.block_until_ready(reference(x, params))
    assert out.shape == (N, Cout, H, W)
    err = float(jnp.max(jnp.abs(out - ref)))
    # bf16 MXU operands (by design, per perf review) -> relaxed tolerance vs
    # the pure-f32 reference.
    assert jnp.allclose(out, ref, atol=5e-2, rtol=5e-2), err

    print("KERNEL_OK")
</pallas_src>

<mosaic_0001>
module attributes {stable_mosaic.version = 11 : i64} {
  func.func @kernel(%arg0: i32, %arg1: memref<1x16x16x4xbf16, #tpu.memory_space<vmem>>, %arg2: memref<36x128xbf16, #tpu.memory_space<vmem>>, %arg3: memref<1x4xf32, #tpu.memory_space<vmem>>, %arg4: memref<1x4xf32, #tpu.memory_space<vmem>>, %arg5: memref<1x16x16x128xbf16, #tpu.memory_space<vmem>>, %arg6: memref<1x2x128xf32, #tpu.memory_space<vmem>>, %arg7: memref<18x18x4xbf16, #tpu.memory_space<vmem>>, %arg8: memref<16x16x36xbf16, #tpu.memory_space<vmem>>) attributes {dimension_semantics = [#tpu.dimension_semantics<parallel>], iteration_bounds = array<i64: 2>, scalar_prefetch = 0 : i64, scratch_operands = 2 : i64, tpu.core_type = #tpu.core_type<tc>, window_params = [{transform_indices = @transform_0, window_bounds = array<i64: 1, 16, 16, 4>}, {pipeline_mode = #tpu.pipeline_mode<synchronous>, transform_indices = @transform_1, window_bounds = array<i64: 36, 128>}, {pipeline_mode = #tpu.pipeline_mode<synchronous>, transform_indices = @transform_2, window_bounds = array<i64: 1, 4>}, {pipeline_mode = #tpu.pipeline_mode<synchronous>, transform_indices = @transform_3, window_bounds = array<i64: 1, 4>}, {transform_indices = @transform_4, window_bounds = array<i64: 1, 16, 16, 128>}, {transform_indices = @transform_5, window_bounds = array<i64: 1, 2, 128>}]} {
    %c0 = arith.constant 0 : index
    %c0_0 = arith.constant 0 : index
    %c0_1 = arith.constant 0 : index
    %c0_2 = arith.constant 0 : index
    %0 = vector.load %arg1[%c0, %c0_0, %c0_1, %c0_2] : memref<1x16x16x4xbf16, #tpu.memory_space<vmem>>, vector<1x16x16x4xbf16>
    %1 = vector.shape_cast %0 : vector<1x16x16x4xbf16> to vector<16x16x4xbf16>
    %cst = arith.constant 0.000000e+00 : bf16
    %2 = vector.broadcast %cst : bf16 to vector<1x18x4xbf16>
    %cst_3 = arith.constant 0.000000e+00 : bf16
    %3 = vector.broadcast %cst_3 : bf16 to vector<18x1x4xbf16>
    %c0_4 = arith.constant 0 : index
    %c0_5 = arith.constant 0 : index
    %c0_6 = arith.constant 0 : index
    %4 = vector.load %arg7[%c0_4, %c0_5, %c0_6] : memref<18x18x4xbf16, #tpu.memory_space<vmem>>, vector<1x18x4xbf16>
    tpu.vector_store %arg7[%c0_4, %c0_5, %c0_6], %2 {strides = array<i32>} : memref<18x18x4xbf16, #tpu.memory_space<vmem>>, vector<1x18x4xbf16>,
    %c17 = arith.constant 17 : index
    %c0_7 = arith.constant 0 : index
    %c0_8 = arith.constant 0 : index
    %5 = vector.load %arg7[%c17, %c0_7, %c0_8] : memref<18x18x4xbf16, #tpu.memory_space<vmem>>, vector<1x18x4xbf16>
    tpu.vector_store %arg7[%c17, %c0_7, %c0_8], %2 {strides = array<i32>} : memref<18x18x4xbf16, #tpu.memory_space<vmem>>, vector<1x18x4xbf16>,
    %c0_9 = arith.constant 0 : index
    %c0_10 = arith.constant 0 : index
    %c0_11 = arith.constant 0 : index
    %6 = vector.load %arg7[%c0_9, %c0_10, %c0_11] : memref<18x18x4xbf16, #tpu.memory_space<vmem>>, vector<18x1x4xbf16>
    tpu.vector_store %arg7[%c0_9, %c0_10, %c0_11], %3 {strides = array<i32>} : memref<18x18x4xbf16, #tpu.memory_space<vmem>>, vector<18x1x4xbf16>,
    %c0_12 = arith.constant 0 : index
    %c17_13 = arith.constant 17 : index
    %c0_14 = arith.constant 0 : index
    %7 = vector.load %arg7[%c0_12, %c17_13, %c0_14] : memref<18x18x4xbf16, #tpu.memory_space<vmem>>, vector<18x1x4xbf16>
    tpu.vector_store %arg7[%c0_12, %c17_13, %c0_14], %3 {strides = array<i32>} : memref<18x18x4xbf16, #tpu.memory_space<vmem>>, vector<18x1x4xbf16>,
    %c1 = arith.constant 1 : index
    %c1_15 = arith.constant 1 : index
    %c0_16 = arith.constant 0 : index
    %8 = vector.load %arg7[%c1, %c1_15, %c0_16] : memref<18x18x4xbf16, #tpu.memory_space<vmem>>, vector<16x16x4xbf16>
    tpu.vector_store %arg7[%c1, %c1_15, %c0_16], %1 {strides = array<i32>} : memref<18x18x4xbf16, #tpu.memory_space<vmem>>, vector<16x16x4xbf16>,
    %c0_17 = arith.constant 0 : index
    %c0_18 = arith.constant 0 : index
    %c0_19 = arith.constant 0 : index
    %9 = vector.load %arg7[%c0_17, %c0_18, %c0_19] : memref<18x18x4xbf16, #tpu.memory_space<vmem>>, vector<16x16x4xbf16>
    %c0_20 = arith.constant 0 : index
    %c0_21 = arith.constant 0 : index
    %c0_22 = arith.constant 0 : index
    %10 = vector.load %arg8[%c0_20, %c0_21, %c0_22] : memref<16x16x36xbf16, #tpu.memory_space<vmem>>, vector<16x16x4xbf16>
    tpu.vector_store %arg8[%c0_20, %c0_21, %c0_22], %9 {strides = array<i32>} : memref<16x16x36xbf16, #tpu.memory_space<vmem>>, vector<16x16x4xbf16>,
    %c0_23 = arith.constant 0 : index
    %c1_24 = arith.constant 1 : index
    %c0_25 = arith.constant 0 : index
    %11 = vector.load %arg7[%c0_23, %c1_24, %c0_25] : memref<18x18x4xbf16, #tpu.memory_space<vmem>>, vector<16x16x4xbf16>
    %c0_26 = arith.constant 0 : index
    %c0_27 = arith.constant 0 : index
    %c4 = arith.constant 4 : index
    %12 = vector.load %arg8[%c0_26, %c0_27, %c4] : memref<16x16x36xbf16, #tpu.memory_space<vmem>>, vector<16x16x4xbf16>
    tpu.vector_store %arg8[%c0_26, %c0_27, %c4], %11 {strides = array<i32>} : memref<16x16x36xbf16, #tpu.memory_space<vmem>>, vector<16x16x4xbf16>,
    %c0_28 = arith.constant 0 : index
    %c2 = arith.constant 2 : index
    %c0_29 = arith.constant 0 : index
    %13 = vector.load %arg7[%c0_28, %c2, %c0_29] : memref<18x18x4xbf16, #tpu.memory_space<vmem>>, vector<16x16x4xbf16>
    %c0_30 = arith.constant 0 : index
    %c0_31 = arith.constant 0 : index
    %c8 = arith.constant 8 : index
    %14 = vector.load %arg8[%c0_30, %c0_31, %c8] : memref<16x16x36xbf16, #tpu.memory_space<vmem>>, vector<16x16x4xbf16>
    tpu.vector_store %arg8[%c0_30, %c0_31, %c8], %13 {strides = array<i32>} : memref<16x16x36xbf16, #tpu.memory_space<vmem>>, vector<16x16x4xbf16>,
    %c1_32 = arith.constant 1 : index
    %c0_33 = arith.constant 0 : index
    %c0_34 = arith.constant 0 : index
    %15 = vector.load %arg7[%c1_32, %c0_33, %c0_34] : memref<18x18x4xbf16, #tpu.memory_space<vmem>>, vector<16x16x4xbf16>
    %c0_35 = arith.constant 0 : index
    %c0_36 = arith.constant 0 : index
    %c12 = arith.constant 12 : index
    %16 = vector.load %arg8[%c0_35, %c0_36, %c12] : memref<16x16x36xbf16, #tpu.memory_space<vmem>>, vector<16x16x4xbf16>
    tpu.vector_store %arg8[%c0_35, %c0_36, %c12], %15 {strides = array<i32>} : memref<16x16x36xbf16, #tpu.memory_space<vmem>>, vector<16x16x4xbf16>,
    %c1_37 = arith.constant 1 : index
    %c1_38 = arith.constant 1 : index
    %c0_39 = arith.constant 0 : index
    %17 = vector.load %arg7[%c1_37, %c1_38, %c0_39] : memref<18x18x4xbf16, #tpu.memory_space<vmem>>, vector<16x16x4xbf16>
    %c0_40 = arith.constant 0 : index
    %c0_41 = arith.constant 0 : index
    %c16 = arith.constant 16 : index
    %18 = vector.load %arg8[%c0_40, %c0_41, %c16] : memref<16x16x36xbf16, #tpu.memory_space<vmem>>, vector<16x16x4xbf16>
    tpu.vector_store %arg8[%c0_40, %c0_41, %c16], %17 {strides = array<i32>} : memref<16x16x36xbf16, #tpu.memory_space<vmem>>, vector<16x16x4xbf16>,
    %c1_42 = arith.constant 1 : index
    %c2_43 = arith.constant 2 : index
    %c0_44 = arith.constant 0 : index
    %19 = vector.load %arg7[%c1_42, %c2_43, %c0_44] : memref<18x18x4xbf16, #tpu.memory_space<vmem>>, vector<16x16x4xbf16>
    %c0_45 = arith.constant 0 : index
    %c0_46 = arith.constant 0 : index
    %c20 = arith.constant 20 : index
    %20 = vector.load %arg8[%c0_45, %c0_46, %c20] : memref<16x16x36xbf16, #tpu.memory_space<vmem>>, vector<16x16x4xbf16>
    tpu.vector_store %arg8[%c0_45, %c0_46, %c20], %19 {strides = array<i32>} : memref<16x16x36xbf16, #tpu.memory_space<vmem>>, vector<16x16x4xbf16>,
    %c2_47 = arith.constant 2 : index
    %c0_48 = arith.constant 0 : index
    %c0_49 = arith.constant 0 : index
    %21 = vector.load %arg7[%c2_47, %c0_48, %c0_49] : memref<18x18x4xbf16, #tpu.memory_space<vmem>>, vector<16x16x4xbf16>
    %c0_50 = arith.constant 0 : index
    %c0_51 = arith.constant 0 : index
    %c24 = arith.constant 24 : index
    %22 = vector.load %arg8[%c0_50, %c0_51, %c24] : memref<16x16x36xbf16, #tpu.memory_space<vmem>>, vector<16x16x4xbf16>
    tpu.vector_store %arg8[%c0_50, %c0_51, %c24], %21 {strides = array<i32>} : memref<16x16x36xbf16, #tpu.memory_space<vmem>>, vector<16x16x4xbf16>,
    %c2_52 = arith.constant 2 : index
    %c1_53 = arith.constant 1 : index
    %c0_54 = arith.constant 0 : index
    %23 = vector.load %arg7[%c2_52, %c1_53, %c0_54] : memref<18x18x4xbf16, #tpu.memory_space<vmem>>, vector<16x16x4xbf16>
    %c0_55 = arith.constant 0 : index
    %c0_56 = arith.constant 0 : index
    %c28 = arith.constant 28 : index
    %24 = vector.load %arg8[%c0_55, %c0_56, %c28] : memref<16x16x36xbf16, #tpu.memory_space<vmem>>, vector<16x16x4xbf16>
    tpu.vector_store %arg8[%c0_55, %c0_56, %c28], %23 {strides = array<i32>} : memref<16x16x36xbf16, #tpu.memory_space<vmem>>, vector<16x16x4xbf16>,
    %c2_57 = arith.constant 2 : index
    %c2_58 = arith.constant 2 : index
    %c0_59 = arith.constant 0 : index
    %25 = vector.load %arg7[%c2_57, %c2_58, %c0_59] : memref<18x18x4xbf16, #tpu.memory_space<vmem>>, vector<16x16x4xbf16>
    %c0_60 = arith.constant 0 : index
    %c0_61 = arith.constant 0 : index
    %c32 = arith.constant 32 : index
    %26 = vector.load %arg8[%c0_60, %c0_61, %c32] : memref<16x16x36xbf16, #tpu.memory_space<vmem>>, vector<16x16x4xbf16>
    tpu.vector_store %arg8[%c0_60, %c0_61, %c32], %25 {strides = array<i32>} : memref<16x16x36xbf16, #tpu.memory_space<vmem>>, vector<16x16x4xbf16>,
    %c0_62 = arith.constant 0 : index
    %c0_63 = arith.constant 0 : index
    %c0_64 = arith.constant 0 : index
    %27 = vector.load %arg8[%c0_62, %c0_63, %c0_64] : memref<16x16x36xbf16, #tpu.memory_space<vmem>>, vector<16x16x36xbf16>
    %28 = vector.shape_cast %27 : vector<16x16x36xbf16> to vector<256x36xbf16>
    %c0_65 = arith.constant 0 : index
    %c0_66 = arith.constant 0 : index
    %29 = vector.load %arg2[%c0_65, %c0_66] : memref<36x128xbf16, #tpu.memory_space<vmem>>, vector<36x128xbf16>
    %cst_67 = arith.constant dense<0.000000e+00> : vector<256x128xf32>
    %30 = tpu.matmul %28, %29, %cst_67 {dimension_numbers = #tpu.dot_dimension_numbers<[1], [0], [0], [1], [0, 0, 1, 1], [], []>} : vector<256x36xbf16>, vector<36x128xbf16>, vector<256x128xf32> -> vector<256x128xf32>
    %cst_68 = arith.constant dense<0.000000e+00> : vector<128xf32>
    %31 = vector.multi_reduction <add>, %30, %cst_68 [0] : vector<256x128xf32> to vector<128xf32>
    %32 = vector.shape_cast %31 : vector<128xf32> to vector<1x128xf32>
    %33 = arith.mulf %30, %30 : vector<256x128xf32>
    %cst_69 = arith.constant dense<0.000000e+00> : vector<128xf32>
    %34 = vector.multi_reduction <add>, %33, %cst_69 [0] : vector<256x128xf32> to vector<128xf32>
    %35 = vector.shape_cast %34 : vector<128xf32> to vector<1x128xf32>
    %36 = vector.shape_cast %32 : vector<1x128xf32> to vector<1x1x128xf32>
    %c0_70 = arith.constant 0 : index
    %c0_71 = arith.constant 0 : index
    %c0_72 = arith.constant 0 : index
    %37 = vector.load %arg6[%c0_70, %c0_71, %c0_72] : memref<1x2x128xf32, #tpu.memory_space<vmem>>, vector<1x1x128xf32>
    tpu.vector_store %arg6[%c0_70, %c0_71, %c0_72], %36 {strides = array<i32>} : memref<1x2x128xf32, #tpu.memory_space<vmem>>, vector<1x1x128xf32>,
    %38 = vector.shape_cast %35 : vector<1x128xf32> to vector<1x1x128xf32>
    %c0_73 = arith.constant 0 : index
    %c1_74 = arith.constant 1 : index
    %c0_75 = arith.constant 0 : index
    %39 = vector.load %arg6[%c0_73, %c1_74, %c0_75] : memref<1x2x128xf32, #tpu.memory_space<vmem>>, vector<1x1x128xf32>
    tpu.vector_store %arg6[%c0_73, %c1_74, %c0_75], %38 {strides = array<i32>} : memref<1x2x128xf32, #tpu.memory_space<vmem>>, vector<1x1x128xf32>,
    %40 = vector.shape_cast %30 : vector<256x128xf32> to vector<1x16x16x128xf32>
    %41 = arith.truncf %40 : vector<1x16x16x128xf32> to vector<1x16x16x128xbf16>
    %c0_76 = arith.constant 0 : index
    %c0_77 = arith.constant 0 : index
    %c0_78 = arith.constant 0 : index
    %c0_79 = arith.constant 0 : index
    %42 = vector.load %arg5[%c0_76, %c0_77, %c0_78, %c0_79] : memref<1x16x16x128xbf16, #tpu.memory_space<vmem>>, vector<1x16x16x128xbf16>
    tpu.vector_store %arg5[%c0_76, %c0_77, %c0_78, %c0_79], %41 {strides = array<i32>} : memref<1x16x16x128xbf16, #tpu.memory_space<vmem>>, vector<1x16x16x128xbf16>,
    return
  }
  func.func @transform_0(%arg0: i32) -> (i32, i32, i32, i32) {
    %c0_i32 = arith.constant 0 : i32
    %c0_i32_0 = arith.constant 0 : i32
    %c0_i32_1 = arith.constant 0 : i32
    %c0_i32_2 = arith.constant 0 : i32
    return %arg0, %c0_i32, %c0_i32_0, %c0_i32_1 : i32, i32, i32, i32
  }
  func.func @transform_1(%arg0: i32) -> (i32, i32) {
    %c0_i32 = arith.constant 0 : i32
    %c0_i32_0 = arith.constant 0 : i32
    %c0_i32_1 = arith.constant 0 : i32
    return %c0_i32, %c0_i32_0 : i32, i32
  }
  func.func @transform_2(%arg0: i32) -> (i32, i32) {
    %c0_i32 = arith.constant 0 : i32
    %c0_i32_0 = arith.constant 0 : i32
    %c0_i32_1 = arith.constant 0 : i32
    return %c0_i32, %c0_i32_0 : i32, i32
  }
  func.func @transform_3(%arg0: i32) -> (i32, i32) {
    %c0_i32 = arith.constant 0 : i32
    %c0_i32_0 = arith.constant 0 : i32
    %c0_i32_1 = arith.constant 0 : i32
    return %c0_i32, %c0_i32_0 : i32, i32
  }
  func.func @transform_4(%arg0: i32) -> (i32, i32, i32, i32) {
    %c0_i32 = arith.constant 0 : i32
    %c0_i32_0 = arith.constant 0 : i32
    %c0_i32_1 = arith.constant 0 : i32
    %c0_i32_2 = arith.constant 0 : i32
    return %arg0, %c0_i32, %c0_i32_0, %c0_i32_1 : i32, i32, i32, i32
  }
  func.func @transform_5(%arg0: i32) -> (i32, i32, i32) {
    %c0_i32 = arith.constant 0 : i32
    %c0_i32_0 = arith.constant 0 : i32
    %c0_i32_1 = arith.constant 0 : i32
    return %arg0, %c0_i32, %c0_i32_0 : i32, i32, i32
  }
}

module attributes {stable_mosaic.version = 11 : i64} {
  func.func @kernel(%arg0: i32, %arg1: memref<1x16x16x128xbf16, #tpu.memory_space<vmem>>, %arg2: memref<1152x128xbf16, #tpu.memory_space<vmem>>, %arg3: memref<1x128xf32, #tpu.memory_space<vmem>>, %arg4: memref<1x128xf32, #tpu.memory_space<vmem>>, %arg5: memref<1x16x16x128xf32, #tpu.memory_space<vmem>>, %arg6: memref<1x2x128xf32, #tpu.memory_space<vmem>>, %arg7: memref<18x18x128xbf16, #tpu.memory_space<vmem>>, %arg8: memref<16x16x1152xbf16, #tpu.memory_space<vmem>>) attributes {dimension_semantics = [#tpu.dimension_semantics<parallel>], iteration_bounds = array<i64: 2>, scalar_prefetch = 0 : i64, scratch_operands = 2 : i64, tpu.core_type = #tpu.core_type<tc>, window_params = [{transform_indices = @transform_0, window_bounds = array<i64: 1, 16, 16, 128>}, {pipeline_mode = #tpu.pipeline_mode<synchronous>, transform_indices = @transform_1, window_bounds = array<i64: 1152, 128>}, {pipeline_mode = #tpu.pipeline_mode<synchronous>, transform_indices = @transform_2, window_bounds = array<i64: 1, 128>}, {pipeline_mode = #tpu.pipeline_mode<synchronous>, transform_indices = @transform_3, window_bounds = array<i64: 1, 128>}, {transform_indices = @transform_4, window_bounds = array<i64: 1, 16, 16, 128>}, {transform_indices = @transform_5, window_bounds = array<i64: 1, 2, 128>}]} {
    %c0 = arith.constant 0 : index
    %c0_0 = arith.constant 0 : index
    %c0_1 = arith.constant 0 : index
    %c0_2 = arith.constant 0 : index
    %0 = vector.load %arg1[%c0, %c0_0, %c0_1, %c0_2] : memref<1x16x16x128xbf16, #tpu.memory_space<vmem>>, vector<1x16x16x128xbf16>
    %1 = vector.shape_cast %0 : vector<1x16x16x128xbf16> to vector<16x16x128xbf16>
    %2 = arith.extf %1 : vector<16x16x128xbf16> to vector<16x16x128xf32>
    %c0_3 = arith.constant 0 : index
    %c0_4 = arith.constant 0 : index
    %3 = vector.load %arg3[%c0_3, %c0_4] : memref<1x128xf32, #tpu.memory_space<vmem>>, vector<1x128xf32>
    %4 = vector.shape_cast %3 : vector<1x128xf32> to vector<1x1x128xf32>
    %5 = vector.broadcast %4 : vector<1x1x128xf32> to vector<16x16x128xf32>
    %6 = arith.mulf %2, %5 : vector<16x16x128xf32>
    %c0_5 = arith.constant 0 : index
    %c0_6 = arith.constant 0 : index
    %7 = vector.load %arg4[%c0_5, %c0_6] : memref<1x128xf32, #tpu.memory_space<vmem>>, vector<1x128xf32>
    %8 = vector.shape_cast %7 : vector<1x128xf32> to vector<1x1x128xf32>
    %9 = vector.broadcast %8 : vector<1x1x128xf32> to vector<16x16x128xf32>
    %10 = arith.addf %6, %9 : vector<16x16x128xf32>
    %cst = arith.constant 0.000000e+00 : f32
    %11 = vector.broadcast %cst : f32 to vector<16x16x128xf32>
    %12 = arith.maximumf %10, %11 : vector<16x16x128xf32>
    %cst_7 = arith.constant 0.000000e+00 : bf16
    %13 = vector.broadcast %cst_7 : bf16 to vector<1x18x128xbf16>
    %cst_8 = arith.constant 0.000000e+00 : bf16
    %14 = vector.broadcast %cst_8 : bf16 to vector<18x1x128xbf16>
    %c0_9 = arith.constant 0 : index
    %c0_10 = arith.constant 0 : index
    %c0_11 = arith.constant 0 : index
    %15 = vector.load %arg7[%c0_9, %c0_10, %c0_11] : memref<18x18x128xbf16, #tpu.memory_space<vmem>>, vector<1x18x128xbf16>
    tpu.vector_store %arg7[%c0_9, %c0_10, %c0_11], %13 {strides = array<i32>} : memref<18x18x128xbf16, #tpu.memory_space<vmem>>, vector<1x18x128xbf16>,
    %c17 = arith.constant 17 : index
    %c0_12 = arith.constant 0 : index
    %c0_13 = arith.constant 0 : index
    %16 = vector.load %arg7[%c17, %c0_12, %c0_13] : memref<18x18x128xbf16, #tpu.memory_space<vmem>>, vector<1x18x128xbf16>
    tpu.vector_store %arg7[%c17, %c0_12, %c0_13], %13 {strides = array<i32>} : memref<18x18x128xbf16, #tpu.memory_space<vmem>>, vector<1x18x128xbf16>,
    %c0_14 = arith.constant 0 : index
    %c0_15 = arith.constant 0 : index
    %c0_16 = arith.constant 0 : index
    %17 = vector.load %arg7[%c0_14, %c0_15, %c0_16] : memref<18x18x128xbf16, #tpu.memory_space<vmem>>, vector<18x1x128xbf16>
    tpu.vector_store %arg7[%c0_14, %c0_15, %c0_16], %14 {strides = array<i32>} : memref<18x18x128xbf16, #tpu.memory_space<vmem>>, vector<18x1x128xbf16>,
    %c0_17 = arith.constant 0 : index
    %c17_18 = arith.constant 17 : index
    %c0_19 = arith.constant 0 : index
    %18 = vector.load %arg7[%c0_17, %c17_18, %c0_19] : memref<18x18x128xbf16, #tpu.memory_space<vmem>>, vector<18x1x128xbf16>
    tpu.vector_store %arg7[%c0_17, %c17_18, %c0_19], %14 {strides = array<i32>} : memref<18x18x128xbf16, #tpu.memory_space<vmem>>, vector<18x1x128xbf16>,
    %19 = arith.truncf %12 : vector<16x16x128xf32> to vector<16x16x128xbf16>
    %c1 = arith.constant 1 : index
    %c1_20 = arith.constant 1 : index
    %c0_21 = arith.constant 0 : index
    %20 = vector.load %arg7[%c1, %c1_20, %c0_21] : memref<18x18x128xbf16, #tpu.memory_space<vmem>>, vector<16x16x128xbf16>
    tpu.vector_store %arg7[%c1, %c1_20, %c0_21], %19 {strides = array<i32>} : memref<18x18x128xbf16, #tpu.memory_space<vmem>>, vector<16x16x128xbf16>,
    %c0_22 = arith.constant 0 : index
    %c0_23 = arith.constant 0 : index
    %c0_24 = arith.constant 0 : index
    %21 = vector.load %arg7[%c0_22, %c0_23, %c0_24] : memref<18x18x128xbf16, #tpu.memory_space<vmem>>, vector<16x16x128xbf16>
    %c0_25 = arith.constant 0 : index
    %c0_26 = arith.constant 0 : index
    %c0_27 = arith.constant 0 : index
    %22 = vector.load %arg8[%c0_25, %c0_26, %c0_27] : memref<16x16x1152xbf16, #tpu.memory_space<vmem>>, vector<16x16x128xbf16>
    tpu.vector_store %arg8[%c0_25, %c0_26, %c0_27], %21 {strides = array<i32>} : memref<16x16x1152xbf16, #tpu.memory_space<vmem>>, vector<16x16x128xbf16>,
    %c0_28 = arith.constant 0 : index
    %c1_29 = arith.constant 1 : index
    %c0_30 = arith.constant 0 : index
    %23 = vector.load %arg7[%c0_28, %c1_29, %c0_30] : memref<18x18x128xbf16, #tpu.memory_space<vmem>>, vector<16x16x128xbf16>
    %c0_31 = arith.constant 0 : index
    %c0_32 = arith.constant 0 : index
    %c128 = arith.constant 128 : index
    %24 = vector.load %arg8[%c0_31, %c0_32, %c128] : memref<16x16x1152xbf16, #tpu.memory_space<vmem>>, vector<16x16x128xbf16>
    tpu.vector_store %arg8[%c0_31, %c0_32, %c128], %23 {strides = array<i32>} : memref<16x16x1152xbf16, #tpu.memory_space<vmem>>, vector<16x16x128xbf16>,
    %c0_33 = arith.constant 0 : index
    %c2 = arith.constant 2 : index
    %c0_34 = arith.constant 0 : index
    %25 = vector.load %arg7[%c0_33, %c2, %c0_34] : memref<18x18x128xbf16, #tpu.memory_space<vmem>>, vector<16x16x128xbf16>
    %c0_35 = arith.constant 0 : index
    %c0_36 = arith.constant 0 : index
    %c256 = arith.constant 256 : index
    %26 = vector.load %arg8[%c0_35, %c0_36, %c256] : memref<16x16x1152xbf16, #tpu.memory_space<vmem>>, vector<16x16x128xbf16>
    tpu.vector_store %arg8[%c0_35, %c0_36, %c256], %25 {strides = array<i32>} : memref<16x16x1152xbf16, #tpu.memory_space<vmem>>, vector<16x16x128xbf16>,
    %c1_37 = arith.constant 1 : index
    %c0_38 = arith.constant 0 : index
    %c0_39 = arith.constant 0 : index
    %27 = vector.load %arg7[%c1_37, %c0_38, %c0_39] : memref<18x18x128xbf16, #tpu.memory_space<vmem>>, vector<16x16x128xbf16>
    %c0_40 = arith.constant 0 : index
    %c0_41 = arith.constant 0 : index
    %c384 = arith.constant 384 : index
    %28 = vector.load %arg8[%c0_40, %c0_41, %c384] : memref<16x16x1152xbf16, #tpu.memory_space<vmem>>, vector<16x16x128xbf16>
    tpu.vector_store %arg8[%c0_40, %c0_41, %c384], %27 {strides = array<i32>} : memref<16x16x1152xbf16, #tpu.memory_space<vmem>>, vector<16x16x128xbf16>,
    %c1_42 = arith.constant 1 : index
    %c1_43 = arith.constant 1 : index
    %c0_44 = arith.constant 0 : index
    %29 = vector.load %arg7[%c1_42, %c1_43, %c0_44] : memref<18x18x128xbf16, #tpu.memory_space<vmem>>, vector<16x16x128xbf16>
    %c0_45 = arith.constant 0 : index
    %c0_46 = arith.constant 0 : index
    %c512 = arith.constant 512 : index
    %30 = vector.load %arg8[%c0_45, %c0_46, %c512] : memref<16x16x1152xbf16, #tpu.memory_space<vmem>>, vector<16x16x128xbf16>
    tpu.vector_store %arg8[%c0_45, %c0_46, %c512], %29 {strides = array<i32>} : memref<16x16x1152xbf16, #tpu.memory_space<vmem>>, vector<16x16x128xbf16>,
    %c1_47 = arith.constant 1 : index
    %c2_48 = arith.constant 2 : index
    %c0_49 = arith.constant 0 : index
    %31 = vector.load %arg7[%c1_47, %c2_48, %c0_49] : memref<18x18x128xbf16, #tpu.memory_space<vmem>>, vector<16x16x128xbf16>
    %c0_50 = arith.constant 0 : index
    %c0_51 = arith.constant 0 : index
    %c640 = arith.constant 640 : index
    %32 = vector.load %arg8[%c0_50, %c0_51, %c640] : memref<16x16x1152xbf16, #tpu.memory_space<vmem>>, vector<16x16x128xbf16>
    tpu.vector_store %arg8[%c0_50, %c0_51, %c640], %31 {strides = array<i32>} : memref<16x16x1152xbf16, #tpu.memory_space<vmem>>, vector<16x16x128xbf16>,
    %c2_52 = arith.constant 2 : index
    %c0_53 = arith.constant 0 : index
    %c0_54 = arith.constant 0 : index
    %33 = vector.load %arg7[%c2_52, %c0_53, %c0_54] : memref<18x18x128xbf16, #tpu.memory_space<vmem>>, vector<16x16x128xbf16>
    %c0_55 = arith.constant 0 : index
    %c0_56 = arith.constant 0 : index
    %c768 = arith.constant 768 : index
    %34 = vector.load %arg8[%c0_55, %c0_56, %c768] : memref<16x16x1152xbf16, #tpu.memory_space<vmem>>, vector<16x16x128xbf16>
    tpu.vector_store %arg8[%c0_55, %c0_56, %c768], %33 {strides = array<i32>} : memref<16x16x1152xbf16, #tpu.memory_space<vmem>>, vector<16x16x128xbf16>,
    %c2_57 = arith.constant 2 : index
    %c1_58 = arith.constant 1 : index
    %c0_59 = arith.constant 0 : index
    %35 = vector.load %arg7[%c2_57, %c1_58, %c0_59] : memref<18x18x128xbf16, #tpu.memory_space<vmem>>, vector<16x16x128xbf16>
    %c0_60 = arith.constant 0 : index
    %c0_61 = arith.constant 0 : index
    %c896 = arith.constant 896 : index
    %36 = vector.load %arg8[%c0_60, %c0_61, %c896] : memref<16x16x1152xbf16, #tpu.memory_space<vmem>>, vector<16x16x128xbf16>
    tpu.vector_store %arg8[%c0_60, %c0_61, %c896], %35 {strides = array<i32>} : memref<16x16x1152xbf16, #tpu.memory_space<vmem>>, vector<16x16x128xbf16>,
    %c2_62 = arith.constant 2 : index
    %c2_63 = arith.constant 2 : index
    %c0_64 = arith.constant 0 : index
    %37 = vector.load %arg7[%c2_62, %c2_63, %c0_64] : memref<18x18x128xbf16, #tpu.memory_space<vmem>>, vector<16x16x128xbf16>
    %c0_65 = arith.constant 0 : index
    %c0_66 = arith.constant 0 : index
    %c1024 = arith.constant 1024 : index
    %38 = vector.load %arg8[%c0_65, %c0_66, %c1024] : memref<16x16x1152xbf16, #tpu.memory_space<vmem>>, vector<16x16x128xbf16>
    tpu.vector_store %arg8[%c0_65, %c0_66, %c1024], %37 {strides = array<i32>} : memref<16x16x1152xbf16, #tpu.memory_space<vmem>>, vector<16x16x128xbf16>,
    %c0_67 = arith.constant 0 : index
    %c0_68 = arith.constant 0 : index
    %c0_69 = arith.constant 0 : index
    %39 = vector.load %arg8[%c0_67, %c0_68, %c0_69] : memref<16x16x1152xbf16, #tpu.memory_space<vmem>>, vector<16x16x1152xbf16>
    %40 = vector.shape_cast %39 : vector<16x16x1152xbf16> to vector<256x1152xbf16>
    %c0_70 = arith.constant 0 : index
    %c0_71 = arith.constant 0 : index
    %41 = vector.load %arg2[%c0_70, %c0_71] : memref<1152x128xbf16, #tpu.memory_space<vmem>>, vector<1152x128xbf16>
    %cst_72 = arith.constant dense<0.000000e+00> : vector<256x128xf32>
    %42 = tpu.matmul %40, %41, %cst_72 {dimension_numbers = #tpu.dot_dimension_numbers<[1], [0], [0], [1], [0, 0, 1, 1], [], []>} : vector<256x1152xbf16>, vector<1152x128xbf16>, vector<256x128xf32> -> vector<256x128xf32>
    %cst_73 = arith.constant dense<0.000000e+00> : vector<128xf32>
    %43 = vector.multi_reduction <add>, %42, %cst_73 [0] : vector<256x128xf32> to vector<128xf32>
    %44 = vector.shape_cast %43 : vector<128xf32> to vector<1x128xf32>
    %45 = arith.mulf %42, %42 : vector<256x128xf32>
    %cst_74 = arith.constant dense<0.000000e+00> : vector<128xf32>
    %46 = vector.multi_reduction <add>, %45, %cst_74 [0] : vector<256x128xf32> to vector<128xf32>
    %47 = vector.shape_cast %46 : vector<128xf32> to vector<1x128xf32>
    %48 = vector.shape_cast %44 : vector<1x128xf32> to vector<1x1x128xf32>
    %c0_75 = arith.constant 0 : index
    %c0_76 = arith.constant 0 : index
    %c0_77 = arith.constant 0 : index
    %49 = vector.load %arg6[%c0_75, %c0_76, %c0_77] : memref<1x2x128xf32, #tpu.memory_space<vmem>>, vector<1x1x128xf32>
    tpu.vector_store %arg6[%c0_75, %c0_76, %c0_77], %48 {strides = array<i32>} : memref<1x2x128xf32, #tpu.memory_space<vmem>>, vector<1x1x128xf32>,
    %50 = vector.shape_cast %47 : vector<1x128xf32> to vector<1x1x128xf32>
    %c0_78 = arith.constant 0 : index
    %c1_79 = arith.constant 1 : index
    %c0_80 = arith.constant 0 : index
    %51 = vector.load %arg6[%c0_78, %c1_79, %c0_80] : memref<1x2x128xf32, #tpu.memory_space<vmem>>, vector<1x1x128xf32>
    tpu.vector_store %arg6[%c0_78, %c1_79, %c0_80], %50 {strides = array<i32>} : memref<1x2x128xf32, #tpu.memory_space<vmem>>, vector<1x1x128xf32>,
    %52 = vector.shape_cast %42 : vector<256x128xf32> to vector<1x16x16x128xf32>
    %c0_81 = arith.constant 0 : index
    %c0_82 = arith.constant 0 : index
    %c0_83 = arith.constant 0 : index
    %c0_84 = arith.constant 0 : index
    %53 = vector.load %arg5[%c0_81, %c0_82, %c0_83, %c0_84] : memref<1x16x16x128xf32, #tpu.memory_space<vmem>>, vector<1x16x16x128xf32>
    tpu.vector_store %arg5[%c0_81, %c0_82, %c0_83, %c0_84], %52 {strides = array<i32>} : memref<1x16x16x128xf32, #tpu.memory_space<vmem>>, vector<1x16x16x128xf32>,
    return
  }
  func.func @transform_0(%arg0: i32) -> (i32, i32, i32, i32) {
    %c0_i32 = arith.constant 0 : i32
    %c0_i32_0 = arith.constant 0 : i32
    %c0_i32_1 = arith.constant 0 : i32
    %c0_i32_2 = arith.constant 0 : i32
    return %arg0, %c0_i32, %c0_i32_0, %c0_i32_1 : i32, i32, i32, i32
  }
  func.func @transform_1(%arg0: i32) -> (i32, i32) {
    %c0_i32 = arith.constant 0 : i32
    %c0_i32_0 = arith.constant 0 : i32
    %c0_i32_1 = arith.constant 0 : i32
    return %c0_i32, %c0_i32_0 : i32, i32
  }
  func.func @transform_2(%arg0: i32) -> (i32, i32) {
    %c0_i32 = arith.constant 0 : i32
    %c0_i32_0 = arith.constant 0 : i32
    %c0_i32_1 = arith.constant 0 : i32
    return %c0_i32, %c0_i32_0 : i32, i32
  }
  func.func @transform_3(%arg0: i32) -> (i32, i32) {
    %c0_i32 = arith.constant 0 : i32
    %c0_i32_0 = arith.constant 0 : i32
    %c0_i32_1 = arith.constant 0 : i32
    return %c0_i32, %c0_i32_0 : i32, i32
  }
  func.func @transform_4(%arg0: i32) -> (i32, i32, i32, i32) {
    %c0_i32 = arith.constant 0 : i32
    %c0_i32_0 = arith.constant 0 : i32
    %c0_i32_1 = arith.constant 0 : i32
    %c0_i32_2 = arith.constant 0 : i32
    return %arg0, %c0_i32, %c0_i32_0, %c0_i32_1 : i32, i32, i32, i32
  }
  func.func @transform_5(%arg0: i32) -> (i32, i32, i32) {
    %c0_i32 = arith.constant 0 : i32
    %c0_i32_0 = arith.constant 0 : i32
    %c0_i32_1 = arith.constant 0 : i32
    return %arg0, %c0_i32, %c0_i32_0 : i32, i32, i32
  }
}

module attributes {stable_mosaic.version = 11 : i64} {
  func.func @_affine_relu_kernel(%arg0: i32, %arg1: memref<1x16x16x128xf32, #tpu.memory_space<vmem>>, %arg2: memref<1x128xf32, #tpu.memory_space<vmem>>, %arg3: memref<1x128xf32, #tpu.memory_space<vmem>>, %arg4: memref<1x16x16x128xf32, #tpu.memory_space<vmem>>) attributes {dimension_semantics = [#tpu.dimension_semantics<parallel>], iteration_bounds = array<i64: 2>, scalar_prefetch = 0 : i64, scratch_operands = 0 : i64, tpu.core_type = #tpu.core_type<tc>, window_params = [{transform_indices = @transform_0, window_bounds = array<i64: 1, 16, 16, 128>}, {pipeline_mode = #tpu.pipeline_mode<synchronous>, transform_indices = @transform_1, window_bounds = array<i64: 1, 128>}, {pipeline_mode = #tpu.pipeline_mode<synchronous>, transform_indices = @transform_2, window_bounds = array<i64: 1, 128>}, {transform_indices = @transform_3, window_bounds = array<i64: 1, 16, 16, 128>}]} {
    %c0 = arith.constant 0 : index
    %c0_0 = arith.constant 0 : index
    %c0_1 = arith.constant 0 : index
    %c0_2 = arith.constant 0 : index
    %0 = vector.load %arg1[%c0, %c0_0, %c0_1, %c0_2] : memref<1x16x16x128xf32, #tpu.memory_space<vmem>>, vector<1x16x16x128xf32>
    %c0_3 = arith.constant 0 : index
    %c0_4 = arith.constant 0 : index
    %1 = vector.load %arg2[%c0_3, %c0_4] : memref<1x128xf32, #tpu.memory_space<vmem>>, vector<1x128xf32>
    %2 = vector.shape_cast %1 : vector<1x128xf32> to vector<1x1x1x128xf32>
    %3 = vector.broadcast %2 : vector<1x1x1x128xf32> to vector<1x16x16x128xf32>
    %4 = arith.mulf %0, %3 : vector<1x16x16x128xf32>
    %c0_5 = arith.constant 0 : index
    %c0_6 = arith.constant 0 : index
    %5 = vector.load %arg3[%c0_5, %c0_6] : memref<1x128xf32, #tpu.memory_space<vmem>>, vector<1x128xf32>
    %6 = vector.shape_cast %5 : vector<1x128xf32> to vector<1x1x1x128xf32>
    %7 = vector.broadcast %6 : vector<1x1x1x128xf32> to vector<1x16x16x128xf32>
    %8 = arith.addf %4, %7 : vector<1x16x16x128xf32>
    %cst = arith.constant 0.000000e+00 : f32
    %9 = vector.broadcast %cst : f32 to vector<1x16x16x128xf32>
    %10 = arith.maximumf %8, %9 : vector<1x16x16x128xf32>
    %c0_7 = arith.constant 0 : index
    %c0_8 = arith.constant 0 : index
    %c0_9 = arith.constant 0 : index
    %c0_10 = arith.constant 0 : index
    %11 = vector.load %arg4[%c0_7, %c0_8, %c0_9, %c0_10] : memref<1x16x16x128xf32, #tpu.memory_space<vmem>>, vector<1x16x16x128xf32>
    tpu.vector_store %arg4[%c0_7, %c0_8, %c0_9, %c0_10], %10 {strides = array<i32>} : memref<1x16x16x128xf32, #tpu.memory_space<vmem>>, vector<1x16x16x128xf32>,
    return
  }
  func.func @transform_0(%arg0: i32) -> (i32, i32, i32, i32) {
    %c0_i32 = arith.constant 0 : i32
    %c0_i32_0 = arith.constant 0 : i32
    %c0_i32_1 = arith.constant 0 : i32
    %c0_i32_2 = arith.constant 0 : i32
    return %arg0, %c0_i32, %c0_i32_0, %c0_i32_1 : i32, i32, i32, i32
  }
  func.func @transform_1(%arg0: i32) -> (i32, i32) {
    %c0_i32 = arith.constant 0 : i32
    %c0_i32_0 = arith.constant 0 : i32
    %c0_i32_1 = arith.constant 0 : i32
    return %c0_i32, %c0_i32_0 : i32, i32
  }
  func.func @transform_2(%arg0: i32) -> (i32, i32) {
    %c0_i32 = arith.constant 0 : i32
    %c0_i32_0 = arith.constant 0 : i32
    %c0_i32_1 = arith.constant 0 : i32
    return %c0_i32, %c0_i32_0 : i32, i32
  }
  func.func @transform_3(%arg0: i32) -> (i32, i32, i32, i32) {
    %c0_i32 = arith.constant 0 : i32
    %c0_i32_0 = arith.constant 0 : i32
    %c0_i32_1 = arith.constant 0 : i32
    %c0_i32_2 = arith.constant 0 : i32
    return %arg0, %c0_i32, %c0_i32_0, %c0_i32_1 : i32, i32, i32, i32
  }
}

</mosaic_0001>

<llo_original>
// kernel: double_conv.5
$region0: #{double_conv.5}
  #allocation0 [shape = 'u32[]', space=smem, size = 0x4, offset = 0x4, fixed_abs, tag = 'smem constant byte address 0x4 - core index']
  #allocation1 [shape = 'u32[144,128]{1,0:T(1,128)}', space=vmem, size = 0x12000, scoped, tag = 'internal scratch']
  %s0 = inlined_call_operand.vmem [shape: f32[2,16,16,128], index: 0, kind: input, shape index: {}]
  %s1 = inlined_call_operand.vmem [shape: f32[1,128], index: 1, kind: input, shape index: {}]
  %s2 = inlined_call_operand.vmem [shape: f32[1,128], index: 2, kind: input, shape index: {}]
  %s3 = inlined_call_operand.vmem [shape: f32[2,16,16,128], index: 3, kind: output, shape index: {}]
  %s4 = sld [smem:[#allocation0]]
  $region45: #{double_conv.5} parent=0
    _
  %s6 = ssub.s32 1, %s4
  %s7 = scalar_select 0, %s6, %s4
  loop: start=0, step=1, limit=4
  $region2: #{double_conv.5} parent=0 // loop_pre_header
    _
  $region3: #{double_conv.5} parent=0 // loop_header
    %s9 = sphi 0, %s13
    %p10 = scmp.ge.s32.totalorder %s9, 4
    %s19 = sphi 0, %s21
    %s22 = sphi 0, %s19
    %s23 = sphi 0, %s22
    %s39 = sphi 0, %s23
    %s43 = sphi 0, %s43
    %s45 = sphi 0, %s43
    %s46 = sphi 0, %s45
    %s60 = sphi 0, %s46
    %s64 = sphi 0, %s64
    %s66 = sphi 0, %s64
    %s67 = sphi 0, %s66
    %s81 = sphi 0, %s67
    %s87 = sphi 0, %s89
    %s90 = sphi 0, %s87
    %s91 = sphi 0, %s90
    %s107 = sphi 0, %s91
  $region4: #{double_conv.5} parent=0 // loop_header_branch
    %12 = sbr.rel (%p10) target = $region8
  $region5: #{double_conv.5} parent=0 // loop_body
    %s14 = ssub.s32 %s9, 1
    %s15 = ssub.s32 %s9, 2
    %s16 = sadd.s32 %s9, 1
    %s17 = ssub.s32 %s9, %s16
    %p18 = scmp.eq.s32.totalorder %s17, 0
    %s20 = sadd.s32 %s19, 1
    %s21 = scalar_select %p18, %s19, %s20
    %p24 = pneg %p18
    %p25 = scmp.eq.s32.totalorder %s9, 1
    %p26 = por %p24, %p25
    %p27 = scmp.ne.s32.totalorder %s19, %s22
    %p28 = scmp.eq.s32.totalorder %s9, 0
    %p29 = por %p27, %p28
    %p30 = scmp.ne.s32.totalorder %s19, %s22
    %p31 = scmp.eq.s32.totalorder %s14, 1
    %p32 = por %p30, %p31
    %p33 = scmp.ne.s32.totalorder %s22, %s23
    %p34 = scmp.eq.s32.totalorder %s14, 0
    %p35 = por %p33, %p34
    %p36 = scmp.ne.s32.totalorder %s22, %s23
    %p37 = scmp.eq.s32.totalorder %s15, 1
    %p38 = por %p36, %p37
    %p40 = scmp.ne.s32.totalorder %s23, %s39
    %p41 = scmp.eq.s32.totalorder %s15, 0
    %p42 = por %p40, %p41
    %s44 = sadd.s32 %s43, 1
    %p47 = scmp.eq.s32.totalorder %s9, 1
    %p48 = scmp.ne.s32.totalorder %s43, %s45
    %p49 = scmp.eq.s32.totalorder %s9, 0
    %p50 = por %p48, %p49
    %p51 = scmp.ne.s32.totalorder %s43, %s45
    %p52 = scmp.eq.s32.totalorder %s14, 1
    %p53 = por %p51, %p52
    %p54 = scmp.ne.s32.totalorder %s45, %s46
    %p55 = scmp.eq.s32.totalorder %s14, 0
    %p56 = por %p54, %p55
    %p57 = scmp.ne.s32.totalorder %s45, %s46
    %p58 = scmp.eq.s32.totalorder %s15, 1
    %p59 = por %p57, %p58
    %p61 = scmp.ne.s32.totalorder %s46, %s60
    %p62 = scmp.eq.s32.totalorder %s15, 0
    %p63 = por %p61, %p62
    %s65 = sadd.s32 %s64, 1
    %p68 = scmp.eq.s32.totalorder %s9, 1
    %p69 = scmp.ne.s32.totalorder %s64, %s66
    %p70 = scmp.eq.s32.totalorder %s9, 0
    %p71 = por %p69, %p70
    %p72 = scmp.ne.s32.totalorder %s64, %s66
    %p73 = scmp.eq.s32.totalorder %s14, 1
    %p74 = por %p72, %p73
    %p75 = scmp.ne.s32.totalorder %s66, %s67
    %p76 = scmp.eq.s32.totalorder %s14, 0
    %p77 = por %p75, %p76
    %p78 = scmp.ne.s32.totalorder %s66, %s67
    %p79 = scmp.eq.s32.totalorder %s15, 1
    %p80 = por %p78, %p79
    %p82 = scmp.ne.s32.totalorder %s67, %s81
    %p83 = scmp.eq.s32.totalorder %s15, 0
    %p84 = por %p82, %p83
    %s85 = ssub.s32 %s9, %s16
    %p86 = scmp.eq.s32.totalorder %s85, 0
    %s88 = sadd.s32 %s87, 1
    %s89 = scalar_select %p86, %s87, %s88
    %p92 = pneg %p86
    %p93 = scmp.eq.s32.totalorder %s9, 1
    %p94 = por %p92, %p93
    %p95 = scmp.ne.s32.totalorder %s87, %s90
    %p96 = scmp.eq.s32.totalorder %s9, 0
    %p97 = por %p95, %p96
    %p98 = scmp.ne.s32.totalorder %s87, %s90
    %p99 = scmp.eq.s32.totalorder %s14, 1
    %p100 = por %p98, %p99
    %p101 = scmp.ne.s32.totalorder %s90, %s91
    %p102 = scmp.eq.s32.totalorder %s14, 0
    %p103 = por %p101, %p102
    %p104 = scmp.ne.s32.totalorder %s90, %s91
    %p105 = scmp.eq.s32.totalorder %s15, 1
    %p106 = por %p104, %p105
    %p108 = scmp.ne.s32.totalorder %s91, %s107
    %p109 = scmp.eq.s32.totalorder %s15, 0
    %p110 = por %p108, %p109
    %p111 = scmp.le.s32.totalorder 1, %s9
    %p112 = scmp.lt.s32.totalorder %s9, 3
    %p113 = pnand %p111, %p112
    %p114 = pneg %p113
    // Predicated region
    $region9: #{double_conv.5} parent=5 // pred_check
      _
    $region10: #{double_conv.5} parent=5 // pred_check_branch
      %116 = sbr.rel (%p113) target = $region12
    $region11: #{double_conv.5} parent=5 // pred_region
      %s117 = ssub.s32 %s9, 1
      // Predicated region
      $region13: #{double_conv.5} parent=11 // pred_check
        %p118 = pneg %p56
      $region14: #{double_conv.5} parent=11 // pred_check_branch
        %120 = sbr.rel (%p118) target = $region16
      $region15: #{double_conv.5} parent=11 // pred_region
        _
      $region16: #{double_conv.5} parent=11 // pred_fallthru
        _
      // Predicated region
      $region17: #{double_conv.5} parent=11 // pred_check
        %p121 = pneg %p77
      $region18: #{double_conv.5} parent=11 // pred_check_branch
        %123 = sbr.rel (%p121) target = $region20
      $region19: #{double_conv.5} parent=11 // pred_region
        _
      $region20: #{double_conv.5} parent=11 // pred_fallthru
        _
    $region12: #{double_conv.5} parent=5 // pred_fallthru
      _
    %p124 = scmp.lt.s32.totalorder %s9, 2
    // Predicated region
    $region21: #{double_conv.5} parent=5 // pred_check
      %p125 = pneg %p124
    $region22: #{double_conv.5} parent=5 // pred_check_branch
      %127 = sbr.rel (%p125) target = $region24
    $region23: #{double_conv.5} parent=5 // pred_region
      // Predicated region
      $region25: #{double_conv.5} parent=23 // pred_check
        %p128 = pneg %p29
      $region26: #{double_conv.5} parent=23 // pred_check_branch
        %130 = sbr.rel (%p128) target = $region28
      $region27: #{double_conv.5} parent=23 // pred_region
        %p131 = scmp.lt.s32.totalorder %s9, 1
        %s132 = scalar_select %p131, %s9, 1
        %s133 = smul.addr %s132, 32
        %s134 = smul.addr %s133, 8
        %s135 = scalar_lea.vmem %s0, %s134
      $region28: #{double_conv.5} parent=23 // pred_fallthru
        _
    $region24: #{double_conv.5} parent=5 // pred_fallthru
      _
    %p136 = scmp.le.s32.totalorder 1, %s9
    %p137 = scmp.lt.s32.totalorder %s9, 3
    %p138 = pnand %p136, %p137
    %p139 = pneg %p138
    // Predicated region
    $region29: #{double_conv.5} parent=5 // pred_check
      _
    $region30: #{double_conv.5} parent=5 // pred_check_branch
      %141 = sbr.rel (%p138) target = $region32
    $region31: #{double_conv.5} parent=5 // pred_region
      %s142 = ssub.s32 %s9, 1
      %p143 = scmp.lt.s32.totalorder %s14, 1
      %s144 = scalar_select %p143, %s14, 1
      %s145 = smul.addr %s144, 32
      %s146 = smul.addr %s145, 8
      %s147 = scalar_lea.vmem %s0, %s146
      %p148 = pneg %p35
      %p149 = pneg %p32
      %p150 = pneg %p56
      %p151 = pneg %p53
      %p152 = pneg %p77
      %p153 = pneg %p74
      %p154 = pneg %p103
      %p155 = pneg %p100
      %p156 = scmp.lt.s32.totalorder %s14, 1
      %s157 = scalar_select %p156, %s14, 1
      %s158 = smul.addr %s157, 32
      %s159 = smul.addr %s158, 8
      %s160 = scalar_lea.vmem %s3, %s159
      %p161 = scmp.lt.s32.totalorder %s14, 1
      %s162 = scalar_select %p161, %s14, 1
      %s163 = smul.addr %s162, 32
      %s164 = smul.addr %s163, 8
      %s165 = scalar_lea.vmem %s0, %s164
      %p166 = scmp.lt.s32.totalorder %s14, 1
      %s167 = scalar_select %p166, %s14, 1
      %s168 = smul.addr %s167, 32
      %s169 = smul.addr %s168, 8
      %s170 = scalar_lea.vmem %s3, %s169
      %v171 = vld [vmem:[%s165] sm:$0xff]
      %v172 = vld [vmem:[%s165 + $0x8] sm:$0xff]
      %v173 = vld [vmem:[%s165 + $0x10] sm:$0xff]
      %v174 = vld [vmem:[%s165 + $0x18] sm:$0xff]
      %v175 = vld [vmem:[%s165 + $0x20] sm:$0xff]
      %v176 = vld [vmem:[%s165 + $0x28] sm:$0xff]
      %v177 = vld [vmem:[%s165 + $0x30] sm:$0xff]
      %v178 = vld [vmem:[%s165 + $0x38] sm:$0xff]
      %v179 = vld [vmem:[%s165 + $0x40] sm:$0xff]
      %v180 = vld [vmem:[%s165 + $0x48] sm:$0xff]
      %v181 = vld [vmem:[%s165 + $0x50] sm:$0xff]
      %v182 = vld [vmem:[%s165 + $0x58] sm:$0xff]
      %v183 = vld [vmem:[%s165 + $0x60] sm:$0xff]
      %v184 = vld [vmem:[%s165 + $0x68] sm:$0xff]
      %v185 = vld [vmem:[%s165 + $0x70] sm:$0xff]
      %v186 = vld [vmem:[%s165 + $0x78] sm:$0xff]
      %v187 = vld [vmem:[%s165 + $0x80] sm:$0xff]
      %v188 = vld [vmem:[%s165 + $0x88] sm:$0xff]
      %v189 = vld [vmem:[%s165 + $0x90] sm:$0xff]
      %v190 = vld [vmem:[%s165 + $0x98] sm:$0xff]
      %v191 = vld [vmem:[%s165 + $0xa0] sm:$0xff]
      %v192 = vld [vmem:[%s165 + $0xa8] sm:$0xff]
      %v193 = vld [vmem:[%s165 + $0xb0] sm:$0xff]
      %v194 = vld [vmem:[%s165 + $0xb8] sm:$0xff]
      %v195 = vld [vmem:[%s165 + $0xc0] sm:$0xff]
      %v196 = vld [vmem:[%s165 + $0xc8] sm:$0xff]
      %v197 = vld [vmem:[%s165 + $0xd0] sm:$0xff]
      %v198 = vld [vmem:[%s165 + $0xd8] sm:$0xff]
      %v199 = vld [vmem:[%s165 + $0xe0] sm:$0xff]
      %v200 = vld [vmem:[%s165 + $0xe8] sm:$0xff]
      %v201 = vld [vmem:[%s165 + $0xf0] sm:$0xff]
      %v202 = vld [vmem:[%s165 + $0xf8] sm:$0xff]
      %v203 = vld [vmem:[%s1] sm:$0x1]
      %v205 = vlaneseq
      %v206 = vshrl.u32 %v205, 7
      %v207 = vsub.s32 0, %v206
      %v208 = vrot.slane %v203, %v207
      %v210 = vmul.f32 %v171, %v208
      %v211 = vmul.f32 %v172, %v208
      %v212 = vmul.f32 %v173, %v208
      %v213 = vmul.f32 %v174, %v208
      %v214 = vmul.f32 %v175, %v208
      %v215 = vmul.f32 %v176, %v208
      %v216 = vmul.f32 %v177, %v208
      %v217 = vmul.f32 %v178, %v208
      %v218 = vmul.f32 %v179, %v208
      %v219 = vmul.f32 %v180, %v208
      %v220 = vmul.f32 %v181, %v208
      %v221 = vmul.f32 %v182, %v208
      %v222 = vmul.f32 %v183, %v208
      %v223 = vmul.f32 %v184, %v208
      %v224 = vmul.f32 %v185, %v208
      %v225 = vmul.f32 %v186, %v208
      %v226 = vmul.f32 %v187, %v208
      %v227 = vmul.f32 %v188, %v208
      %v228 = vmul.f32 %v189, %v208
      %v229 = vmul.f32 %v190, %v208
      %v230 = vmul.f32 %v191, %v208
      %v231 = vmul.f32 %v192, %v208
      %v232 = vmul.f32 %v193, %v208
      %v233 = vmul.f32 %v194, %v208
      %v234 = vmul.f32 %v195, %v208
      %v235 = vmul.f32 %v196, %v208
      %v236 = vmul.f32 %v197, %v208
      %v237 = vmul.f32 %v198, %v208
      %v238 = vmul.f32 %v199, %v208
      %v239 = vmul.f32 %v200, %v208
      %v240 = vmul.f32 %v201, %v208
      %v241 = vmul.f32 %v202, %v208
      %v242 = vld [vmem:[%s2] sm:$0x1]
      %v244 = vlaneseq
      %v245 = vshrl.u32 %v244, 7
      %v246 = vsub.s32 0, %v245
      %v247 = vrot.slane %v242, %v246
      %v249 = vadd.f32 %v210, %v247
      %v250 = vadd.f32 %v211, %v247
      %v251 = vadd.f32 %v212, %v247
      %v252 = vadd.f32 %v213, %v247
      %v253 = vadd.f32 %v214, %v247
      %v254 = vadd.f32 %v215, %v247
      %v255 = vadd.f32 %v216, %v247
      %v256 = vadd.f32 %v217, %v247
      %v257 = vadd.f32 %v218, %v247
      %v258 = vadd.f32 %v219, %v247
      %v259 = vadd.f32 %v220, %v247
      %v260 = vadd.f32 %v221, %v247
      %v261 = vadd.f32 %v222, %v247
      %v262 = vadd.f32 %v223, %v247
      %v263 = vadd.f32 %v224, %v247
      %v264 = vadd.f32 %v225, %v247
      %v265 = vadd.f32 %v226, %v247
      %v266 = vadd.f32 %v227, %v247
      %v267 = vadd.f32 %v228, %v247
      %v268 = vadd.f32 %v229, %v247
      %v269 = vadd.f32 %v230, %v247
      %v270 = vadd.f32 %v231, %v247
      %v271 = vadd.f32 %v232, %v247
      %v272 = vadd.f32 %v233, %v247
      %v273 = vadd.f32 %v234, %v247
      %v274 = vadd.f32 %v235, %v247
      %v275 = vadd.f32 %v236, %v247
      %v276 = vadd.f32 %v237, %v247
      %v277 = vadd.f32 %v238, %v247
      %v278 = vadd.f32 %v239, %v247
      %v279 = vadd.f32 %v240, %v247
      %v280 = vadd.f32 %v241, %v247
      %v281 = vmax.f32 %v249, 0.0
      %v282 = vmax.f32 %v250, 0.0
      %v283 = vmax.f32 %v251, 0.0
      %v284 = vmax.f32 %v252, 0.0
      %v285 = vmax.f32 %v253, 0.0
      %v286 = vmax.f32 %v254, 0.0
      %v287 = vmax.f32 %v255, 0.0
      %v288 = vmax.f32 %v256, 0.0
      %v289 = vmax.f32 %v257, 0.0
      %v290 = vmax.f32 %v258, 0.0
      %v291 = vmax.f32 %v259, 0.0
      %v292 = vmax.f32 %v260, 0.0
      %v293 = vmax.f32 %v261, 0.0
      %v294 = vmax.f32 %v262, 0.0
      %v295 = vmax.f32 %v263, 0.0
      %v296 = vmax.f32 %v264, 0.0
      %v297 = vmax.f32 %v265, 0.0
      %v298 = vmax.f32 %v266, 0.0
      %v299 = vmax.f32 %v267, 0.0
      %v300 = vmax.f32 %v268, 0.0
      %v301 = vmax.f32 %v269, 0.0
      %v302 = vmax.f32 %v270, 0.0
      %v303 = vmax.f32 %v271, 0.0
      %v304 = vmax.f32 %v272, 0.0
      %v305 = vmax.f32 %v273, 0.0
      %v306 = vmax.f32 %v274, 0.0
      %v307 = vmax.f32 %v275, 0.0
      %v308 = vmax.f32 %v276, 0.0
      %v309 = vmax.f32 %v277, 0.0
      %v310 = vmax.f32 %v278, 0.0
      %v311 = vmax.f32 %v279, 0.0
      %v312 = vmax.f32 %v280, 0.0
      %313 = vst [vmem:[%s170] sm:$0xff] %v281
      %314 = vst [vmem:[%s170 + $0x8] sm:$0xff] %v282
      %315 = vst [vmem:[%s170 + $0x10] sm:$0xff] %v283
      %316 = vst [vmem:[%s170 + $0x18] sm:$0xff] %v284
      %317 = vst [vmem:[%s170 + $0x20] sm:$0xff] %v285
      %318 = vst [vmem:[%s170 + $0x28] sm:$0xff] %v286
      %319 = vst [vmem:[%s170 + $0x30] sm:$0xff] %v287
      %320 = vst [vmem:[%s170 + $0x38] sm:$0xff] %v288
      %321 = vst [vmem:[%s170 + $0x40] sm:$0xff] %v289
      %322 = vst [vmem:[%s170 + $0x48] sm:$0xff] %v290
      %323 = vst [vmem:[%s170 + $0x50] sm:$0xff] %v291
      %324 = vst [vmem:[%s170 + $0x58] sm:$0xff] %v292
      %325 = vst [vmem:[%s170 + $0x60] sm:$0xff] %v293
      %326 = vst [vmem:[%s170 + $0x68] sm:$0xff] %v294
      %327 = vst [vmem:[%s170 + $0x70] sm:$0xff] %v295
      %328 = vst [vmem:[%s170 + $0x78] sm:$0xff] %v296
      %329 = vst [vmem:[%s170 + $0x80] sm:$0xff] %v297
      %330 = vst [vmem:[%s170 + $0x88] sm:$0xff] %v298
      %331 = vst [vmem:[%s170 + $0x90] sm:$0xff] %v299
      %332 = vst [vmem:[%s170 + $0x98] sm:$0xff] %v300
      %333 = vst [vmem:[%s170 + $0xa0] sm:$0xff] %v301
      %334 = vst [vmem:[%s170 + $0xa8] sm:$0xff] %v302
      %335 = vst [vmem:[%s170 + $0xb0] sm:$0xff] %v303
      %336 = vst [vmem:[%s170 + $0xb8] sm:$0xff] %v304
      %337 = vst [vmem:[%s170 + $0xc0] sm:$0xff] %v305
      %338 = vst [vmem:[%s170 + $0xc8] sm:$0xff] %v306
      %339 = vst [vmem:[%s170 + $0xd0] sm:$0xff] %v307
      %340 = vst [vmem:[%s170 + $0xd8] sm:$0xff] %v308
      %341 = vst [vmem:[%s170 + $0xe0] sm:$0xff] %v309
      %342 = vst [vmem:[%s170 + $0xe8] sm:$0xff] %v310
      %343 = vst [vmem:[%s170 + $0xf0] sm:$0xff] %v311
      %344 = vst [vmem:[%s170 + $0xf8] sm:$0xff] %v312
      %p345 = scmp.lt.s32.totalorder %s14, 1
      %s346 = scalar_select %p345, %s14, 1
      %s347 = smul.addr %s346, 32
      %s348 = smul.addr %s347, 8
      %s349 = scalar_lea.vmem %s3, %s348
      // Predicated region
      $region33: #{double_conv.5} parent=31 // pred_check
        %p350 = pneg %p100
      $region34: #{double_conv.5} parent=31 // pred_check_branch
        %352 = sbr.rel (%p350) target = $region36
      $region35: #{double_conv.5} parent=31 // pred_region
        _
      $region36: #{double_conv.5} parent=31 // pred_fallthru
        _
    $region32: #{double_conv.5} parent=5 // pred_fallthru
      _
    %p353 = scmp.le.s32.totalorder 2, %s9
    // Predicated region
    $region37: #{double_conv.5} parent=5 // pred_check
      %p354 = pneg %p353
    $region38: #{double_conv.5} parent=5 // pred_check_branch
      %356 = sbr.rel (%p354) target = $region40
    $region39: #{double_conv.5} parent=5 // pred_region
      %s357 = ssub.s32 %s9, 2
      // Predicated region
      $region41: #{double_conv.5} parent=39 // pred_check
        %p358 = pneg %p106
      $region42: #{double_conv.5} parent=39 // pred_check_branch
        %360 = sbr.rel (%p358) target = $region44
      $region43: #{double_conv.5} parent=39 // pred_region
        %p361 = scmp.lt.s32.totalorder %s15, 1
        %s362 = scalar_select %p361, %s15, 1
        %s363 = smul.addr %s362, 32
        %s364 = smul.addr %s363, 8
        %s365 = scalar_lea.vmem %s3, %s364
      $region44: #{double_conv.5} parent=39 // pred_fallthru
        _
    $region40: #{double_conv.5} parent=5 // pred_fallthru
      _
  $region6: #{double_conv.5} parent=0 // loop_footer
    %s13 = sadd.s32 1, %s9
  $region7: #{double_conv.5} parent=0 // loop_footer_branch
    %8 = sbr.rel target = $region3
  $region8: #{double_conv.5} parent=0 // loop_exit
    _

// kernel: double_conv.3
$region0: #{double_conv.3}
  #allocation0 [shape = 'u32[]', space=smem, size = 0x4, offset = 0x4, fixed_abs, tag = 'smem constant byte address 0x4 - core index']
  #allocation1 [shape = 'u32[144,128]{1,0:T(1,128)}', space=vmem, size = 0x12000, scoped, tag = 'internal scratch']
  #allocation2 [shape = 'bf16[18,18,4]{2,1,0:T(8,128)(2,1)}', space=vmem, size = 0x1b000, scoped, tag = 'scratch operand']
  #allocation3 [shape = 'bf16[16,16,36]{2,1,0:T(16,128)(2,1)}', space=vmem, size = 0x10000, scoped, tag = 'scratch operand']
  %s0 = inlined_call_operand.vmem [shape: bf16[2,16,16,4], index: 0, kind: input, shape index: {}]
  %s1 = inlined_call_operand.vmem [shape: bf16[36,128], index: 1, kind: input, shape index: {}]
  %s2 = inlined_call_operand.vmem [shape: f32[1,4], index: 2, kind: input, shape index: {}]
  %s3 = inlined_call_operand.vmem [shape: f32[1,4], index: 3, kind: input, shape index: {}]
  %s4 = inlined_call_operand.vmem [shape: bf16[2,16,16,128], index: 4, kind: output, shape index: {0}]
  %s5 = inlined_call_operand.vmem [shape: f32[2,2,128], index: 5, kind: output, shape index: {1}]
  %6 = xla_tuple %s4, %s5
  %s7 = sld [smem:[#allocation0]]
  $region57: #{double_conv.3} parent=0
    _
  %s9 = ssub.s32 1, %s7
  %s10 = scalar_select 0, %s9, %s7
  loop: start=0, step=1, limit=4
  $region2: #{double_conv.3} parent=0 // loop_pre_header
    _
  $region3: #{double_conv.3} parent=0 // loop_header
    %s12 = sphi 0, %s16
    %p13 = scmp.ge.s32.totalorder %s12, 4
    %s22 = sphi 0, %s24
    %s25 = sphi 0, %s22
    %s26 = sphi 0, %s25
    %s42 = sphi 0, %s26
    %s46 = sphi 0, %s46
    %s48 = sphi 0, %s46
    %s49 = sphi 0, %s48
    %s63 = sphi 0, %s49
    %s67 = sphi 0, %s67
    %s69 = sphi 0, %s67
    %s70 = sphi 0, %s69
    %s84 = sphi 0, %s70
    %s88 = sphi 0, %s88
    %s90 = sphi 0, %s88
    %s91 = sphi 0, %s90
    %s105 = sphi 0, %s91
    %s111 = sphi 0, %s113
    %s114 = sphi 0, %s111
    %s115 = sphi 0, %s114
    %s131 = sphi 0, %s115
    %s137 = sphi 0, %s139
    %s140 = sphi 0, %s137
    %s141 = sphi 0, %s140
    %s157 = sphi 0, %s141
  $region4: #{double_conv.3} parent=0 // loop_header_branch
    %15 = sbr.rel (%p13) target = $region8
  $region5: #{double_conv.3} parent=0 // loop_body
    %s17 = ssub.s32 %s12, 1
    %s18 = ssub.s32 %s12, 2
    %s19 = sadd.s32 %s12, 1
    %s20 = ssub.s32 %s12, %s19
    %p21 = scmp.eq.s32.totalorder %s20, 0
    %s23 = sadd.s32 %s22, 1
    %s24 = scalar_select %p21, %s22, %s23
    %p27 = pneg %p21
    %p28 = scmp.eq.s32.totalorder %s12, 1
    %p29 = por %p27, %p28
    %p30 = scmp.ne.s32.totalorder %s22, %s25
    %p31 = scmp.eq.s32.totalorder %s12, 0
    %p32 = por %p30, %p31
    %p33 = scmp.ne.s32.totalorder %s22, %s25
    %p34 = scmp.eq.s32.totalorder %s17, 1
    %p35 = por %p33, %p34
    %p36 = scmp.ne.s32.totalorder %s25, %s26
    %p37 = scmp.eq.s32.totalorder %s17, 0
    %p38 = por %p36, %p37
    %p39 = scmp.ne.s32.totalorder %s25, %s26
    %p40 = scmp.eq.s32.totalorder %s18, 1
    %p41 = por %p39, %p40
    %p43 = scmp.ne.s32.totalorder %s26, %s42
    %p44 = scmp.eq.s32.totalorder %s18, 0
    %p45 = por %p43, %p44
    %s47 = sadd.s32 %s46, 1
    %p50 = scmp.eq.s32.totalorder %s12, 1
    %p51 = scmp.ne.s32.totalorder %s46, %s48
    %p52 = scmp.eq.s32.totalorder %s12, 0
    %p53 = por %p51, %p52
    %p54 = scmp.ne.s32.totalorder %s46, %s48
    %p55 = scmp.eq.s32.totalorder %s17, 1
    %p56 = por %p54, %p55
    %p57 = scmp.ne.s32.totalorder %s48, %s49
    %p58 = scmp.eq.s32.totalorder %s17, 0
    %p59 = por %p57, %p58
    %p60 = scmp.ne.s32.totalorder %s48, %s49
    %p61 = scmp.eq.s32.totalorder %s18, 1
    %p62 = por %p60, %p61
    %p64 = scmp.ne.s32.totalorder %s49, %s63
    %p65 = scmp.eq.s32.totalorder %s18, 0
    %p66 = por %p64, %p65
    %s68 = sadd.s32 %s67, 1
    %p71 = scmp.eq.s32.totalorder %s12, 1
    %p72 = scmp.ne.s32.totalorder %s67, %s69
    %p73 = scmp.eq.s32.totalorder %s12, 0
    %p74 = por %p72, %p73
    %p75 = scmp.ne.s32.totalorder %s67, %s69
    %p76 = scmp.eq.s32.totalorder %s17, 1
    %p77 = por %p75, %p76
    %p78 = scmp.ne.s32.totalorder %s69, %s70
    %p79 = scmp.eq.s32.totalorder %s17, 0
    %p80 = por %p78, %p79
    %p81 = scmp.ne.s32.totalorder %s69, %s70
    %p82 = scmp.eq.s32.totalorder %s18, 1
    %p83 = por %p81, %p82
    %p85 = scmp.ne.s32.totalorder %s70, %s84
    %p86 = scmp.eq.s32.totalorder %s18, 0
    %p87 = por %p85, %p86
    %s89 = sadd.s32 %s88, 1
    %p92 = scmp.eq.s32.totalorder %s12, 1
    %p93 = scmp.ne.s32.totalorder %s88, %s90
    %p94 = scmp.eq.s32.totalorder %s12, 0
    %p95 = por %p93, %p94
    %p96 = scmp.ne.s32.totalorder %s88, %s90
    %p97 = scmp.eq.s32.totalorder %s17, 1
    %p98 = por %p96, %p97
    %p99 = scmp.ne.s32.totalorder %s90, %s91
    %p100 = scmp.eq.s32.totalorder %s17, 0
    %p101 = por %p99, %p100
    %p102 = scmp.ne.s32.totalorder %s90, %s91
    %p103 = scmp.eq.s32.totalorder %s18, 1
    %p104 = por %p102, %p103
    %p106 = scmp.ne.s32.totalorder %s91, %s105
    %p107 = scmp.eq.s32.totalorder %s18, 0
    %p108 = por %p106, %p107
    %s109 = ssub.s32 %s12, %s19
    %p110 = scmp.eq.s32.totalorder %s109, 0
    %s112 = sadd.s32 %s111, 1
    %s113 = scalar_select %p110, %s111, %s112
    %p116 = pneg %p110
    %p117 = scmp.eq.s32.totalorder %s12, 1
    %p118 = por %p116, %p117
    %p119 = scmp.ne.s32.totalorder %s111, %s114
    %p120 = scmp.eq.s32.totalorder %s12, 0
    %p121 = por %p119, %p120
    %p122 = scmp.ne.s32.totalorder %s111, %s114
    %p123 = scmp.eq.s32.totalorder %s17, 1
    %p124 = por %p122, %p123
    %p125 = scmp.ne.s32.totalorder %s114, %s115
    %p126 = scmp.eq.s32.totalorder %s17, 0
    %p127 = por %p125, %p126
    %p128 = scmp.ne.s32.totalorder %s114, %s115
    %p129 = scmp.eq.s32.totalorder %s18, 1
    %p130 = por %p128, %p129
    %p132 = scmp.ne.s32.totalorder %s115, %s131
    %p133 = scmp.eq.s32.totalorder %s18, 0
    %p134 = por %p132, %p133
    %s135 = ssub.s32 %s12, %s19
    %p136 = scmp.eq.s32.totalorder %s135, 0
    %s138 = sadd.s32 %s137, 1
    %s139 = scalar_select %p136, %s137, %s138
    %p142 = pneg %p136
    %p143 = scmp.eq.s32.totalorder %s12, 1
    %p144 = por %p142, %p143
    %p145 = scmp.ne.s32.totalorder %s137, %s140
    %p146 = scmp.eq.s32.totalorder %s12, 0
    %p147 = por %p145, %p146
    %p148 = scmp.ne.s32.totalorder %s137, %s140
    %p149 = scmp.eq.s32.totalorder %s17, 1
    %p150 = por %p148, %p149
    %p151 = scmp.ne.s32.totalorder %s140, %s141
    %p152 = scmp.eq.s32.totalorder %s17, 0
    %p153 = por %p151, %p152
    %p154 = scmp.ne.s32.totalorder %s140, %s141
    %p155 = scmp.eq.s32.totalorder %s18, 1
    %p156 = por %p154, %p155
    %p158 = scmp.ne.s32.totalorder %s141, %s157
    %p159 = scmp.eq.s32.totalorder %s18, 0
    %p160 = por %p158, %p159
    %p161 = scmp.le.s32.totalorder 1, %s12
    %p162 = scmp.lt.s32.totalorder %s12, 3
    %p163 = pnand %p161, %p162
    %p164 = pneg %p163
    // Predicated region
    $region9: #{double_conv.3} parent=5 // pred_check
      _
    $region10: #{double_conv.3} parent=5 // pred_check_branch
      %166 = sbr.rel (%p163) target = $region12
    $region11: #{double_conv.3} parent=5 // pred_region
      %s167 = ssub.s32 %s12, 1
      // Predicated region
      $region13: #{double_conv.3} parent=11 // pred_check
        %p168 = pneg %p59
      $region14: #{double_conv.3} parent=11 // pred_check_branch
        %170 = sbr.rel (%p168) target = $region16
      $region15: #{double_conv.3} parent=11 // pred_region
        _
      $region16: #{double_conv.3} parent=11 // pred_fallthru
        _
      // Predicated region
      $region17: #{double_conv.3} parent=11 // pred_check
        %p171 = pneg %p80
      $region18: #{double_conv.3} parent=11 // pred_check_branch
        %173 = sbr.rel (%p171) target = $region20
      $region19: #{double_conv.3} parent=11 // pred_region
        _
      $region20: #{double_conv.3} parent=11 // pred_fallthru
        _
      // Predicated region
      $region21: #{double_conv.3} parent=11 // pred_check
        %p174 = pneg %p101
      $region22: #{double_conv.3} parent=11 // pred_check_branch
        %176 = sbr.rel (%p174) target = $region24
      $region23: #{double_conv.3} parent=11 // pred_region
        _
      $region24: #{double_conv.3} parent=11 // pred_fallthru
        _
    $region12: #{double_conv.3} parent=5 // pred_fallthru
      _
    %p177 = scmp.lt.s32.totalorder %s12, 2
    // Predicated region
    $region25: #{double_conv.3} parent=5 // pred_check
      %p178 = pneg %p177
    $region26: #{double_conv.3} parent=5 // pred_check_branch
      %180 = sbr.rel (%p178) target = $region28
    $region27: #{double_conv.3} parent=5 // pred_region
      // Predicated region
      $region29: #{double_conv.3} parent=27 // pred_check
        %p181 = pneg %p32
      $region30: #{double_conv.3} parent=27 // pred_check_branch
        %183 = sbr.rel (%p181) target = $region32
      $region31: #{double_conv.3} parent=27 // pred_region
        %p184 = scmp.lt.s32.totalorder %s12, 1
        %s185 = scalar_select %p184, %s12, 1
        %s186 = smul.addr %s185, 32
        %s187 = smul.addr %s186, 4
        %s188 = scalar_lea.vmem %s0, %s187
      $region32: #{double_conv.3} parent=27 // pred_fallthru
        _
    $region28: #{double_conv.3} parent=5 // pred_fallthru
      _
    %p189 = scmp.le.s32.totalorder 1, %s12
    %p190 = scmp.lt.s32.totalorder %s12, 3
    %p191 = pnand %p189, %p190
    %p192 = pneg %p191
    // Predicated region
    $region33: #{double_conv.3} parent=5 // pred_check
      _
    $region34: #{double_conv.3} parent=5 // pred_check_branch
      %194 = sbr.rel (%p191) target = $region36
    $region35: #{double_conv.3} parent=5 // pred_region
      %s195 = ssub.s32 %s12, 1
      %p196 = scmp.lt.s32.totalorder %s17, 1
      %s197 = scalar_select %p196, %s17, 1
      %s198 = smul.addr %s197, 32
      %s199 = smul.addr %s198, 4
      %s200 = scalar_lea.vmem %s0, %s199
      %p201 = pneg %p38
      %p202 = pneg %p35
      %p203 = pneg %p59
      %p204 = pneg %p56
      %p205 = pneg %p80
      %p206 = pneg %p77
      %p207 = pneg %p101
      %p208 = pneg %p98
      %p209 = pneg %p127
      %p210 = pneg %p124
      %p211 = scmp.lt.s32.totalorder %s17, 1
      %s212 = scalar_select %p211, %s17, 1
      %s213 = smul.addr %s212, 32
      %s214 = smul.addr %s213, 4
      %s215 = scalar_lea.vmem %s4, %s214
      %p216 = pneg %p153
      %p217 = pneg %p150
      %p218 = scmp.lt.s32.totalorder %s17, 1
      %s219 = scalar_select %p218, %s17, 1
      %s220 = smul.addr %s219, 2
      %s221 = scalar_lea.vmem %s5, %s220
      %p222 = scmp.lt.s32.totalorder %s17, 1
      %s223 = scalar_select %p222, %s17, 1
      %s224 = smul.addr %s223, 32
      %s225 = smul.addr %s224, 4
      %s226 = scalar_lea.vmem %s0, %s225
      %p227 = scmp.lt.s32.totalorder %s17, 1
      %s228 = scalar_select %p227, %s17, 1
      %s229 = smul.addr %s228, 32
      %s230 = smul.addr %s229, 4
      %s231 = scalar_lea.vmem %s4, %s230
      %p232 = scmp.lt.s32.totalorder %s17, 1
      %s233 = scalar_select %p232, %s17, 1
      %s234 = smul.addr %s233, 2
      %s235 = scalar_lea.vmem %s5, %s234
      %v237 = vld [vmem:[%s226] sm:$0xf]
      %v238 = vld [vmem:[%s226 + $0x4] sm:$0xf]
      %v239 = vld [vmem:[%s226 + $0x8] sm:$0xf]
      %v240 = vld [vmem:[%s226 + $0xc] sm:$0xf]
      %v241 = vld [vmem:[%s226 + $0x10] sm:$0xf]
      %v242 = vld [vmem:[%s226 + $0x14] sm:$0xf]
      %v243 = vld [vmem:[%s226 + $0x18] sm:$0xf]
      %v244 = vld [vmem:[%s226 + $0x1c] sm:$0xf]
      %v245 = vld [vmem:[%s226 + $0x20] sm:$0xf]
      %v246 = vld [vmem:[%s226 + $0x24] sm:$0xf]
      %v247 = vld [vmem:[%s226 + $0x28] sm:$0xf]
      %v248 = vld [vmem:[%s226 + $0x2c] sm:$0xf]
      %v249 = vld [vmem:[%s226 + $0x30] sm:$0xf]
      %v250 = vld [vmem:[%s226 + $0x34] sm:$0xf]
      %v251 = vld [vmem:[%s226 + $0x38] sm:$0xf]
      %v252 = vld [vmem:[%s226 + $0x3c] sm:$0xf]
      %v253 = vld [vmem:[%s226 + $0x40] sm:$0xf]
      %v254 = vld [vmem:[%s226 + $0x44] sm:$0xf]
      %v255 = vld [vmem:[%s226 + $0x48] sm:$0xf]
      %v256 = vld [vmem:[%s226 + $0x4c] sm:$0xf]
      %v257 = vld [vmem:[%s226 + $0x50] sm:$0xf]
      %v258 = vld [vmem:[%s226 + $0x54] sm:$0xf]
      %v259 = vld [vmem:[%s226 + $0x58] sm:$0xf]
      %v260 = vld [vmem:[%s226 + $0x5c] sm:$0xf]
      %v261 = vld [vmem:[%s226 + $0x60] sm:$0xf]
      %v262 = vld [vmem:[%s226 + $0x64] sm:$0xf]
      %v263 = vld [vmem:[%s226 + $0x68] sm:$0xf]
      %v264 = vld [vmem:[%s226 + $0x6c] sm:$0xf]
      %v265 = vld [vmem:[%s226 + $0x70] sm:$0xf]
      %v266 = vld [vmem:[%s226 + $0x74] sm:$0xf]
      %v267 = vld [vmem:[%s226 + $0x78] sm:$0xf]
      %v268 = vld [vmem:[%s226 + $0x7c] sm:$0xf]
      %vm269 = vcmask 27648
      %270 = vst.msk [vmem:[#allocation2] sm:$0xf] %vm269, 0
      %271 = vst.msk [vmem:[#allocation2 + $0x4] sm:$0xf] %vm269, 0
      %vm272 = vcmask 24576
      %273 = vst.msk [vmem:[#allocation2 + $0x8] sm:$0x1] %vm272, 0
      %s274 = scalar_lea.vmem [#allocation2], 204
      %275 = vst.msk [vmem:[%s274] sm:$0xf] %vm269, 0
      %276 = vst.msk [vmem:[%s274 + $0x4] sm:$0xf] %vm269, 0
      %277 = vst.msk [vmem:[%s274 + $0x8] sm:$0x1] %vm272, 0
      %vm278 = vcmask 24576
      %vm279 = vsmask.f32 256
      %vm280 = vmand %vm278, %vm279
      %v281 = vld [vmem:[#allocation2] sm:$0x1]
      %v282 = vsel %vm280, 0, %v281
      %283 = vst [vmem:[#allocation2] sm:$0x1] %v282
      %v284 = vld [vmem:[#allocation2 + $0xc] sm:$0x1]
      %v285 = vsel %vm280, 0, %v284
      %286 = vst [vmem:[#allocation2 + $0xc] sm:$0x1] %v285
      %v287 = vld [vmem:[#allocation2 + $0x18] sm:$0x1]
      %v288 = vsel %vm280, 0, %v287
      %289 = vst [vmem:[#allocation2 + $0x18] sm:$0x1] %v288
      %v290 = vld [vmem:[#allocation2 + $0x24] sm:$0x1]
      %v291 = vsel %vm280, 0, %v290
      %292 = vst [vmem:[#allocation2 + $0x24] sm:$0x1] %v291
      %v293 = vld [vmem:[#allocation2 + $0x30] sm:$0x1]
      %v294 = vsel %vm280, 0, %v293
      %295 = vst [vmem:[#allocation2 + $0x30] sm:$0x1] %v294
      %v296 = vld [vmem:[#allocation2 + $0x3c] sm:$0x1]
      %v297 = vsel %vm280, 0, %v296
      %298 = vst [vmem:[#allocation2 + $0x3c] sm:$0x1] %v297
      %v299 = vld [vmem:[#allocation2 + $0x48] sm:$0x1]
      %v300 = vsel %vm280, 0, %v299
      %301 = vst [vmem:[#allocation2 + $0x48] sm:$0x1] %v300
      %v302 = vld [vmem:[#allocation2 + $0x54] sm:$0x1]
      %v303 = vsel %vm280, 0, %v302
      %304 = vst [vmem:[#allocation2 + $0x54] sm:$0x1] %v303
      %v305 = vld [vmem:[#allocation2 + $0x60] sm:$0x1]
      %v306 = vsel %vm280, 0, %v305
      %307 = vst [vmem:[#allocation2 + $0x60] sm:$0x1] %v306
      %v308 = vld [vmem:[#allocation2 + $0x6c] sm:$0x1]
      %v309 = vsel %vm280, 0, %v308
      %310 = vst [vmem:[#allocation2 + $0x6c] sm:$0x1] %v309
      %v311 = vld [vmem:[#allocation2 + $0x78] sm:$0x1]
      %v312 = vsel %vm280, 0, %v311
      %313 = vst [vmem:[#allocation2 + $0x78] sm:$0x1] %v312
      %v314 = vld [vmem:[#allocation2 + $0x84] sm:$0x1]
      %v315 = vsel %vm280, 0, %v314
      %316 = vst [vmem:[#allocation2 + $0x84] sm:$0x1] %v315
      %v317 = vld [vmem:[#allocation2 + $0x90] sm:$0x1]
      %v318 = vsel %vm280, 0, %v317
      %319 = vst [vmem:[#allocation2 + $0x90] sm:$0x1] %v318
      %v320 = vld [vmem:[#allocation2 + $0x9c] sm:$0x1]
      %v321 = vsel %vm280, 0, %v320
      %322 = vst [vmem:[#allocation2 + $0x9c] sm:$0x1] %v321
      %v323 = vld [vmem:[#allocation2 + $0xa8] sm:$0x1]
      %v324 = vsel %vm280, 0, %v323
      %325 = vst [vmem:[#allocation2 + $0xa8] sm:$0x1] %v324
      %v326 = vld [vmem:[#allocation2 + $0xb4] sm:$0x1]
      %v327 = vsel %vm280, 0, %v326
      %328 = vst [vmem:[#allocation2 + $0xb4] sm:$0x1] %v327
      %v329 = vld [vmem:[#allocation2 + $0xc0] sm:$0x1]
      %v330 = vsel %vm280, 0, %v329
      %331 = vst [vmem:[#allocation2 + $0xc0] sm:$0x1] %v330
      %v332 = vld [vmem:[#allocation2 + $0xcc] sm:$0x1]
      %v333 = vsel %vm280, 0, %v332
      %334 = vst [vmem:[#allocation2 + $0xcc] sm:$0x1] %v333
      %vm335 = vsmask.f32 7938
      %vm336 = vmand %vm278, %vm335
      %v337 = vld [vmem:[#allocation2 + $0x8] sm:$0x1]
      %v338 = vsel %vm336, 0, %v337
      %339 = vst [vmem:[#allocation2 + $0x8] sm:$0x1] %v338
      %v340 = vld [vmem:[#allocation2 + $0x14] sm:$0x1]
      %v341 = vsel %vm336, 0, %v340
      %342 = vst [vmem:[#allocation2 + $0x14] sm:$0x1] %v341
      %v343 = vld [vmem:[#allocation2 + $0x20] sm:$0x1]
      %v344 = vsel %vm336, 0, %v343
      %345 = vst [vmem:[#allocation2 + $0x20] sm:$0x1] %v344
      %v346 = vld [vmem:[#allocation2 + $0x2c] sm:$0x1]
      %v347 = vsel %vm336, 0, %v346
      %348 = vst [vmem:[#allocation2 + $0x2c] sm:$0x1] %v347
      %v349 = vld [vmem:[#allocation2 + $0x38] sm:$0x1]
      %v350 = vsel %vm336, 0, %v349
      %351 = vst [vmem:[#allocation2 + $0x38] sm:$0x1] %v350
      %v352 = vld [vmem:[#allocation2 + $0x44] sm:$0x1]
      %v353 = vsel %vm336, 0, %v352
      %354 = vst [vmem:[#allocation2 + $0x44] sm:$0x1] %v353
      %v355 = vld [vmem:[#allocation2 + $0x50] sm:$0x1]
      %v356 = vsel %vm336, 0, %v355
      %357 = vst [vmem:[#allocation2 + $0x50] sm:$0x1] %v356
      %v358 = vld [vmem:[#allocation2 + $0x5c] sm:$0x1]
      %v359 = vsel %vm336, 0, %v358
      %360 = vst [vmem:[#allocation2 + $0x5c] sm:$0x1] %v359
      %v361 = vld [vmem:[#allocation2 + $0x68] sm:$0x1]
      %v362 = vsel %vm336, 0, %v361
      %363 = vst [vmem:[#allocation2 + $0x68] sm:$0x1] %v362
      %v364 = vld [vmem:[#allocation2 + $0x74] sm:$0x1]
      %v365 = vsel %vm336, 0, %v364
      %366 = vst [vmem:[#allocation2 + $0x74] sm:$0x1] %v365
      %v367 = vld [vmem:[#allocation2 + $0x80] sm:$0x1]
      %v368 = vsel %vm336, 0, %v367
      %369 = vst [vmem:[#allocation2 + $0x80] sm:$0x1] %v368
      %v370 = vld [vmem:[#allocation2 + $0x8c] sm:$0x1]
      %v371 = vsel %vm336, 0, %v370
      %372 = vst [vmem:[#allocation2 + $0x8c] sm:$0x1] %v371
      %v373 = vld [vmem:[#allocation2 + $0x98] sm:$0x1]
      %v374 = vsel %vm336, 0, %v373
      %375 = vst [vmem:[#allocation2 + $0x98] sm:$0x1] %v374
      %v376 = vld [vmem:[#allocation2 + $0xa4] sm:$0x1]
      %v377 = vsel %vm336, 0, %v376
      %378 = vst [vmem:[#allocation2 + $0xa4] sm:$0x1] %v377
      %v379 = vld [vmem:[#allocation2 + $0xb0] sm:$0x1]
      %v380 = vsel %vm336, 0, %v379
      %381 = vst [vmem:[#allocation2 + $0xb0] sm:$0x1] %v380
      %v382 = vld [vmem:[#allocation2 + $0xbc] sm:$0x1]
      %v383 = vsel %vm336, 0, %v382
      %384 = vst [vmem:[#allocation2 + $0xbc] sm:$0x1] %v383
      %v385 = vld [vmem:[#allocation2 + $0xc8] sm:$0x1]
      %v386 = vsel %vm336, 0, %v385
      %387 = vst [vmem:[#allocation2 + $0xc8] sm:$0x1] %v386
      %v388 = vld [vmem:[#allocation2 + $0xd4] sm:$0x1]
      %v389 = vsel %vm336, 0, %v388
      %390 = vst [vmem:[#allocation2 + $0xd4] sm:$0x1] %v389
      %vm391 = vsmask.f32 4368
      %vm392 = vmor %vm279, %vm391
      %v394 = vshrl.u32 %v237, 16
      %v396 = vrot.slane %v394, 7
      %v397 = vshll.u32 %v237, 16
      %v399 = vor.u32 %v396, %v397
      %v400 = vrot.slane %v396, 4
      %v402 = vshrl.u32 %v238, 16
      %v404 = vrot.slane %v402, 7
      %v405 = vshll.u32 %v238, 16
      %v407 = vor.u32 %v404, %v405
      %v408 = vsel %vm392, %v400, %v407
      %v409 = vrot.slane %v404, 4
      %v411 = vshrl.u32 %v239, 16
      %v413 = vrot.slane %v411, 7
      %v414 = vshll.u32 %v239, 16
      %v416 = vor.u32 %v413, %v414
      %v417 = vrot.slane %v413, 4
      %v419 = vshrl.u32 %v240, 16
      %v421 = vrot.slane %v419, 7
      %v422 = vshll.u32 %v240, 16
      %v424 = vor.u32 %v421, %v422
      %v425 = vsel %vm392, %v417, %v424
      %v426 = vrot.slane %v421, 4
      %v428 = vshrl.u32 %v241, 16
      %v430 = vrot.slane %v428, 7
      %v431 = vshll.u32 %v241, 16
      %v433 = vor.u32 %v430, %v431
      %v434 = vrot.slane %v430, 4
      %v436 = vshrl.u32 %v242, 16
      %v438 = vrot.slane %v436, 7
      %v439 = vshll.u32 %v242, 16
      %v441 = vor.u32 %v438, %v439
      %v442 = vsel %vm392, %v434, %v441
      %v443 = vrot.slane %v438, 4
      %v445 = vshrl.u32 %v243, 16
      %v447 = vrot.slane %v445, 7
      %v448 = vshll.u32 %v243, 16
      %v450 = vor.u32 %v447, %v448
      %v451 = vrot.slane %v447, 4
      %v453 = vshrl.u32 %v244, 16
      %v455 = vrot.slane %v453, 7
      %v456 = vshll.u32 %v244, 16
      %v458 = vor.u32 %v455, %v456
      %v459 = vsel %vm392, %v451, %v458
      %v460 = vrot.slane %v455, 4
      %v462 = vshrl.u32 %v245, 16
      %v464 = vrot.slane %v462, 7
      %v465 = vshll.u32 %v245, 16
      %v467 = vor.u32 %v464, %v465
      %v468 = vrot.slane %v464, 4
      %v470 = vshrl.u32 %v246, 16
      %v472 = vrot.slane %v470, 7
      %v473 = vshll.u32 %v246, 16
      %v475 = vor.u32 %v472, %v473
      %v476 = vsel %vm392, %v468, %v475
      %v477 = vrot.slane %v472, 4
      %v479 = vshrl.u32 %v247, 16
      %v481 = vrot.slane %v479, 7
      %v482 = vshll.u32 %v247, 16
      %v484 = vor.u32 %v481, %v482
      %v485 = vrot.slane %v481, 4
      %v487 = vshrl.u32 %v248, 16
      %v489 = vrot.slane %v487, 7
      %v490 = vshll.u32 %v248, 16
      %v492 = vor.u32 %v489, %v490
      %v493 = vsel %vm392, %v485, %v492
      %v494 = vrot.slane %v489, 4
      %v496 = vshrl.u32 %v249, 16
      %v498 = vrot.slane %v496, 7
      %v499 = vshll.u32 %v249, 16
      %v501 = vor.u32 %v498, %v499
      %v502 = vrot.slane %v498, 4
      %v504 = vshrl.u32 %v250, 16
      %v506 = vrot.slane %v504, 7
      %v507 = vshll.u32 %v250, 16
      %v509 = vor.u32 %v506, %v507
      %v510 = vsel %vm392, %v502, %v509
      %v511 = vrot.slane %v506, 4
      %v513 = vshrl.u32 %v251, 16
      %v515 = vrot.slane %v513, 7
      %v516 = vshll.u32 %v251, 16
      %v518 = vor.u32 %v515, %v516
      %v519 = vrot.slane %v515, 4
      %v521 = vshrl.u32 %v252, 16
      %v523 = vrot.slane %v521, 7
      %v524 = vshll.u32 %v252, 16
      %v526 = vor.u32 %v523, %v524
      %v527 = vsel %vm392, %v519, %v526
      %v528 = vrot.slane %v523, 4
      %v530 = vshrl.u32 %v253, 16
      %v532 = vrot.slane %v530, 7
      %v533 = vshll.u32 %v253, 16
      %v535 = vor.u32 %v532, %v533
      %v536 = vrot.slane %v532, 4
      %v538 = vshrl.u32 %v254, 16
      %v540 = vrot.slane %v538, 7
      %v541 = vshll.u32 %v254, 16
      %v543 = vor.u32 %v540, %v541
      %v544 = vsel %vm392, %v536, %v543
      %v545 = vrot.slane %v540, 4
      %v547 = vshrl.u32 %v255, 16
      %v549 = vrot.slane %v547, 7
      %v550 = vshll.u32 %v255, 16
      %v552 = vor.u32 %v549, %v550
      %v553 = vrot.slane %v549, 4
      %v555 = vshrl.u32 %v256, 16
      %v557 = vrot.slane %v555, 7
      %v558 = vshll.u32 %v256, 16
      %v560 = vor.u32 %v557, %v558
      %v561 = vsel %vm392, %v553, %v560
      %v562 = vrot.slane %v557, 4
      %v564 = vshrl.u32 %v257, 16
      %v566 = vrot.slane %v564, 7
      %v567 = vshll.u32 %v257, 16
      %v569 = vor.u32 %v566, %v567
      %v570 = vrot.slane %v566, 4
      %v572 = vshrl.u32 %v258, 16
      %v574 = vrot.slane %v572, 7
      %v575 = vshll.u32 %v258, 16
      %v577 = vor.u32 %v574, %v575
      %v578 = vsel %vm392, %v570, %v577
      %v579 = vrot.slane %v574, 4
      %v581 = vshrl.u32 %v259, 16
      %v583 = vrot.slane %v581, 7
      %v584 = vshll.u32 %v259, 16
      %v586 = vor.u32 %v583, %v584
      %v587 = vrot.slane %v583, 4
      %v589 = vshrl.u32 %v260, 16
      %v591 = vrot.slane %v589, 7
      %v592 = vshll.u32 %v260, 16
      %v594 = vor.u32 %v591, %v592
      %v595 = vsel %vm392, %v587, %v594
      %v596 = vrot.slane %v591, 4
      %v598 = vshrl.u32 %v261, 16
      %v600 = vrot.slane %v598, 7
      %v601 = vshll.u32 %v261, 16
      %v603 = vor.u32 %v600, %v601
      %v604 = vrot.slane %v600, 4
      %v606 = vshrl.u32 %v262, 16
      %v608 = vrot.slane %v606, 7
      %v609 = vshll.u32 %v262, 16
      %v611 = vor.u32 %v608, %v609
      %v612 = vsel %vm392, %v604, %v611
      %v613 = vrot.slane %v608, 4
      %v615 = vshrl.u32 %v263, 16
      %v617 = vrot.slane %v615, 7
      %v618 = vshll.u32 %v263, 16
      %v620 = vor.u32 %v617, %v618
      %v621 = vrot.slane %v617, 4
      %v623 = vshrl.u32 %v264, 16
      %v625 = vrot.slane %v623, 7
      %v626 = vshll.u32 %v264, 16
      %v628 = vor.u32 %v625, %v626
      %v629 = vsel %vm392, %v621, %v628
      %v630 = vrot.slane %v625, 4
      %v632 = vshrl.u32 %v265, 16
      %v634 = vrot.slane %v632, 7
      %v635 = vshll.u32 %v265, 16
      %v637 = vor.u32 %v634, %v635
      %v638 = vrot.slane %v634, 4
      %v640 = vshrl.u32 %v266, 16
      %v642 = vrot.slane %v640, 7
      %v643 = vshll.u32 %v266, 16
      %v645 = vor.u32 %v642, %v643
      %v646 = vsel %vm392, %v638, %v645
      %v647 = vrot.slane %v642, 4
      %v649 = vshrl.u32 %v267, 16
      %v651 = vrot.slane %v649, 7
      %v652 = vshll.u32 %v267, 16
      %v654 = vor.u32 %v651, %v652
      %v655 = vrot.slane %v651, 4
      %v657 = vshrl.u32 %v268, 16
      %v659 = vrot.slane %v657, 7
      %v660 = vshll.u32 %v268, 16
      %v662 = vor.u32 %v659, %v660
      %v663 = vsel %vm392, %v655, %v662
      %v664 = vrot.slane %v659, 4
      %s713 = scalar_lea.vmem [#allocation2], 12
      %vm714 = vcmask 27648
      %vm715 = vmand %vm714, %vm335
      %v716 = vld [vmem:[%s713] sm:$0xf]
      %v717 = vsel %vm715, %v399, %v716
      %718 = vst [vmem:[%s713] sm:$0xf] %v717
      %719 = vst.msk [vmem:[%s713 + $0x4] sm:$0xf] %vm269, %v408
      %v720 = vld [vmem:[%s713 + $0x8] sm:$0x1]
      %v721 = vsel %vm280, %v409, %v720
      %722 = vst [vmem:[%s713 + $0x8] sm:$0x1] %v721
      %v723 = vld [vmem:[%s713 + $0xc] sm:$0xf]
      %v724 = vsel %vm715, %v416, %v723
      %725 = vst [vmem:[%s713 + $0xc] sm:$0xf] %v724
      %726 = vst.msk [vmem:[%s713 + $0x10] sm:$0xf] %vm269, %v425
      %v727 = vld [vmem:[%s713 + $0x14] sm:$0x1]
      %v728 = vsel %vm280, %v426, %v727
      %729 = vst [vmem:[%s713 + $0x14] sm:$0x1] %v728
      %v730 = vld [vmem:[%s713 + $0x18] sm:$0xf]
      %v731 = vsel %vm715, %v433, %v730
      %732 = vst [vmem:[%s713 + $0x18] sm:$0xf] %v731
      %733 = vst.msk [vmem:[%s713 + $0x1c] sm:$0xf] %vm269, %v442
      %v734 = vld [vmem:[%s713 + $0x20] sm:$0x1]
      %v735 = vsel %vm280, %v443, %v734
      %736 = vst [vmem:[%s713 + $0x20] sm:$0x1] %v735
      %v737 = vld [vmem:[%s713 + $0x24] sm:$0xf]
      %v738 = vsel %vm715, %v450, %v737
      %739 = vst [vmem:[%s713 + $0x24] sm:$0xf] %v738
      %740 = vst.msk [vmem:[%s713 + $0x28] sm:$0xf] %vm269, %v459
      %v741 = vld [vmem:[%s713 + $0x2c] sm:$0x1]
      %v742 = vsel %vm280, %v460, %v741
      %743 = vst [vmem:[%s713 + $0x2c] sm:$0x1] %v742
      %v744 = vld [vmem:[%s713 + $0x30] sm:$0xf]
      %v745 = vsel %vm715, %v467, %v744
      %746 = vst [vmem:[%s713 + $0x30] sm:$0xf] %v745
      %747 = vst.msk [vmem:[%s713 + $0x34] sm:$0xf] %vm269, %v476
      %v748 = vld [vmem:[%s713 + $0x38] sm:$0x1]
      %v749 = vsel %vm280, %v477, %v748
      %750 = vst [vmem:[%s713 + $0x38] sm:$0x1] %v749
      %v751 = vld [vmem:[%s713 + $0x3c] sm:$0xf]
      %v752 = vsel %vm715, %v484, %v751
      %753 = vst [vmem:[%s713 + $0x3c] sm:$0xf] %v752
      %754 = vst.msk [vmem:[%s713 + $0x40] sm:$0xf] %vm269, %v493
      %v755 = vld [vmem:[%s713 + $0x44] sm:$0x1]
      %v756 = vsel %vm280, %v494, %v755
      %757 = vst [vmem:[%s713 + $0x44] sm:$0x1] %v756
      %v758 = vld [vmem:[%s713 + $0x48] sm:$0xf]
      %v759 = vsel %vm715, %v501, %v758
      %760 = vst [vmem:[%s713 + $0x48] sm:$0xf] %v759
      %761 = vst.msk [vmem:[%s713 + $0x4c] sm:$0xf] %vm269, %v510
      %v762 = vld [vmem:[%s713 + $0x50] sm:$0x1]
      %v763 = vsel %vm280, %v511, %v762
      %764 = vst [vmem:[%s713 + $0x50] sm:$0x1] %v763
      %v765 = vld [vmem:[%s713 + $0x54] sm:$0xf]
      %v766 = vsel %vm715, %v518, %v765
      %767 = vst [vmem:[%s713 + $0x54] sm:$0xf] %v766
      %768 = vst.msk [vmem:[%s713 + $0x58] sm:$0xf] %vm269, %v527
      %v769 = vld [vmem:[%s713 + $0x5c] sm:$0x1]
      %v770 = vsel %vm280, %v528, %v769
      %771 = vst [vmem:[%s713 + $0x5c] sm:$0x1] %v770
      %v772 = vld [vmem:[%s713 + $0x60] sm:$0xf]
      %v773 = vsel %vm715, %v535, %v772
      %774 = vst [vmem:[%s713 + $0x60] sm:$0xf] %v773
      %775 = vst.msk [vmem:[%s713 + $0x64] sm:$0xf] %vm269, %v544
      %v776 = vld [vmem:[%s713 + $0x68] sm:$0x1]
      %v777 = vsel %vm280, %v545, %v776
      %778 = vst [vmem:[%s713 + $0x68] sm:$0x1] %v777
      %v779 = vld [vmem:[%s713 + $0x6c] sm:$0xf]
      %v780 = vsel %vm715, %v552, %v779
      %781 = vst [vmem:[%s713 + $0x6c] sm:$0xf] %v780
      %782 = vst.msk [vmem:[%s713 + $0x70] sm:$0xf] %vm269, %v561
      %v783 = vld [vmem:[%s713 + $0x74] sm:$0x1]
      %v784 = vsel %vm280, %v562, %v783
      %785 = vst [vmem:[%s713 + $0x74] sm:$0x1] %v784
      %v786 = vld [vmem:[%s713 + $0x78] sm:$0xf]
      %v787 = vsel %vm715, %v569, %v786
      %788 = vst [vmem:[%s713 + $0x78] sm:$0xf] %v787
      %789 = vst.msk [vmem:[%s713 + $0x7c] sm:$0xf] %vm269, %v578
      %v790 = vld [vmem:[%s713 + $0x80] sm:$0x1]
      %v791 = vsel %vm280, %v579, %v790
      %792 = vst [vmem:[%s713 + $0x80] sm:$0x1] %v791
      %v793 = vld [vmem:[%s713 + $0x84] sm:$0xf]
      %v794 = vsel %vm715, %v586, %v793
      %795 = vst [vmem:[%s713 + $0x84] sm:$0xf] %v794
      %796 = vst.msk [vmem:[%s713 + $0x88] sm:$0xf] %vm269, %v595
      %v797 = vld [vmem:[%s713 + $0x8c] sm:$0x1]
      %v798 = vsel %vm280, %v596, %v797
      %799 = vst [vmem:[%s713 + $0x8c] sm:$0x1] %v798
      %v800 = vld [vmem:[%s713 + $0x90] sm:$0xf]
      %v801 = vsel %vm715, %v603, %v800
      %802 = vst [vmem:[%s713 + $0x90] sm:$0xf] %v801
      %803 = vst.msk [vmem:[%s713 + $0x94] sm:$0xf] %vm269, %v612
      %v804 = vld [vmem:[%s713 + $0x98] sm:$0x1]
      %v805 = vsel %vm280, %v613, %v804
      %806 = vst [vmem:[%s713 + $0x98] sm:$0x1] %v805
      %v807 = vld [vmem:[%s713 + $0x9c] sm:$0xf]
      %v808 = vsel %vm715, %v620, %v807
      %809 = vst [vmem:[%s713 + $0x9c] sm:$0xf] %v808
      %810 = vst.msk [vmem:[%s713 + $0xa0] sm:$0xf] %vm269, %v629
      %v811 = vld [vmem:[%s713 + $0xa4] sm:$0x1]
      %v812 = vsel %vm280, %v630, %v811
      %813 = vst [vmem:[%s713 + $0xa4] sm:$0x1] %v812
      %v814 = vld [vmem:[%s713 + $0xa8] sm:$0xf]
      %v815 = vsel %vm715, %v637, %v814
      %816 = vst [vmem:[%s713 + $0xa8] sm:$0xf] %v815
      %817 = vst.msk [vmem:[%s713 + $0xac] sm:$0xf] %vm269, %v646
      %v818 = vld [vmem:[%s713 + $0xb0] sm:$0x1]
      %v819 = vsel %vm280, %v647, %v818
      %820 = vst [vmem:[%s713 + $0xb0] sm:$0x1] %v819
      %v821 = vld [vmem:[%s713 + $0xb4] sm:$0xf]
      %v822 = vsel %vm715, %v654, %v821
      %823 = vst [vmem:[%s713 + $0xb4] sm:$0xf] %v822
      %824 = vst.msk [vmem:[%s713 + $0xb8] sm:$0xf] %vm269, %v663
      %v825 = vld [vmem:[%s713 + $0xbc] sm:$0x1]
      %v826 = vsel %vm280, %v664, %v825
      %827 = vst [vmem:[%s713 + $0xbc] sm:$0x1] %v826
      %v828 = vld [vmem:[#allocation2] sm:$0xf]
      %v829 = vld [vmem:[#allocation2 + $0x4] sm:$0xf]
      %v830 = vld [vmem:[#allocation2 + $0xc] sm:$0xf]
      %v831 = vld [vmem:[#allocation2 + $0x10] sm:$0xf]
      %v832 = vld [vmem:[#allocation2 + $0x18] sm:$0xf]
      %v833 = vld [vmem:[#allocation2 + $0x1c] sm:$0xf]
      %v834 = vld [vmem:[#allocation2 + $0x24] sm:$0xf]
      %v835 = vld [vmem:[#allocation2 + $0x28] sm:$0xf]
      %v836 = vld [vmem:[#allocation2 + $0x30] sm:$0xf]
      %v837 = vld [vmem:[#allocation2 + $0x34] sm:$0xf]
      %v838 = vld [vmem:[#allocation2 + $0x3c] sm:$0xf]
      %v839 = vld [vmem:[#allocation2 + $0x40] sm:$0xf]
      %v840 = vld [vmem:[#allocation2 + $0x48] sm:$0xf]
      %v841 = vld [vmem:[#allocation2 + $0x4c] sm:$0xf]
      %v842 = vld [vmem:[#allocation2 + $0x54] sm:$0xf]
      %v843 = vld [vmem:[#allocation2 + $0x58] sm:$0xf]
      %v844 = vld [vmem:[#allocation2 + $0x60] sm:$0xf]
      %v845 = vld [vmem:[#allocation2 + $0x64] sm:$0xf]
      %v846 = vld [vmem:[#allocation2 + $0x6c] sm:$0xf]
      %v847 = vld [vmem:[#allocation2 + $0x70] sm:$0xf]
      %v848 = vld [vmem:[#allocation2 + $0x78] sm:$0xf]
      %v849 = vld [vmem:[#allocation2 + $0x7c] sm:$0xf]
      %v850 = vld [vmem:[#allocation2 + $0x84] sm:$0xf]
      %v851 = vld [vmem:[#allocation2 + $0x88] sm:$0xf]
      %v852 = vld [vmem:[#allocation2 + $0x90] sm:$0xf]
      %v853 = vld [vmem:[#allocation2 + $0x94] sm:$0xf]
      %v854 = vld [vmem:[#allocation2 + $0x9c] sm:$0xf]
      %v855 = vld [vmem:[#allocation2 + $0xa0] sm:$0xf]
      %v856 = vld [vmem:[#allocation2 + $0xa8] sm:$0xf]
      %v857 = vld [vmem:[#allocation2 + $0xac] sm:$0xf]
      %v858 = vld [vmem:[#allocation2 + $0xb4] sm:$0xf]
      %v859 = vld [vmem:[#allocation2 + $0xb8] sm:$0xf]
      %v892 = vunpack.c.l.b16 %v828
      %v893 = vunpack.c.l.b16 %v829
      %v894 = vunpack.c.l.b16 %v830
      %v895 = vunpack.c.l.b16 %v831
      %v896 = vunpack.c.l.b16 %v832
      %v897 = vunpack.c.l.b16 %v833
      %v898 = vunpack.c.l.b16 %v834
      %v899 = vunpack.c.l.b16 %v835
      %v900 = vunpack.c.l.b16 %v836
      %v901 = vunpack.c.l.b16 %v837
      %v902 = vunpack.c.l.b16 %v838
      %v903 = vunpack.c.l.b16 %v839
      %v904 = vunpack.c.l.b16 %v840
      %v905 = vunpack.c.l.b16 %v841
      %v906 = vunpack.c.l.b16 %v842
      %v907 = vunpack.c.l.b16 %v843
      %v908 = vunpack.c.l.b16 %v844
      %v909 = vunpack.c.l.b16 %v845
      %v910 = vunpack.c.l.b16 %v846
      %v911 = vunpack.c.l.b16 %v847
      %v912 = vunpack.c.l.b16 %v848
      %v913 = vunpack.c.l.b16 %v849
      %v914 = vunpack.c.l.b16 %v850
      %v915 = vunpack.c.l.b16 %v851
      %v916 = vunpack.c.l.b16 %v852
      %v917 = vunpack.c.l.b16 %v853
      %v918 = vunpack.c.l.b16 %v854
      %v919 = vunpack.c.l.b16 %v855
      %v920 = vunpack.c.l.b16 %v856
      %v921 = vunpack.c.l.b16 %v857
      %v922 = vunpack.c.l.b16 %v858
      %v923 = vunpack.c.l.b16 %v859
      %v924 = vpack.c.b16 %v893, %v892
      %v925 = vpack.c.b16 %v895, %v894
      %v926 = vpack.c.b16 %v897, %v896
      %v927 = vpack.c.b16 %v899, %v898
      %v928 = vpack.c.b16 %v901, %v900
      %v929 = vpack.c.b16 %v903, %v902
      %v930 = vpack.c.b16 %v905, %v904
      %v931 = vpack.c.b16 %v907, %v906
      %v932 = vpack.c.b16 %v909, %v908
      %v933 = vpack.c.b16 %v911, %v910
      %v934 = vpack.c.b16 %v913, %v912
      %v935 = vpack.c.b16 %v915, %v914
      %v936 = vpack.c.b16 %v917, %v916
      %v937 = vpack.c.b16 %v919, %v918
      %v938 = vpack.c.b16 %v921, %v920
      %v939 = vpack.c.b16 %v923, %v922
      %vm956 = vcmask 31744
      %957 = vst.msk [vmem:[#allocation3] sm:$0xff] %vm956, %v924
      %958 = vst.msk [vmem:[#allocation3 + $0x8] sm:$0xff] %vm956, %v925
      %959 = vst.msk [vmem:[#allocation3 + $0x10] sm:$0xff] %vm956, %v926
      %960 = vst.msk [vmem:[#allocation3 + $0x18] sm:$0xff] %vm956, %v927
      %961 = vst.msk [vmem:[#allocation3 + $0x20] sm:$0xff] %vm956, %v928
      %962 = vst.msk [vmem:[#allocation3 + $0x28] sm:$0xff] %vm956, %v929
      %963 = vst.msk [vmem:[#allocation3 + $0x30] sm:$0xff] %vm956, %v930
      %964 = vst.msk [vmem:[#allocation3 + $0x38] sm:$0xff] %vm956, %v931
      %965 = vst.msk [vmem:[#allocation3 + $0x40] sm:$0xff] %vm956, %v932
      %966 = vst.msk [vmem:[#allocation3 + $0x48] sm:$0xff] %vm956, %v933
      %967 = vst.msk [vmem:[#allocation3 + $0x50] sm:$0xff] %vm956, %v934
      %968 = vst.msk [vmem:[#allocation3 + $0x58] sm:$0xff] %vm956, %v935
      %969 = vst.msk [vmem:[#allocation3 + $0x60] sm:$0xff] %vm956, %v936
      %970 = vst.msk [vmem:[#allocation3 + $0x68] sm:$0xff] %vm956, %v937
      %971 = vst.msk [vmem:[#allocation3 + $0x70] sm:$0xff] %vm956, %v938
      %972 = vst.msk [vmem:[#allocation3 + $0x78] sm:$0xff] %vm956, %v939
      %v973 = vld [vmem:[#allocation2] sm:$0xf]
      %v974 = vld [vmem:[#allocation2 + $0x4] sm:$0xf]
      %v975 = vld [vmem:[#allocation2 + $0x8] sm:$0x1]
      %v976 = vld [vmem:[#allocation2 + $0xc] sm:$0xf]
      %v977 = vld [vmem:[#allocation2 + $0x10] sm:$0xf]
      %v978 = vld [vmem:[#allocation2 + $0x14] sm:$0x1]
      %v979 = vld [vmem:[#allocation2 + $0x18] sm:$0xf]
      %v980 = vld [vmem:[#allocation2 + $0x1c] sm:$0xf]
      %v981 = vld [vmem:[#allocation2 + $0x20] sm:$0x1]
      %v982 = vld [vmem:[#allocation2 + $0x24] sm:$0xf]
      %v983 = vld [vmem:[#allocation2 + $0x28] sm:$0xf]
      %v984 = vld [vmem:[#allocation2 + $0x2c] sm:$0x1]
      %v985 = vld [vmem:[#allocation2 + $0x30] sm:$0xf]
      %v986 = vld [vmem:[#allocation2 + $0x34] sm:$0xf]
      %v987 = vld [vmem:[#allocation2 + $0x38] sm:$0x1]
      %v988 = vld [vmem:[#allocation2 + $0x3c] sm:$0xf]
      %v989 = vld [vmem:[#allocation2 + $0x40] sm:$0xf]
      %v990 = vld [vmem:[#allocation2 + $0x44] sm:$0x1]
      %v991 = vld [vmem:[#allocation2 + $0x48] sm:$0xf]
      %v992 = vld [vmem:[#allocation2 + $0x4c] sm:$0xf]
      %v993 = vld [vmem:[#allocation2 + $0x50] sm:$0x1]
      %v994 = vld [vmem:[#allocation2 + $0x54] sm:$0xf]
      %v995 = vld [vmem:[#allocation2 + $0x58] sm:$0xf]
      %v996 = vld [vmem:[#allocation2 + $0x5c] sm:$0x1]
      %v997 = vld [vmem:[#allocation2 + $0x60] sm:$0xf]
      %v998 = vld [vmem:[#allocation2 + $0x64] sm:$0xf]
      %v999 = vld [vmem:[#allocation2 + $0x68] sm:$0x1]
      %v1000 = vld [vmem:[#allocation2 + $0x6c] sm:$0xf]
      %v1001 = vld [vmem:[#allocation2 + $0x70] sm:$0xf]
      %v1002 = vld [vmem:[#allocation2 + $0x74] sm:$0x1]
      %v1003 = vld [vmem:[#allocation2 + $0x78] sm:$0xf]
      %v1004 = vld [vmem:[#allocation2 + $0x7c] sm:$0xf]
      %v1005 = vld [vmem:[#allocation2 + $0x80] sm:$0x1]
      %v1006 = vld [vmem:[#allocation2 + $0x84] sm:$0xf]
      %v1007 = vld [vmem:[#allocation2 + $0x88] sm:$0xf]
      %v1008 = vld [vmem:[#allocation2 + $0x8c] sm:$0x1]
      %v1009 = vld [vmem:[#allocation2 + $0x90] sm:$0xf]
      %v1010 = vld [vmem:[#allocation2 + $0x94] sm:$0xf]
      %v1011 = vld [vmem:[#allocation2 + $0x98] sm:$0x1]
      %v1012 = vld [vmem:[#allocation2 + $0x9c] sm:$0xf]
      %v1013 = vld [vmem:[#allocation2 + $0xa0] sm:$0xf]
      %v1014 = vld [vmem:[#allocation2 + $0xa4] sm:$0x1]
      %v1015 = vld [vmem:[#allocation2 + $0xa8] sm:$0xf]
      %v1016 = vld [vmem:[#allocation2 + $0xac] sm:$0xf]
      %v1017 = vld [vmem:[#allocation2 + $0xb0] sm:$0x1]
      %v1018 = vld [vmem:[#allocation2 + $0xb4] sm:$0xf]
      %v1019 = vld [vmem:[#allocation2 + $0xb8] sm:$0xf]
      %v1020 = vld [vmem:[#allocation2 + $0xbc] sm:$0x1]
      %v1069 = vunpack.c.l.b16 %v973
      %v1070 = vunpack.c.l.b16 %v974
      %v1071 = vunpack.c.l.b16 %v975
      %v1072 = vunpack.c.l.b16 %v976
      %v1073 = vunpack.c.l.b16 %v977
      %v1074 = vunpack.c.l.b16 %v978
      %v1075 = vunpack.c.l.b16 %v979
      %v1076 = vunpack.c.l.b16 %v980
      %v1077 = vunpack.c.l.b16 %v981
      %v1078 = vunpack.c.l.b16 %v982
      %v1079 = vunpack.c.l.b16 %v983
      %v1080 = vunpack.c.l.b16 %v984
      %v1081 = vunpack.c.l.b16 %v985
      %v1082 = vunpack.c.l.b16 %v986
      %v1083 = vunpack.c.l.b16 %v987
      %v1084 = vunpack.c.l.b16 %v988
      %v1085 = vunpack.c.l.b16 %v989
      %v1086 = vunpack.c.l.b16 %v990
      %v1087 = vunpack.c.l.b16 %v991
      %v1088 = vunpack.c.l.b16 %v992
      %v1089 = vunpack.c.l.b16 %v993
      %v1090 = vunpack.c.l.b16 %v994
      %v1091 = vunpack.c.l.b16 %v995
      %v1092 = vunpack.c.l.b16 %v996
      %v1093 = vunpack.c.l.b16 %v997
      %v1094 = vunpack.c.l.b16 %v998
      %v1095 = vunpack.c.l.b16 %v999
      %v1096 = vunpack.c.l.b16 %v1000
      %v1097 = vunpack.c.l.b16 %v1001
      %v1098 = vunpack.c.l.b16 %v1002
      %v1099 = vunpack.c.l.b16 %v1003
      %v1100 = vunpack.c.l.b16 %v1004
      %v1101 = vunpack.c.l.b16 %v1005
      %v1102 = vunpack.c.l.b16 %v1006
      %v1103 = vunpack.c.l.b16 %v1007
      %v1104 = vunpack.c.l.b16 %v1008
      %v1105 = vunpack.c.l.b16 %v1009
      %v1106 = vunpack.c.l.b16 %v1010
      %v1107 = vunpack.c.l.b16 %v1011
      %v1108 = vunpack.c.l.b16 %v1012
      %v1109 = vunpack.c.l.b16 %v1013
      %v1110 = vunpack.c.l.b16 %v1014
      %v1111 = vunpack.c.l.b16 %v1015
      %v1112 = vunpack.c.l.b16 %v1016
      %v1113 = vunpack.c.l.b16 %v1017
      %v1114 = vunpack.c.l.b16 %v1018
      %v1115 = vunpack.c.l.b16 %v1019
      %v1116 = vunpack.c.l.b16 %v1020
      %v1117 = vpack.c.b16 %v1070, %v1069
      %v1118 = vpack.c.b16 %v1071, %v1071
      %v1119 = vpack.c.b16 %v1073, %v1072
      %v1120 = vpack.c.b16 %v1074, %v1074
      %v1121 = vpack.c.b16 %v1076, %v1075
      %v1122 = vpack.c.b16 %v1077, %v1077
      %v1123 = vpack.c.b16 %v1079, %v1078
      %v1124 = vpack.c.b16 %v1080, %v1080
      %v1125 = vpack.c.b16 %v1082, %v1081
      %v1126 = vpack.c.b16 %v1083, %v1083
      %v1127 = vpack.c.b16 %v1085, %v1084
      %v1128 = vpack.c.b16 %v1086, %v1086
      %v1129 = vpack.c.b16 %v1088, %v1087
      %v1130 = vpack.c.b16 %v1089, %v1089
      %v1131 = vpack.c.b16 %v1091, %v1090
      %v1132 = vpack.c.b16 %v1092, %v1092
      %v1133 = vpack.c.b16 %v1094, %v1093
      %v1134 = vpack.c.b16 %v1095, %v1095
      %v1135 = vpack.c.b16 %v1097, %v1096
      %v1136 = vpack.c.b16 %v1098, %v1098
      %v1137 = vpack.c.b16 %v1100, %v1099
      %v1138 = vpack.c.b16 %v1101, %v1101
      %v1139 = vpack.c.b16 %v1103, %v1102
      %v1140 = vpack.c.b16 %v1104, %v1104
      %v1141 = vpack.c.b16 %v1106, %v1105
      %v1142 = vpack.c.b16 %v1107, %v1107
      %v1143 = vpack.c.b16 %v1109, %v1108
      %v1144 = vpack.c.b16 %v1110, %v1110
      %v1145 = vpack.c.b16 %v1112, %v1111
      %v1146 = vpack.c.b16 %v1113, %v1113
      %v1147 = vpack.c.b16 %v1115, %v1114
      %v1148 = vpack.c.b16 %v1116, %v1116
      %vm1149 = vsmask.f32 7424
      %v1151 = vshrl.u32 %v1117, 16
      %v1153 = vshll.u32 %v1117, 16
      %v1155 = vrot.slane %v1153, 1
      %v1156 = vor.u32 %v1151, %v1155
      %v1158 = vshll.u32 %v1118, 16
      %v1160 = vrot.slane %v1158, 1
      %v1161 = vsel %vm1149, %v1156, %v1160
      %v1163 = vshrl.u32 %v1119, 16
      %v1165 = vshll.u32 %v1119, 16
      %v1167 = vrot.slane %v1165, 1
      %v1168 = vor.u32 %v1163, %v1167
      %v1170 = vshll.u32 %v1120, 16
      %v1172 = vrot.slane %v1170, 1
      %v1173 = vsel %vm1149, %v1168, %v1172
      %v1175 = vshrl.u32 %v1121, 16
      %v1177 = vshll.u32 %v1121, 16
      %v1179 = vrot.slane %v1177, 1
      %v1180 = vor.u32 %v1175, %v1179
      %v1182 = vshll.u32 %v1122, 16
      %v1184 = vrot.slane %v1182, 1
      %v1185 = vsel %vm1149, %v1180, %v1184
      %v1187 = vshrl.u32 %v1123, 16
      %v1189 = vshll.u32 %v1123, 16
      %v1191 = vrot.slane %v1189, 1
      %v1192 = vor.u32 %v1187, %v1191
      %v1194 = vshll.u32 %v1124, 16
      %v1196 = vrot.slane %v1194, 1
      %v1197 = vsel %vm1149, %v1192, %v1196
      %v1199 = vshrl.u32 %v1125, 16
      %v1201 = vshll.u32 %v1125, 16
      %v1203 = vrot.slane %v1201, 1
      %v1204 = vor.u32 %v1199, %v1203
      %v1206 = vshll.u32 %v1126, 16
      %v1208 = vrot.slane %v1206, 1
      %v1209 = vsel %vm1149, %v1204, %v1208
      %v1211 = vshrl.u32 %v1127, 16
      %v1213 = vshll.u32 %v1127, 16
      %v1215 = vrot.slane %v1213, 1
      %v1216 = vor.u32 %v1211, %v1215
      %v1218 = vshll.u32 %v1128, 16
      %v1220 = vrot.slane %v1218, 1
      %v1221 = vsel %vm1149, %v1216, %v1220
      %v1223 = vshrl.u32 %v1129, 16
      %v1225 = vshll.u32 %v1129, 16
      %v1227 = vrot.slane %v1225, 1
      %v1228 = vor.u32 %v1223, %v1227
      %v1230 = vshll.u32 %v1130, 16
      %v1232 = vrot.slane %v1230, 1
      %v1233 = vsel %vm1149, %v1228, %v1232
      %v1235 = vshrl.u32 %v1131, 16
      %v1237 = vshll.u32 %v1131, 16
      %v1239 = vrot.slane %v1237, 1
      %v1240 = vor.u32 %v1235, %v1239
      %v1242 = vshll.u32 %v1132, 16
      %v1244 = vrot.slane %v1242, 1
      %v1245 = vsel %vm1149, %v1240, %v1244
      %v1247 = vshrl.u32 %v1133, 16
      %v1249 = vshll.u32 %v1133, 16
      %v1251 = vrot.slane %v1249, 1
      %v1252 = vor.u32 %v1247, %v1251
      %v1254 = vshll.u32 %v1134, 16
      %v1256 = vrot.slane %v1254, 1
      %v1257 = vsel %vm1149, %v1252, %v1256
      %v1259 = vshrl.u32 %v1135, 16
      %v1261 = vshll.u32 %v1135, 16
      %v1263 = vrot.slane %v1261, 1
      %v1264 = vor.u32 %v1259, %v1263
      %v1266 = vshll.u32 %v1136, 16
      %v1268 = vrot.slane %v1266, 1
      %v1269 = vsel %vm1149, %v1264, %v1268
      %v1271 = vshrl.u32 %v1137, 16
      %v1273 = vshll.u32 %v1137, 16
      %v1275 = vrot.slane %v1273, 1
      %v1276 = vor.u32 %v1271, %v1275
      %v1278 = vshll.u32 %v1138, 16
      %v1280 = vrot.slane %v1278, 1
      %v1281 = vsel %vm1149, %v1276, %v1280
      %v1283 = vshrl.u32 %v1139, 16
      %v1285 = vshll.u32 %v1139, 16
      %v1287 = vrot.slane %v1285, 1
      %v1288 = vor.u32 %v1283, %v1287
      %v1290 = vshll.u32 %v1140, 16
      %v1292 = vrot.slane %v1290, 1
      %v1293 = vsel %vm1149, %v1288, %v1292
      %v1295 = vshrl.u32 %v1141, 16
      %v1297 = vshll.u32 %v1141, 16
      %v1299 = vrot.slane %v1297, 1
      %v1300 = vor.u32 %v1295, %v1299
      %v1302 = vshll.u32 %v1142, 16
      %v1304 = vrot.slane %v1302, 1
      %v1305 = vsel %vm1149, %v1300, %v1304
      %v1307 = vshrl.u32 %v1143, 16
      %v1309 = vshll.u32 %v1143, 16
      %v1311 = vrot.slane %v1309, 1
      %v1312 = vor.u32 %v1307, %v1311
      %v1314 = vshll.u32 %v1144, 16
      %v1316 = vrot.slane %v1314, 1
      %v1317 = vsel %vm1149, %v1312, %v1316
      %v1319 = vshrl.u32 %v1145, 16
      %v1321 = vshll.u32 %v1145, 16
      %v1323 = vrot.slane %v1321, 1
      %v1324 = vor.u32 %v1319, %v1323
      %v1326 = vshll.u32 %v1146, 16
      %v1328 = vrot.slane %v1326, 1
      %v1329 = vsel %vm1149, %v1324, %v1328
      %v1331 = vshrl.u32 %v1147, 16
      %v1333 = vshll.u32 %v1147, 16
      %v1335 = vrot.slane %v1333, 1
      %v1336 = vor.u32 %v1331, %v1335
      %v1338 = vshll.u32 %v1148, 16
      %v1340 = vrot.slane %v1338, 1
      %v1341 = vsel %vm1149, %v1336, %v1340
      %1342 = vrot.lane.b32.xlu0 %v1161, 4
      %v1343 = vpop.permute.xlu0 %1342
      %1344 = vrot.lane.b32.xlu0 %v1173, 4
      %v1345 = vpop.permute.xlu0 %1344
      %1346 = vrot.lane.b32.xlu0 %v1185, 4
      %v1347 = vpop.permute.xlu0 %1346
      %1348 = vrot.lane.b32.xlu0 %v1197, 4
      %v1349 = vpop.permute.xlu0 %1348
      %1350 = vrot.lane.b32.xlu0 %v1209, 4
      %v1351 = vpop.permute.xlu0 %1350
      %1352 = vrot.lane.b32.xlu0 %v1221, 4
      %v1353 = vpop.permute.xlu0 %1352
      %1354 = vrot.lane.b32.xlu0 %v1233, 4
      %v1355 = vpop.permute.xlu0 %1354
      %1356 = vrot.lane.b32.xlu0 %v1245, 4
      %v1357 = vpop.permute.xlu0 %1356
      %1358 = vrot.lane.b32.xlu0 %v1257, 4
      %v1359 = vpop.permute.xlu0 %1358
      %1360 = vrot.lane.b32.xlu0 %v1269, 4
      %v1361 = vpop.permute.xlu0 %1360
      %1362 = vrot.lane.b32.xlu0 %v1281, 4
      %v1363 = vpop.permute.xlu0 %1362
      %1364 = vrot.lane.b32.xlu0 %v1293, 4
      %v1365 = vpop.permute.xlu0 %1364
      %1366 = vrot.lane.b32.xlu0 %v1305, 4
      %v1367 = vpop.permute.xlu0 %1366
      %1368 = vrot.lane.b32.xlu0 %v1317, 4
      %v1369 = vpop.permute.xlu0 %1368
      %1370 = vrot.lane.b32.xlu0 %v1329, 4
      %v1371 = vpop.permute.xlu0 %1370
      %1372 = vrot.lane.b32.xlu0 %v1341, 4
      %v1373 = vpop.permute.xlu0 %1372
      %vm1390 = vcmask 64544
      %1391 = vst.msk [vmem:[#allocation3] sm:$0xff] %vm1390, %v1343
      %1392 = vst.msk [vmem:[#allocation3 + $0x8] sm:$0xff] %vm1390, %v1345
      %1393 = vst.msk [vmem:[#allocation3 + $0x10] sm:$0xff] %vm1390, %v1347
      %1394 = vst.msk [vmem:[#allocation3 + $0x18] sm:$0xff] %vm1390, %v1349
      %1395 = vst.msk [vmem:[#allocation3 + $0x20] sm:$0xff] %vm1390, %v1351
      %1396 = vst.msk [vmem:[#allocation3 + $0x28] sm:$0xff] %vm1390, %v1353
      %1397 = vst.msk [vmem:[#allocation3 + $0x30] sm:$0xff] %vm1390, %v1355
      %1398 = vst.msk [vmem:[#allocation3 + $0x38] sm:$0xff] %vm1390, %v1357
      %1399 = vst.msk [vmem:[#allocation3 + $0x40] sm:$0xff] %vm1390, %v1359
      %1400 = vst.msk [vmem:[#allocation3 + $0x48] sm:$0xff] %vm1390, %v1361
      %1401 = vst.msk [vmem:[#allocation3 + $0x50] sm:$0xff] %vm1390, %v1363
      %1402 = vst.msk [vmem:[#allocation3 + $0x58] sm:$0xff] %vm1390, %v1365
      %1403 = vst.msk [vmem:[#allocation3 + $0x60] sm:$0xff] %vm1390, %v1367
      %1404 = vst.msk [vmem:[#allocation3 + $0x68] sm:$0xff] %vm1390, %v1369
      %1405 = vst.msk [vmem:[#allocation3 + $0x70] sm:$0xff] %vm1390, %v1371
      %1406 = vst.msk [vmem:[#allocation3 + $0x78] sm:$0xff] %vm1390, %v1373
      %v1407 = vld [vmem:[#allocation2] sm:$0xe]
      %v1408 = vld [vmem:[#allocation2 + $0x4] sm:$0xf]
      %v1409 = vld [vmem:[#allocation2 + $0x8] sm:$0x1]
      %v1410 = vld [vmem:[#allocation2 + $0xc] sm:$0xe]
      %v1411 = vld [vmem:[#allocation2 + $0x10] sm:$0xf]
      %v1412 = vld [vmem:[#allocation2 + $0x14] sm:$0x1]
      %v1413 = vld [vmem:[#allocation2 + $0x18] sm:$0xe]
      %v1414 = vld [vmem:[#allocation2 + $0x1c] sm:$0xf]
      %v1415 = vld [vmem:[#allocation2 + $0x20] sm:$0x1]
      %v1416 = vld [vmem:[#allocation2 + $0x24] sm:$0xe]
      %v1417 = vld [vmem:[#allocation2 + $0x28] sm:$0xf]
      %v1418 = vld [vmem:[#allocation2 + $0x2c] sm:$0x1]
      %v1419 = vld [vmem:[#allocation2 + $0x30] sm:$0xe]
      %v1420 = vld [vmem:[#allocation2 + $0x34] sm:$0xf]
      %v1421 = vld [vmem:[#allocation2 + $0x38] sm:$0x1]
      %v1422 = vld [vmem:[#allocation2 + $0x3c] sm:$0xe]
      %v1423 = vld [vmem:[#allocation2 + $0x40] sm:$0xf]
      %v1424 = vld [vmem:[#allocation2 + $0x44] sm:$0x1]
      %v1425 = vld [vmem:[#allocation2 + $0x48] sm:$0xe]
      %v1426 = vld [vmem:[#allocation2 + $0x4c] sm:$0xf]
      %v1427 = vld [vmem:[#allocation2 + $0x50] sm:$0x1]
      %v1428 = vld [vmem:[#allocation2 + $0x54] sm:$0xe]
      %v1429 = vld [vmem:[#allocation2 + $0x58] sm:$0xf]
      %v1430 = vld [vmem:[#allocation2 + $0x5c] sm:$0x1]
      %v1431 = vld [vmem:[#allocation2 + $0x60] sm:$0xe]
      %v1432 = vld [vmem:[#allocation2 + $0x64] sm:$0xf]
      %v1433 = vld [vmem:[#allocation2 + $0x68] sm:$0x1]
      %v1434 = vld [vmem:[#allocation2 + $0x6c] sm:$0xe]
      %v1435 = vld [vmem:[#allocation2 + $0x70] sm:$0xf]
      %v1436 = vld [vmem:[#allocation2 + $0x74] sm:$0x1]
      %v1437 = vld [vmem:[#allocation2 + $0x78] sm:$0xe]
      %v1438 = vld [vmem:[#allocation2 + $0x7c] sm:$0xf]
      %v1439 = vld [vmem:[#allocation2 + $0x80] sm:$0x1]
      %v1440 = vld [vmem:[#allocation2 + $0x84] sm:$0xe]
      %v1441 = vld [vmem:[#allocation2 + $0x88] sm:$0xf]
      %v1442 = vld [vmem:[#allocation2 + $0x8c] sm:$0x1]
      %v1443 = vld [vmem:[#allocation2 + $0x90] sm:$0xe]
      %v1444 = vld [vmem:[#allocation2 + $0x94] sm:$0xf]
      %v1445 = vld [vmem:[#allocation2 + $0x98] sm:$0x1]
      %v1446 = vld [vmem:[#allocation2 + $0x9c] sm:$0xe]
      %v1447 = vld [vmem:[#allocation2 + $0xa0] sm:$0xf]
      %v1448 = vld [vmem:[#allocation2 + $0xa4] sm:$0x1]
      %v1449 = vld [vmem:[#allocation2 + $0xa8] sm:$0xe]
      %v1450 = vld [vmem:[#allocation2 + $0xac] sm:$0xf]
      %v1451 = vld [vmem:[#allocation2 + $0xb0] sm:$0x1]
      %v1452 = vld [vmem:[#allocation2 + $0xb4] sm:$0xe]
      %v1453 = vld [vmem:[#allocation2 + $0xb8] sm:$0xf]
      %v1454 = vld [vmem:[#allocation2 + $0xbc] sm:$0x1]
      %v1503 = vunpack.c.l.b16 %v1407
      %v1504 = vunpack.c.l.b16 %v1408
      %v1505 = vunpack.c.l.b16 %v1409
      %v1506 = vunpack.c.l.b16 %v1410
      %v1507 = vunpack.c.l.b16 %v1411
      %v1508 = vunpack.c.l.b16 %v1412
      %v1509 = vunpack.c.l.b16 %v1413
      %v1510 = vunpack.c.l.b16 %v1414
      %v1511 = vunpack.c.l.b16 %v1415
      %v1512 = vunpack.c.l.b16 %v1416
      %v1513 = vunpack.c.l.b16 %v1417
      %v1514 = vunpack.c.l.b16 %v1418
      %v1515 = vunpack.c.l.b16 %v1419
      %v1516 = vunpack.c.l.b16 %v1420
      %v1517 = vunpack.c.l.b16 %v1421
      %v1518 = vunpack.c.l.b16 %v1422
      %v1519 = vunpack.c.l.b16 %v1423
      %v1520 = vunpack.c.l.b16 %v1424
      %v1521 = vunpack.c.l.b16 %v1425
      %v1522 = vunpack.c.l.b16 %v1426
      %v1523 = vunpack.c.l.b16 %v1427
      %v1524 = vunpack.c.l.b16 %v1428
      %v1525 = vunpack.c.l.b16 %v1429
      %v1526 = vunpack.c.l.b16 %v1430
      %v1527 = vunpack.c.l.b16 %v1431
      %v1528 = vunpack.c.l.b16 %v1432
      %v1529 = vunpack.c.l.b16 %v1433
      %v1530 = vunpack.c.l.b16 %v1434
      %v1531 = vunpack.c.l.b16 %v1435
      %v1532 = vunpack.c.l.b16 %v1436
      %v1533 = vunpack.c.l.b16 %v1437
      %v1534 = vunpack.c.l.b16 %v1438
      %v1535 = vunpack.c.l.b16 %v1439
      %v1536 = vunpack.c.l.b16 %v1440
      %v1537 = vunpack.c.l.b16 %v1441
      %v1538 = vunpack.c.l.b16 %v1442
      %v1539 = vunpack.c.l.b16 %v1443
      %v1540 = vunpack.c.l.b16 %v1444
      %v1541 = vunpack.c.l.b16 %v1445
      %v1542 = vunpack.c.l.b16 %v1446
      %v1543 = vunpack.c.l.b16 %v1447
      %v1544 = vunpack.c.l.b16 %v1448
      %v1545 = vunpack.c.l.b16 %v1449
      %v1546 = vunpack.c.l.b16 %v1450
      %v1547 = vunpack.c.l.b16 %v1451
      %v1548 = vunpack.c.l.b16 %v1452
      %v1549 = vunpack.c.l.b16 %v1453
      %v1550 = vunpack.c.l.b16 %v1454
      %v1551 = vpack.c.b16 %v1504, %v1503
      %v1552 = vpack.c.b16 %v1505, %v1505
      %v1553 = vpack.c.b16 %v1507, %v1506
      %v1554 = vpack.c.b16 %v1508, %v1508
      %v1555 = vpack.c.b16 %v1510, %v1509
      %v1556 = vpack.c.b16 %v1511, %v1511
      %v1557 = vpack.c.b16 %v1513, %v1512
      %v1558 = vpack.c.b16 %v1514, %v1514
      %v1559 = vpack.c.b16 %v1516, %v1515
      %v1560 = vpack.c.b16 %v1517, %v1517
      %v1561 = vpack.c.b16 %v1519, %v1518
      %v1562 = vpack.c.b16 %v1520, %v1520
      %v1563 = vpack.c.b16 %v1522, %v1521
      %v1564 = vpack.c.b16 %v1523, %v1523
      %v1565 = vpack.c.b16 %v1525, %v1524
      %v1566 = vpack.c.b16 %v1526, %v1526
      %v1567 = vpack.c.b16 %v1528, %v1527
      %v1568 = vpack.c.b16 %v1529, %v1529
      %v1569 = vpack.c.b16 %v1531, %v1530
      %v1570 = vpack.c.b16 %v1532, %v1532
      %v1571 = vpack.c.b16 %v1534, %v1533
      %v1572 = vpack.c.b16 %v1535, %v1535
      %v1573 = vpack.c.b16 %v1537, %v1536
      %v1574 = vpack.c.b16 %v1538, %v1538
      %v1575 = vpack.c.b16 %v1540, %v1539
      %v1576 = vpack.c.b16 %v1541, %v1541
      %v1577 = vpack.c.b16 %v1543, %v1542
      %v1578 = vpack.c.b16 %v1544, %v1544
      %v1579 = vpack.c.b16 %v1546, %v1545
      %v1580 = vpack.c.b16 %v1547, %v1547
      %v1581 = vpack.c.b16 %v1549, %v1548
      %v1582 = vpack.c.b16 %v1550, %v1550
      %vm1583 = vcmask 1046528
      %v1584 = vrot.slane %v1551, 1
      %v1585 = vrot.slane %v1552, 1
      %v1586 = vsel %vm1583, %v1584, %v1585
      %v1587 = vrot.slane %v1553, 1
      %v1588 = vrot.slane %v1554, 1
      %v1589 = vsel %vm1583, %v1587, %v1588
      %v1590 = vrot.slane %v1555, 1
      %v1591 = vrot.slane %v1556, 1
      %v1592 = vsel %vm1583, %v1590, %v1591
      %v1593 = vrot.slane %v1557, 1
      %v1594 = vrot.slane %v1558, 1
      %v1595 = vsel %vm1583, %v1593, %v1594
      %v1596 = vrot.slane %v1559, 1
      %v1597 = vrot.slane %v1560, 1
      %v1598 = vsel %vm1583, %v1596, %v1597
      %v1599 = vrot.slane %v1561, 1
      %v1600 = vrot.slane %v1562, 1
      %v1601 = vsel %vm1583, %v1599, %v1600
      %v1602 = vrot.slane %v1563, 1
      %v1603 = vrot.slane %v1564, 1
      %v1604 = vsel %vm1583, %v1602, %v1603
      %v1605 = vrot.slane %v1565, 1
      %v1606 = vrot.slane %v1566, 1
      %v1607 = vsel %vm1583, %v1605, %v1606
      %v1608 = vrot.slane %v1567, 1
      %v1609 = vrot.slane %v1568, 1
      %v1610 = vsel %vm1583, %v1608, %v1609
      %v1611 = vrot.slane %v1569, 1
      %v1612 = vrot.slane %v1570, 1
      %v1613 = vsel %vm1583, %v1611, %v1612
      %v1614 = vrot.slane %v1571, 1
      %v1615 = vrot.slane %v1572, 1
      %v1616 = vsel %vm1583, %v1614, %v1615
      %v1617 = vrot.slane %v1573, 1
      %v1618 = vrot.slane %v1574, 1
      %v1619 = vsel %vm1583, %v1617, %v1618
      %v1620 = vrot.slane %v1575, 1
      %v1621 = vrot.slane %v1576, 1
      %v1622 = vsel %vm1583, %v1620, %v1621
      %v1623 = vrot.slane %v1577, 1
      %v1624 = vrot.slane %v1578, 1
      %v1625 = vsel %vm1583, %v1623, %v1624
      %v1626 = vrot.slane %v1579, 1
      %v1627 = vrot.slane %v1580, 1
      %v1628 = vsel %vm1583, %v1626, %v1627
      %v1629 = vrot.slane %v1581, 1
      %v1630 = vrot.slane %v1582, 1
      %v1631 = vsel %vm1583, %v1629, %v1630
      %1632 = vrot.lane.b32.xlu0 %v1586, 8
      %v1633 = vpop.permute.xlu0 %1632
      %1634 = vrot.lane.b32.xlu0 %v1589, 8
      %v1635 = vpop.permute.xlu0 %1634
      %1636 = vrot.lane.b32.xlu0 %v1592, 8
      %v1637 = vpop.permute.xlu0 %1636
      %1638 = vrot.lane.b32.xlu0 %v1595, 8
      %v1639 = vpop.permute.xlu0 %1638
      %1640 = vrot.lane.b32.xlu0 %v1598, 8
      %v1641 = vpop.permute.xlu0 %1640
      %1642 = vrot.lane.b32.xlu0 %v1601, 8
      %v1643 = vpop.permute.xlu0 %1642
      %1644 = vrot.lane.b32.xlu0 %v1604, 8
      %v1645 = vpop.permute.xlu0 %1644
      %1646 = vrot.lane.b32.xlu0 %v1607, 8
      %v1647 = vpop.permute.xlu0 %1646
      %1648 = vrot.lane.b32.xlu0 %v1610, 8
      %v1649 = vpop.permute.xlu0 %1648
      %1650 = vrot.lane.b32.xlu0 %v1613, 8
      %v1651 = vpop.permute.xlu0 %1650
      %1652 = vrot.lane.b32.xlu0 %v1616, 8
      %v1653 = vpop.permute.xlu0 %1652
      %1654 = vrot.lane.b32.xlu0 %v1619, 8
      %v1655 = vpop.permute.xlu0 %1654
      %1656 = vrot.lane.b32.xlu0 %v1622, 8
      %v1657 = vpop.permute.xlu0 %1656
      %1658 = vrot.lane.b32.xlu0 %v1625, 8
      %v1659 = vpop.permute.xlu0 %1658
      %1660 = vrot.lane.b32.xlu0 %v1628, 8
      %v1661 = vpop.permute.xlu0 %1660
      %1662 = vrot.lane.b32.xlu0 %v1631, 8
      %v1663 = vpop.permute.xlu0 %1662
      %vm1680 = vcmask 97344
      %1681 = vst.msk [vmem:[#allocation3] sm:$0xff] %vm1680, %v1633
      %1682 = vst.msk [vmem:[#allocation3 + $0x8] sm:$0xff] %vm1680, %v1635
      %1683 = vst.msk [vmem:[#allocation3 + $0x10] sm:$0xff] %vm1680, %v1637
      %1684 = vst.msk [vmem:[#allocation3 + $0x18] sm:$0xff] %vm1680, %v1639
      %1685 = vst.msk [vmem:[#allocation3 + $0x20] sm:$0xff] %vm1680, %v1641
      %1686 = vst.msk [vmem:[#allocation3 + $0x28] sm:$0xff] %vm1680, %v1643
      %1687 = vst.msk [vmem:[#allocation3 + $0x30] sm:$0xff] %vm1680, %v1645
      %1688 = vst.msk [vmem:[#allocation3 + $0x38] sm:$0xff] %vm1680, %v1647
      %1689 = vst.msk [vmem:[#allocation3 + $0x40] sm:$0xff] %vm1680, %v1649
      %1690 = vst.msk [vmem:[#allocation3 + $0x48] sm:$0xff] %vm1680, %v1651
      %1691 = vst.msk [vmem:[#allocation3 + $0x50] sm:$0xff] %vm1680, %v1653
      %1692 = vst.msk [vmem:[#allocation3 + $0x58] sm:$0xff] %vm1680, %v1655
      %1693 = vst.msk [vmem:[#allocation3 + $0x60] sm:$0xff] %vm1680, %v1657
      %1694 = vst.msk [vmem:[#allocation3 + $0x68] sm:$0xff] %vm1680, %v1659
      %1695 = vst.msk [vmem:[#allocation3 + $0x70] sm:$0xff] %vm1680, %v1661
      %1696 = vst.msk [vmem:[#allocation3 + $0x78] sm:$0xff] %vm1680, %v1663
      %v1697 = vld [vmem:[%s713] sm:$0xf]
      %v1698 = vld [vmem:[%s713 + $0x4] sm:$0xf]
      %v1699 = vld [vmem:[%s713 + $0xc] sm:$0xf]
      %v1700 = vld [vmem:[%s713 + $0x10] sm:$0xf]
      %v1701 = vld [vmem:[%s713 + $0x18] sm:$0xf]
      %v1702 = vld [vmem:[%s713 + $0x1c] sm:$0xf]
      %v1703 = vld [vmem:[%s713 + $0x24] sm:$0xf]
      %v1704 = vld [vmem:[%s713 + $0x28] sm:$0xf]
      %v1705 = vld [vmem:[%s713 + $0x30] sm:$0xf]
      %v1706 = vld [vmem:[%s713 + $0x34] sm:$0xf]
      %v1707 = vld [vmem:[%s713 + $0x3c] sm:$0xf]
      %v1708 = vld [vmem:[%s713 + $0x40] sm:$0xf]
      %v1709 = vld [vmem:[%s713 + $0x48] sm:$0xf]
      %v1710 = vld [vmem:[%s713 + $0x4c] sm:$0xf]
      %v1711 = vld [vmem:[%s713 + $0x54] sm:$0xf]
      %v1712 = vld [vmem:[%s713 + $0x58] sm:$0xf]
      %v1713 = vld [vmem:[%s713 + $0x60] sm:$0xf]
      %v1714 = vld [vmem:[%s713 + $0x64] sm:$0xf]
      %v1715 = vld [vmem:[%s713 + $0x6c] sm:$0xf]
      %v1716 = vld [vmem:[%s713 + $0x70] sm:$0xf]
      %v1717 = vld [vmem:[%s713 + $0x78] sm:$0xf]
      %v1718 = vld [vmem:[%s713 + $0x7c] sm:$0xf]
      %v1719 = vld [vmem:[%s713 + $0x84] sm:$0xf]
      %v1720 = vld [vmem:[%s713 + $0x88] sm:$0xf]
      %v1721 = vld [vmem:[%s713 + $0x90] sm:$0xf]
      %v1722 = vld [vmem:[%s713 + $0x94] sm:$0xf]
      %v1723 = vld [vmem:[%s713 + $0x9c] sm:$0xf]
      %v1724 = vld [vmem:[%s713 + $0xa0] sm:$0xf]
      %v1725 = vld [vmem:[%s713 + $0xa8] sm:$0xf]
      %v1726 = vld [vmem:[%s713 + $0xac] sm:$0xf]
      %v1727 = vld [vmem:[%s713 + $0xb4] sm:$0xf]
      %v1728 = vld [vmem:[%s713 + $0xb8] sm:$0xf]
      %v1761 = vunpack.c.l.b16 %v1697
      %v1762 = vunpack.c.l.b16 %v1698
      %v1763 = vunpack.c.l.b16 %v1699
      %v1764 = vunpack.c.l.b16 %v1700
      %v1765 = vunpack.c.l.b16 %v1701
      %v1766 = vunpack.c.l.b16 %v1702
      %v1767 = vunpack.c.l.b16 %v1703
      %v1768 = vunpack.c.l.b16 %v1704
      %v1769 = vunpack.c.l.b16 %v1705
      %v1770 = vunpack.c.l.b16 %v1706
      %v1771 = vunpack.c.l.b16 %v1707
      %v1772 = vunpack.c.l.b16 %v1708
      %v1773 = vunpack.c.l.b16 %v1709
      %v1774 = vunpack.c.l.b16 %v1710
      %v1775 = vunpack.c.l.b16 %v1711
      %v1776 = vunpack.c.l.b16 %v1712
      %v1777 = vunpack.c.l.b16 %v1713
      %v1778 = vunpack.c.l.b16 %v1714
      %v1779 = vunpack.c.l.b16 %v1715
      %v1780 = vunpack.c.l.b16 %v1716
      %v1781 = vunpack.c.l.b16 %v1717
      %v1782 = vunpack.c.l.b16 %v1718
      %v1783 = vunpack.c.l.b16 %v1719
      %v1784 = vunpack.c.l.b16 %v1720
      %v1785 = vunpack.c.l.b16 %v1721
      %v1786 = vunpack.c.l.b16 %v1722
      %v1787 = vunpack.c.l.b16 %v1723
      %v1788 = vunpack.c.l.b16 %v1724
      %v1789 = vunpack.c.l.b16 %v1725
      %v1790 = vunpack.c.l.b16 %v1726
      %v1791 = vunpack.c.l.b16 %v1727
      %v1792 = vunpack.c.l.b16 %v1728
      %v1793 = vpack.c.b16 %v1762, %v1761
      %v1794 = vpack.c.b16 %v1764, %v1763
      %v1795 = vpack.c.b16 %v1766, %v1765
      %v1796 = vpack.c.b16 %v1768, %v1767
      %v1797 = vpack.c.b16 %v1770, %v1769
      %v1798 = vpack.c.b16 %v1772, %v1771
      %v1799 = vpack.c.b16 %v1774, %v1773
      %v1800 = vpack.c.b16 %v1776, %v1775
      %v1801 = vpack.c.b16 %v1778, %v1777
      %v1802 = vpack.c.b16 %v1780, %v1779
      %v1803 = vpack.c.b16 %v1782, %v1781
      %v1804 = vpack.c.b16 %v1784, %v1783
      %v1805 = vpack.c.b16 %v1786, %v1785
      %v1806 = vpack.c.b16 %v1788, %v1787
      %v1807 = vpack.c.b16 %v1790, %v1789
      %v1808 = vpack.c.b16 %v1792, %v1791
      %1809 = vrot.lane.b32.xlu0 %v1793, 12
      %v1810 = vpop.permute.xlu0 %1809
      %1811 = vrot.lane.b32.xlu0 %v1794, 12
      %v1812 = vpop.permute.xlu0 %1811
      %1813 = vrot.lane.b32.xlu0 %v1795, 12
      %v1814 = vpop.permute.xlu0 %1813
      %1815 = vrot.lane.b32.xlu0 %v1796, 12
      %v1816 = vpop.permute.xlu0 %1815
      %1817 = vrot.lane.b32.xlu0 %v1797, 12
      %v1818 = vpop.permute.xlu0 %1817
      %1819 = vrot.lane.b32.xlu0 %v1798, 12
      %v1820 = vpop.permute.xlu0 %1819
      %1821 = vrot.lane.b32.xlu0 %v1799, 12
      %v1822 = vpop.permute.xlu0 %1821
      %1823 = vrot.lane.b32.xlu0 %v1800, 12
      %v1824 = vpop.permute.xlu0 %1823
      %1825 = vrot.lane.b32.xlu0 %v1801, 12
      %v1826 = vpop.permute.xlu0 %1825
      %1827 = vrot.lane.b32.xlu0 %v1802, 12
      %v1828 = vpop.permute.xlu0 %1827
      %1829 = vrot.lane.b32.xlu0 %v1803, 12
      %v1830 = vpop.permute.xlu0 %1829
      %1831 = vrot.lane.b32.xlu0 %v1804, 12
      %v1832 = vpop.permute.xlu0 %1831
      %1833 = vrot.lane.b32.xlu0 %v1805, 12
      %v1834 = vpop.permute.xlu0 %1833
      %1835 = vrot.lane.b32.xlu0 %v1806, 12
      %v1836 = vpop.permute.xlu0 %1835
      %1837 = vrot.lane.b32.xlu0 %v1807, 12
      %v1838 = vpop.permute.xlu0 %1837
      %1839 = vrot.lane.b32.xlu0 %v1808, 12
      %v1840 = vpop.permute.xlu0 %1839
      %vm1857 = vcmask 130144
      %1858 = vst.msk [vmem:[#allocation3] sm:$0xff] %vm1857, %v1810
      %1859 = vst.msk [vmem:[#allocation3 + $0x8] sm:$0xff] %vm1857, %v1812
      %1860 = vst.msk [vmem:[#allocation3 + $0x10] sm:$0xff] %vm1857, %v1814
      %1861 = vst.msk [vmem:[#allocation3 + $0x18] sm:$0xff] %vm1857, %v1816
      %1862 = vst.msk [vmem:[#allocation3 + $0x20] sm:$0xff] %vm1857, %v1818
      %1863 = vst.msk [vmem:[#allocation3 + $0x28] sm:$0xff] %vm1857, %v1820
      %1864 = vst.msk [vmem:[#allocation3 + $0x30] sm:$0xff] %vm1857, %v1822
      %1865 = vst.msk [vmem:[#allocation3 + $0x38] sm:$0xff] %vm1857, %v1824
      %1866 = vst.msk [vmem:[#allocation3 + $0x40] sm:$0xff] %vm1857, %v1826
      %1867 = vst.msk [vmem:[#allocation3 + $0x48] sm:$0xff] %vm1857, %v1828
      %1868 = vst.msk [vmem:[#allocation3 + $0x50] sm:$0xff] %vm1857, %v1830
      %1869 = vst.msk [vmem:[#allocation3 + $0x58] sm:$0xff] %vm1857, %v1832
      %1870 = vst.msk [vmem:[#allocation3 + $0x60] sm:$0xff] %vm1857, %v1834
      %1871 = vst.msk [vmem:[#allocation3 + $0x68] sm:$0xff] %vm1857, %v1836
      %1872 = vst.msk [vmem:[#allocation3 + $0x70] sm:$0xff] %vm1857, %v1838
      %1873 = vst.msk [vmem:[#allocation3 + $0x78] sm:$0xff] %vm1857, %v1840
      %v1874 = vld [vmem:[%s713] sm:$0xf]
      %v1875 = vld [vmem:[%s713 + $0x4] sm:$0xf]
      %v1876 = vld [vmem:[%s713 + $0x8] sm:$0x1]
      %v1877 = vld [vmem:[%s713 + $0xc] sm:$0xf]
      %v1878 = vld [vmem:[%s713 + $0x10] sm:$0xf]
      %v1879 = vld [vmem:[%s713 + $0x14] sm:$0x1]
      %v1880 = vld [vmem:[%s713 + $0x18] sm:$0xf]
      %v1881 = vld [vmem:[%s713 + $0x1c] sm:$0xf]
      %v1882 = vld [vmem:[%s713 + $0x20] sm:$0x1]
      %v1883 = vld [vmem:[%s713 + $0x24] sm:$0xf]
      %v1884 = vld [vmem:[%s713 + $0x28] sm:$0xf]
      %v1885 = vld [vmem:[%s713 + $0x2c] sm:$0x1]
      %v1886 = vld [vmem:[%s713 + $0x30] sm:$0xf]
      %v1887 = vld [vmem:[%s713 + $0x34] sm:$0xf]
      %v1888 = vld [vmem:[%s713 + $0x38] sm:$0x1]
      %v1889 = vld [vmem:[%s713 + $0x3c] sm:$0xf]
      %v1890 = vld [vmem:[%s713 + $0x40] sm:$0xf]
      %v1891 = vld [vmem:[%s713 + $0x44] sm:$0x1]
      %v1892 = vld [vmem:[%s713 + $0x48] sm:$0xf]
      %v1893 = vld [vmem:[%s713 + $0x4c] sm:$0xf]
      %v1894 = vld [vmem:[%s713 + $0x50] sm:$0x1]
      %v1895 = vld [vmem:[%s713 + $0x54] sm:$0xf]
      %v1896 = vld [vmem:[%s713 + $0x58] sm:$0xf]
      %v1897 = vld [vmem:[%s713 + $0x5c] sm:$0x1]
      %v1898 = vld [vmem:[%s713 + $0x60] sm:$0xf]
      %v1899 = vld [vmem:[%s713 + $0x64] sm:$0xf]
      %v1900 = vld [vmem:[%s713 + $0x68] sm:$0x1]
      %v1901 = vld [vmem:[%s713 + $0x6c] sm:$0xf]
      %v1902 = vld [vmem:[%s713 + $0x70] sm:$0xf]
      %v1903 = vld [vmem:[%s713 + $0x74] sm:$0x1]
      %v1904 = vld [vmem:[%s713 + $0x78] sm:$0xf]
      %v1905 = vld [vmem:[%s713 + $0x7c] sm:$0xf]
      %v1906 = vld [vmem:[%s713 + $0x80] sm:$0x1]
      %v1907 = vld [vmem:[%s713 + $0x84] sm:$0xf]
      %v1908 = vld [vmem:[%s713 + $0x88] sm:$0xf]
      %v1909 = vld [vmem:[%s713 + $0x8c] sm:$0x1]
      %v1910 = vld [vmem:[%s713 + $0x90] sm:$0xf]
      %v1911 = vld [vmem:[%s713 + $0x94] sm:$0xf]
      %v1912 = vld [vmem:[%s713 + $0x98] sm:$0x1]
      %v1913 = vld [vmem:[%s713 + $0x9c] sm:$0xf]
      %v1914 = vld [vmem:[%s713 + $0xa0] sm:$0xf]
      %v1915 = vld [vmem:[%s713 + $0xa4] sm:$0x1]
      %v1916 = vld [vmem:[%s713 + $0xa8] sm:$0xf]
      %v1917 = vld [vmem:[%s713 + $0xac] sm:$0xf]
      %v1918 = vld [vmem:[%s713 + $0xb0] sm:$0x1]
      %v1919 = vld [vmem:[%s713 + $0xb4] sm:$0xf]
      %v1920 = vld [vmem:[%s713 + $0xb8] sm:$0xf]
      %v1921 = vld [vmem:[%s713 + $0xbc] sm:$0x1]
      %v1970 = vunpack.c.l.b16 %v1874
      %v1971 = vunpack.c.l.b16 %v1875
      %v1972 = vunpack.c.l.b16 %v1876
      %v1973 = vunpack.c.l.b16 %v1877
      %v1974 = vunpack.c.l.b16 %v1878
      %v1975 = vunpack.c.l.b16 %v1879
      %v1976 = vunpack.c.l.b16 %v1880
      %v1977 = vunpack.c.l.b16 %v1881
      %v1978 = vunpack.c.l.b16 %v1882
      %v1979 = vunpack.c.l.b16 %v1883
      %v1980 = vunpack.c.l.b16 %v1884
      %v1981 = vunpack.c.l.b16 %v1885
      %v1982 = vunpack.c.l.b16 %v1886
      %v1983 = vunpack.c.l.b16 %v1887
      %v1984 = vunpack.c.l.b16 %v1888
      %v1985 = vunpack.c.l.b16 %v1889
      %v1986 = vunpack.c.l.b16 %v1890
      %v1987 = vunpack.c.l.b16 %v1891
      %v1988 = vunpack.c.l.b16 %v1892
      %v1989 = vunpack.c.l.b16 %v1893
      %v1990 = vunpack.c.l.b16 %v1894
      %v1991 = vunpack.c.l.b16 %v1895
      %v1992 = vunpack.c.l.b16 %v1896
      %v1993 = vunpack.c.l.b16 %v1897
      %v1994 = vunpack.c.l.b16 %v1898
      %v1995 = vunpack.c.l.b16 %v1899
      %v1996 = vunpack.c.l.b16 %v1900
      %v1997 = vunpack.c.l.b16 %v1901
      %v1998 = vunpack.c.l.b16 %v1902
      %v1999 = vunpack.c.l.b16 %v1903
      %v2000 = vunpack.c.l.b16 %v1904
      %v2001 = vunpack.c.l.b16 %v1905
      %v2002 = vunpack.c.l.b16 %v1906
      %v2003 = vunpack.c.l.b16 %v1907
      %v2004 = vunpack.c.l.b16 %v1908
      %v2005 = vunpack.c.l.b16 %v1909
      %v2006 = vunpack.c.l.b16 %v1910
      %v2007 = vunpack.c.l.b16 %v1911
      %v2008 = vunpack.c.l.b16 %v1912
      %v2009 = vunpack.c.l.b16 %v1913
      %v2010 = vunpack.c.l.b16 %v1914
      %v2011 = vunpack.c.l.b16 %v1915
      %v2012 = vunpack.c.l.b16 %v1916
      %v2013 = vunpack.c.l.b16 %v1917
      %v2014 = vunpack.c.l.b16 %v1918
      %v2015 = vunpack.c.l.b16 %v1919
      %v2016 = vunpack.c.l.b16 %v1920
      %v2017 = vunpack.c.l.b16 %v1921
      %v2018 = vpack.c.b16 %v1971, %v1970
      %v2019 = vpack.c.b16 %v1972, %v1972
      %v2020 = vpack.c.b16 %v1974, %v1973
      %v2021 = vpack.c.b16 %v1975, %v1975
      %v2022 = vpack.c.b16 %v1977, %v1976
      %v2023 = vpack.c.b16 %v1978, %v1978
      %v2024 = vpack.c.b16 %v1980, %v1979
      %v2025 = vpack.c.b16 %v1981, %v1981
      %v2026 = vpack.c.b16 %v1983, %v1982
      %v2027 = vpack.c.b16 %v1984, %v1984
      %v2028 = vpack.c.b16 %v1986, %v1985
      %v2029 = vpack.c.b16 %v1987, %v1987
      %v2030 = vpack.c.b16 %v1989, %v1988
      %v2031 = vpack.c.b16 %v1990, %v1990
      %v2032 = vpack.c.b16 %v1992, %v1991
      %v2033 = vpack.c.b16 %v1993, %v1993
      %v2034 = vpack.c.b16 %v1995, %v1994
      %v2035 = vpack.c.b16 %v1996, %v1996
      %v2036 = vpack.c.b16 %v1998, %v1997
      %v2037 = vpack.c.b16 %v1999, %v1999
      %v2038 = vpack.c.b16 %v2001, %v2000
      %v2039 = vpack.c.b16 %v2002, %v2002
      %v2040 = vpack.c.b16 %v2004, %v2003
      %v2041 = vpack.c.b16 %v2005, %v2005
      %v2042 = vpack.c.b16 %v2007, %v2006
      %v2043 = vpack.c.b16 %v2008, %v2008
      %v2044 = vpack.c.b16 %v2010, %v2009
      %v2045 = vpack.c.b16 %v2011, %v2011
      %v2046 = vpack.c.b16 %v2013, %v2012
      %v2047 = vpack.c.b16 %v2014, %v2014
      %v2048 = vpack.c.b16 %v2016, %v2015
      %v2049 = vpack.c.b16 %v2017, %v2017
      %v2051 = vshrl.u32 %v2018, 16
      %v2053 = vshll.u32 %v2018, 16
      %v2055 = vrot.slane %v2053, 1
      %v2056 = vor.u32 %v2051, %v2055
      %v2058 = vshll.u32 %v2019, 16
      %v2060 = vrot.slane %v2058, 1
      %v2061 = vsel %vm1149, %v2056, %v2060
      %v2063 = vshrl.u32 %v2020, 16
      %v2065 = vshll.u32 %v2020, 16
      %v2067 = vrot.slane %v2065, 1
      %v2068 = vor.u32 %v2063, %v2067
      %v2070 = vshll.u32 %v2021, 16
      %v2072 = vrot.slane %v2070, 1
      %v2073 = vsel %vm1149, %v2068, %v2072
      %v2075 = vshrl.u32 %v2022, 16
      %v2077 = vshll.u32 %v2022, 16
      %v2079 = vrot.slane %v2077, 1
      %v2080 = vor.u32 %v2075, %v2079
      %v2082 = vshll.u32 %v2023, 16
      %v2084 = vrot.slane %v2082, 1
      %v2085 = vsel %vm1149, %v2080, %v2084
      %v2087 = vshrl.u32 %v2024, 16
      %v2089 = vshll.u32 %v2024, 16
      %v2091 = vrot.slane %v2089, 1
      %v2092 = vor.u32 %v2087, %v2091
      %v2094 = vshll.u32 %v2025, 16
      %v2096 = vrot.slane %v2094, 1
      %v2097 = vsel %vm1149, %v2092, %v2096
      %v2099 = vshrl.u32 %v2026, 16
      %v2101 = vshll.u32 %v2026, 16
      %v2103 = vrot.slane %v2101, 1
      %v2104 = vor.u32 %v2099, %v2103
      %v2106 = vshll.u32 %v2027, 16
      %v2108 = vrot.slane %v2106, 1
      %v2109 = vsel %vm1149, %v2104, %v2108
      %v2111 = vshrl.u32 %v2028, 16
      %v2113 = vshll.u32 %v2028, 16
      %v2115 = vrot.slane %v2113, 1
      %v2116 = vor.u32 %v2111, %v2115
      %v2118 = vshll.u32 %v2029, 16
      %v2120 = vrot.slane %v2118, 1
      %v2121 = vsel %vm1149, %v2116, %v2120
      %v2123 = vshrl.u32 %v2030, 16
      %v2125 = vshll.u32 %v2030, 16
      %v2127 = vrot.slane %v2125, 1
      %v2128 = vor.u32 %v2123, %v2127
      %v2130 = vshll.u32 %v2031, 16
      %v2132 = vrot.slane %v2130, 1
      %v2133 = vsel %vm1149, %v2128, %v2132
      %v2135 = vshrl.u32 %v2032, 16
      %v2137 = vshll.u32 %v2032, 16
      %v2139 = vrot.slane %v2137, 1
      %v2140 = vor.u32 %v2135, %v2139
      %v2142 = vshll.u32 %v2033, 16
      %v2144 = vrot.slane %v2142, 1
      %v2145 = vsel %vm1149, %v2140, %v2144
      %v2147 = vshrl.u32 %v2034, 16
      %v2149 = vshll.u32 %v2034, 16
      %v2151 = vrot.slane %v2149, 1
      %v2152 = vor.u32 %v2147, %v2151
      %v2154 = vshll.u32 %v2035, 16
      %v2156 = vrot.slane %v2154, 1
      %v2157 = vsel %vm1149, %v2152, %v2156
      %v2159 = vshrl.u32 %v2036, 16
      %v2161 = vshll.u32 %v2036, 16
      %v2163 = vrot.slane %v2161, 1
      %v2164 = vor.u32 %v2159, %v2163
      %v2166 = vshll.u32 %v2037, 16
      %v2168 = vrot.slane %v2166, 1
      %v2169 = vsel %vm1149, %v2164, %v2168
      %v2171 = vshrl.u32 %v2038, 16
      %v2173 = vshll.u32 %v2038, 16
      %v2175 = vrot.slane %v2173, 1
      %v2176 = vor.u32 %v2171, %v2175
      %v2178 = vshll.u32 %v2039, 16
      %v2180 = vrot.slane %v2178, 1
      %v2181 = vsel %vm1149, %v2176, %v2180
      %v2183 = vshrl.u32 %v2040, 16
      %v2185 = vshll.u32 %v2040, 16
      %v2187 = vrot.slane %v2185, 1
      %v2188 = vor.u32 %v2183, %v2187
      %v2190 = vshll.u32 %v2041, 16
      %v2192 = vrot.slane %v2190, 1
      %v2193 = vsel %vm1149, %v2188, %v2192
      %v2195 = vshrl.u32 %v2042, 16
      %v2197 = vshll.u32 %v2042, 16
      %v2199 = vrot.slane %v2197, 1
      %v2200 = vor.u32 %v2195, %v2199
      %v2202 = vshll.u32 %v2043, 16
      %v2204 = vrot.slane %v2202, 1
      %v2205 = vsel %vm1149, %v2200, %v2204
      %v2207 = vshrl.u32 %v2044, 16
      %v2209 = vshll.u32 %v2044, 16
      %v2211 = vrot.slane %v2209, 1
      %v2212 = vor.u32 %v2207, %v2211
      %v2214 = vshll.u32 %v2045, 16
      %v2216 = vrot.slane %v2214, 1
      %v2217 = vsel %vm1149, %v2212, %v2216
      %v2219 = vshrl.u32 %v2046, 16
      %v2221 = vshll.u32 %v2046, 16
      %v2223 = vrot.slane %v2221, 1
      %v2224 = vor.u32 %v2219, %v2223
      %v2226 = vshll.u32 %v2047, 16
      %v2228 = vrot.slane %v2226, 1
      %v2229 = vsel %vm1149, %v2224, %v2228
      %v2231 = vshrl.u32 %v2048, 16
      %v2233 = vshll.u32 %v2048, 16
      %v2235 = vrot.slane %v2233, 1
      %v2236 = vor.u32 %v2231, %v2235
      %v2238 = vshll.u32 %v2049, 16
      %v2240 = vrot.slane %v2238, 1
      %v2241 = vsel %vm1149, %v2236, %v2240
      %2242 = vrot.lane.b32.xlu0 %v2061, 16
      %v2243 = vpop.permute.xlu0 %2242
      %2244 = vrot.lane.b32.xlu0 %v2073, 16
      %v2245 = vpop.permute.xlu0 %2244
      %2246 = vrot.lane.b32.xlu0 %v2085, 16
      %v2247 = vpop.permute.xlu0 %2246
      %2248 = vrot.lane.b32.xlu0 %v2097, 16
      %v2249 = vpop.permute.xlu0 %2248
      %2250 = vrot.lane.b32.xlu0 %v2109, 16
      %v2251 = vpop.permute.xlu0 %2250
      %2252 = vrot.lane.b32.xlu0 %v2121, 16
      %v2253 = vpop.permute.xlu0 %2252
      %2254 = vrot.lane.b32.xlu0 %v2133, 16
      %v2255 = vpop.permute.xlu0 %2254
      %2256 = vrot.lane.b32.xlu0 %v2145, 16
      %v2257 = vpop.permute.xlu0 %2256
      %2258 = vrot.lane.b32.xlu0 %v2157, 16
      %v2259 = vpop.permute.xlu0 %2258
      %2260 = vrot.lane.b32.xlu0 %v2169, 16
      %v2261 = vpop.permute.xlu0 %2260
      %2262 = vrot.lane.b32.xlu0 %v2181, 16
      %v2263 = vpop.permute.xlu0 %2262
      %2264 = vrot.lane.b32.xlu0 %v2193, 16
      %v2265 = vpop.permute.xlu0 %2264
      %2266 = vrot.lane.b32.xlu0 %v2205, 16
      %v2267 = vpop.permute.xlu0 %2266
      %2268 = vrot.lane.b32.xlu0 %v2217, 16
      %v2269 = vpop.permute.xlu0 %2268
      %2270 = vrot.lane.b32.xlu0 %v2229, 16
      %v2271 = vpop.permute.xlu0 %2270
      %2272 = vrot.lane.b32.xlu0 %v2241, 16
      %v2273 = vpop.permute.xlu0 %2272
      %vm2290 = vcmask 162944
      %2291 = vst.msk [vmem:[#allocation3] sm:$0xff] %vm2290, %v2243
      %2292 = vst.msk [vmem:[#allocation3 + $0x8] sm:$0xff] %vm2290, %v2245
      %2293 = vst.msk [vmem:[#allocation3 + $0x10] sm:$0xff] %vm2290, %v2247
      %2294 = vst.msk [vmem:[#allocation3 + $0x18] sm:$0xff] %vm2290, %v2249
      %2295 = vst.msk [vmem:[#allocation3 + $0x20] sm:$0xff] %vm2290, %v2251
      %2296 = vst.msk [vmem:[#allocation3 + $0x28] sm:$0xff] %vm2290, %v2253
      %2297 = vst.msk [vmem:[#allocation3 + $0x30] sm:$0xff] %vm2290, %v2255
      %2298 = vst.msk [vmem:[#allocation3 + $0x38] sm:$0xff] %vm2290, %v2257
      %2299 = vst.msk [vmem:[#allocation3 + $0x40] sm:$0xff] %vm2290, %v2259
      %2300 = vst.msk [vmem:[#allocation3 + $0x48] sm:$0xff] %vm2290, %v2261
      %2301 = vst.msk [vmem:[#allocation3 + $0x50] sm:$0xff] %vm2290, %v2263
      %2302 = vst.msk [vmem:[#allocation3 + $0x58] sm:$0xff] %vm2290, %v2265
      %2303 = vst.msk [vmem:[#allocation3 + $0x60] sm:$0xff] %vm2290, %v2267
      %2304 = vst.msk [vmem:[#allocation3 + $0x68] sm:$0xff] %vm2290, %v2269
      %2305 = vst.msk [vmem:[#allocation3 + $0x70] sm:$0xff] %vm2290, %v2271
      %2306 = vst.msk [vmem:[#allocation3 + $0x78] sm:$0xff] %vm2290, %v2273
      %v2307 = vld [vmem:[%s713] sm:$0xe]
      %v2308 = vld [vmem:[%s713 + $0x4] sm:$0xf]
      %v2309 = vld [vmem:[%s713 + $0x8] sm:$0x1]
      %v2310 = vld [vmem:[%s713 + $0xc] sm:$0xe]
      %v2311 = vld [vmem:[%s713 + $0x10] sm:$0xf]
      %v2312 = vld [vmem:[%s713 + $0x14] sm:$0x1]
      %v2313 = vld [vmem:[%s713 + $0x18] sm:$0xe]
      %v2314 = vld [vmem:[%s713 + $0x1c] sm:$0xf]
      %v2315 = vld [vmem:[%s713 + $0x20] sm:$0x1]
      %v2316 = vld [vmem:[%s713 + $0x24] sm:$0xe]
      %v2317 = vld [vmem:[%s713 + $0x28] sm:$0xf]
      %v2318 = vld [vmem:[%s713 + $0x2c] sm:$0x1]
      %v2319 = vld [vmem:[%s713 + $0x30] sm:$0xe]
      %v2320 = vld [vmem:[%s713 + $0x34] sm:$0xf]
      %v2321 = vld [vmem:[%s713 + $0x38] sm:$0x1]
      %v2322 = vld [vmem:[%s713 + $0x3c] sm:$0xe]
      %v2323 = vld [vmem:[%s713 + $0x40] sm:$0xf]
      %v2324 = vld [vmem:[%s713 + $0x44] sm:$0x1]
      %v2325 = vld [vmem:[%s713 + $0x48] sm:$0xe]
      %v2326 = vld [vmem:[%s713 + $0x4c] sm:$0xf]
      %v2327 = vld [vmem:[%s713 + $0x50] sm:$0x1]
      %v2328 = vld [vmem:[%s713 + $0x54] sm:$0xe]
      %v2329 = vld [vmem:[%s713 + $0x58] sm:$0xf]
      %v2330 = vld [vmem:[%s713 + $0x5c] sm:$0x1]
      %v2331 = vld [vmem:[%s713 + $0x60] sm:$0xe]
      %v2332 = vld [vmem:[%s713 + $0x64] sm:$0xf]
      %v2333 = vld [vmem:[%s713 + $0x68] sm:$0x1]
      %v2334 = vld [vmem:[%s713 + $0x6c] sm:$0xe]
      %v2335 = vld [vmem:[%s713 + $0x70] sm:$0xf]
      %v2336 = vld [vmem:[%s713 + $0x74] sm:$0x1]
      %v2337 = vld [vmem:[%s713 + $0x78] sm:$0xe]
      %v2338 = vld [vmem:[%s713 + $0x7c] sm:$0xf]
      %v2339 = vld [vmem:[%s713 + $0x80] sm:$0x1]
      %v2340 = vld [vmem:[%s713 + $0x84] sm:$0xe]
      %v2341 = vld [vmem:[%s713 + $0x88] sm:$0xf]
      %v2342 = vld [vmem:[%s713 + $0x8c] sm:$0x1]
      %v2343 = vld [vmem:[%s713 + $0x90] sm:$0xe]
      %v2344 = vld [vmem:[%s713 + $0x94] sm:$0xf]
      %v2345 = vld [vmem:[%s713 + $0x98] sm:$0x1]
      %v2346 = vld [vmem:[%s713 + $0x9c] sm:$0xe]
      %v2347 = vld [vmem:[%s713 + $0xa0] sm:$0xf]
      %v2348 = vld [vmem:[%s713 + $0xa4] sm:$0x1]
      %v2349 = vld [vmem:[%s713 + $0xa8] sm:$0xe]
      %v2350 = vld [vmem:[%s713 + $0xac] sm:$0xf]
      %v2351 = vld [vmem:[%s713 + $0xb0] sm:$0x1]
      %v2352 = vld [vmem:[%s713 + $0xb4] sm:$0xe]
      %v2353 = vld [vmem:[%s713 + $0xb8] sm:$0xf]
      %v2354 = vld [vmem:[%s713 + $0xbc] sm:$0x1]
      %v2403 = vunpack.c.l.b16 %v2307
      %v2404 = vunpack.c.l.b16 %v2308
      %v2405 = vunpack.c.l.b16 %v2309
      %v2406 = vunpack.c.l.b16 %v2310
      %v2407 = vunpack.c.l.b16 %v2311
      %v2408 = vunpack.c.l.b16 %v2312
      %v2409 = vunpack.c.l.b16 %v2313
      %v2410 = vunpack.c.l.b16 %v2314
      %v2411 = vunpack.c.l.b16 %v2315
      %v2412 = vunpack.c.l.b16 %v2316
      %v2413 = vunpack.c.l.b16 %v2317
      %v2414 = vunpack.c.l.b16 %v2318
      %v2415 = vunpack.c.l.b16 %v2319
      %v2416 = vunpack.c.l.b16 %v2320
      %v2417 = vunpack.c.l.b16 %v2321
      %v2418 = vunpack.c.l.b16 %v2322
      %v2419 = vunpack.c.l.b16 %v2323
      %v2420 = vunpack.c.l.b16 %v2324
      %v2421 = vunpack.c.l.b16 %v2325
      %v2422 = vunpack.c.l.b16 %v2326
      %v2423 = vunpack.c.l.b16 %v2327
      %v2424 = vunpack.c.l.b16 %v2328
      %v2425 = vunpack.c.l.b16 %v2329
      %v2426 = vunpack.c.l.b16 %v2330
      %v2427 = vunpack.c.l.b16 %v2331
      %v2428 = vunpack.c.l.b16 %v2332
      %v2429 = vunpack.c.l.b16 %v2333
      %v2430 = vunpack.c.l.b16 %v2334
      %v2431 = vunpack.c.l.b16 %v2335
      %v2432 = vunpack.c.l.b16 %v2336
      %v2433 = vunpack.c.l.b16 %v2337
      %v2434 = vunpack.c.l.b16 %v2338
      %v2435 = vunpack.c.l.b16 %v2339
      %v2436 = vunpack.c.l.b16 %v2340
      %v2437 = vunpack.c.l.b16 %v2341
      %v2438 = vunpack.c.l.b16 %v2342
      %v2439 = vunpack.c.l.b16 %v2343
      %v2440 = vunpack.c.l.b16 %v2344
      %v2441 = vunpack.c.l.b16 %v2345
      %v2442 = vunpack.c.l.b16 %v2346
      %v2443 = vunpack.c.l.b16 %v2347
      %v2444 = vunpack.c.l.b16 %v2348
      %v2445 = vunpack.c.l.b16 %v2349
      %v2446 = vunpack.c.l.b16 %v2350
      %v2447 = vunpack.c.l.b16 %v2351
      %v2448 = vunpack.c.l.b16 %v2352
      %v2449 = vunpack.c.l.b16 %v2353
      %v2450 = vunpack.c.l.b16 %v2354
      %v2451 = vpack.c.b16 %v2404, %v2403
      %v2452 = vpack.c.b16 %v2405, %v2405
      %v2453 = vpack.c.b16 %v2407, %v2406
      %v2454 = vpack.c.b16 %v2408, %v2408
      %v2455 = vpack.c.b16 %v2410, %v2409
      %v2456 = vpack.c.b16 %v2411, %v2411
      %v2457 = vpack.c.b16 %v2413, %v2412
      %v2458 = vpack.c.b16 %v2414, %v2414
      %v2459 = vpack.c.b16 %v2416, %v2415
      %v2460 = vpack.c.b16 %v2417, %v2417
      %v2461 = vpack.c.b16 %v2419, %v2418
      %v2462 = vpack.c.b16 %v2420, %v2420
      %v2463 = vpack.c.b16 %v2422, %v2421
      %v2464 = vpack.c.b16 %v2423, %v2423
      %v2465 = vpack.c.b16 %v2425, %v2424
      %v2466 = vpack.c.b16 %v2426, %v2426
      %v2467 = vpack.c.b16 %v2428, %v2427
      %v2468 = vpack.c.b16 %v2429, %v2429
      %v2469 = vpack.c.b16 %v2431, %v2430
      %v2470 = vpack.c.b16 %v2432, %v2432
      %v2471 = vpack.c.b16 %v2434, %v2433
      %v2472 = vpack.c.b16 %v2435, %v2435
      %v2473 = vpack.c.b16 %v2437, %v2436
      %v2474 = vpack.c.b16 %v2438, %v2438
      %v2475 = vpack.c.b16 %v2440, %v2439
      %v2476 = vpack.c.b16 %v2441, %v2441
      %v2477 = vpack.c.b16 %v2443, %v2442
      %v2478 = vpack.c.b16 %v2444, %v2444
      %v2479 = vpack.c.b16 %v2446, %v2445
      %v2480 = vpack.c.b16 %v2447, %v2447
      %v2481 = vpack.c.b16 %v2449, %v2448
      %v2482 = vpack.c.b16 %v2450, %v2450
      %v2483 = vrot.slane %v2451, 1
      %v2484 = vrot.slane %v2452, 1
      %v2485 = vsel %vm1583, %v2483, %v2484
      %v2486 = vrot.slane %v2453, 1
      %v2487 = vrot.slane %v2454, 1
      %v2488 = vsel %vm1583, %v2486, %v2487
      %v2489 = vrot.slane %v2455, 1
      %v2490 = vrot.slane %v2456, 1
      %v2491 = vsel %vm1583, %v2489, %v2490
      %v2492 = vrot.slane %v2457, 1
      %v2493 = vrot.slane %v2458, 1
      %v2494 = vsel %vm1583, %v2492, %v2493
      %v2495 = vrot.slane %v2459, 1
      %v2496 = vrot.slane %v2460, 1
      %v2497 = vsel %vm1583, %v2495, %v2496
      %v2498 = vrot.slane %v2461, 1
      %v2499 = vrot.slane %v2462, 1
      %v2500 = vsel %vm1583, %v2498, %v2499
      %v2501 = vrot.slane %v2463, 1
      %v2502 = vrot.slane %v2464, 1
      %v2503 = vsel %vm1583, %v2501, %v2502
      %v2504 = vrot.slane %v2465, 1
      %v2505 = vrot.slane %v2466, 1
      %v2506 = vsel %vm1583, %v2504, %v2505
      %v2507 = vrot.slane %v2467, 1
      %v2508 = vrot.slane %v2468, 1
      %v2509 = vsel %vm1583, %v2507, %v2508
      %v2510 = vrot.slane %v2469, 1
      %v2511 = vrot.slane %v2470, 1
      %v2512 = vsel %vm1583, %v2510, %v2511
      %v2513 = vrot.slane %v2471, 1
      %v2514 = vrot.slane %v2472, 1
      %v2515 = vsel %vm1583, %v2513, %v2514
      %v2516 = vrot.slane %v2473, 1
      %v2517 = vrot.slane %v2474, 1
      %v2518 = vsel %vm1583, %v2516, %v2517
      %v2519 = vrot.slane %v2475, 1
      %v2520 = vrot.slane %v2476, 1
      %v2521 = vsel %vm1583, %v2519, %v2520
      %v2522 = vrot.slane %v2477, 1
      %v2523 = vrot.slane %v2478, 1
      %v2524 = vsel %vm1583, %v2522, %v2523
      %v2525 = vrot.slane %v2479, 1
      %v2526 = vrot.slane %v2480, 1
      %v2527 = vsel %vm1583, %v2525, %v2526
      %v2528 = vrot.slane %v2481, 1
      %v2529 = vrot.slane %v2482, 1
      %v2530 = vsel %vm1583, %v2528, %v2529
      %2531 = vrot.lane.b32.xlu0 %v2485, 20
      %v2532 = vpop.permute.xlu0 %2531
      %2533 = vrot.lane.b32.xlu0 %v2488, 20
      %v2534 = vpop.permute.xlu0 %2533
      %2535 = vrot.lane.b32.xlu0 %v2491, 20
      %v2536 = vpop.permute.xlu0 %2535
      %2537 = vrot.lane.b32.xlu0 %v2494, 20
      %v2538 = vpop.permute.xlu0 %2537
      %2539 = vrot.lane.b32.xlu0 %v2497, 20
      %v2540 = vpop.permute.xlu0 %2539
      %2541 = vrot.lane.b32.xlu0 %v2500, 20
      %v2542 = vpop.permute.xlu0 %2541
      %2543 = vrot.lane.b32.xlu0 %v2503, 20
      %v2544 = vpop.permute.xlu0 %2543
      %2545 = vrot.lane.b32.xlu0 %v2506, 20
      %v2546 = vpop.permute.xlu0 %2545
      %2547 = vrot.lane.b32.xlu0 %v2509, 20
      %v2548 = vpop.permute.xlu0 %2547
      %2549 = vrot.lane.b32.xlu0 %v2512, 20
      %v2550 = vpop.permute.xlu0 %2549
      %2551 = vrot.lane.b32.xlu0 %v2515, 20
      %v2552 = vpop.permute.xlu0 %2551
      %2553 = vrot.lane.b32.xlu0 %v2518, 20
      %v2554 = vpop.permute.xlu0 %2553
      %2555 = vrot.lane.b32.xlu0 %v2521, 20
      %v2556 = vpop.permute.xlu0 %2555
      %2557 = vrot.lane.b32.xlu0 %v2524, 20
      %v2558 = vpop.permute.xlu0 %2557
      %2559 = vrot.lane.b32.xlu0 %v2527, 20
      %v2560 = vpop.permute.xlu0 %2559
      %2561 = vrot.lane.b32.xlu0 %v2530, 20
      %v2562 = vpop.permute.xlu0 %2561
      %vm2579 = vcmask 195744
      %2580 = vst.msk [vmem:[#allocation3] sm:$0xff] %vm2579, %v2532
      %2581 = vst.msk [vmem:[#allocation3 + $0x8] sm:$0xff] %vm2579, %v2534
      %2582 = vst.msk [vmem:[#allocation3 + $0x10] sm:$0xff] %vm2579, %v2536
      %2583 = vst.msk [vmem:[#allocation3 + $0x18] sm:$0xff] %vm2579, %v2538
      %2584 = vst.msk [vmem:[#allocation3 + $0x20] sm:$0xff] %vm2579, %v2540
      %2585 = vst.msk [vmem:[#allocation3 + $0x28] sm:$0xff] %vm2579, %v2542
      %2586 = vst.msk [vmem:[#allocation3 + $0x30] sm:$0xff] %vm2579, %v2544
      %2587 = vst.msk [vmem:[#allocation3 + $0x38] sm:$0xff] %vm2579, %v2546
      %2588 = vst.msk [vmem:[#allocation3 + $0x40] sm:$0xff] %vm2579, %v2548
      %2589 = vst.msk [vmem:[#allocation3 + $0x48] sm:$0xff] %vm2579, %v2550
      %2590 = vst.msk [vmem:[#allocation3 + $0x50] sm:$0xff] %vm2579, %v2552
      %2591 = vst.msk [vmem:[#allocation3 + $0x58] sm:$0xff] %vm2579, %v2554
      %2592 = vst.msk [vmem:[#allocation3 + $0x60] sm:$0xff] %vm2579, %v2556
      %2593 = vst.msk [vmem:[#allocation3 + $0x68] sm:$0xff] %vm2579, %v2558
      %2594 = vst.msk [vmem:[#allocation3 + $0x70] sm:$0xff] %vm2579, %v2560
      %2595 = vst.msk [vmem:[#allocation3 + $0x78] sm:$0xff] %vm2579, %v2562
      %s2596 = scalar_lea.vmem [#allocation2], 24
      %v2597 = vld [vmem:[%s2596] sm:$0xf]
      %v2598 = vld [vmem:[%s2596 + $0x4] sm:$0xf]
      %v2599 = vld [vmem:[%s2596 + $0xc] sm:$0xf]
      %v2600 = vld [vmem:[%s2596 + $0x10] sm:$0xf]
      %v2601 = vld [vmem:[%s2596 + $0x18] sm:$0xf]
      %v2602 = vld [vmem:[%s2596 + $0x1c] sm:$0xf]
      %v2603 = vld [vmem:[%s2596 + $0x24] sm:$0xf]
      %v2604 = vld [vmem:[%s2596 + $0x28] sm:$0xf]
      %v2605 = vld [vmem:[%s2596 + $0x30] sm:$0xf]
      %v2606 = vld [vmem:[%s2596 + $0x34] sm:$0xf]
      %v2607 = vld [vmem:[%s2596 + $0x3c] sm:$0xf]
      %v2608 = vld [vmem:[%s2596 + $0x40] sm:$0xf]
      %v2609 = vld [vmem:[%s2596 + $0x48] sm:$0xf]
      %v2610 = vld [vmem:[%s2596 + $0x4c] sm:$0xf]
      %v2611 = vld [vmem:[%s2596 + $0x54] sm:$0xf]
      %v2612 = vld [vmem:[%s2596 + $0x58] sm:$0xf]
      %v2613 = vld [vmem:[%s2596 + $0x60] sm:$0xf]
      %v2614 = vld [vmem:[%s2596 + $0x64] sm:$0xf]
      %v2615 = vld [vmem:[%s2596 + $0x6c] sm:$0xf]
      %v2616 = vld [vmem:[%s2596 + $0x70] sm:$0xf]
      %v2617 = vld [vmem:[%s2596 + $0x78] sm:$0xf]
      %v2618 = vld [vmem:[%s2596 + $0x7c] sm:$0xf]
      %v2619 = vld [vmem:[%s2596 + $0x84] sm:$0xf]
      %v2620 = vld [vmem:[%s2596 + $0x88] sm:$0xf]
      %v2621 = vld [vmem:[%s2596 + $0x90] sm:$0xf]
      %v2622 = vld [vmem:[%s2596 + $0x94] sm:$0xf]
      %v2623 = vld [vmem:[%s2596 + $0x9c] sm:$0xf]
      %v2624 = vld [vmem:[%s2596 + $0xa0] sm:$0xf]
      %v2625 = vld [vmem:[%s2596 + $0xa8] sm:$0xf]
      %v2626 = vld [vmem:[%s2596 + $0xac] sm:$0xf]
      %v2627 = vld [vmem:[%s2596 + $0xb4] sm:$0xf]
      %v2628 = vld [vmem:[%s2596 + $0xb8] sm:$0xf]
      %v2661 = vunpack.c.l.b16 %v2597
      %v2662 = vunpack.c.l.b16 %v2598
      %v2663 = vunpack.c.l.b16 %v2599
      %v2664 = vunpack.c.l.b16 %v2600
      %v2665 = vunpack.c.l.b16 %v2601
      %v2666 = vunpack.c.l.b16 %v2602
      %v2667 = vunpack.c.l.b16 %v2603
      %v2668 = vunpack.c.l.b16 %v2604
      %v2669 = vunpack.c.l.b16 %v2605
      %v2670 = vunpack.c.l.b16 %v2606
      %v2671 = vunpack.c.l.b16 %v2607
      %v2672 = vunpack.c.l.b16 %v2608
      %v2673 = vunpack.c.l.b16 %v2609
      %v2674 = vunpack.c.l.b16 %v2610
      %v2675 = vunpack.c.l.b16 %v2611
      %v2676 = vunpack.c.l.b16 %v2612
      %v2677 = vunpack.c.l.b16 %v2613
      %v2678 = vunpack.c.l.b16 %v2614
      %v2679 = vunpack.c.l.b16 %v2615
      %v2680 = vunpack.c.l.b16 %v2616
      %v2681 = vunpack.c.l.b16 %v2617
      %v2682 = vunpack.c.l.b16 %v2618
      %v2683 = vunpack.c.l.b16 %v2619
      %v2684 = vunpack.c.l.b16 %v2620
      %v2685 = vunpack.c.l.b16 %v2621
      %v2686 = vunpack.c.l.b16 %v2622
      %v2687 = vunpack.c.l.b16 %v2623
      %v2688 = vunpack.c.l.b16 %v2624
      %v2689 = vunpack.c.l.b16 %v2625
      %v2690 = vunpack.c.l.b16 %v2626
      %v2691 = vunpack.c.l.b16 %v2627
      %v2692 = vunpack.c.l.b16 %v2628
      %v2693 = vpack.c.b16 %v2662, %v2661
      %v2694 = vpack.c.b16 %v2664, %v2663
      %v2695 = vpack.c.b16 %v2666, %v2665
      %v2696 = vpack.c.b16 %v2668, %v2667
      %v2697 = vpack.c.b16 %v2670, %v2669
      %v2698 = vpack.c.b16 %v2672, %v2671
      %v2699 = vpack.c.b16 %v2674, %v2673
      %v2700 = vpack.c.b16 %v2676, %v2675
      %v2701 = vpack.c.b16 %v2678, %v2677
      %v2702 = vpack.c.b16 %v2680, %v2679
      %v2703 = vpack.c.b16 %v2682, %v2681
      %v2704 = vpack.c.b16 %v2684, %v2683
      %v2705 = vpack.c.b16 %v2686, %v2685
      %v2706 = vpack.c.b16 %v2688, %v2687
      %v2707 = vpack.c.b16 %v2690, %v2689
      %v2708 = vpack.c.b16 %v2692, %v2691
      %2709 = vrot.lane.b32.xlu0 %v2693, 24
      %v2710 = vpop.permute.xlu0 %2709
      %2711 = vrot.lane.b32.xlu0 %v2694, 24
      %v2712 = vpop.permute.xlu0 %2711
      %2713 = vrot.lane.b32.xlu0 %v2695, 24
      %v2714 = vpop.permute.xlu0 %2713
      %2715 = vrot.lane.b32.xlu0 %v2696, 24
      %v2716 = vpop.permute.xlu0 %2715
      %2717 = vrot.lane.b32.xlu0 %v2697, 24
      %v2718 = vpop.permute.xlu0 %2717
      %2719 = vrot.lane.b32.xlu0 %v2698, 24
      %v2720 = vpop.permute.xlu0 %2719
      %2721 = vrot.lane.b32.xlu0 %v2699, 24
      %v2722 = vpop.permute.xlu0 %2721
      %2723 = vrot.lane.b32.xlu0 %v2700, 24
      %v2724 = vpop.permute.xlu0 %2723
      %2725 = vrot.lane.b32.xlu0 %v2701, 24
      %v2726 = vpop.permute.xlu0 %2725
      %2727 = vrot.lane.b32.xlu0 %v2702, 24
      %v2728 = vpop.permute.xlu0 %2727
      %2729 = vrot.lane.b32.xlu0 %v2703, 24
      %v2730 = vpop.permute.xlu0 %2729
      %2731 = vrot.lane.b32.xlu0 %v2704, 24
      %v2732 = vpop.permute.xlu0 %2731
      %2733 = vrot.lane.b32.xlu0 %v2705, 24
      %v2734 = vpop.permute.xlu0 %2733
      %2735 = vrot.lane.b32.xlu0 %v2706, 24
      %v2736 = vpop.permute.xlu0 %2735
      %2737 = vrot.lane.b32.xlu0 %v2707, 24
      %v2738 = vpop.permute.xlu0 %2737
      %2739 = vrot.lane.b32.xlu0 %v2708, 24
      %v2740 = vpop.permute.xlu0 %2739
      %vm2757 = vcmask 228544
      %2758 = vst.msk [vmem:[#allocation3] sm:$0xff] %vm2757, %v2710
      %2759 = vst.msk [vmem:[#allocation3 + $0x8] sm:$0xff] %vm2757, %v2712
      %2760 = vst.msk [vmem:[#allocation3 + $0x10] sm:$0xff] %vm2757, %v2714
      %2761 = vst.msk [vmem:[#allocation3 + $0x18] sm:$0xff] %vm2757, %v2716
      %2762 = vst.msk [vmem:[#allocation3 + $0x20] sm:$0xff] %vm2757, %v2718
      %2763 = vst.msk [vmem:[#allocation3 + $0x28] sm:$0xff] %vm2757, %v2720
      %2764 = vst.msk [vmem:[#allocation3 + $0x30] sm:$0xff] %vm2757, %v2722
      %2765 = vst.msk [vmem:[#allocation3 + $0x38] sm:$0xff] %vm2757, %v2724
      %2766 = vst.msk [vmem:[#allocation3 + $0x40] sm:$0xff] %vm2757, %v2726
      %2767 = vst.msk [vmem:[#allocation3 + $0x48] sm:$0xff] %vm2757, %v2728
      %2768 = vst.msk [vmem:[#allocation3 + $0x50] sm:$0xff] %vm2757, %v2730
      %2769 = vst.msk [vmem:[#allocation3 + $0x58] sm:$0xff] %vm2757, %v2732
      %2770 = vst.msk [vmem:[#allocation3 + $0x60] sm:$0xff] %vm2757, %v2734
      %2771 = vst.msk [vmem:[#allocation3 + $0x68] sm:$0xff] %vm2757, %v2736
      %2772 = vst.msk [vmem:[#allocation3 + $0x70] sm:$0xff] %vm2757, %v2738
      %2773 = vst.msk [vmem:[#allocation3 + $0x78] sm:$0xff] %vm2757, %v2740
      %v2774 = vld [vmem:[%s2596] sm:$0xf]
      %v2775 = vld [vmem:[%s2596 + $0x4] sm:$0xf]
      %v2776 = vld [vmem:[%s2596 + $0x8] sm:$0x1]
      %v2777 = vld [vmem:[%s2596 + $0xc] sm:$0xf]
      %v2778 = vld [vmem:[%s2596 + $0x10] sm:$0xf]
      %v2779 = vld [vmem:[%s2596 + $0x14] sm:$0x1]
      %v2780 = vld [vmem:[%s2596 + $0x18] sm:$0xf]
      %v2781 = vld [vmem:[%s2596 + $0x1c] sm:$0xf]
      %v2782 = vld [vmem:[%s2596 + $0x20] sm:$0x1]
      %v2783 = vld [vmem:[%s2596 + $0x24] sm:$0xf]
      %v2784 = vld [vmem:[%s2596 + $0x28] sm:$0xf]
      %v2785 = vld [vmem:[%s2596 + $0x2c] sm:$0x1]
      %v2786 = vld [vmem:[%s2596 + $0x30] sm:$0xf]
      %v2787 = vld [vmem:[%s2596 + $0x34] sm:$0xf]
      %v2788 = vld [vmem:[%s2596 + $0x38] sm:$0x1]
      %v2789 = vld [vmem:[%s2596 + $0x3c] sm:$0xf]
      %v2790 = vld [vmem:[%s2596 + $0x40] sm:$0xf]
      %v2791 = vld [vmem:[%s2596 + $0x44] sm:$0x1]
      %v2792 = vld [vmem:[%s2596 + $0x48] sm:$0xf]
      %v2793 = vld [vmem:[%s2596 + $0x4c] sm:$0xf]
      %v2794 = vld [vmem:[%s2596 + $0x50] sm:$0x1]
      %v2795 = vld [vmem:[%s2596 + $0x54] sm:$0xf]
      %v2796 = vld [vmem:[%s2596 + $0x58] sm:$0xf]
      %v2797 = vld [vmem:[%s2596 + $0x5c] sm:$0x1]
      %v2798 = vld [vmem:[%s2596 + $0x60] sm:$0xf]
      %v2799 = vld [vmem:[%s2596 + $0x64] sm:$0xf]
      %v2800 = vld [vmem:[%s2596 + $0x68] sm:$0x1]
      %v2801 = vld [vmem:[%s2596 + $0x6c] sm:$0xf]
      %v2802 = vld [vmem:[%s2596 + $0x70] sm:$0xf]
      %v2803 = vld [vmem:[%s2596 + $0x74] sm:$0x1]
      %v2804 = vld [vmem:[%s2596 + $0x78] sm:$0xf]
      %v2805 = vld [vmem:[%s2596 + $0x7c] sm:$0xf]
      %v2806 = vld [vmem:[%s2596 + $0x80] sm:$0x1]
      %v2807 = vld [vmem:[%s2596 + $0x84] sm:$0xf]
      %v2808 = vld [vmem:[%s2596 + $0x88] sm:$0xf]
      %v2809 = vld [vmem:[%s2596 + $0x8c] sm:$0x1]
      %v2810 = vld [vmem:[%s2596 + $0x90] sm:$0xf]
      %v2811 = vld [vmem:[%s2596 + $0x94] sm:$0xf]
      %v2812 = vld [vmem:[%s2596 + $0x98] sm:$0x1]
      %v2813 = vld [vmem:[%s2596 + $0x9c] sm:$0xf]
      %v2814 = vld [vmem:[%s2596 + $0xa0] sm:$0xf]
      %v2815 = vld [vmem:[%s2596 + $0xa4] sm:$0x1]
      %v2816 = vld [vmem:[%s2596 + $0xa8] sm:$0xf]
      %v2817 = vld [vmem:[%s2596 + $0xac] sm:$0xf]
      %v2818 = vld [vmem:[%s2596 + $0xb0] sm:$0x1]
      %v2819 = vld [vmem:[%s2596 + $0xb4] sm:$0xf]
      %v2820 = vld [vmem:[%s2596 + $0xb8] sm:$0xf]
      %v2821 = vld [vmem:[%s2596 + $0xbc] sm:$0x1]
      %v2870 = vunpack.c.l.b16 %v2774
      %v2871 = vunpack.c.l.b16 %v2775
      %v2872 = vunpack.c.l.b16 %v2776
      %v2873 = vunpack.c.l.b16 %v2777
      %v2874 = vunpack.c.l.b16 %v2778
      %v2875 = vunpack.c.l.b16 %v2779
      %v2876 = vunpack.c.l.b16 %v2780
      %v2877 = vunpack.c.l.b16 %v2781
      %v2878 = vunpack.c.l.b16 %v2782
      %v2879 = vunpack.c.l.b16 %v2783
      %v2880 = vunpack.c.l.b16 %v2784
      %v2881 = vunpack.c.l.b16 %v2785
      %v2882 = vunpack.c.l.b16 %v2786
      %v2883 = vunpack.c.l.b16 %v2787
      %v2884 = vunpack.c.l.b16 %v2788
      %v2885 = vunpack.c.l.b16 %v2789
      %v2886 = vunpack.c.l.b16 %v2790
      %v2887 = vunpack.c.l.b16 %v2791
      %v2888 = vunpack.c.l.b16 %v2792
      %v2889 = vunpack.c.l.b16 %v2793
      %v2890 = vunpack.c.l.b16 %v2794
      %v2891 = vunpack.c.l.b16 %v2795
      %v2892 = vunpack.c.l.b16 %v2796
      %v2893 = vunpack.c.l.b16 %v2797
      %v2894 = vunpack.c.l.b16 %v2798
      %v2895 = vunpack.c.l.b16 %v2799
      %v2896 = vunpack.c.l.b16 %v2800
      %v2897 = vunpack.c.l.b16 %v2801
      %v2898 = vunpack.c.l.b16 %v2802
      %v2899 = vunpack.c.l.b16 %v2803
      %v2900 = vunpack.c.l.b16 %v2804
      %v2901 = vunpack.c.l.b16 %v2805
      %v2902 = vunpack.c.l.b16 %v2806
      %v2903 = vunpack.c.l.b16 %v2807
      %v2904 = vunpack.c.l.b16 %v2808
      %v2905 = vunpack.c.l.b16 %v2809
      %v2906 = vunpack.c.l.b16 %v2810
      %v2907 = vunpack.c.l.b16 %v2811
      %v2908 = vunpack.c.l.b16 %v2812
      %v2909 = vunpack.c.l.b16 %v2813
      %v2910 = vunpack.c.l.b16 %v2814
      %v2911 = vunpack.c.l.b16 %v2815
      %v2912 = vunpack.c.l.b16 %v2816
      %v2913 = vunpack.c.l.b16 %v2817
      %v2914 = vunpack.c.l.b16 %v2818
      %v2915 = vunpack.c.l.b16 %v2819
      %v2916 = vunpack.c.l.b16 %v2820
      %v2917 = vunpack.c.l.b16 %v2821
      %v2918 = vpack.c.b16 %v2871, %v2870
      %v2919 = vpack.c.b16 %v2872, %v2872
      %v2920 = vpack.c.b16 %v2874, %v2873
      %v2921 = vpack.c.b16 %v2875, %v2875
      %v2922 = vpack.c.b16 %v2877, %v2876
      %v2923 = vpack.c.b16 %v2878, %v2878
      %v2924 = vpack.c.b16 %v2880, %v2879
      %v2925 = vpack.c.b16 %v2881, %v2881
      %v2926 = vpack.c.b16 %v2883, %v2882
      %v2927 = vpack.c.b16 %v2884, %v2884
      %v2928 = vpack.c.b16 %v2886, %v2885
      %v2929 = vpack.c.b16 %v2887, %v2887
      %v2930 = vpack.c.b16 %v2889, %v2888
      %v2931 = vpack.c.b16 %v2890, %v2890
      %v2932 = vpack.c.b16 %v2892, %v2891
      %v2933 = vpack.c.b16 %v2893, %v2893
      %v2934 = vpack.c.b16 %v2895, %v2894
      %v2935 = vpack.c.b16 %v2896, %v2896
      %v2936 = vpack.c.b16 %v2898, %v2897
      %v2937 = vpack.c.b16 %v2899, %v2899
      %v2938 = vpack.c.b16 %v2901, %v2900
      %v2939 = vpack.c.b16 %v2902, %v2902
      %v2940 = vpack.c.b16 %v2904, %v2903
      %v2941 = vpack.c.b16 %v2905, %v2905
      %v2942 = vpack.c.b16 %v2907, %v2906
      %v2943 = vpack.c.b16 %v2908, %v2908
      %v2944 = vpack.c.b16 %v2910, %v2909
      %v2945 = vpack.c.b16 %v2911, %v2911
      %v2946 = vpack.c.b16 %v2913, %v2912
      %v2947 = vpack.c.b16 %v2914, %v2914
      %v2948 = vpack.c.b16 %v2916, %v2915
      %v2949 = vpack.c.b16 %v2917, %v2917
      %v2951 = vshrl.u32 %v2918, 16
      %v2953 = vshll.u32 %v2918, 16
      %v2955 = vrot.slane %v2953, 1
      %v2956 = vor.u32 %v2951, %v2955
      %v2958 = vshll.u32 %v2919, 16
      %v2960 = vrot.slane %v2958, 1
      %v2961 = vsel %vm1149, %v2956, %v2960
      %v2963 = vshrl.u32 %v2920, 16
      %v2965 = vshll.u32 %v2920, 16
      %v2967 = vrot.slane %v2965, 1
      %v2968 = vor.u32 %v2963, %v2967
      %v2970 = vshll.u32 %v2921, 16
      %v2972 = vrot.slane %v2970, 1
      %v2973 = vsel %vm1149, %v2968, %v2972
      %v2975 = vshrl.u32 %v2922, 16
      %v2977 = vshll.u32 %v2922, 16
      %v2979 = vrot.slane %v2977, 1
      %v2980 = vor.u32 %v2975, %v2979
      %v2982 = vshll.u32 %v2923, 16
      %v2984 = vrot.slane %v2982, 1
      %v2985 = vsel %vm1149, %v2980, %v2984
      %v2987 = vshrl.u32 %v2924, 16
      %v2989 = vshll.u32 %v2924, 16
      %v2991 = vrot.slane %v2989, 1
      %v2992 = vor.u32 %v2987, %v2991
      %v2994 = vshll.u32 %v2925, 16
      %v2996 = vrot.slane %v2994, 1
      %v2997 = vsel %vm1149, %v2992, %v2996
      %v2999 = vshrl.u32 %v2926, 16
      %v3001 = vshll.u32 %v2926, 16
      %v3003 = vrot.slane %v3001, 1
      %v3004 = vor.u32 %v2999, %v3003
      %v3006 = vshll.u32 %v2927, 16
      %v3008 = vrot.slane %v3006, 1
      %v3009 = vsel %vm1149, %v3004, %v3008
      %v3011 = vshrl.u32 %v2928, 16
      %v3013 = vshll.u32 %v2928, 16
      %v3015 = vrot.slane %v3013, 1
      %v3016 = vor.u32 %v3011, %v3015
      %v3018 = vshll.u32 %v2929, 16
      %v3020 = vrot.slane %v3018, 1
      %v3021 = vsel %vm1149, %v3016, %v3020
      %v3023 = vshrl.u32 %v2930, 16
      %v3025 = vshll.u32 %v2930, 16
      %v3027 = vrot.slane %v3025, 1
      %v3028 = vor.u32 %v3023, %v3027
      %v3030 = vshll.u32 %v2931, 16
      %v3032 = vrot.slane %v3030, 1
      %v3033 = vsel %vm1149, %v3028, %v3032
      %v3035 = vshrl.u32 %v2932, 16
      %v3037 = vshll.u32 %v2932, 16
      %v3039 = vrot.slane %v3037, 1
      %v3040 = vor.u32 %v3035, %v3039
      %v3042 = vshll.u32 %v2933, 16
      %v3044 = vrot.slane %v3042, 1
      %v3045 = vsel %vm1149, %v3040, %v3044
      %v3047 = vshrl.u32 %v2934, 16
      %v3049 = vshll.u32 %v2934, 16
      %v3051 = vrot.slane %v3049, 1
      %v3052 = vor.u32 %v3047, %v3051
      %v3054 = vshll.u32 %v2935, 16
      %v3056 = vrot.slane %v3054, 1
      %v3057 = vsel %vm1149, %v3052, %v3056
      %v3059 = vshrl.u32 %v2936, 16
      %v3061 = vshll.u32 %v2936, 16
      %v3063 = vrot.slane %v3061, 1
      %v3064 = vor.u32 %v3059, %v3063
      %v3066 = vshll.u32 %v2937, 16
      %v3068 = vrot.slane %v3066, 1
      %v3069 = vsel %vm1149, %v3064, %v3068
      %v3071 = vshrl.u32 %v2938, 16
      %v3073 = vshll.u32 %v2938, 16
      %v3075 = vrot.slane %v3073, 1
      %v3076 = vor.u32 %v3071, %v3075
      %v3078 = vshll.u32 %v2939, 16
      %v3080 = vrot.slane %v3078, 1
      %v3081 = vsel %vm1149, %v3076, %v3080
      %v3083 = vshrl.u32 %v2940, 16
      %v3085 = vshll.u32 %v2940, 16
      %v3087 = vrot.slane %v3085, 1
      %v3088 = vor.u32 %v3083, %v3087
      %v3090 = vshll.u32 %v2941, 16
      %v3092 = vrot.slane %v3090, 1
      %v3093 = vsel %vm1149, %v3088, %v3092
      %v3095 = vshrl.u32 %v2942, 16
      %v3097 = vshll.u32 %v2942, 16
      %v3099 = vrot.slane %v3097, 1
      %v3100 = vor.u32 %v3095, %v3099
      %v3102 = vshll.u32 %v2943, 16
      %v3104 = vrot.slane %v3102, 1
      %v3105 = vsel %vm1149, %v3100, %v3104
      %v3107 = vshrl.u32 %v2944, 16
      %v3109 = vshll.u32 %v2944, 16
      %v3111 = vrot.slane %v3109, 1
      %v3112 = vor.u32 %v3107, %v3111
      %v3114 = vshll.u32 %v2945, 16
      %v3116 = vrot.slane %v3114, 1
      %v3117 = vsel %vm1149, %v3112, %v3116
      %v3119 = vshrl.u32 %v2946, 16
      %v3121 = vshll.u32 %v2946, 16
      %v3123 = vrot.slane %v3121, 1
      %v3124 = vor.u32 %v3119, %v3123
      %v3126 = vshll.u32 %v2947, 16
      %v3128 = vrot.slane %v3126, 1
      %v3129 = vsel %vm1149, %v3124, %v3128
      %v3131 = vshrl.u32 %v2948, 16
      %v3133 = vshll.u32 %v2948, 16
      %v3135 = vrot.slane %v3133, 1
      %v3136 = vor.u32 %v3131, %v3135
      %v3138 = vshll.u32 %v2949, 16
      %v3140 = vrot.slane %v3138, 1
      %v3141 = vsel %vm1149, %v3136, %v3140
      %3142 = vrot.lane.b32.xlu0 %v2961, 28
      %v3143 = vpop.permute.xlu0 %3142
      %3144 = vrot.lane.b32.xlu0 %v2973, 28
      %v3145 = vpop.permute.xlu0 %3144
      %3146 = vrot.lane.b32.xlu0 %v2985, 28
      %v3147 = vpop.permute.xlu0 %3146
      %3148 = vrot.lane.b32.xlu0 %v2997, 28
      %v3149 = vpop.permute.xlu0 %3148
      %3150 = vrot.lane.b32.xlu0 %v3009, 28
      %v3151 = vpop.permute.xlu0 %3150
      %3152 = vrot.lane.b32.xlu0 %v3021, 28
      %v3153 = vpop.permute.xlu0 %3152
      %3154 = vrot.lane.b32.xlu0 %v3033, 28
      %v3155 = vpop.permute.xlu0 %3154
      %3156 = vrot.lane.b32.xlu0 %v3045, 28
      %v3157 = vpop.permute.xlu0 %3156
      %3158 = vrot.lane.b32.xlu0 %v3057, 28
      %v3159 = vpop.permute.xlu0 %3158
      %3160 = vrot.lane.b32.xlu0 %v3069, 28
      %v3161 = vpop.permute.xlu0 %3160
      %3162 = vrot.lane.b32.xlu0 %v3081, 28
      %v3163 = vpop.permute.xlu0 %3162
      %3164 = vrot.lane.b32.xlu0 %v3093, 28
      %v3165 = vpop.permute.xlu0 %3164
      %3166 = vrot.lane.b32.xlu0 %v3105, 28
      %v3167 = vpop.permute.xlu0 %3166
      %3168 = vrot.lane.b32.xlu0 %v3117, 28
      %v3169 = vpop.permute.xlu0 %3168
      %3170 = vrot.lane.b32.xlu0 %v3129, 28
      %v3171 = vpop.permute.xlu0 %3170
      %3172 = vrot.lane.b32.xlu0 %v3141, 28
      %v3173 = vpop.permute.xlu0 %3172
      %vm3190 = vcmask 261344
      %3191 = vst.msk [vmem:[#allocation3] sm:$0xff] %vm3190, %v3143
      %3192 = vst.msk [vmem:[#allocation3 + $0x8] sm:$0xff] %vm3190, %v3145
      %3193 = vst.msk [vmem:[#allocation3 + $0x10] sm:$0xff] %vm3190, %v3147
      %3194 = vst.msk [vmem:[#allocation3 + $0x18] sm:$0xff] %vm3190, %v3149
      %3195 = vst.msk [vmem:[#allocation3 + $0x20] sm:$0xff] %vm3190, %v3151
      %3196 = vst.msk [vmem:[#allocation3 + $0x28] sm:$0xff] %vm3190, %v3153
      %3197 = vst.msk [vmem:[#allocation3 + $0x30] sm:$0xff] %vm3190, %v3155
      %3198 = vst.msk [vmem:[#allocation3 + $0x38] sm:$0xff] %vm3190, %v3157
      %3199 = vst.msk [vmem:[#allocation3 + $0x40] sm:$0xff] %vm3190, %v3159
      %3200 = vst.msk [vmem:[#allocation3 + $0x48] sm:$0xff] %vm3190, %v3161
      %3201 = vst.msk [vmem:[#allocation3 + $0x50] sm:$0xff] %vm3190, %v3163
      %3202 = vst.msk [vmem:[#allocation3 + $0x58] sm:$0xff] %vm3190, %v3165
      %3203 = vst.msk [vmem:[#allocation3 + $0x60] sm:$0xff] %vm3190, %v3167
      %3204 = vst.msk [vmem:[#allocation3 + $0x68] sm:$0xff] %vm3190, %v3169
      %3205 = vst.msk [vmem:[#allocation3 + $0x70] sm:$0xff] %vm3190, %v3171
      %3206 = vst.msk [vmem:[#allocation3 + $0x78] sm:$0xff] %vm3190, %v3173
      %v3207 = vld [vmem:[%s2596] sm:$0xe]
      %v3208 = vld [vmem:[%s2596 + $0x4] sm:$0xf]
      %v3209 = vld [vmem:[%s2596 + $0x8] sm:$0x1]
      %v3210 = vld [vmem:[%s2596 + $0xc] sm:$0xe]
      %v3211 = vld [vmem:[%s2596 + $0x10] sm:$0xf]
      %v3212 = vld [vmem:[%s2596 + $0x14] sm:$0x1]
      %v3213 = vld [vmem:[%s2596 + $0x18] sm:$0xe]
      %v3214 = vld [vmem:[%s2596 + $0x1c] sm:$0xf]
      %v3215 = vld [vmem:[%s2596 + $0x20] sm:$0x1]
      %v3216 = vld [vmem:[%s2596 + $0x24] sm:$0xe]
      %v3217 = vld [vmem:[%s2596 + $0x28] sm:$0xf]
      %v3218 = vld [vmem:[%s2596 + $0x2c] sm:$0x1]
      %v3219 = vld [vmem:[%s2596 + $0x30] sm:$0xe]
      %v3220 = vld [vmem:[%s2596 + $0x34] sm:$0xf]
      %v3221 = vld [vmem:[%s2596 + $0x38] sm:$0x1]
      %v3222 = vld [vmem:[%s2596 + $0x3c] sm:$0xe]
      %v3223 = vld [vmem:[%s2596 + $0x40] sm:$0xf]
      %v3224 = vld [vmem:[%s2596 + $0x44] sm:$0x1]
      %v3225 = vld [vmem:[%s2596 + $0x48] sm:$0xe]
      %v3226 = vld [vmem:[%s2596 + $0x4c] sm:$0xf]
      %v3227 = vld [vmem:[%s2596 + $0x50] sm:$0x1]
      %v3228 = vld [vmem:[%s2596 + $0x54] sm:$0xe]
      %v3229 = vld [vmem:[%s2596 + $0x58] sm:$0xf]
      %v3230 = vld [vmem:[%s2596 + $0x5c] sm:$0x1]
      %v3231 = vld [vmem:[%s2596 + $0x60] sm:$0xe]
      %v3232 = vld [vmem:[%s2596 + $0x64] sm:$0xf]
      %v3233 = vld [vmem:[%s2596 + $0x68] sm:$0x1]
      %v3234 = vld [vmem:[%s2596 + $0x6c] sm:$0xe]
      %v3235 = vld [vmem:[%s2596 + $0x70] sm:$0xf]
      %v3236 = vld [vmem:[%s2596 + $0x74] sm:$0x1]
      %v3237 = vld [vmem:[%s2596 + $0x78] sm:$0xe]
      %v3238 = vld [vmem:[%s2596 + $0x7c] sm:$0xf]
      %v3239 = vld [vmem:[%s2596 + $0x80] sm:$0x1]
      %v3240 = vld [vmem:[%s2596 + $0x84] sm:$0xe]
      %v3241 = vld [vmem:[%s2596 + $0x88] sm:$0xf]
      %v3242 = vld [vmem:[%s2596 + $0x8c] sm:$0x1]
      %v3243 = vld [vmem:[%s2596 + $0x90] sm:$0xe]
      %v3244 = vld [vmem:[%s2596 + $0x94] sm:$0xf]
      %v3245 = vld [vmem:[%s2596 + $0x98] sm:$0x1]
      %v3246 = vld [vmem:[%s2596 + $0x9c] sm:$0xe]
      %v3247 = vld [vmem:[%s2596 + $0xa0] sm:$0xf]
      %v3248 = vld [vmem:[%s2596 + $0xa4] sm:$0x1]
      %v3249 = vld [vmem:[%s2596 + $0xa8] sm:$0xe]
      %v3250 = vld [vmem:[%s2596 + $0xac] sm:$0xf]
      %v3251 = vld [vmem:[%s2596 + $0xb0] sm:$0x1]
      %v3252 = vld [vmem:[%s2596 + $0xb4] sm:$0xe]
      %v3253 = vld [vmem:[%s2596 + $0xb8] sm:$0xf]
      %v3254 = vld [vmem:[%s2596 + $0xbc] sm:$0x1]
      %v3303 = vunpack.c.l.b16 %v3207
      %v3304 = vunpack.c.l.b16 %v3208
      %v3305 = vunpack.c.l.b16 %v3209
      %v3306 = vunpack.c.l.b16 %v3210
      %v3307 = vunpack.c.l.b16 %v3211
      %v3308 = vunpack.c.l.b16 %v3212
      %v3309 = vunpack.c.l.b16 %v3213
      %v3310 = vunpack.c.l.b16 %v3214
      %v3311 = vunpack.c.l.b16 %v3215
      %v3312 = vunpack.c.l.b16 %v3216
      %v3313 = vunpack.c.l.b16 %v3217
      %v3314 = vunpack.c.l.b16 %v3218
      %v3315 = vunpack.c.l.b16 %v3219
      %v3316 = vunpack.c.l.b16 %v3220
      %v3317 = vunpack.c.l.b16 %v3221
      %v3318 = vunpack.c.l.b16 %v3222
      %v3319 = vunpack.c.l.b16 %v3223
      %v3320 = vunpack.c.l.b16 %v3224
      %v3321 = vunpack.c.l.b16 %v3225
      %v3322 = vunpack.c.l.b16 %v3226
      %v3323 = vunpack.c.l.b16 %v3227
      %v3324 = vunpack.c.l.b16 %v3228
      %v3325 = vunpack.c.l.b16 %v3229
      %v3326 = vunpack.c.l.b16 %v3230
      %v3327 = vunpack.c.l.b16 %v3231
      %v3328 = vunpack.c.l.b16 %v3232
      %v3329 = vunpack.c.l.b16 %v3233
      %v3330 = vunpack.c.l.b16 %v3234
      %v3331 = vunpack.c.l.b16 %v3235
      %v3332 = vunpack.c.l.b16 %v3236
      %v3333 = vunpack.c.l.b16 %v3237
      %v3334 = vunpack.c.l.b16 %v3238
      %v3335 = vunpack.c.l.b16 %v3239
      %v3336 = vunpack.c.l.b16 %v3240
      %v3337 = vunpack.c.l.b16 %v3241
      %v3338 = vunpack.c.l.b16 %v3242
      %v3339 = vunpack.c.l.b16 %v3243
      %v3340 = vunpack.c.l.b16 %v3244
      %v3341 = vunpack.c.l.b16 %v3245
      %v3342 = vunpack.c.l.b16 %v3246
      %v3343 = vunpack.c.l.b16 %v3247
      %v3344 = vunpack.c.l.b16 %v3248
      %v3345 = vunpack.c.l.b16 %v3249
      %v3346 = vunpack.c.l.b16 %v3250
      %v3347 = vunpack.c.l.b16 %v3251
      %v3348 = vunpack.c.l.b16 %v3252
      %v3349 = vunpack.c.l.b16 %v3253
      %v3350 = vunpack.c.l.b16 %v3254
      %v3351 = vpack.c.b16 %v3304, %v3303
      %v3352 = vpack.c.b16 %v3305, %v3305
      %v3353 = vpack.c.b16 %v3307, %v3306
      %v3354 = vpack.c.b16 %v3308, %v3308
      %v3355 = vpack.c.b16 %v3310, %v3309
      %v3356 = vpack.c.b16 %v3311, %v3311
      %v3357 = vpack.c.b16 %v3313, %v3312
      %v3358 = vpack.c.b16 %v3314, %v3314
      %v3359 = vpack.c.b16 %v3316, %v3315
      %v3360 = vpack.c.b16 %v3317, %v3317
      %v3361 = vpack.c.b16 %v3319, %v3318
      %v3362 = vpack.c.b16 %v3320, %v3320
      %v3363 = vpack.c.b16 %v3322, %v3321
      %v3364 = vpack.c.b16 %v3323, %v3323
      %v3365 = vpack.c.b16 %v3325, %v3324
      %v3366 = vpack.c.b16 %v3326, %v3326
      %v3367 = vpack.c.b16 %v3328, %v3327
      %v3368 = vpack.c.b16 %v3329, %v3329
      %v3369 = vpack.c.b16 %v3331, %v3330
      %v3370 = vpack.c.b16 %v3332, %v3332
      %v3371 = vpack.c.b16 %v3334, %v3333
      %v3372 = vpack.c.b16 %v3335, %v3335
      %v3373 = vpack.c.b16 %v3337, %v3336
      %v3374 = vpack.c.b16 %v3338, %v3338
      %v3375 = vpack.c.b16 %v3340, %v3339
      %v3376 = vpack.c.b16 %v3341, %v3341
      %v3377 = vpack.c.b16 %v3343, %v3342
      %v3378 = vpack.c.b16 %v3344, %v3344
      %v3379 = vpack.c.b16 %v3346, %v3345
      %v3380 = vpack.c.b16 %v3347, %v3347
      %v3381 = vpack.c.b16 %v3349, %v3348
      %v3382 = vpack.c.b16 %v3350, %v3350
      %v3383 = vrot.slane %v3351, 1
      %v3384 = vrot.slane %v3352, 1
      %v3385 = vsel %vm1583, %v3383, %v3384
      %v3386 = vrot.slane %v3353, 1
      %v3387 = vrot.slane %v3354, 1
      %v3388 = vsel %vm1583, %v3386, %v3387
      %v3389 = vrot.slane %v3355, 1
      %v3390 = vrot.slane %v3356, 1
      %v3391 = vsel %vm1583, %v3389, %v3390
      %v3392 = vrot.slane %v3357, 1
      %v3393 = vrot.slane %v3358, 1
      %v3394 = vsel %vm1583, %v3392, %v3393
      %v3395 = vrot.slane %v3359, 1
      %v3396 = vrot.slane %v3360, 1
      %v3397 = vsel %vm1583, %v3395, %v3396
      %v3398 = vrot.slane %v3361, 1
      %v3399 = vrot.slane %v3362, 1
      %v3400 = vsel %vm1583, %v3398, %v3399
      %v3401 = vrot.slane %v3363, 1
      %v3402 = vrot.slane %v3364, 1
      %v3403 = vsel %vm1583, %v3401, %v3402
      %v3404 = vrot.slane %v3365, 1
      %v3405 = vrot.slane %v3366, 1
      %v3406 = vsel %vm1583, %v3404, %v3405
      %v3407 = vrot.slane %v3367, 1
      %v3408 = vrot.slane %v3368, 1
      %v3409 = vsel %vm1583, %v3407, %v3408
      %v3410 = vrot.slane %v3369, 1
      %v3411 = vrot.slane %v3370, 1
      %v3412 = vsel %vm1583, %v3410, %v3411
      %v3413 = vrot.slane %v3371, 1
      %v3414 = vrot.slane %v3372, 1
      %v3415 = vsel %vm1583, %v3413, %v3414
      %v3416 = vrot.slane %v3373, 1
      %v3417 = vrot.slane %v3374, 1
      %v3418 = vsel %vm1583, %v3416, %v3417
      %v3419 = vrot.slane %v3375, 1
      %v3420 = vrot.slane %v3376, 1
      %v3421 = vsel %vm1583, %v3419, %v3420
      %v3422 = vrot.slane %v3377, 1
      %v3423 = vrot.slane %v3378, 1
      %v3424 = vsel %vm1583, %v3422, %v3423
      %v3425 = vrot.slane %v3379, 1
      %v3426 = vrot.slane %v3380, 1
      %v3427 = vsel %vm1583, %v3425, %v3426
      %v3428 = vrot.slane %v3381, 1
      %v3429 = vrot.slane %v3382, 1
      %v3430 = vsel %vm1583, %v3428, %v3429
      %3431 = vrot.lane.b32.xlu0 %v3385, 32
      %v3432 = vpop.permute.xlu0 %3431
      %3433 = vrot.lane.b32.xlu0 %v3388, 32
      %v3434 = vpop.permute.xlu0 %3433
      %3435 = vrot.lane.b32.xlu0 %v3391, 32
      %v3436 = vpop.permute.xlu0 %3435
      %3437 = vrot.lane.b32.xlu0 %v3394, 32
      %v3438 = vpop.permute.xlu0 %3437
      %3439 = vrot.lane.b32.xlu0 %v3397, 32
      %v3440 = vpop.permute.xlu0 %3439
      %3441 = vrot.lane.b32.xlu0 %v3400, 32
      %v3442 = vpop.permute.xlu0 %3441
      %3443 = vrot.lane.b32.xlu0 %v3403, 32
      %v3444 = vpop.permute.xlu0 %3443
      %3445 = vrot.lane.b32.xlu0 %v3406, 32
      %v3446 = vpop.permute.xlu0 %3445
      %3447 = vrot.lane.b32.xlu0 %v3409, 32
      %v3448 = vpop.permute.xlu0 %3447
      %3449 = vrot.lane.b32.xlu0 %v3412, 32
      %v3450 = vpop.permute.xlu0 %3449
      %3451 = vrot.lane.b32.xlu0 %v3415, 32
      %v3452 = vpop.permute.xlu0 %3451
      %3453 = vrot.lane.b32.xlu0 %v3418, 32
      %v3454 = vpop.permute.xlu0 %3453
      %3455 = vrot.lane.b32.xlu0 %v3421, 32
      %v3456 = vpop.permute.xlu0 %3455
      %3457 = vrot.lane.b32.xlu0 %v3424, 32
      %v3458 = vpop.permute.xlu0 %3457
      %3459 = vrot.lane.b32.xlu0 %v3427, 32
      %v3460 = vpop.permute.xlu0 %3459
      %3461 = vrot.lane.b32.xlu0 %v3430, 32
      %v3462 = vpop.permute.xlu0 %3461
      %vm3479 = vcmask 294144
      %3480 = vst.msk [vmem:[#allocation3] sm:$0xff] %vm3479, %v3432
      %3481 = vst.msk [vmem:[#allocation3 + $0x8] sm:$0xff] %vm3479, %v3434
      %3482 = vst.msk [vmem:[#allocation3 + $0x10] sm:$0xff] %vm3479, %v3436
      %3483 = vst.msk [vmem:[#allocation3 + $0x18] sm:$0xff] %vm3479, %v3438
      %3484 = vst.msk [vmem:[#allocation3 + $0x20] sm:$0xff] %vm3479, %v3440
      %3485 = vst.msk [vmem:[#allocation3 + $0x28] sm:$0xff] %vm3479, %v3442
      %3486 = vst.msk [vmem:[#allocation3 + $0x30] sm:$0xff] %vm3479, %v3444
      %3487 = vst.msk [vmem:[#allocation3 + $0x38] sm:$0xff] %vm3479, %v3446
      %3488 = vst.msk [vmem:[#allocation3 + $0x40] sm:$0xff] %vm3479, %v3448
      %3489 = vst.msk [vmem:[#allocation3 + $0x48] sm:$0xff] %vm3479, %v3450
      %3490 = vst.msk [vmem:[#allocation3 + $0x50] sm:$0xff] %vm3479, %v3452
      %3491 = vst.msk [vmem:[#allocation3 + $0x58] sm:$0xff] %vm3479, %v3454
      %3492 = vst.msk [vmem:[#allocation3 + $0x60] sm:$0xff] %vm3479, %v3456
      %3493 = vst.msk [vmem:[#allocation3 + $0x68] sm:$0xff] %vm3479, %v3458
      %3494 = vst.msk [vmem:[#allocation3 + $0x70] sm:$0xff] %vm3479, %v3460
      %3495 = vst.msk [vmem:[#allocation3 + $0x78] sm:$0xff] %vm3479, %v3462
      %v3496 = vld [vmem:[#allocation3] sm:$0xff]
      %v3497 = vld [vmem:[#allocation3 + $0x8] sm:$0xff]
      %v3498 = vld [vmem:[#allocation3 + $0x10] sm:$0xff]
      %v3499 = vld [vmem:[#allocation3 + $0x18] sm:$0xff]
      %v3500 = vld [vmem:[#allocation3 + $0x20] sm:$0xff]
      %v3501 = vld [vmem:[#allocation3 + $0x28] sm:$0xff]
      %v3502 = vld [vmem:[#allocation3 + $0x30] sm:$0xff]
      %v3503 = vld [vmem:[#allocation3 + $0x38] sm:$0xff]
      %v3504 = vld [vmem:[#allocation3 + $0x40] sm:$0xff]
      %v3505 = vld [vmem:[#allocation3 + $0x48] sm:$0xff]
      %v3506 = vld [vmem:[#allocation3 + $0x50] sm:$0xff]
      %v3507 = vld [vmem:[#allocation3 + $0x58] sm:$0xff]
      %v3508 = vld [vmem:[#allocation3 + $0x60] sm:$0xff]
      %v3509 = vld [vmem:[#allocation3 + $0x68] sm:$0xff]
      %v3510 = vld [vmem:[#allocation3 + $0x70] sm:$0xff]
      %v3511 = vld [vmem:[#allocation3 + $0x78] sm:$0xff]
      %v3512 = vld [vmem:[%s1] sm:$0xf]
      %v3513 = vld [vmem:[%s1 + $0x4] sm:$0xf]
      %v3514 = vld [vmem:[%s1 + $0x8] sm:$0xf]
      %v3515 = vld [vmem:[%s1 + $0xc] sm:$0xf]
      %v3516 = vld [vmem:[%s1 + $0x10] sm:$0x3]
      %v3522 = vunpack.c.l.b16 %v3512
      %v3523 = vunpack.c.l.b16 %v3513
      %v3524 = vunpack.c.l.b16 %v3514
      %v3525 = vunpack.c.l.b16 %v3515
      %v3526 = vunpack.c.l.b16 %v3516
      %v3527 = vpack.c.b16 %v3523, %v3522
      %v3528 = vpack.c.b16 %v3525, %v3524
      %v3529 = vpack.c.b16 %v3526, %v3526
      %vm3532 = vcmask 293888
      %v3534 = vsel %vm3532, %v3496, 0
      %v3537 = vsel %vm3532, %v3497, 0
      %v3540 = vsel %vm3532, %v3498, 0
      %v3543 = vsel %vm3532, %v3499, 0
      %v3546 = vsel %vm3532, %v3500, 0
      %v3549 = vsel %vm3532, %v3501, 0
      %v3552 = vsel %vm3532, %v3502, 0
      %v3555 = vsel %vm3532, %v3503, 0
      %v3558 = vsel %vm3532, %v3504, 0
      %v3561 = vsel %vm3532, %v3505, 0
      %v3564 = vsel %vm3532, %v3506, 0
      %v3567 = vsel %vm3532, %v3507, 0
      %v3570 = vsel %vm3532, %v3508, 0
      %v3573 = vsel %vm3532, %v3509, 0
      %v3576 = vsel %vm3532, %v3510, 0
      %v3579 = vsel %vm3532, %v3511, 0
      %vm3581 = vcmask 1041408
      %v3583 = vsel %vm3581, %v3529, 0
      %3585 = vmatprep.subr.bf16.mxu0 0
      %3586 = vmatpush1.bf16.msra.mxu0 %v3527
      %3587 = vmatprep.subr.bf16.mxu0 0
      %3588 = vmatpush1.bf16.msra.mxu0 %v3528
      %3589 = vmatprep.subr.bf16.mxu0 0
      %3590 = vmatpush1.bf16.msra.mxu0 %v3583
      %3591 = vmatprep.subr.bf16.mxu0 0
      %3592 = vmatpush1.bf16.msra.mxu0 0
      %3593 = vmatprep.subr.bf16.mxu0 0
      %3594 = vmatpush1.bf16.msra.mxu0 0
      %3595 = vmatprep.subr.bf16.mxu0 0
      %3596 = vmatpush1.bf16.msra.mxu0 0
      %3597 = vmatprep.subr.bf16.mxu0 0
      %3598 = vmatpush1.bf16.msra.mxu0 0
      %3599 = vmatprep.subr.bf16.mxu0 0
      %3600 = vmatpush1.bf16.msra.mxu0 0
      %3601 = vmatprep.subr.bf16.mxu0 0
      %3602 = vmatpush1.bf16.msra.mxu0 0
      %3603 = vmatprep.subr.bf16.mxu0 0
      %3604 = vmatpush1.bf16.msra.mxu0 0
      %3605 = vmatprep.subr.bf16.mxu0 0
      %3606 = vmatpush1.bf16.msra.mxu0 0
      %3607 = vmatprep.subr.bf16.mxu0 0
      %3608 = vmatpush1.bf16.msra.mxu0 0
      %3609 = vmatprep.subr.bf16.mxu0 0
      %3610 = vmatpush1.bf16.msra.mxu0 0
      %3611 = vmatprep.subr.bf16.mxu0 0
      %3612 = vmatpush1.bf16.msra.mxu0 0
      %3613 = vmatprep.subr.bf16.mxu0 0
      %3614 = vmatpush1.bf16.msra.mxu0 0
      %3615 = vmatprep.subr.bf16.mxu0 0
      %3616 = vmatpush1.bf16.msra.mxu0 0
      %3617 = vmatprep.mubr.bf16.mxu0 0
      %3618 = vmatmul.mubr.bf16.gmra.mrb[0].mxu0 %v3534
      %v3619 = vpop.f32.mrb[0].mxu0
      %v3620 = vadd.f32 0.0, %v3619
      %v3621 = vpop.f32.mrb[0].mxu0
      %v3622 = vpop.f32.mrb[0].mxu0
      %v3623 = vadd.f32 0.0, %v3622
      %v3624 = vpop.f32.mrb[0].mxu0
      %3625 = vmatprep.mubr.bf16.mxu0 0
      %3626 = vmatmul.mubr.bf16.gmra.mrb[0].mxu0 %v3537
      %v3627 = vpop.f32.mrb[0].mxu0
      %v3628 = vadd.f32 0.0, %v3627
      %v3629 = vpop.f32.mrb[0].mxu0
      %v3630 = vpop.f32.mrb[0].mxu0
      %v3631 = vadd.f32 0.0, %v3630
      %v3632 = vpop.f32.mrb[0].mxu0
      %3633 = vmatprep.mubr.bf16.mxu0 0
      %3634 = vmatmul.mubr.bf16.gmra.mrb[0].mxu0 %v3540
      %v3635 = vpop.f32.mrb[0].mxu0
      %v3636 = vadd.f32 0.0, %v3635
      %v3637 = vpop.f32.mrb[0].mxu0
      %v3638 = vpop.f32.mrb[0].mxu0
      %v3639 = vadd.f32 0.0, %v3638
      %v3640 = vpop.f32.mrb[0].mxu0
      %3641 = vmatprep.mubr.bf16.mxu0 0
      %3642 = vmatmul.mubr.bf16.gmra.mrb[0].mxu0 %v3543
      %v3643 = vpop.f32.mrb[0].mxu0
      %v3644 = vadd.f32 0.0, %v3643
      %v3645 = vpop.f32.mrb[0].mxu0
      %v3646 = vpop.f32.mrb[0].mxu0
      %v3647 = vadd.f32 0.0, %v3646
      %v3648 = vpop.f32.mrb[0].mxu0
      %3649 = vmatprep.mubr.bf16.mxu0 0
      %3650 = vmatmul.mubr.bf16.gmra.mrb[0].mxu0 %v3546
      %v3651 = vpop.f32.mrb[0].mxu0
      %v3652 = vadd.f32 0.0, %v3651
      %v3653 = vpop.f32.mrb[0].mxu0
      %v3654 = vpop.f32.mrb[0].mxu0
      %v3655 = vadd.f32 0.0, %v3654
      %v3656 = vpop.f32.mrb[0].mxu0
      %3657 = vmatprep.mubr.bf16.mxu0 0
      %3658 = vmatmul.mubr.bf16.gmra.mrb[0].mxu0 %v3549
      %v3659 = vpop.f32.mrb[0].mxu0
      %v3660 = vadd.f32 0.0, %v3659
      %v3661 = vpop.f32.mrb[0].mxu0
      %v3662 = vpop.f32.mrb[0].mxu0
      %v3663 = vadd.f32 0.0, %v3662
      %v3664 = vpop.f32.mrb[0].mxu0
      %3665 = vmatprep.mubr.bf16.mxu0 0
      %3666 = vmatmul.mubr.bf16.gmra.mrb[0].mxu0 %v3552
      %v3667 = vpop.f32.mrb[0].mxu0
      %v3668 = vadd.f32 0.0, %v3667
      %v3669 = vpop.f32.mrb[0].mxu0
      %v3670 = vpop.f32.mrb[0].mxu0
      %v3671 = vadd.f32 0.0, %v3670
      %v3672 = vpop.f32.mrb[0].mxu0
      %3673 = vmatprep.mubr.bf16.mxu0 0
      %3674 = vmatmul.mubr.bf16.gmra.mrb[0].mxu0 %v3555
      %v3675 = vpop.f32.mrb[0].mxu0
      %v3676 = vadd.f32 0.0, %v3675
      %v3677 = vpop.f32.mrb[0].mxu0
      %v3678 = vpop.f32.mrb[0].mxu0
      %v3679 = vadd.f32 0.0, %v3678
      %v3680 = vpop.f32.mrb[0].mxu0
      %3681 = vmatprep.mubr.bf16.mxu0 0
      %3682 = vmatmul.mubr.bf16.gmra.mrb[0].mxu0 %v3558
      %v3683 = vpop.f32.mrb[0].mxu0
      %v3684 = vadd.f32 0.0, %v3683
      %v3685 = vpop.f32.mrb[0].mxu0
      %v3686 = vpop.f32.mrb[0].mxu0
      %v3687 = vadd.f32 0.0, %v3686
      %v3688 = vpop.f32.mrb[0].mxu0
      %3689 = vmatprep.mubr.bf16.mxu0 0
      %3690 = vmatmul.mubr.bf16.gmra.mrb[0].mxu0 %v3561
      %v3691 = vpop.f32.mrb[0].mxu0
      %v3692 = vadd.f32 0.0, %v3691
      %v3693 = vpop.f32.mrb[0].mxu0
      %v3694 = vpop.f32.mrb[0].mxu0
      %v3695 = vadd.f32 0.0, %v3694
      %v3696 = vpop.f32.mrb[0].mxu0
      %3697 = vmatprep.mubr.bf16.mxu0 0
      %3698 = vmatmul.mubr.bf16.gmra.mrb[0].mxu0 %v3564
      %v3699 = vpop.f32.mrb[0].mxu0
      %v3700 = vadd.f32 0.0, %v3699
      %v3701 = vpop.f32.mrb[0].mxu0
      %v3702 = vpop.f32.mrb[0].mxu0
      %v3703 = vadd.f32 0.0, %v3702
      %v3704 = vpop.f32.mrb[0].mxu0
      %3705 = vmatprep.mubr.bf16.mxu0 0
      %3706 = vmatmul.mubr.bf16.gmra.mrb[0].mxu0 %v3567
      %v3707 = vpop.f32.mrb[0].mxu0
      %v3708 = vadd.f32 0.0, %v3707
      %v3709 = vpop.f32.mrb[0].mxu0
      %v3710 = vpop.f32.mrb[0].mxu0
      %v3711 = vadd.f32 0.0, %v3710
      %v3712 = vpop.f32.mrb[0].mxu0
      %3713 = vmatprep.mubr.bf16.mxu0 0
      %3714 = vmatmul.mubr.bf16.gmra.mrb[0].mxu0 %v3570
      %v3715 = vpop.f32.mrb[0].mxu0
      %v3716 = vadd.f32 0.0, %v3715
      %v3717 = vpop.f32.mrb[0].mxu0
      %v3718 = vpop.f32.mrb[0].mxu0
      %v3719 = vadd.f32 0.0, %v3718
      %v3720 = vpop.f32.mrb[0].mxu0
      %3721 = vmatprep.mubr.bf16.mxu0 0
      %3722 = vmatmul.mubr.bf16.gmra.mrb[0].mxu0 %v3573
      %v3723 = vpop.f32.mrb[0].mxu0
      %v3724 = vadd.f32 0.0, %v3723
      %v3725 = vpop.f32.mrb[0].mxu0
      %v3726 = vpop.f32.mrb[0].mxu0
      %v3727 = vadd.f32 0.0, %v3726
      %v3728 = vpop.f32.mrb[0].mxu0
      %3729 = vmatprep.mubr.bf16.mxu0 0
      %3730 = vmatmul.mubr.bf16.gmra.mrb[0].mxu0 %v3576
      %v3731 = vpop.f32.mrb[0].mxu0
      %v3732 = vadd.f32 0.0, %v3731
      %v3733 = vpop.f32.mrb[0].mxu0
      %v3734 = vpop.f32.mrb[0].mxu0
      %v3735 = vadd.f32 0.0, %v3734
      %v3736 = vpop.f32.mrb[0].mxu0
      %3737 = vmatprep.mubr.bf16.mxu0 0
      %3738 = vmatmul.mubr.bf16.gmra.mrb[0].mxu0 %v3579
      %v3739 = vpop.f32.mrb[0].mxu0
      %v3740 = vadd.f32 0.0, %v3739
      %v3741 = vpop.f32.mrb[0].mxu0
      %v3742 = vpop.f32.mrb[0].mxu0
      %v3743 = vadd.f32 0.0, %v3742
      %v3744 = vpop.f32.mrb[0].mxu0
      %3745 = vdwg.mxu0
      %v3746 = vadd.f32 %v3620, %v3623
      %v3747 = vadd.f32 %v3746, %v3628
      %v3748 = vadd.f32 %v3747, %v3631
      %v3749 = vadd.f32 %v3748, %v3636
      %v3750 = vadd.f32 %v3749, %v3639
      %v3751 = vadd.f32 %v3750, %v3644
      %v3752 = vadd.f32 %v3751, %v3647
      %v3753 = vadd.f32 %v3752, %v3652
      %v3754 = vadd.f32 %v3753, %v3655
      %v3755 = vadd.f32 %v3754, %v3660
      %v3756 = vadd.f32 %v3755, %v3663
      %v3757 = vadd.f32 %v3756, %v3668
      %v3758 = vadd.f32 %v3757, %v3671
      %v3759 = vadd.f32 %v3758, %v3676
      %v3760 = vadd.f32 %v3759, %v3679
      %v3761 = vadd.f32 %v3760, %v3684
      %v3762 = vadd.f32 %v3761, %v3687
      %v3763 = vadd.f32 %v3762, %v3692
      %v3764 = vadd.f32 %v3763, %v3695
      %v3765 = vadd.f32 %v3764, %v3700
      %v3766 = vadd.f32 %v3765, %v3703
      %v3767 = vadd.f32 %v3766, %v3708
      %v3768 = vadd.f32 %v3767, %v3711
      %v3769 = vadd.f32 %v3768, %v3716
      %v3770 = vadd.f32 %v3769, %v3719
      %v3771 = vadd.f32 %v3770, %v3724
      %v3772 = vadd.f32 %v3771, %v3727
      %v3773 = vadd.f32 %v3772, %v3732
      %v3774 = vadd.f32 %v3773, %v3735
      %v3775 = vadd.f32 %v3774, %v3740
      %v3776 = vadd.f32 %v3775, %v3743
      %v3777 = vrot.slane %v3776, 4
      %v3778 = vadd.f32 %v3776, %v3777
      %v3779 = vrot.slane %v3778, 2
      %v3780 = vadd.f32 %v3778, %v3779
      %v3781 = vrot.slane %v3780, 1
      %v3782 = vadd.f32 %v3780, %v3781
      %v3783 = vmul.f32 %v3620, %v3620
      %v3784 = vmul.f32 %v3623, %v3623
      %v3785 = vmul.f32 %v3628, %v3628
      %v3786 = vmul.f32 %v3631, %v3631
      %v3787 = vmul.f32 %v3636, %v3636
      %v3788 = vmul.f32 %v3639, %v3639
      %v3789 = vmul.f32 %v3644, %v3644
      %v3790 = vmul.f32 %v3647, %v3647
      %v3791 = vmul.f32 %v3652, %v3652
      %v3792 = vmul.f32 %v3655, %v3655
      %v3793 = vmul.f32 %v3660, %v3660
      %v3794 = vmul.f32 %v3663, %v3663
      %v3795 = vmul.f32 %v3668, %v3668
      %v3796 = vmul.f32 %v3671, %v3671
      %v3797 = vmul.f32 %v3676, %v3676
      %v3798 = vmul.f32 %v3679, %v3679
      %v3799 = vmul.f32 %v3684, %v3684
      %v3800 = vmul.f32 %v3687, %v3687
      %v3801 = vmul.f32 %v3692, %v3692
      %v3802 = vmul.f32 %v3695, %v3695
      %v3803 = vmul.f32 %v3700, %v3700
      %v3804 = vmul.f32 %v3703, %v3703
      %v3805 = vmul.f32 %v3708, %v3708
      %v3806 = vmul.f32 %v3711, %v3711
      %v3807 = vmul.f32 %v3716, %v3716
      %v3808 = vmul.f32 %v3719, %v3719
      %v3809 = vmul.f32 %v3724, %v3724
      %v3810 = vmul.f32 %v3727, %v3727
      %v3811 = vmul.f32 %v3732, %v3732
      %v3812 = vmul.f32 %v3735, %v3735
      %v3813 = vmul.f32 %v3740, %v3740
      %v3814 = vmul.f32 %v3743, %v3743
      %v3815 = vadd.f32 %v3783, %v3784
      %v3816 = vadd.f32 %v3815, %v3785
      %v3817 = vadd.f32 %v3816, %v3786
      %v3818 = vadd.f32 %v3817, %v3787
      %v3819 = vadd.f32 %v3818, %v3788
      %v3820 = vadd.f32 %v3819, %v3789
      %v3821 = vadd.f32 %v3820, %v3790
      %v3822 = vadd.f32 %v3821, %v3791
      %v3823 = vadd.f32 %v3822, %v3792
      %v3824 = vadd.f32 %v3823, %v3793
      %v3825 = vadd.f32 %v3824, %v3794
      %v3826 = vadd.f32 %v3825, %v3795
      %v3827 = vadd.f32 %v3826, %v3796
      %v3828 = vadd.f32 %v3827, %v3797
      %v3829 = vadd.f32 %v3828, %v3798
      %v3830 = vadd.f32 %v3829, %v3799
      %v3831 = vadd.f32 %v3830, %v3800
      %v3832 = vadd.f32 %v3831, %v3801
      %v3833 = vadd.f32 %v3832, %v3802
      %v3834 = vadd.f32 %v3833, %v3803
      %v3835 = vadd.f32 %v3834, %v3804
      %v3836 = vadd.f32 %v3835, %v3805
      %v3837 = vadd.f32 %v3836, %v3806
      %v3838 = vadd.f32 %v3837, %v3807
      %v3839 = vadd.f32 %v3838, %v3808
      %v3840 = vadd.f32 %v3839, %v3809
      %v3841 = vadd.f32 %v3840, %v3810
      %v3842 = vadd.f32 %v3841, %v3811
      %v3843 = vadd.f32 %v3842, %v3812
      %v3844 = vadd.f32 %v3843, %v3813
      %v3845 = vadd.f32 %v3844, %v3814
      %v3846 = vrot.slane %v3845, 4
      %v3847 = vadd.f32 %v3845, %v3846
      %v3848 = vrot.slane %v3847, 2
      %v3849 = vadd.f32 %v3847, %v3848
      %v3850 = vrot.slane %v3849, 1
      %v3851 = vadd.f32 %v3849, %v3850
      %3852 = vst [vmem:[%s235] sm:$0x1] %v3782
      %3853 = vst [vmem:[%s235 + $0x1] sm:$0x1] %v3851
      %v3854 = vpack.c.bf16 %v3623, %v3620
      %v3855 = vpack.c.bf16 %v3631, %v3628
      %v3856 = vpack.c.bf16 %v3639, %v3636
      %v3857 = vpack.c.bf16 %v3647, %v3644
      %v3858 = vpack.c.bf16 %v3655, %v3652
      %v3859 = vpack.c.bf16 %v3663, %v3660
      %v3860 = vpack.c.bf16 %v3671, %v3668
      %v3861 = vpack.c.bf16 %v3679, %v3676
      %v3862 = vpack.c.bf16 %v3687, %v3684
      %v3863 = vpack.c.bf16 %v3695, %v3692
      %v3864 = vpack.c.bf16 %v3703, %v3700
      %v3865 = vpack.c.bf16 %v3711, %v3708
      %v3866 = vpack.c.bf16 %v3719, %v3716
      %v3867 = vpack.c.bf16 %v3727, %v3724
      %v3868 = vpack.c.bf16 %v3735, %v3732
      %v3869 = vpack.c.bf16 %v3743, %v3740
      %v3886 = vunpack.c.l.b16 %v3854
      %v3887 = vunpack.c.h.b16 %v3854
      %v3888 = vunpack.c.l.b16 %v3855
      %v3889 = vunpack.c.h.b16 %v3855
      %v3890 = vunpack.c.l.b16 %v3856
      %v3891 = vunpack.c.h.b16 %v3856
      %v3892 = vunpack.c.l.b16 %v3857
      %v3893 = vunpack.c.h.b16 %v3857
      %v3894 = vunpack.c.l.b16 %v3858
      %v3895 = vunpack.c.h.b16 %v3858
      %v3896 = vunpack.c.l.b16 %v3859
      %v3897 = vunpack.c.h.b16 %v3859
      %v3898 = vunpack.c.l.b16 %v3860
      %v3899 = vunpack.c.h.b16 %v3860
      %v3900 = vunpack.c.l.b16 %v3861
      %v3901 = vunpack.c.h.b16 %v3861
      %v3902 = vunpack.c.l.b16 %v3862
      %v3903 = vunpack.c.h.b16 %v3862
      %v3904 = vunpack.c.l.b16 %v3863
      %v3905 = vunpack.c.h.b16 %v3863
      %v3906 = vunpack.c.l.b16 %v3864
      %v3907 = vunpack.c.h.b16 %v3864
      %v3908 = vunpack.c.l.b16 %v3865
      %v3909 = vunpack.c.h.b16 %v3865
      %v3910 = vunpack.c.l.b16 %v3866
      %v3911 = vunpack.c.h.b16 %v3866
      %v3912 = vunpack.c.l.b16 %v3867
      %v3913 = vunpack.c.h.b16 %v3867
      %v3914 = vunpack.c.l.b16 %v3868
      %v3915 = vunpack.c.h.b16 %v3868
      %v3916 = vunpack.c.l.b16 %v3869
      %v3917 = vunpack.c.h.b16 %v3869
      %v3918 = vpack.c.b16 %v3886, %v3886
      %v3919 = vpack.c.b16 %v3887, %v3887
      %v3920 = vpack.c.b16 %v3888, %v3888
      %v3921 = vpack.c.b16 %v3889, %v3889
      %v3922 = vpack.c.b16 %v3890, %v3890
      %v3923 = vpack.c.b16 %v3891, %v3891
      %v3924 = vpack.c.b16 %v3892, %v3892
      %v3925 = vpack.c.b16 %v3893, %v3893
      %v3926 = vpack.c.b16 %v3894, %v3894
      %v3927 = vpack.c.b16 %v3895, %v3895
      %v3928 = vpack.c.b16 %v3896, %v3896
      %v3929 = vpack.c.b16 %v3897, %v3897
      %v3930 = vpack.c.b16 %v3898, %v3898
      %v3931 = vpack.c.b16 %v3899, %v3899
      %v3932 = vpack.c.b16 %v3900, %v3900
      %v3933 = vpack.c.b16 %v3901, %v3901
      %v3934 = vpack.c.b16 %v3902, %v3902
      %v3935 = vpack.c.b16 %v3903, %v3903
      %v3936 = vpack.c.b16 %v3904, %v3904
      %v3937 = vpack.c.b16 %v3905, %v3905
      %v3938 = vpack.c.b16 %v3906, %v3906
      %v3939 = vpack.c.b16 %v3907, %v3907
      %v3940 = vpack.c.b16 %v3908, %v3908
      %v3941 = vpack.c.b16 %v3909, %v3909
      %v3942 = vpack.c.b16 %v3910, %v3910
      %v3943 = vpack.c.b16 %v3911, %v3911
      %v3944 = vpack.c.b16 %v3912, %v3912
      %v3945 = vpack.c.b16 %v3913, %v3913
      %v3946 = vpack.c.b16 %v3914, %v3914
      %v3947 = vpack.c.b16 %v3915, %v3915
      %v3948 = vpack.c.b16 %v3916, %v3916
      %v3949 = vpack.c.b16 %v3917, %v3917
      %3982 = vst [vmem:[%s231] sm:$0xf] %v3918
      %3983 = vst [vmem:[%s231 + $0x4] sm:$0xf] %v3919
      %3984 = vst [vmem:[%s231 + $0x8] sm:$0xf] %v3920
      %3985 = vst [vmem:[%s231 + $0xc] sm:$0xf] %v3921
      %3986 = vst [vmem:[%s231 + $0x10] sm:$0xf] %v3922
      %3987 = vst [vmem:[%s231 + $0x14] sm:$0xf] %v3923
      %3988 = vst [vmem:[%s231 + $0x18] sm:$0xf] %v3924
      %3989 = vst [vmem:[%s231 + $0x1c] sm:$0xf] %v3925
      %3990 = vst [vmem:[%s231 + $0x20] sm:$0xf] %v3926
      %3991 = vst [vmem:[%s231 + $0x24] sm:$0xf] %v3927
      %3992 = vst [vmem:[%s231 + $0x28] sm:$0xf] %v3928
      %3993 = vst [vmem:[%s231 + $0x2c] sm:$0xf] %v3929
      %3994 = vst [vmem:[%s231 + $0x30] sm:$0xf] %v3930
      %3995 = vst [vmem:[%s231 + $0x34] sm:$0xf] %v3931
      %3996 = vst [vmem:[%s231 + $0x38] sm:$0xf] %v3932
      %3997 = vst [vmem:[%s231 + $0x3c] sm:$0xf] %v3933
      %3998 = vst [vmem:[%s231 + $0x40] sm:$0xf] %v3934
      %3999 = vst [vmem:[%s231 + $0x44] sm:$0xf] %v3935
      %4000 = vst [vmem:[%s231 + $0x48] sm:$0xf] %v3936
      %4001 = vst [vmem:[%s231 + $0x4c] sm:$0xf] %v3937
      %4002 = vst [vmem:[%s231 + $0x50] sm:$0xf] %v3938
      %4003 = vst [vmem:[%s231 + $0x54] sm:$0xf] %v3939
      %4004 = vst [vmem:[%s231 + $0x58] sm:$0xf] %v3940
      %4005 = vst [vmem:[%s231 + $0x5c] sm:$0xf] %v3941
      %4006 = vst [vmem:[%s231 + $0x60] sm:$0xf] %v3942
      %4007 = vst [vmem:[%s231 + $0x64] sm:$0xf] %v3943
      %4008 = vst [vmem:[%s231 + $0x68] sm:$0xf] %v3944
      %4009 = vst [vmem:[%s231 + $0x6c] sm:$0xf] %v3945
      %4010 = vst [vmem:[%s231 + $0x70] sm:$0xf] %v3946
      %4011 = vst [vmem:[%s231 + $0x74] sm:$0xf] %v3947
      %4012 = vst [vmem:[%s231 + $0x78] sm:$0xf] %v3948
      %4013 = vst [vmem:[%s231 + $0x7c] sm:$0xf] %v3949
      %p4014 = scmp.lt.s32.totalorder %s17, 1
      %s4015 = scalar_select %p4014, %s17, 1
      %s4016 = smul.addr %s4015, 32
      %s4017 = smul.addr %s4016, 4
      %s4018 = scalar_lea.vmem %s4, %s4017
      %p4019 = scmp.lt.s32.totalorder %s17, 1
      %s4020 = scalar_select %p4019, %s17, 1
      %s4021 = smul.addr %s4020, 2
      %s4022 = scalar_lea.vmem %s5, %s4021
      // Predicated region
      $region37: #{double_conv.3} parent=35 // pred_check
        %p4023 = pneg %p124
      $region38: #{double_conv.3} parent=35 // pred_check_branch
        %4025 = sbr.rel (%p4023) target = $region40
      $region39: #{double_conv.3} parent=35 // pred_region
        _
      $region40: #{double_conv.3} parent=35 // pred_fallthru
        _
      // Predicated region
      $region41: #{double_conv.3} parent=35 // pred_check
        %p4026 = pneg %p150
      $region42: #{double_conv.3} parent=35 // pred_check_branch
        %4028 = sbr.rel (%p4026) target = $region44
      $region43: #{double_conv.3} parent=35 // pred_region
        _
      $region44: #{double_conv.3} parent=35 // pred_fallthru
        _
    $region36: #{double_conv.3} parent=5 // pred_fallthru
      _
    %p4029 = scmp.le.s32.totalorder 2, %s12
    // Predicated region
    $region45: #{double_conv.3} parent=5 // pred_check
      %p4030 = pneg %p4029
    $region46: #{double_conv.3} parent=5 // pred_check_branch
      %4032 = sbr.rel (%p4030) target = $region48
    $region47: #{double_conv.3} parent=5 // pred_region
      %s4033 = ssub.s32 %s12, 2
      // Predicated region
      $region49: #{double_conv.3} parent=47 // pred_check
        %p4034 = pneg %p130
      $region50: #{double_conv.3} parent=47 // pred_check_branch
        %4036 = sbr.rel (%p4034) target = $region52
      $region51: #{double_conv.3} parent=47 // pred_region
        %p4037 = scmp.lt.s32.totalorder %s18, 1
        %s4038 = scalar_select %p4037, %s18, 1
        %s4039 = smul.addr %s4038, 32
        %s4040 = smul.addr %s4039, 4
        %s4041 = scalar_lea.vmem %s4, %s4040
      $region52: #{double_conv.3} parent=47 // pred_fallthru
        _
      // Predicated region
      $region53: #{double_conv.3} parent=47 // pred_check
        %p4042 = pneg %p156
      $region54: #{double_conv.3} parent=47 // pred_check_branch
        %4044 = sbr.rel (%p4042) target = $region56
      $region55: #{double_conv.3} parent=47 // pred_region
        %p4045 = scmp.lt.s32.totalorder %s18, 1
        %s4046 = scalar_select %p4045, %s18, 1
        %s4047 = smul.addr %s4046, 2
        %s4048 = scalar_lea.vmem %s5, %s4047
      $region56: #{double_conv.3} parent=47 // pred_fallthru
        _
    $region48: #{double_conv.3} parent=5 // pred_fallthru
      _
  $region6: #{double_conv.3} parent=0 // loop_footer
    %s16 = sadd.s32 1, %s12
  $region7: #{double_conv.3} parent=0 // loop_footer_branch
    %11 = sbr.rel target = $region3
  $region8: #{double_conv.3} parent=0 // loop_exit
    _

// kernel: double_conv.4
$region0: #{double_conv.4}
  #allocation0 [shape = 'u32[]', space=smem, size = 0x4, offset = 0x4, fixed_abs, tag = 'smem constant byte address 0x4 - core index']
  #allocation1 [shape = 'u32[144,128]{1,0:T(1,128)}', space=vmem, size = 0x12000, scoped, tag = 'internal scratch']
  #allocation2 [shape = 'bf16[18,18,128]{2,1,0:T(8,128)(2,1)}', space=vmem, size = 0x1b000, scoped, tag = 'scratch operand']
  #allocation3 [shape = 'bf16[16,16,1152]{2,1,0:T(16,128)(2,1)}', space=vmem, size = 0x90000, scoped, tag = 'scratch operand']
  %s0 = inlined_call_operand.vmem [shape: bf16[2,16,16,128], index: 0, kind: input, shape index: {}]
  %s1 = inlined_call_operand.vmem [shape: bf16[1152,128], index: 1, kind: input, shape index: {}]
  %s2 = inlined_call_operand.vmem [shape: f32[1,128], index: 2, kind: input, shape index: {}]
  %s3 = inlined_call_operand.vmem [shape: f32[1,128], index: 3, kind: input, shape index: {}]
  %s4 = inlined_call_operand.vmem [shape: f32[2,16,16,128], index: 4, kind: output, shape index: {0}]
  %s5 = inlined_call_operand.vmem [shape: f32[2,2,128], index: 5, kind: output, shape index: {1}]
  %6 = xla_tuple %s4, %s5
  %s7 = sld [smem:[#allocation0]]
  $region57: #{double_conv.4} parent=0
    _
  %s9 = ssub.s32 1, %s7
  %s10 = scalar_select 0, %s9, %s7
  loop: start=0, step=1, limit=4
  $region2: #{double_conv.4} parent=0 // loop_pre_header
    _
  $region3: #{double_conv.4} parent=0 // loop_header
    %s12 = sphi 0, %s16
    %p13 = scmp.ge.s32.totalorder %s12, 4
    %s22 = sphi 0, %s24
    %s25 = sphi 0, %s22
    %s26 = sphi 0, %s25
    %s42 = sphi 0, %s26
    %s46 = sphi 0, %s46
    %s48 = sphi 0, %s46
    %s49 = sphi 0, %s48
    %s63 = sphi 0, %s49
    %s67 = sphi 0, %s67
    %s69 = sphi 0, %s67
    %s70 = sphi 0, %s69
    %s84 = sphi 0, %s70
    %s88 = sphi 0, %s88
    %s90 = sphi 0, %s88
    %s91 = sphi 0, %s90
    %s105 = sphi 0, %s91
    %s111 = sphi 0, %s113
    %s114 = sphi 0, %s111
    %s115 = sphi 0, %s114
    %s131 = sphi 0, %s115
    %s137 = sphi 0, %s139
    %s140 = sphi 0, %s137
    %s141 = sphi 0, %s140
    %s157 = sphi 0, %s141
  $region4: #{double_conv.4} parent=0 // loop_header_branch
    %15 = sbr.rel (%p13) target = $region8
  $region5: #{double_conv.4} parent=0 // loop_body
    %s17 = ssub.s32 %s12, 1
    %s18 = ssub.s32 %s12, 2
    %s19 = sadd.s32 %s12, 1
    %s20 = ssub.s32 %s12, %s19
    %p21 = scmp.eq.s32.totalorder %s20, 0
    %s23 = sadd.s32 %s22, 1
    %s24 = scalar_select %p21, %s22, %s23
    %p27 = pneg %p21
    %p28 = scmp.eq.s32.totalorder %s12, 1
    %p29 = por %p27, %p28
    %p30 = scmp.ne.s32.totalorder %s22, %s25
    %p31 = scmp.eq.s32.totalorder %s12, 0
    %p32 = por %p30, %p31
    %p33 = scmp.ne.s32.totalorder %s22, %s25
    %p34 = scmp.eq.s32.totalorder %s17, 1
    %p35 = por %p33, %p34
    %p36 = scmp.ne.s32.totalorder %s25, %s26
    %p37 = scmp.eq.s32.totalorder %s17, 0
    %p38 = por %p36, %p37
    %p39 = scmp.ne.s32.totalorder %s25, %s26
    %p40 = scmp.eq.s32.totalorder %s18, 1
    %p41 = por %p39, %p40
    %p43 = scmp.ne.s32.totalorder %s26, %s42
    %p44 = scmp.eq.s32.totalorder %s18, 0
    %p45 = por %p43, %p44
    %s47 = sadd.s32 %s46, 1
    %p50 = scmp.eq.s32.totalorder %s12, 1
    %p51 = scmp.ne.s32.totalorder %s46, %s48
    %p52 = scmp.eq.s32.totalorder %s12, 0
    %p53 = por %p51, %p52
    %p54 = scmp.ne.s32.totalorder %s46, %s48
    %p55 = scmp.eq.s32.totalorder %s17, 1
    %p56 = por %p54, %p55
    %p57 = scmp.ne.s32.totalorder %s48, %s49
    %p58 = scmp.eq.s32.totalorder %s17, 0
    %p59 = por %p57, %p58
    %p60 = scmp.ne.s32.totalorder %s48, %s49
    %p61 = scmp.eq.s32.totalorder %s18, 1
    %p62 = por %p60, %p61
    %p64 = scmp.ne.s32.totalorder %s49, %s63
    %p65 = scmp.eq.s32.totalorder %s18, 0
    %p66 = por %p64, %p65
    %s68 = sadd.s32 %s67, 1
    %p71 = scmp.eq.s32.totalorder %s12, 1
    %p72 = scmp.ne.s32.totalorder %s67, %s69
    %p73 = scmp.eq.s32.totalorder %s12, 0
    %p74 = por %p72, %p73
    %p75 = scmp.ne.s32.totalorder %s67, %s69
    %p76 = scmp.eq.s32.totalorder %s17, 1
    %p77 = por %p75, %p76
    %p78 = scmp.ne.s32.totalorder %s69, %s70
    %p79 = scmp.eq.s32.totalorder %s17, 0
    %p80 = por %p78, %p79
    %p81 = scmp.ne.s32.totalorder %s69, %s70
    %p82 = scmp.eq.s32.totalorder %s18, 1
    %p83 = por %p81, %p82
    %p85 = scmp.ne.s32.totalorder %s70, %s84
    %p86 = scmp.eq.s32.totalorder %s18, 0
    %p87 = por %p85, %p86
    %s89 = sadd.s32 %s88, 1
    %p92 = scmp.eq.s32.totalorder %s12, 1
    %p93 = scmp.ne.s32.totalorder %s88, %s90
    %p94 = scmp.eq.s32.totalorder %s12, 0
    %p95 = por %p93, %p94
    %p96 = scmp.ne.s32.totalorder %s88, %s90
    %p97 = scmp.eq.s32.totalorder %s17, 1
    %p98 = por %p96, %p97
    %p99 = scmp.ne.s32.totalorder %s90, %s91
    %p100 = scmp.eq.s32.totalorder %s17, 0
    %p101 = por %p99, %p100
    %p102 = scmp.ne.s32.totalorder %s90, %s91
    %p103 = scmp.eq.s32.totalorder %s18, 1
    %p104 = por %p102, %p103
    %p106 = scmp.ne.s32.totalorder %s91, %s105
    %p107 = scmp.eq.s32.totalorder %s18, 0
    %p108 = por %p106, %p107
    %s109 = ssub.s32 %s12, %s19
    %p110 = scmp.eq.s32.totalorder %s109, 0
    %s112 = sadd.s32 %s111, 1
    %s113 = scalar_select %p110, %s111, %s112
    %p116 = pneg %p110
    %p117 = scmp.eq.s32.totalorder %s12, 1
    %p118 = por %p116, %p117
    %p119 = scmp.ne.s32.totalorder %s111, %s114
    %p120 = scmp.eq.s32.totalorder %s12, 0
    %p121 = por %p119, %p120
    %p122 = scmp.ne.s32.totalorder %s111, %s114
    %p123 = scmp.eq.s32.totalorder %s17, 1
    %p124 = por %p122, %p123
    %p125 = scmp.ne.s32.totalorder %s114, %s115
    %p126 = scmp.eq.s32.totalorder %s17, 0
    %p127 = por %p125, %p126
    %p128 = scmp.ne.s32.totalorder %s114, %s115
    %p129 = scmp.eq.s32.totalorder %s18, 1
    %p130 = por %p128, %p129
    %p132 = scmp.ne.s32.totalorder %s115, %s131
    %p133 = scmp.eq.s32.totalorder %s18, 0
    %p134 = por %p132, %p133
    %s135 = ssub.s32 %s12, %s19
    %p136 = scmp.eq.s32.totalorder %s135, 0
    %s138 = sadd.s32 %s137, 1
    %s139 = scalar_select %p136, %s137, %s138
    %p142 = pneg %p136
    %p143 = scmp.eq.s32.totalorder %s12, 1
    %p144 = por %p142, %p143
    %p145 = scmp.ne.s32.totalorder %s137, %s140
    %p146 = scmp.eq.s32.totalorder %s12, 0
    %p147 = por %p145, %p146
    %p148 = scmp.ne.s32.totalorder %s137, %s140
    %p149 = scmp.eq.s32.totalorder %s17, 1
    %p150 = por %p148, %p149
    %p151 = scmp.ne.s32.totalorder %s140, %s141
    %p152 = scmp.eq.s32.totalorder %s17, 0
    %p153 = por %p151, %p152
    %p154 = scmp.ne.s32.totalorder %s140, %s141
    %p155 = scmp.eq.s32.totalorder %s18, 1
    %p156 = por %p154, %p155
    %p158 = scmp.ne.s32.totalorder %s141, %s157
    %p159 = scmp.eq.s32.totalorder %s18, 0
    %p160 = por %p158, %p159
    %p161 = scmp.le.s32.totalorder 1, %s12
    %p162 = scmp.lt.s32.totalorder %s12, 3
    %p163 = pnand %p161, %p162
    %p164 = pneg %p163
    // Predicated region
    $region9: #{double_conv.4} parent=5 // pred_check
      _
    $region10: #{double_conv.4} parent=5 // pred_check_branch
      %166 = sbr.rel (%p163) target = $region12
    $region11: #{double_conv.4} parent=5 // pred_region
      %s167 = ssub.s32 %s12, 1
      // Predicated region
      $region13: #{double_conv.4} parent=11 // pred_check
        %p168 = pneg %p59
      $region14: #{double_conv.4} parent=11 // pred_check_branch
        %170 = sbr.rel (%p168) target = $region16
      $region15: #{double_conv.4} parent=11 // pred_region
        _
      $region16: #{double_conv.4} parent=11 // pred_fallthru
        _
      // Predicated region
      $region17: #{double_conv.4} parent=11 // pred_check
        %p171 = pneg %p80
      $region18: #{double_conv.4} parent=11 // pred_check_branch
        %173 = sbr.rel (%p171) target = $region20
      $region19: #{double_conv.4} parent=11 // pred_region
        _
      $region20: #{double_conv.4} parent=11 // pred_fallthru
        _
      // Predicated region
      $region21: #{double_conv.4} parent=11 // pred_check
        %p174 = pneg %p101
      $region22: #{double_conv.4} parent=11 // pred_check_branch
        %176 = sbr.rel (%p174) target = $region24
      $region23: #{double_conv.4} parent=11 // pred_region
        _
      $region24: #{double_conv.4} parent=11 // pred_fallthru
        _
    $region12: #{double_conv.4} parent=5 // pred_fallthru
      _
    %p177 = scmp.lt.s32.totalorder %s12, 2
    // Predicated region
    $region25: #{double_conv.4} parent=5 // pred_check
      %p178 = pneg %p177
    $region26: #{double_conv.4} parent=5 // pred_check_branch
      %180 = sbr.rel (%p178) target = $region28
    $region27: #{double_conv.4} parent=5 // pred_region
      // Predicated region
      $region29: #{double_conv.4} parent=27 // pred_check
        %p181 = pneg %p32
      $region30: #{double_conv.4} parent=27 // pred_check_branch
        %183 = sbr.rel (%p181) target = $region32
      $region31: #{double_conv.4} parent=27 // pred_region
        %p184 = scmp.lt.s32.totalorder %s12, 1
        %s185 = scalar_select %p184, %s12, 1
        %s186 = smul.addr %s185, 32
        %s187 = smul.addr %s186, 4
        %s188 = scalar_lea.vmem %s0, %s187
      $region32: #{double_conv.4} parent=27 // pred_fallthru
        _
    $region28: #{double_conv.4} parent=5 // pred_fallthru
      _
    %p189 = scmp.le.s32.totalorder 1, %s12
    %p190 = scmp.lt.s32.totalorder %s12, 3
    %p191 = pnand %p189, %p190
    %p192 = pneg %p191
    // Predicated region
    $region33: #{double_conv.4} parent=5 // pred_check
      _
    $region34: #{double_conv.4} parent=5 // pred_check_branch
      %194 = sbr.rel (%p191) target = $region36
    $region35: #{double_conv.4} parent=5 // pred_region
      %s195 = ssub.s32 %s12, 1
      %p196 = scmp.lt.s32.totalorder %s17, 1
      %s197 = scalar_select %p196, %s17, 1
      %s198 = smul.addr %s197, 32
      %s199 = smul.addr %s198, 4
      %s200 = scalar_lea.vmem %s0, %s199
      %p201 = pneg %p38
      %p202 = pneg %p35
      %p203 = pneg %p59
      %p204 = pneg %p56
      %p205 = pneg %p80
      %p206 = pneg %p77
      %p207 = pneg %p101
      %p208 = pneg %p98
      %p209 = pneg %p127
      %p210 = pneg %p124
      %p211 = scmp.lt.s32.totalorder %s17, 1
      %s212 = scalar_select %p211, %s17, 1
      %s213 = smul.addr %s212, 32
      %s214 = smul.addr %s213, 8
      %s215 = scalar_lea.vmem %s4, %s214
      %p216 = pneg %p153
      %p217 = pneg %p150
      %p218 = scmp.lt.s32.totalorder %s17, 1
      %s219 = scalar_select %p218, %s17, 1
      %s220 = smul.addr %s219, 2
      %s221 = scalar_lea.vmem %s5, %s220
      %p222 = scmp.lt.s32.totalorder %s17, 1
      %s223 = scalar_select %p222, %s17, 1
      %s224 = smul.addr %s223, 32
      %s225 = smul.addr %s224, 4
      %s226 = scalar_lea.vmem %s0, %s225
      %p227 = scmp.lt.s32.totalorder %s17, 1
      %s228 = scalar_select %p227, %s17, 1
      %s229 = smul.addr %s228, 32
      %s230 = smul.addr %s229, 8
      %s231 = scalar_lea.vmem %s4, %s230
      %p232 = scmp.lt.s32.totalorder %s17, 1
      %s233 = scalar_select %p232, %s17, 1
      %s234 = smul.addr %s233, 2
      %s235 = scalar_lea.vmem %s5, %s234
      %v237 = vld [vmem:[%s226] sm:$0xf]
      %v238 = vld [vmem:[%s226 + $0x4] sm:$0xf]
      %v239 = vld [vmem:[%s226 + $0x8] sm:$0xf]
      %v240 = vld [vmem:[%s226 + $0xc] sm:$0xf]
      %v241 = vld [vmem:[%s226 + $0x10] sm:$0xf]
      %v242 = vld [vmem:[%s226 + $0x14] sm:$0xf]
      %v243 = vld [vmem:[%s226 + $0x18] sm:$0xf]
      %v244 = vld [vmem:[%s226 + $0x1c] sm:$0xf]
      %v245 = vld [vmem:[%s226 + $0x20] sm:$0xf]
      %v246 = vld [vmem:[%s226 + $0x24] sm:$0xf]
      %v247 = vld [vmem:[%s226 + $0x28] sm:$0xf]
      %v248 = vld [vmem:[%s226 + $0x2c] sm:$0xf]
      %v249 = vld [vmem:[%s226 + $0x30] sm:$0xf]
      %v250 = vld [vmem:[%s226 + $0x34] sm:$0xf]
      %v251 = vld [vmem:[%s226 + $0x38] sm:$0xf]
      %v252 = vld [vmem:[%s226 + $0x3c] sm:$0xf]
      %v253 = vld [vmem:[%s226 + $0x40] sm:$0xf]
      %v254 = vld [vmem:[%s226 + $0x44] sm:$0xf]
      %v255 = vld [vmem:[%s226 + $0x48] sm:$0xf]
      %v256 = vld [vmem:[%s226 + $0x4c] sm:$0xf]
      %v257 = vld [vmem:[%s226 + $0x50] sm:$0xf]
      %v258 = vld [vmem:[%s226 + $0x54] sm:$0xf]
      %v259 = vld [vmem:[%s226 + $0x58] sm:$0xf]
      %v260 = vld [vmem:[%s226 + $0x5c] sm:$0xf]
      %v261 = vld [vmem:[%s226 + $0x60] sm:$0xf]
      %v262 = vld [vmem:[%s226 + $0x64] sm:$0xf]
      %v263 = vld [vmem:[%s226 + $0x68] sm:$0xf]
      %v264 = vld [vmem:[%s226 + $0x6c] sm:$0xf]
      %v265 = vld [vmem:[%s226 + $0x70] sm:$0xf]
      %v266 = vld [vmem:[%s226 + $0x74] sm:$0xf]
      %v267 = vld [vmem:[%s226 + $0x78] sm:$0xf]
      %v268 = vld [vmem:[%s226 + $0x7c] sm:$0xf]
      %v269 = vunpack.c.l.bf16 %v237
      %v270 = vunpack.c.l.bf16 %v238
      %v271 = vunpack.c.l.bf16 %v239
      %v272 = vunpack.c.l.bf16 %v240
      %v273 = vunpack.c.l.bf16 %v241
      %v274 = vunpack.c.l.bf16 %v242
      %v275 = vunpack.c.l.bf16 %v243
      %v276 = vunpack.c.l.bf16 %v244
      %v277 = vunpack.c.l.bf16 %v245
      %v278 = vunpack.c.l.bf16 %v246
      %v279 = vunpack.c.l.bf16 %v247
      %v280 = vunpack.c.l.bf16 %v248
      %v281 = vunpack.c.l.bf16 %v249
      %v282 = vunpack.c.l.bf16 %v250
      %v283 = vunpack.c.l.bf16 %v251
      %v284 = vunpack.c.l.bf16 %v252
      %v285 = vunpack.c.l.bf16 %v253
      %v286 = vunpack.c.l.bf16 %v254
      %v287 = vunpack.c.l.bf16 %v255
      %v288 = vunpack.c.l.bf16 %v256
      %v289 = vunpack.c.l.bf16 %v257
      %v290 = vunpack.c.l.bf16 %v258
      %v291 = vunpack.c.l.bf16 %v259
      %v292 = vunpack.c.l.bf16 %v260
      %v293 = vunpack.c.l.bf16 %v261
      %v294 = vunpack.c.l.bf16 %v262
      %v295 = vunpack.c.l.bf16 %v263
      %v296 = vunpack.c.l.bf16 %v264
      %v297 = vunpack.c.l.bf16 %v265
      %v298 = vunpack.c.l.bf16 %v266
      %v299 = vunpack.c.l.bf16 %v267
      %v300 = vunpack.c.l.bf16 %v268
      %v301 = vld [vmem:[%s2] sm:$0x1]
      %v303 = vlaneseq
      %v304 = vshrl.u32 %v303, 7
      %v305 = vsub.s32 0, %v304
      %v306 = vrot.slane %v301, %v305
      %v308 = vmul.f32 %v269, %v306
      %v309 = vmul.f32 %v270, %v306
      %v310 = vmul.f32 %v271, %v306
      %v311 = vmul.f32 %v272, %v306
      %v312 = vmul.f32 %v273, %v306
      %v313 = vmul.f32 %v274, %v306
      %v314 = vmul.f32 %v275, %v306
      %v315 = vmul.f32 %v276, %v306
      %v316 = vmul.f32 %v277, %v306
      %v317 = vmul.f32 %v278, %v306
      %v318 = vmul.f32 %v279, %v306
      %v319 = vmul.f32 %v280, %v306
      %v320 = vmul.f32 %v281, %v306
      %v321 = vmul.f32 %v282, %v306
      %v322 = vmul.f32 %v283, %v306
      %v323 = vmul.f32 %v284, %v306
      %v324 = vmul.f32 %v285, %v306
      %v325 = vmul.f32 %v286, %v306
      %v326 = vmul.f32 %v287, %v306
      %v327 = vmul.f32 %v288, %v306
      %v328 = vmul.f32 %v289, %v306
      %v329 = vmul.f32 %v290, %v306
      %v330 = vmul.f32 %v291, %v306
      %v331 = vmul.f32 %v292, %v306
      %v332 = vmul.f32 %v293, %v306
      %v333 = vmul.f32 %v294, %v306
      %v334 = vmul.f32 %v295, %v306
      %v335 = vmul.f32 %v296, %v306
      %v336 = vmul.f32 %v297, %v306
      %v337 = vmul.f32 %v298, %v306
      %v338 = vmul.f32 %v299, %v306
      %v339 = vmul.f32 %v300, %v306
      %v340 = vld [vmem:[%s3] sm:$0x1]
      %v342 = vlaneseq
      %v343 = vshrl.u32 %v342, 7
      %v344 = vsub.s32 0, %v343
      %v345 = vrot.slane %v340, %v344
      %v347 = vadd.f32 %v308, %v345
      %v348 = vadd.f32 %v309, %v345
      %v349 = vadd.f32 %v310, %v345
      %v350 = vadd.f32 %v311, %v345
      %v351 = vadd.f32 %v312, %v345
      %v352 = vadd.f32 %v313, %v345
      %v353 = vadd.f32 %v314, %v345
      %v354 = vadd.f32 %v315, %v345
      %v355 = vadd.f32 %v316, %v345
      %v356 = vadd.f32 %v317, %v345
      %v357 = vadd.f32 %v318, %v345
      %v358 = vadd.f32 %v319, %v345
      %v359 = vadd.f32 %v320, %v345
      %v360 = vadd.f32 %v321, %v345
      %v361 = vadd.f32 %v322, %v345
      %v362 = vadd.f32 %v323, %v345
      %v363 = vadd.f32 %v324, %v345
      %v364 = vadd.f32 %v325, %v345
      %v365 = vadd.f32 %v326, %v345
      %v366 = vadd.f32 %v327, %v345
      %v367 = vadd.f32 %v328, %v345
      %v368 = vadd.f32 %v329, %v345
      %v369 = vadd.f32 %v330, %v345
      %v370 = vadd.f32 %v331, %v345
      %v371 = vadd.f32 %v332, %v345
      %v372 = vadd.f32 %v333, %v345
      %v373 = vadd.f32 %v334, %v345
      %v374 = vadd.f32 %v335, %v345
      %v375 = vadd.f32 %v336, %v345
      %v376 = vadd.f32 %v337, %v345
      %v377 = vadd.f32 %v338, %v345
      %v378 = vadd.f32 %v339, %v345
      %v379 = vmax.f32 %v347, 0.0
      %v380 = vmax.f32 %v348, 0.0
      %v381 = vmax.f32 %v349, 0.0
      %v382 = vmax.f32 %v350, 0.0
      %v383 = vmax.f32 %v351, 0.0
      %v384 = vmax.f32 %v352, 0.0
      %v385 = vmax.f32 %v353, 0.0
      %v386 = vmax.f32 %v354, 0.0
      %v387 = vmax.f32 %v355, 0.0
      %v388 = vmax.f32 %v356, 0.0
      %v389 = vmax.f32 %v357, 0.0
      %v390 = vmax.f32 %v358, 0.0
      %v391 = vmax.f32 %v359, 0.0
      %v392 = vmax.f32 %v360, 0.0
      %v393 = vmax.f32 %v361, 0.0
      %v394 = vmax.f32 %v362, 0.0
      %v395 = vmax.f32 %v363, 0.0
      %v396 = vmax.f32 %v364, 0.0
      %v397 = vmax.f32 %v365, 0.0
      %v398 = vmax.f32 %v366, 0.0
      %v399 = vmax.f32 %v367, 0.0
      %v400 = vmax.f32 %v368, 0.0
      %v401 = vmax.f32 %v369, 0.0
      %v402 = vmax.f32 %v370, 0.0
      %v403 = vmax.f32 %v371, 0.0
      %v404 = vmax.f32 %v372, 0.0
      %v405 = vmax.f32 %v373, 0.0
      %v406 = vmax.f32 %v374, 0.0
      %v407 = vmax.f32 %v375, 0.0
      %v408 = vmax.f32 %v376, 0.0
      %v409 = vmax.f32 %v377, 0.0
      %v410 = vmax.f32 %v378, 0.0
      %411 = vst [vmem:[#allocation2] sm:$0xf] 0
      %412 = vst [vmem:[#allocation2 + $0x4] sm:$0xf] 0
      %413 = vst [vmem:[#allocation2 + $0x8] sm:$0x1] 0
      %s414 = scalar_lea.vmem [#allocation2], 204
      %415 = vst [vmem:[%s414] sm:$0xf] 0
      %416 = vst [vmem:[%s414 + $0x4] sm:$0xf] 0
      %417 = vst [vmem:[%s414 + $0x8] sm:$0x1] 0
      %vm418 = vcmask 1040384
      %vm419 = vsmask.f32 256
      %vm420 = vmand %vm418, %vm419
      %v421 = vld [vmem:[#allocation2] sm:$0x1]
      %v422 = vsel %vm420, 0, %v421
      %423 = vst [vmem:[#allocation2] sm:$0x1] %v422
      %v424 = vld [vmem:[#allocation2 + $0xc] sm:$0x1]
      %v425 = vsel %vm420, 0, %v424
      %426 = vst [vmem:[#allocation2 + $0xc] sm:$0x1] %v425
      %v427 = vld [vmem:[#allocation2 + $0x18] sm:$0x1]
      %v428 = vsel %vm420, 0, %v427
      %429 = vst [vmem:[#allocation2 + $0x18] sm:$0x1] %v428
      %v430 = vld [vmem:[#allocation2 + $0x24] sm:$0x1]
      %v431 = vsel %vm420, 0, %v430
      %432 = vst [vmem:[#allocation2 + $0x24] sm:$0x1] %v431
      %v433 = vld [vmem:[#allocation2 + $0x30] sm:$0x1]
      %v434 = vsel %vm420, 0, %v433
      %435 = vst [vmem:[#allocation2 + $0x30] sm:$0x1] %v434
      %v436 = vld [vmem:[#allocation2 + $0x3c] sm:$0x1]
      %v437 = vsel %vm420, 0, %v436
      %438 = vst [vmem:[#allocation2 + $0x3c] sm:$0x1] %v437
      %v439 = vld [vmem:[#allocation2 + $0x48] sm:$0x1]
      %v440 = vsel %vm420, 0, %v439
      %441 = vst [vmem:[#allocation2 + $0x48] sm:$0x1] %v440
      %v442 = vld [vmem:[#allocation2 + $0x54] sm:$0x1]
      %v443 = vsel %vm420, 0, %v442
      %444 = vst [vmem:[#allocation2 + $0x54] sm:$0x1] %v443
      %v445 = vld [vmem:[#allocation2 + $0x60] sm:$0x1]
      %v446 = vsel %vm420, 0, %v445
      %447 = vst [vmem:[#allocation2 + $0x60] sm:$0x1] %v446
      %v448 = vld [vmem:[#allocation2 + $0x6c] sm:$0x1]
      %v449 = vsel %vm420, 0, %v448
      %450 = vst [vmem:[#allocation2 + $0x6c] sm:$0x1] %v449
      %v451 = vld [vmem:[#allocation2 + $0x78] sm:$0x1]
      %v452 = vsel %vm420, 0, %v451
      %453 = vst [vmem:[#allocation2 + $0x78] sm:$0x1] %v452
      %v454 = vld [vmem:[#allocation2 + $0x84] sm:$0x1]
      %v455 = vsel %vm420, 0, %v454
      %456 = vst [vmem:[#allocation2 + $0x84] sm:$0x1] %v455
      %v457 = vld [vmem:[#allocation2 + $0x90] sm:$0x1]
      %v458 = vsel %vm420, 0, %v457
      %459 = vst [vmem:[#allocation2 + $0x90] sm:$0x1] %v458
      %v460 = vld [vmem:[#allocation2 + $0x9c] sm:$0x1]
      %v461 = vsel %vm420, 0, %v460
      %462 = vst [vmem:[#allocation2 + $0x9c] sm:$0x1] %v461
      %v463 = vld [vmem:[#allocation2 + $0xa8] sm:$0x1]
      %v464 = vsel %vm420, 0, %v463
      %465 = vst [vmem:[#allocation2 + $0xa8] sm:$0x1] %v464
      %v466 = vld [vmem:[#allocation2 + $0xb4] sm:$0x1]
      %v467 = vsel %vm420, 0, %v466
      %468 = vst [vmem:[#allocation2 + $0xb4] sm:$0x1] %v467
      %v469 = vld [vmem:[#allocation2 + $0xc0] sm:$0x1]
      %v470 = vsel %vm420, 0, %v469
      %471 = vst [vmem:[#allocation2 + $0xc0] sm:$0x1] %v470
      %v472 = vld [vmem:[#allocation2 + $0xcc] sm:$0x1]
      %v473 = vsel %vm420, 0, %v472
      %474 = vst [vmem:[#allocation2 + $0xcc] sm:$0x1] %v473
      %vm475 = vsmask.f32 7938
      %vm476 = vmand %vm418, %vm475
      %v477 = vld [vmem:[#allocation2 + $0x8] sm:$0x1]
      %v478 = vsel %vm476, 0, %v477
      %479 = vst [vmem:[#allocation2 + $0x8] sm:$0x1] %v478
      %v480 = vld [vmem:[#allocation2 + $0x14] sm:$0x1]
      %v481 = vsel %vm476, 0, %v480
      %482 = vst [vmem:[#allocation2 + $0x14] sm:$0x1] %v481
      %v483 = vld [vmem:[#allocation2 + $0x20] sm:$0x1]
      %v484 = vsel %vm476, 0, %v483
      %485 = vst [vmem:[#allocation2 + $0x20] sm:$0x1] %v484
      %v486 = vld [vmem:[#allocation2 + $0x2c] sm:$0x1]
      %v487 = vsel %vm476, 0, %v486
      %488 = vst [vmem:[#allocation2 + $0x2c] sm:$0x1] %v487
      %v489 = vld [vmem:[#allocation2 + $0x38] sm:$0x1]
      %v490 = vsel %vm476, 0, %v489
      %491 = vst [vmem:[#allocation2 + $0x38] sm:$0x1] %v490
      %v492 = vld [vmem:[#allocation2 + $0x44] sm:$0x1]
      %v493 = vsel %vm476, 0, %v492
      %494 = vst [vmem:[#allocation2 + $0x44] sm:$0x1] %v493
      %v495 = vld [vmem:[#allocation2 + $0x50] sm:$0x1]
      %v496 = vsel %vm476, 0, %v495
      %497 = vst [vmem:[#allocation2 + $0x50] sm:$0x1] %v496
      %v498 = vld [vmem:[#allocation2 + $0x5c] sm:$0x1]
      %v499 = vsel %vm476, 0, %v498
      %500 = vst [vmem:[#allocation2 + $0x5c] sm:$0x1] %v499
      %v501 = vld [vmem:[#allocation2 + $0x68] sm:$0x1]
      %v502 = vsel %vm476, 0, %v501
      %503 = vst [vmem:[#allocation2 + $0x68] sm:$0x1] %v502
      %v504 = vld [vmem:[#allocation2 + $0x74] sm:$0x1]
      %v505 = vsel %vm476, 0, %v504
      %506 = vst [vmem:[#allocation2 + $0x74] sm:$0x1] %v505
      %v507 = vld [vmem:[#allocation2 + $0x80] sm:$0x1]
      %v508 = vsel %vm476, 0, %v507
      %509 = vst [vmem:[#allocation2 + $0x80] sm:$0x1] %v508
      %v510 = vld [vmem:[#allocation2 + $0x8c] sm:$0x1]
      %v511 = vsel %vm476, 0, %v510
      %512 = vst [vmem:[#allocation2 + $0x8c] sm:$0x1] %v511
      %v513 = vld [vmem:[#allocation2 + $0x98] sm:$0x1]
      %v514 = vsel %vm476, 0, %v513
      %515 = vst [vmem:[#allocation2 + $0x98] sm:$0x1] %v514
      %v516 = vld [vmem:[#allocation2 + $0xa4] sm:$0x1]
      %v517 = vsel %vm476, 0, %v516
      %518 = vst [vmem:[#allocation2 + $0xa4] sm:$0x1] %v517
      %v519 = vld [vmem:[#allocation2 + $0xb0] sm:$0x1]
      %v520 = vsel %vm476, 0, %v519
      %521 = vst [vmem:[#allocation2 + $0xb0] sm:$0x1] %v520
      %v522 = vld [vmem:[#allocation2 + $0xbc] sm:$0x1]
      %v523 = vsel %vm476, 0, %v522
      %524 = vst [vmem:[#allocation2 + $0xbc] sm:$0x1] %v523
      %v525 = vld [vmem:[#allocation2 + $0xc8] sm:$0x1]
      %v526 = vsel %vm476, 0, %v525
      %527 = vst [vmem:[#allocation2 + $0xc8] sm:$0x1] %v526
      %v528 = vld [vmem:[#allocation2 + $0xd4] sm:$0x1]
      %v529 = vsel %vm476, 0, %v528
      %530 = vst [vmem:[#allocation2 + $0xd4] sm:$0x1] %v529
      %v531 = vpack.c.bf16 %v380, %v379
      %v532 = vpack.c.bf16 %v382, %v381
      %v533 = vpack.c.bf16 %v384, %v383
      %v534 = vpack.c.bf16 %v386, %v385
      %v535 = vpack.c.bf16 %v388, %v387
      %v536 = vpack.c.bf16 %v390, %v389
      %v537 = vpack.c.bf16 %v392, %v391
      %v538 = vpack.c.bf16 %v394, %v393
      %v539 = vpack.c.bf16 %v396, %v395
      %v540 = vpack.c.bf16 %v398, %v397
      %v541 = vpack.c.bf16 %v400, %v399
      %v542 = vpack.c.bf16 %v402, %v401
      %v543 = vpack.c.bf16 %v404, %v403
      %v544 = vpack.c.bf16 %v406, %v405
      %v545 = vpack.c.bf16 %v408, %v407
      %v546 = vpack.c.bf16 %v410, %v409
      %v563 = vunpack.c.l.b16 %v531
      %v564 = vunpack.c.h.b16 %v531
      %v565 = vunpack.c.l.b16 %v532
      %v566 = vunpack.c.h.b16 %v532
      %v567 = vunpack.c.l.b16 %v533
      %v568 = vunpack.c.h.b16 %v533
      %v569 = vunpack.c.l.b16 %v534
      %v570 = vunpack.c.h.b16 %v534
      %v571 = vunpack.c.l.b16 %v535
      %v572 = vunpack.c.h.b16 %v535
      %v573 = vunpack.c.l.b16 %v536
      %v574 = vunpack.c.h.b16 %v536
      %v575 = vunpack.c.l.b16 %v537
      %v576 = vunpack.c.h.b16 %v537
      %v577 = vunpack.c.l.b16 %v538
      %v578 = vunpack.c.h.b16 %v538
      %v579 = vunpack.c.l.b16 %v539
      %v580 = vunpack.c.h.b16 %v539
      %v581 = vunpack.c.l.b16 %v540
      %v582 = vunpack.c.h.b16 %v540
      %v583 = vunpack.c.l.b16 %v541
      %v584 = vunpack.c.h.b16 %v541
      %v585 = vunpack.c.l.b16 %v542
      %v586 = vunpack.c.h.b16 %v542
      %v587 = vunpack.c.l.b16 %v543
      %v588 = vunpack.c.h.b16 %v543
      %v589 = vunpack.c.l.b16 %v544
      %v590 = vunpack.c.h.b16 %v544
      %v591 = vunpack.c.l.b16 %v545
      %v592 = vunpack.c.h.b16 %v545
      %v593 = vunpack.c.l.b16 %v546
      %v594 = vunpack.c.h.b16 %v546
      %v595 = vpack.c.b16 %v563, %v563
      %v596 = vpack.c.b16 %v564, %v564
      %v597 = vpack.c.b16 %v565, %v565
      %v598 = vpack.c.b16 %v566, %v566
      %v599 = vpack.c.b16 %v567, %v567
      %v600 = vpack.c.b16 %v568, %v568
      %v601 = vpack.c.b16 %v569, %v569
      %v602 = vpack.c.b16 %v570, %v570
      %v603 = vpack.c.b16 %v571, %v571
      %v604 = vpack.c.b16 %v572, %v572
      %v605 = vpack.c.b16 %v573, %v573
      %v606 = vpack.c.b16 %v574, %v574
      %v607 = vpack.c.b16 %v575, %v575
      %v608 = vpack.c.b16 %v576, %v576
      %v609 = vpack.c.b16 %v577, %v577
      %v610 = vpack.c.b16 %v578, %v578
      %v611 = vpack.c.b16 %v579, %v579
      %v612 = vpack.c.b16 %v580, %v580
      %v613 = vpack.c.b16 %v581, %v581
      %v614 = vpack.c.b16 %v582, %v582
      %v615 = vpack.c.b16 %v583, %v583
      %v616 = vpack.c.b16 %v584, %v584
      %v617 = vpack.c.b16 %v585, %v585
      %v618 = vpack.c.b16 %v586, %v586
      %v619 = vpack.c.b16 %v587, %v587
      %v620 = vpack.c.b16 %v588, %v588
      %v621 = vpack.c.b16 %v589, %v589
      %v622 = vpack.c.b16 %v590, %v590
      %v623 = vpack.c.b16 %v591, %v591
      %v624 = vpack.c.b16 %v592, %v592
      %v625 = vpack.c.b16 %v593, %v593
      %v626 = vpack.c.b16 %v594, %v594
      %vm627 = vsmask.f32 4368
      %vm628 = vmor %vm419, %vm627
      %v630 = vshrl.u32 %v595, 16
      %v632 = vrot.slane %v630, 7
      %v633 = vshll.u32 %v595, 16
      %v635 = vor.u32 %v632, %v633
      %v636 = vrot.slane %v632, 4
      %v638 = vshrl.u32 %v596, 16
      %v640 = vrot.slane %v638, 7
      %v641 = vshll.u32 %v596, 16
      %v643 = vor.u32 %v640, %v641
      %v644 = vsel %vm628, %v636, %v643
      %v645 = vrot.slane %v640, 4
      %v647 = vshrl.u32 %v597, 16
      %v649 = vrot.slane %v647, 7
      %v650 = vshll.u32 %v597, 16
      %v652 = vor.u32 %v649, %v650
      %v653 = vrot.slane %v649, 4
      %v655 = vshrl.u32 %v598, 16
      %v657 = vrot.slane %v655, 7
      %v658 = vshll.u32 %v598, 16
      %v660 = vor.u32 %v657, %v658
      %v661 = vsel %vm628, %v653, %v660
      %v662 = vrot.slane %v657, 4
      %v664 = vshrl.u32 %v599, 16
      %v666 = vrot.slane %v664, 7
      %v667 = vshll.u32 %v599, 16
      %v669 = vor.u32 %v666, %v667
      %v670 = vrot.slane %v666, 4
      %v672 = vshrl.u32 %v600, 16
      %v674 = vrot.slane %v672, 7
      %v675 = vshll.u32 %v600, 16
      %v677 = vor.u32 %v674, %v675
      %v678 = vsel %vm628, %v670, %v677
      %v679 = vrot.slane %v674, 4
      %v681 = vshrl.u32 %v601, 16
      %v683 = vrot.slane %v681, 7
      %v684 = vshll.u32 %v601, 16
      %v686 = vor.u32 %v683, %v684
      %v687 = vrot.slane %v683, 4
      %v689 = vshrl.u32 %v602, 16
      %v691 = vrot.slane %v689, 7
      %v692 = vshll.u32 %v602, 16
      %v694 = vor.u32 %v691, %v692
      %v695 = vsel %vm628, %v687, %v694
      %v696 = vrot.slane %v691, 4
      %v698 = vshrl.u32 %v603, 16
      %v700 = vrot.slane %v698, 7
      %v701 = vshll.u32 %v603, 16
      %v703 = vor.u32 %v700, %v701
      %v704 = vrot.slane %v700, 4
      %v706 = vshrl.u32 %v604, 16
      %v708 = vrot.slane %v706, 7
      %v709 = vshll.u32 %v604, 16
      %v711 = vor.u32 %v708, %v709
      %v712 = vsel %vm628, %v704, %v711
      %v713 = vrot.slane %v708, 4
      %v715 = vshrl.u32 %v605, 16
      %v717 = vrot.slane %v715, 7
      %v718 = vshll.u32 %v605, 16
      %v720 = vor.u32 %v717, %v718
      %v721 = vrot.slane %v717, 4
      %v723 = vshrl.u32 %v606, 16
      %v725 = vrot.slane %v723, 7
      %v726 = vshll.u32 %v606, 16
      %v728 = vor.u32 %v725, %v726
      %v729 = vsel %vm628, %v721, %v728
      %v730 = vrot.slane %v725, 4
      %v732 = vshrl.u32 %v607, 16
      %v734 = vrot.slane %v732, 7
      %v735 = vshll.u32 %v607, 16
      %v737 = vor.u32 %v734, %v735
      %v738 = vrot.slane %v734, 4
      %v740 = vshrl.u32 %v608, 16
      %v742 = vrot.slane %v740, 7
      %v743 = vshll.u32 %v608, 16
      %v745 = vor.u32 %v742, %v743
      %v746 = vsel %vm628, %v738, %v745
      %v747 = vrot.slane %v742, 4
      %v749 = vshrl.u32 %v609, 16
      %v751 = vrot.slane %v749, 7
      %v752 = vshll.u32 %v609, 16
      %v754 = vor.u32 %v751, %v752
      %v755 = vrot.slane %v751, 4
      %v757 = vshrl.u32 %v610, 16
      %v759 = vrot.slane %v757, 7
      %v760 = vshll.u32 %v610, 16
      %v762 = vor.u32 %v759, %v760
      %v763 = vsel %vm628, %v755, %v762
      %v764 = vrot.slane %v759, 4
      %v766 = vshrl.u32 %v611, 16
      %v768 = vrot.slane %v766, 7
      %v769 = vshll.u32 %v611, 16
      %v771 = vor.u32 %v768, %v769
      %v772 = vrot.slane %v768, 4
      %v774 = vshrl.u32 %v612, 16
      %v776 = vrot.slane %v774, 7
      %v777 = vshll.u32 %v612, 16
      %v779 = vor.u32 %v776, %v777
      %v780 = vsel %vm628, %v772, %v779
      %v781 = vrot.slane %v776, 4
      %v783 = vshrl.u32 %v613, 16
      %v785 = vrot.slane %v783, 7
      %v786 = vshll.u32 %v613, 16
      %v788 = vor.u32 %v785, %v786
      %v789 = vrot.slane %v785, 4
      %v791 = vshrl.u32 %v614, 16
      %v793 = vrot.slane %v791, 7
      %v794 = vshll.u32 %v614, 16
      %v796 = vor.u32 %v793, %v794
      %v797 = vsel %vm628, %v789, %v796
      %v798 = vrot.slane %v793, 4
      %v800 = vshrl.u32 %v615, 16
      %v802 = vrot.slane %v800, 7
      %v803 = vshll.u32 %v615, 16
      %v805 = vor.u32 %v802, %v803
      %v806 = vrot.slane %v802, 4
      %v808 = vshrl.u32 %v616, 16
      %v810 = vrot.slane %v808, 7
      %v811 = vshll.u32 %v616, 16
      %v813 = vor.u32 %v810, %v811
      %v814 = vsel %vm628, %v806, %v813
      %v815 = vrot.slane %v810, 4
      %v817 = vshrl.u32 %v617, 16
      %v819 = vrot.slane %v817, 7
      %v820 = vshll.u32 %v617, 16
      %v822 = vor.u32 %v819, %v820
      %v823 = vrot.slane %v819, 4
      %v825 = vshrl.u32 %v618, 16
      %v827 = vrot.slane %v825, 7
      %v828 = vshll.u32 %v618, 16
      %v830 = vor.u32 %v827, %v828
      %v831 = vsel %vm628, %v823, %v830
      %v832 = vrot.slane %v827, 4
      %v834 = vshrl.u32 %v619, 16
      %v836 = vrot.slane %v834, 7
      %v837 = vshll.u32 %v619, 16
      %v839 = vor.u32 %v836, %v837
      %v840 = vrot.slane %v836, 4
      %v842 = vshrl.u32 %v620, 16
      %v844 = vrot.slane %v842, 7
      %v845 = vshll.u32 %v620, 16
      %v847 = vor.u32 %v844, %v845
      %v848 = vsel %vm628, %v840, %v847
      %v849 = vrot.slane %v844, 4
      %v851 = vshrl.u32 %v621, 16
      %v853 = vrot.slane %v851, 7
      %v854 = vshll.u32 %v621, 16
      %v856 = vor.u32 %v853, %v854
      %v857 = vrot.slane %v853, 4
      %v859 = vshrl.u32 %v622, 16
      %v861 = vrot.slane %v859, 7
      %v862 = vshll.u32 %v622, 16
      %v864 = vor.u32 %v861, %v862
      %v865 = vsel %vm628, %v857, %v864
      %v866 = vrot.slane %v861, 4
      %v868 = vshrl.u32 %v623, 16
      %v870 = vrot.slane %v868, 7
      %v871 = vshll.u32 %v623, 16
      %v873 = vor.u32 %v870, %v871
      %v874 = vrot.slane %v870, 4
      %v876 = vshrl.u32 %v624, 16
      %v878 = vrot.slane %v876, 7
      %v879 = vshll.u32 %v624, 16
      %v881 = vor.u32 %v878, %v879
      %v882 = vsel %vm628, %v874, %v881
      %v883 = vrot.slane %v878, 4
      %v885 = vshrl.u32 %v625, 16
      %v887 = vrot.slane %v885, 7
      %v888 = vshll.u32 %v625, 16
      %v890 = vor.u32 %v887, %v888
      %v891 = vrot.slane %v887, 4
      %v893 = vshrl.u32 %v626, 16
      %v895 = vrot.slane %v893, 7
      %v896 = vshll.u32 %v626, 16
      %v898 = vor.u32 %v895, %v896
      %v899 = vsel %vm628, %v891, %v898
      %v900 = vrot.slane %v895, 4
      %s949 = scalar_lea.vmem [#allocation2], 12
      %vm950 = vcmask 1043456
      %vm951 = vmand %vm950, %vm475
      %v952 = vld [vmem:[%s949] sm:$0xf]
      %v953 = vsel %vm951, %v635, %v952
      %954 = vst [vmem:[%s949] sm:$0xf] %v953
      %955 = vst [vmem:[%s949 + $0x4] sm:$0xf] %v644
      %v956 = vld [vmem:[%s949 + $0x8] sm:$0x1]
      %v957 = vsel %vm420, %v645, %v956
      %958 = vst [vmem:[%s949 + $0x8] sm:$0x1] %v957
      %v959 = vld [vmem:[%s949 + $0xc] sm:$0xf]
      %v960 = vsel %vm951, %v652, %v959
      %961 = vst [vmem:[%s949 + $0xc] sm:$0xf] %v960
      %962 = vst [vmem:[%s949 + $0x10] sm:$0xf] %v661
      %v963 = vld [vmem:[%s949 + $0x14] sm:$0x1]
      %v964 = vsel %vm420, %v662, %v963
      %965 = vst [vmem:[%s949 + $0x14] sm:$0x1] %v964
      %v966 = vld [vmem:[%s949 + $0x18] sm:$0xf]
      %v967 = vsel %vm951, %v669, %v966
      %968 = vst [vmem:[%s949 + $0x18] sm:$0xf] %v967
      %969 = vst [vmem:[%s949 + $0x1c] sm:$0xf] %v678
      %v970 = vld [vmem:[%s949 + $0x20] sm:$0x1]
      %v971 = vsel %vm420, %v679, %v970
      %972 = vst [vmem:[%s949 + $0x20] sm:$0x1] %v971
      %v973 = vld [vmem:[%s949 + $0x24] sm:$0xf]
      %v974 = vsel %vm951, %v686, %v973
      %975 = vst [vmem:[%s949 + $0x24] sm:$0xf] %v974
      %976 = vst [vmem:[%s949 + $0x28] sm:$0xf] %v695
      %v977 = vld [vmem:[%s949 + $0x2c] sm:$0x1]
      %v978 = vsel %vm420, %v696, %v977
      %979 = vst [vmem:[%s949 + $0x2c] sm:$0x1] %v978
      %v980 = vld [vmem:[%s949 + $0x30] sm:$0xf]
      %v981 = vsel %vm951, %v703, %v980
      %982 = vst [vmem:[%s949 + $0x30] sm:$0xf] %v981
      %983 = vst [vmem:[%s949 + $0x34] sm:$0xf] %v712
      %v984 = vld [vmem:[%s949 + $0x38] sm:$0x1]
      %v985 = vsel %vm420, %v713, %v984
      %986 = vst [vmem:[%s949 + $0x38] sm:$0x1] %v985
      %v987 = vld [vmem:[%s949 + $0x3c] sm:$0xf]
      %v988 = vsel %vm951, %v720, %v987
      %989 = vst [vmem:[%s949 + $0x3c] sm:$0xf] %v988
      %990 = vst [vmem:[%s949 + $0x40] sm:$0xf] %v729
      %v991 = vld [vmem:[%s949 + $0x44] sm:$0x1]
      %v992 = vsel %vm420, %v730, %v991
      %993 = vst [vmem:[%s949 + $0x44] sm:$0x1] %v992
      %v994 = vld [vmem:[%s949 + $0x48] sm:$0xf]
      %v995 = vsel %vm951, %v737, %v994
      %996 = vst [vmem:[%s949 + $0x48] sm:$0xf] %v995
      %997 = vst [vmem:[%s949 + $0x4c] sm:$0xf] %v746
      %v998 = vld [vmem:[%s949 + $0x50] sm:$0x1]
      %v999 = vsel %vm420, %v747, %v998
      %1000 = vst [vmem:[%s949 + $0x50] sm:$0x1] %v999
      %v1001 = vld [vmem:[%s949 + $0x54] sm:$0xf]
      %v1002 = vsel %vm951, %v754, %v1001
      %1003 = vst [vmem:[%s949 + $0x54] sm:$0xf] %v1002
      %1004 = vst [vmem:[%s949 + $0x58] sm:$0xf] %v763
      %v1005 = vld [vmem:[%s949 + $0x5c] sm:$0x1]
      %v1006 = vsel %vm420, %v764, %v1005
      %1007 = vst [vmem:[%s949 + $0x5c] sm:$0x1] %v1006
      %v1008 = vld [vmem:[%s949 + $0x60] sm:$0xf]
      %v1009 = vsel %vm951, %v771, %v1008
      %1010 = vst [vmem:[%s949 + $0x60] sm:$0xf] %v1009
      %1011 = vst [vmem:[%s949 + $0x64] sm:$0xf] %v780
      %v1012 = vld [vmem:[%s949 + $0x68] sm:$0x1]
      %v1013 = vsel %vm420, %v781, %v1012
      %1014 = vst [vmem:[%s949 + $0x68] sm:$0x1] %v1013
      %v1015 = vld [vmem:[%s949 + $0x6c] sm:$0xf]
      %v1016 = vsel %vm951, %v788, %v1015
      %1017 = vst [vmem:[%s949 + $0x6c] sm:$0xf] %v1016
      %1018 = vst [vmem:[%s949 + $0x70] sm:$0xf] %v797
      %v1019 = vld [vmem:[%s949 + $0x74] sm:$0x1]
      %v1020 = vsel %vm420, %v798, %v1019
      %1021 = vst [vmem:[%s949 + $0x74] sm:$0x1] %v1020
      %v1022 = vld [vmem:[%s949 + $0x78] sm:$0xf]
      %v1023 = vsel %vm951, %v805, %v1022
      %1024 = vst [vmem:[%s949 + $0x78] sm:$0xf] %v1023
      %1025 = vst [vmem:[%s949 + $0x7c] sm:$0xf] %v814
      %v1026 = vld [vmem:[%s949 + $0x80] sm:$0x1]
      %v1027 = vsel %vm420, %v815, %v1026
      %1028 = vst [vmem:[%s949 + $0x80] sm:$0x1] %v1027
      %v1029 = vld [vmem:[%s949 + $0x84] sm:$0xf]
      %v1030 = vsel %vm951, %v822, %v1029
      %1031 = vst [vmem:[%s949 + $0x84] sm:$0xf] %v1030
      %1032 = vst [vmem:[%s949 + $0x88] sm:$0xf] %v831
      %v1033 = vld [vmem:[%s949 + $0x8c] sm:$0x1]
      %v1034 = vsel %vm420, %v832, %v1033
      %1035 = vst [vmem:[%s949 + $0x8c] sm:$0x1] %v1034
      %v1036 = vld [vmem:[%s949 + $0x90] sm:$0xf]
      %v1037 = vsel %vm951, %v839, %v1036
      %1038 = vst [vmem:[%s949 + $0x90] sm:$0xf] %v1037
      %1039 = vst [vmem:[%s949 + $0x94] sm:$0xf] %v848
      %v1040 = vld [vmem:[%s949 + $0x98] sm:$0x1]
      %v1041 = vsel %vm420, %v849, %v1040
      %1042 = vst [vmem:[%s949 + $0x98] sm:$0x1] %v1041
      %v1043 = vld [vmem:[%s949 + $0x9c] sm:$0xf]
      %v1044 = vsel %vm951, %v856, %v1043
      %1045 = vst [vmem:[%s949 + $0x9c] sm:$0xf] %v1044
      %1046 = vst [vmem:[%s949 + $0xa0] sm:$0xf] %v865
      %v1047 = vld [vmem:[%s949 + $0xa4] sm:$0x1]
      %v1048 = vsel %vm420, %v866, %v1047
      %1049 = vst [vmem:[%s949 + $0xa4] sm:$0x1] %v1048
      %v1050 = vld [vmem:[%s949 + $0xa8] sm:$0xf]
      %v1051 = vsel %vm951, %v873, %v1050
      %1052 = vst [vmem:[%s949 + $0xa8] sm:$0xf] %v1051
      %1053 = vst [vmem:[%s949 + $0xac] sm:$0xf] %v882
      %v1054 = vld [vmem:[%s949 + $0xb0] sm:$0x1]
      %v1055 = vsel %vm420, %v883, %v1054
      %1056 = vst [vmem:[%s949 + $0xb0] sm:$0x1] %v1055
      %v1057 = vld [vmem:[%s949 + $0xb4] sm:$0xf]
      %v1058 = vsel %vm951, %v890, %v1057
      %1059 = vst [vmem:[%s949 + $0xb4] sm:$0xf] %v1058
      %1060 = vst [vmem:[%s949 + $0xb8] sm:$0xf] %v899
      %v1061 = vld [vmem:[%s949 + $0xbc] sm:$0x1]
      %v1062 = vsel %vm420, %v900, %v1061
      %1063 = vst [vmem:[%s949 + $0xbc] sm:$0x1] %v1062
      %v1064 = vld [vmem:[#allocation2] sm:$0xf]
      %v1065 = vld [vmem:[#allocation2 + $0x4] sm:$0xf]
      %v1066 = vld [vmem:[#allocation2 + $0xc] sm:$0xf]
      %v1067 = vld [vmem:[#allocation2 + $0x10] sm:$0xf]
      %v1068 = vld [vmem:[#allocation2 + $0x18] sm:$0xf]
      %v1069 = vld [vmem:[#allocation2 + $0x1c] sm:$0xf]
      %v1070 = vld [vmem:[#allocation2 + $0x24] sm:$0xf]
      %v1071 = vld [vmem:[#allocation2 + $0x28] sm:$0xf]
      %v1072 = vld [vmem:[#allocation2 + $0x30] sm:$0xf]
      %v1073 = vld [vmem:[#allocation2 + $0x34] sm:$0xf]
      %v1074 = vld [vmem:[#allocation2 + $0x3c] sm:$0xf]
      %v1075 = vld [vmem:[#allocation2 + $0x40] sm:$0xf]
      %v1076 = vld [vmem:[#allocation2 + $0x48] sm:$0xf]
      %v1077 = vld [vmem:[#allocation2 + $0x4c] sm:$0xf]
      %v1078 = vld [vmem:[#allocation2 + $0x54] sm:$0xf]
      %v1079 = vld [vmem:[#allocation2 + $0x58] sm:$0xf]
      %v1080 = vld [vmem:[#allocation2 + $0x60] sm:$0xf]
      %v1081 = vld [vmem:[#allocation2 + $0x64] sm:$0xf]
      %v1082 = vld [vmem:[#allocation2 + $0x6c] sm:$0xf]
      %v1083 = vld [vmem:[#allocation2 + $0x70] sm:$0xf]
      %v1084 = vld [vmem:[#allocation2 + $0x78] sm:$0xf]
      %v1085 = vld [vmem:[#allocation2 + $0x7c] sm:$0xf]
      %v1086 = vld [vmem:[#allocation2 + $0x84] sm:$0xf]
      %v1087 = vld [vmem:[#allocation2 + $0x88] sm:$0xf]
      %v1088 = vld [vmem:[#allocation2 + $0x90] sm:$0xf]
      %v1089 = vld [vmem:[#allocation2 + $0x94] sm:$0xf]
      %v1090 = vld [vmem:[#allocation2 + $0x9c] sm:$0xf]
      %v1091 = vld [vmem:[#allocation2 + $0xa0] sm:$0xf]
      %v1092 = vld [vmem:[#allocation2 + $0xa8] sm:$0xf]
      %v1093 = vld [vmem:[#allocation2 + $0xac] sm:$0xf]
      %v1094 = vld [vmem:[#allocation2 + $0xb4] sm:$0xf]
      %v1095 = vld [vmem:[#allocation2 + $0xb8] sm:$0xf]
      %v1128 = vunpack.c.l.b16 %v1064
      %v1129 = vunpack.c.l.b16 %v1065
      %v1130 = vunpack.c.l.b16 %v1066
      %v1131 = vunpack.c.l.b16 %v1067
      %v1132 = vunpack.c.l.b16 %v1068
      %v1133 = vunpack.c.l.b16 %v1069
      %v1134 = vunpack.c.l.b16 %v1070
      %v1135 = vunpack.c.l.b16 %v1071
      %v1136 = vunpack.c.l.b16 %v1072
      %v1137 = vunpack.c.l.b16 %v1073
      %v1138 = vunpack.c.l.b16 %v1074
      %v1139 = vunpack.c.l.b16 %v1075
      %v1140 = vunpack.c.l.b16 %v1076
      %v1141 = vunpack.c.l.b16 %v1077
      %v1142 = vunpack.c.l.b16 %v1078
      %v1143 = vunpack.c.l.b16 %v1079
      %v1144 = vunpack.c.l.b16 %v1080
      %v1145 = vunpack.c.l.b16 %v1081
      %v1146 = vunpack.c.l.b16 %v1082
      %v1147 = vunpack.c.l.b16 %v1083
      %v1148 = vunpack.c.l.b16 %v1084
      %v1149 = vunpack.c.l.b16 %v1085
      %v1150 = vunpack.c.l.b16 %v1086
      %v1151 = vunpack.c.l.b16 %v1087
      %v1152 = vunpack.c.l.b16 %v1088
      %v1153 = vunpack.c.l.b16 %v1089
      %v1154 = vunpack.c.l.b16 %v1090
      %v1155 = vunpack.c.l.b16 %v1091
      %v1156 = vunpack.c.l.b16 %v1092
      %v1157 = vunpack.c.l.b16 %v1093
      %v1158 = vunpack.c.l.b16 %v1094
      %v1159 = vunpack.c.l.b16 %v1095
      %v1160 = vpack.c.b16 %v1129, %v1128
      %v1161 = vpack.c.b16 %v1131, %v1130
      %v1162 = vpack.c.b16 %v1133, %v1132
      %v1163 = vpack.c.b16 %v1135, %v1134
      %v1164 = vpack.c.b16 %v1137, %v1136
      %v1165 = vpack.c.b16 %v1139, %v1138
      %v1166 = vpack.c.b16 %v1141, %v1140
      %v1167 = vpack.c.b16 %v1143, %v1142
      %v1168 = vpack.c.b16 %v1145, %v1144
      %v1169 = vpack.c.b16 %v1147, %v1146
      %v1170 = vpack.c.b16 %v1149, %v1148
      %v1171 = vpack.c.b16 %v1151, %v1150
      %v1172 = vpack.c.b16 %v1153, %v1152
      %v1173 = vpack.c.b16 %v1155, %v1154
      %v1174 = vpack.c.b16 %v1157, %v1156
      %v1175 = vpack.c.b16 %v1159, %v1158
      %1192 = vst [vmem:[#allocation3] sm:$0xff] %v1160
      %1193 = vst [vmem:[#allocation3 + $0x48] sm:$0xff] %v1161
      %1194 = vst [vmem:[#allocation3 + $0x90] sm:$0xff] %v1162
      %1195 = vst [vmem:[#allocation3 + $0xd8] sm:$0xff] %v1163
      %1196 = vst [vmem:[#allocation3 + $0x120] sm:$0xff] %v1164
      %1197 = vst [vmem:[#allocation3 + $0x168] sm:$0xff] %v1165
      %1198 = vst [vmem:[#allocation3 + $0x1b0] sm:$0xff] %v1166
      %1199 = vst [vmem:[#allocation3 + $0x1f8] sm:$0xff] %v1167
      %1200 = vst [vmem:[#allocation3 + $0x240] sm:$0xff] %v1168
      %1201 = vst [vmem:[#allocation3 + $0x288] sm:$0xff] %v1169
      %1202 = vst [vmem:[#allocation3 + $0x2d0] sm:$0xff] %v1170
      %1203 = vst [vmem:[#allocation3 + $0x318] sm:$0xff] %v1171
      %1204 = vst [vmem:[#allocation3 + $0x360] sm:$0xff] %v1172
      %1205 = vst [vmem:[#allocation3 + $0x3a8] sm:$0xff] %v1173
      %1206 = vst [vmem:[#allocation3 + $0x3f0] sm:$0xff] %v1174
      %1207 = vst [vmem:[#allocation3 + $0x438] sm:$0xff] %v1175
      %v1208 = vld [vmem:[#allocation2] sm:$0xf]
      %v1209 = vld [vmem:[#allocation2 + $0x4] sm:$0xf]
      %v1210 = vld [vmem:[#allocation2 + $0x8] sm:$0x1]
      %v1211 = vld [vmem:[#allocation2 + $0xc] sm:$0xf]
      %v1212 = vld [vmem:[#allocation2 + $0x10] sm:$0xf]
      %v1213 = vld [vmem:[#allocation2 + $0x14] sm:$0x1]
      %v1214 = vld [vmem:[#allocation2 + $0x18] sm:$0xf]
      %v1215 = vld [vmem:[#allocation2 + $0x1c] sm:$0xf]
      %v1216 = vld [vmem:[#allocation2 + $0x20] sm:$0x1]
      %v1217 = vld [vmem:[#allocation2 + $0x24] sm:$0xf]
      %v1218 = vld [vmem:[#allocation2 + $0x28] sm:$0xf]
      %v1219 = vld [vmem:[#allocation2 + $0x2c] sm:$0x1]
      %v1220 = vld [vmem:[#allocation2 + $0x30] sm:$0xf]
      %v1221 = vld [vmem:[#allocation2 + $0x34] sm:$0xf]
      %v1222 = vld [vmem:[#allocation2 + $0x38] sm:$0x1]
      %v1223 = vld [vmem:[#allocation2 + $0x3c] sm:$0xf]
      %v1224 = vld [vmem:[#allocation2 + $0x40] sm:$0xf]
      %v1225 = vld [vmem:[#allocation2 + $0x44] sm:$0x1]
      %v1226 = vld [vmem:[#allocation2 + $0x48] sm:$0xf]
      %v1227 = vld [vmem:[#allocation2 + $0x4c] sm:$0xf]
      %v1228 = vld [vmem:[#allocation2 + $0x50] sm:$0x1]
      %v1229 = vld [vmem:[#allocation2 + $0x54] sm:$0xf]
      %v1230 = vld [vmem:[#allocation2 + $0x58] sm:$0xf]
      %v1231 = vld [vmem:[#allocation2 + $0x5c] sm:$0x1]
      %v1232 = vld [vmem:[#allocation2 + $0x60] sm:$0xf]
      %v1233 = vld [vmem:[#allocation2 + $0x64] sm:$0xf]
      %v1234 = vld [vmem:[#allocation2 + $0x68] sm:$0x1]
      %v1235 = vld [vmem:[#allocation2 + $0x6c] sm:$0xf]
      %v1236 = vld [vmem:[#allocation2 + $0x70] sm:$0xf]
      %v1237 = vld [vmem:[#allocation2 + $0x74] sm:$0x1]
      %v1238 = vld [vmem:[#allocation2 + $0x78] sm:$0xf]
      %v1239 = vld [vmem:[#allocation2 + $0x7c] sm:$0xf]
      %v1240 = vld [vmem:[#allocation2 + $0x80] sm:$0x1]
      %v1241 = vld [vmem:[#allocation2 + $0x84] sm:$0xf]
      %v1242 = vld [vmem:[#allocation2 + $0x88] sm:$0xf]
      %v1243 = vld [vmem:[#allocation2 + $0x8c] sm:$0x1]
      %v1244 = vld [vmem:[#allocation2 + $0x90] sm:$0xf]
      %v1245 = vld [vmem:[#allocation2 + $0x94] sm:$0xf]
      %v1246 = vld [vmem:[#allocation2 + $0x98] sm:$0x1]
      %v1247 = vld [vmem:[#allocation2 + $0x9c] sm:$0xf]
      %v1248 = vld [vmem:[#allocation2 + $0xa0] sm:$0xf]
      %v1249 = vld [vmem:[#allocation2 + $0xa4] sm:$0x1]
      %v1250 = vld [vmem:[#allocation2 + $0xa8] sm:$0xf]
      %v1251 = vld [vmem:[#allocation2 + $0xac] sm:$0xf]
      %v1252 = vld [vmem:[#allocation2 + $0xb0] sm:$0x1]
      %v1253 = vld [vmem:[#allocation2 + $0xb4] sm:$0xf]
      %v1254 = vld [vmem:[#allocation2 + $0xb8] sm:$0xf]
      %v1255 = vld [vmem:[#allocation2 + $0xbc] sm:$0x1]
      %v1304 = vunpack.c.l.b16 %v1208
      %v1305 = vunpack.c.l.b16 %v1209
      %v1306 = vunpack.c.l.b16 %v1210
      %v1307 = vunpack.c.l.b16 %v1211
      %v1308 = vunpack.c.l.b16 %v1212
      %v1309 = vunpack.c.l.b16 %v1213
      %v1310 = vunpack.c.l.b16 %v1214
      %v1311 = vunpack.c.l.b16 %v1215
      %v1312 = vunpack.c.l.b16 %v1216
      %v1313 = vunpack.c.l.b16 %v1217
      %v1314 = vunpack.c.l.b16 %v1218
      %v1315 = vunpack.c.l.b16 %v1219
      %v1316 = vunpack.c.l.b16 %v1220
      %v1317 = vunpack.c.l.b16 %v1221
      %v1318 = vunpack.c.l.b16 %v1222
      %v1319 = vunpack.c.l.b16 %v1223
      %v1320 = vunpack.c.l.b16 %v1224
      %v1321 = vunpack.c.l.b16 %v1225
      %v1322 = vunpack.c.l.b16 %v1226
      %v1323 = vunpack.c.l.b16 %v1227
      %v1324 = vunpack.c.l.b16 %v1228
      %v1325 = vunpack.c.l.b16 %v1229
      %v1326 = vunpack.c.l.b16 %v1230
      %v1327 = vunpack.c.l.b16 %v1231
      %v1328 = vunpack.c.l.b16 %v1232
      %v1329 = vunpack.c.l.b16 %v1233
      %v1330 = vunpack.c.l.b16 %v1234
      %v1331 = vunpack.c.l.b16 %v1235
      %v1332 = vunpack.c.l.b16 %v1236
      %v1333 = vunpack.c.l.b16 %v1237
      %v1334 = vunpack.c.l.b16 %v1238
      %v1335 = vunpack.c.l.b16 %v1239
      %v1336 = vunpack.c.l.b16 %v1240
      %v1337 = vunpack.c.l.b16 %v1241
      %v1338 = vunpack.c.l.b16 %v1242
      %v1339 = vunpack.c.l.b16 %v1243
      %v1340 = vunpack.c.l.b16 %v1244
      %v1341 = vunpack.c.l.b16 %v1245
      %v1342 = vunpack.c.l.b16 %v1246
      %v1343 = vunpack.c.l.b16 %v1247
      %v1344 = vunpack.c.l.b16 %v1248
      %v1345 = vunpack.c.l.b16 %v1249
      %v1346 = vunpack.c.l.b16 %v1250
      %v1347 = vunpack.c.l.b16 %v1251
      %v1348 = vunpack.c.l.b16 %v1252
      %v1349 = vunpack.c.l.b16 %v1253
      %v1350 = vunpack.c.l.b16 %v1254
      %v1351 = vunpack.c.l.b16 %v1255
      %v1352 = vpack.c.b16 %v1305, %v1304
      %v1353 = vpack.c.b16 %v1306, %v1306
      %v1354 = vpack.c.b16 %v1308, %v1307
      %v1355 = vpack.c.b16 %v1309, %v1309
      %v1356 = vpack.c.b16 %v1311, %v1310
      %v1357 = vpack.c.b16 %v1312, %v1312
      %v1358 = vpack.c.b16 %v1314, %v1313
      %v1359 = vpack.c.b16 %v1315, %v1315
      %v1360 = vpack.c.b16 %v1317, %v1316
      %v1361 = vpack.c.b16 %v1318, %v1318
      %v1362 = vpack.c.b16 %v1320, %v1319
      %v1363 = vpack.c.b16 %v1321, %v1321
      %v1364 = vpack.c.b16 %v1323, %v1322
      %v1365 = vpack.c.b16 %v1324, %v1324
      %v1366 = vpack.c.b16 %v1326, %v1325
      %v1367 = vpack.c.b16 %v1327, %v1327
      %v1368 = vpack.c.b16 %v1329, %v1328
      %v1369 = vpack.c.b16 %v1330, %v1330
      %v1370 = vpack.c.b16 %v1332, %v1331
      %v1371 = vpack.c.b16 %v1333, %v1333
      %v1372 = vpack.c.b16 %v1335, %v1334
      %v1373 = vpack.c.b16 %v1336, %v1336
      %v1374 = vpack.c.b16 %v1338, %v1337
      %v1375 = vpack.c.b16 %v1339, %v1339
      %v1376 = vpack.c.b16 %v1341, %v1340
      %v1377 = vpack.c.b16 %v1342, %v1342
      %v1378 = vpack.c.b16 %v1344, %v1343
      %v1379 = vpack.c.b16 %v1345, %v1345
      %v1380 = vpack.c.b16 %v1347, %v1346
      %v1381 = vpack.c.b16 %v1348, %v1348
      %v1382 = vpack.c.b16 %v1350, %v1349
      %v1383 = vpack.c.b16 %v1351, %v1351
      %vm1384 = vsmask.f32 7424
      %v1386 = vshrl.u32 %v1352, 16
      %v1388 = vshll.u32 %v1352, 16
      %v1390 = vrot.slane %v1388, 1
      %v1391 = vor.u32 %v1386, %v1390
      %v1393 = vshll.u32 %v1353, 16
      %v1395 = vrot.slane %v1393, 1
      %v1396 = vsel %vm1384, %v1391, %v1395
      %v1398 = vshrl.u32 %v1354, 16
      %v1400 = vshll.u32 %v1354, 16
      %v1402 = vrot.slane %v1400, 1
      %v1403 = vor.u32 %v1398, %v1402
      %v1405 = vshll.u32 %v1355, 16
      %v1407 = vrot.slane %v1405, 1
      %v1408 = vsel %vm1384, %v1403, %v1407
      %v1410 = vshrl.u32 %v1356, 16
      %v1412 = vshll.u32 %v1356, 16
      %v1414 = vrot.slane %v1412, 1
      %v1415 = vor.u32 %v1410, %v1414
      %v1417 = vshll.u32 %v1357, 16
      %v1419 = vrot.slane %v1417, 1
      %v1420 = vsel %vm1384, %v1415, %v1419
      %v1422 = vshrl.u32 %v1358, 16
      %v1424 = vshll.u32 %v1358, 16
      %v1426 = vrot.slane %v1424, 1
      %v1427 = vor.u32 %v1422, %v1426
      %v1429 = vshll.u32 %v1359, 16
      %v1431 = vrot.slane %v1429, 1
      %v1432 = vsel %vm1384, %v1427, %v1431
      %v1434 = vshrl.u32 %v1360, 16
      %v1436 = vshll.u32 %v1360, 16
      %v1438 = vrot.slane %v1436, 1
      %v1439 = vor.u32 %v1434, %v1438
      %v1441 = vshll.u32 %v1361, 16
      %v1443 = vrot.slane %v1441, 1
      %v1444 = vsel %vm1384, %v1439, %v1443
      %v1446 = vshrl.u32 %v1362, 16
      %v1448 = vshll.u32 %v1362, 16
      %v1450 = vrot.slane %v1448, 1
      %v1451 = vor.u32 %v1446, %v1450
      %v1453 = vshll.u32 %v1363, 16
      %v1455 = vrot.slane %v1453, 1
      %v1456 = vsel %vm1384, %v1451, %v1455
      %v1458 = vshrl.u32 %v1364, 16
      %v1460 = vshll.u32 %v1364, 16
      %v1462 = vrot.slane %v1460, 1
      %v1463 = vor.u32 %v1458, %v1462
      %v1465 = vshll.u32 %v1365, 16
      %v1467 = vrot.slane %v1465, 1
      %v1468 = vsel %vm1384, %v1463, %v1467
      %v1470 = vshrl.u32 %v1366, 16
      %v1472 = vshll.u32 %v1366, 16
      %v1474 = vrot.slane %v1472, 1
      %v1475 = vor.u32 %v1470, %v1474
      %v1477 = vshll.u32 %v1367, 16
      %v1479 = vrot.slane %v1477, 1
      %v1480 = vsel %vm1384, %v1475, %v1479
      %v1482 = vshrl.u32 %v1368, 16
      %v1484 = vshll.u32 %v1368, 16
      %v1486 = vrot.slane %v1484, 1
      %v1487 = vor.u32 %v1482, %v1486
      %v1489 = vshll.u32 %v1369, 16
      %v1491 = vrot.slane %v1489, 1
      %v1492 = vsel %vm1384, %v1487, %v1491
      %v1494 = vshrl.u32 %v1370, 16
      %v1496 = vshll.u32 %v1370, 16
      %v1498 = vrot.slane %v1496, 1
      %v1499 = vor.u32 %v1494, %v1498
      %v1501 = vshll.u32 %v1371, 16
      %v1503 = vrot.slane %v1501, 1
      %v1504 = vsel %vm1384, %v1499, %v1503
      %v1506 = vshrl.u32 %v1372, 16
      %v1508 = vshll.u32 %v1372, 16
      %v1510 = vrot.slane %v1508, 1
      %v1511 = vor.u32 %v1506, %v1510
      %v1513 = vshll.u32 %v1373, 16
      %v1515 = vrot.slane %v1513, 1
      %v1516 = vsel %vm1384, %v1511, %v1515
      %v1518 = vshrl.u32 %v1374, 16
      %v1520 = vshll.u32 %v1374, 16
      %v1522 = vrot.slane %v1520, 1
      %v1523 = vor.u32 %v1518, %v1522
      %v1525 = vshll.u32 %v1375, 16
      %v1527 = vrot.slane %v1525, 1
      %v1528 = vsel %vm1384, %v1523, %v1527
      %v1530 = vshrl.u32 %v1376, 16
      %v1532 = vshll.u32 %v1376, 16
      %v1534 = vrot.slane %v1532, 1
      %v1535 = vor.u32 %v1530, %v1534
      %v1537 = vshll.u32 %v1377, 16
      %v1539 = vrot.slane %v1537, 1
      %v1540 = vsel %vm1384, %v1535, %v1539
      %v1542 = vshrl.u32 %v1378, 16
      %v1544 = vshll.u32 %v1378, 16
      %v1546 = vrot.slane %v1544, 1
      %v1547 = vor.u32 %v1542, %v1546
      %v1549 = vshll.u32 %v1379, 16
      %v1551 = vrot.slane %v1549, 1
      %v1552 = vsel %vm1384, %v1547, %v1551
      %v1554 = vshrl.u32 %v1380, 16
      %v1556 = vshll.u32 %v1380, 16
      %v1558 = vrot.slane %v1556, 1
      %v1559 = vor.u32 %v1554, %v1558
      %v1561 = vshll.u32 %v1381, 16
      %v1563 = vrot.slane %v1561, 1
      %v1564 = vsel %vm1384, %v1559, %v1563
      %v1566 = vshrl.u32 %v1382, 16
      %v1568 = vshll.u32 %v1382, 16
      %v1570 = vrot.slane %v1568, 1
      %v1571 = vor.u32 %v1566, %v1570
      %v1573 = vshll.u32 %v1383, 16
      %v1575 = vrot.slane %v1573, 1
      %v1576 = vsel %vm1384, %v1571, %v1575
      %1593 = vst [vmem:[#allocation3 + $0x8] sm:$0xff] %v1396
      %1594 = vst [vmem:[#allocation3 + $0x50] sm:$0xff] %v1408
      %1595 = vst [vmem:[#allocation3 + $0x98] sm:$0xff] %v1420
      %1596 = vst [vmem:[#allocation3 + $0xe0] sm:$0xff] %v1432
      %1597 = vst [vmem:[#allocation3 + $0x128] sm:$0xff] %v1444
      %1598 = vst [vmem:[#allocation3 + $0x170] sm:$0xff] %v1456
      %1599 = vst [vmem:[#allocation3 + $0x1b8] sm:$0xff] %v1468
      %1600 = vst [vmem:[#allocation3 + $0x200] sm:$0xff] %v1480
      %1601 = vst [vmem:[#allocation3 + $0x248] sm:$0xff] %v1492
      %1602 = vst [vmem:[#allocation3 + $0x290] sm:$0xff] %v1504
      %1603 = vst [vmem:[#allocation3 + $0x2d8] sm:$0xff] %v1516
      %1604 = vst [vmem:[#allocation3 + $0x320] sm:$0xff] %v1528
      %1605 = vst [vmem:[#allocation3 + $0x368] sm:$0xff] %v1540
      %1606 = vst [vmem:[#allocation3 + $0x3b0] sm:$0xff] %v1552
      %1607 = vst [vmem:[#allocation3 + $0x3f8] sm:$0xff] %v1564
      %1608 = vst [vmem:[#allocation3 + $0x440] sm:$0xff] %v1576
      %v1609 = vld [vmem:[#allocation2] sm:$0xe]
      %v1610 = vld [vmem:[#allocation2 + $0x4] sm:$0xf]
      %v1611 = vld [vmem:[#allocation2 + $0x8] sm:$0x1]
      %v1612 = vld [vmem:[#allocation2 + $0xc] sm:$0xe]
      %v1613 = vld [vmem:[#allocation2 + $0x10] sm:$0xf]
      %v1614 = vld [vmem:[#allocation2 + $0x14] sm:$0x1]
      %v1615 = vld [vmem:[#allocation2 + $0x18] sm:$0xe]
      %v1616 = vld [vmem:[#allocation2 + $0x1c] sm:$0xf]
      %v1617 = vld [vmem:[#allocation2 + $0x20] sm:$0x1]
      %v1618 = vld [vmem:[#allocation2 + $0x24] sm:$0xe]
      %v1619 = vld [vmem:[#allocation2 + $0x28] sm:$0xf]
      %v1620 = vld [vmem:[#allocation2 + $0x2c] sm:$0x1]
      %v1621 = vld [vmem:[#allocation2 + $0x30] sm:$0xe]
      %v1622 = vld [vmem:[#allocation2 + $0x34] sm:$0xf]
      %v1623 = vld [vmem:[#allocation2 + $0x38] sm:$0x1]
      %v1624 = vld [vmem:[#allocation2 + $0x3c] sm:$0xe]
      %v1625 = vld [vmem:[#allocation2 + $0x40] sm:$0xf]
      %v1626 = vld [vmem:[#allocation2 + $0x44] sm:$0x1]
      %v1627 = vld [vmem:[#allocation2 + $0x48] sm:$0xe]
      %v1628 = vld [vmem:[#allocation2 + $0x4c] sm:$0xf]
      %v1629 = vld [vmem:[#allocation2 + $0x50] sm:$0x1]
      %v1630 = vld [vmem:[#allocation2 + $0x54] sm:$0xe]
      %v1631 = vld [vmem:[#allocation2 + $0x58] sm:$0xf]
      %v1632 = vld [vmem:[#allocation2 + $0x5c] sm:$0x1]
      %v1633 = vld [vmem:[#allocation2 + $0x60] sm:$0xe]
      %v1634 = vld [vmem:[#allocation2 + $0x64] sm:$0xf]
      %v1635 = vld [vmem:[#allocation2 + $0x68] sm:$0x1]
      %v1636 = vld [vmem:[#allocation2 + $0x6c] sm:$0xe]
      %v1637 = vld [vmem:[#allocation2 + $0x70] sm:$0xf]
      %v1638 = vld [vmem:[#allocation2 + $0x74] sm:$0x1]
      %v1639 = vld [vmem:[#allocation2 + $0x78] sm:$0xe]
      %v1640 = vld [vmem:[#allocation2 + $0x7c] sm:$0xf]
      %v1641 = vld [vmem:[#allocation2 + $0x80] sm:$0x1]
      %v1642 = vld [vmem:[#allocation2 + $0x84] sm:$0xe]
      %v1643 = vld [vmem:[#allocation2 + $0x88] sm:$0xf]
      %v1644 = vld [vmem:[#allocation2 + $0x8c] sm:$0x1]
      %v1645 = vld [vmem:[#allocation2 + $0x90] sm:$0xe]
      %v1646 = vld [vmem:[#allocation2 + $0x94] sm:$0xf]
      %v1647 = vld [vmem:[#allocation2 + $0x98] sm:$0x1]
      %v1648 = vld [vmem:[#allocation2 + $0x9c] sm:$0xe]
      %v1649 = vld [vmem:[#allocation2 + $0xa0] sm:$0xf]
      %v1650 = vld [vmem:[#allocation2 + $0xa4] sm:$0x1]
      %v1651 = vld [vmem:[#allocation2 + $0xa8] sm:$0xe]
      %v1652 = vld [vmem:[#allocation2 + $0xac] sm:$0xf]
      %v1653 = vld [vmem:[#allocation2 + $0xb0] sm:$0x1]
      %v1654 = vld [vmem:[#allocation2 + $0xb4] sm:$0xe]
      %v1655 = vld [vmem:[#allocation2 + $0xb8] sm:$0xf]
      %v1656 = vld [vmem:[#allocation2 + $0xbc] sm:$0x1]
      %v1705 = vunpack.c.l.b16 %v1609
      %v1706 = vunpack.c.l.b16 %v1610
      %v1707 = vunpack.c.l.b16 %v1611
      %v1708 = vunpack.c.l.b16 %v1612
      %v1709 = vunpack.c.l.b16 %v1613
      %v1710 = vunpack.c.l.b16 %v1614
      %v1711 = vunpack.c.l.b16 %v1615
      %v1712 = vunpack.c.l.b16 %v1616
      %v1713 = vunpack.c.l.b16 %v1617
      %v1714 = vunpack.c.l.b16 %v1618
      %v1715 = vunpack.c.l.b16 %v1619
      %v1716 = vunpack.c.l.b16 %v1620
      %v1717 = vunpack.c.l.b16 %v1621
      %v1718 = vunpack.c.l.b16 %v1622
      %v1719 = vunpack.c.l.b16 %v1623
      %v1720 = vunpack.c.l.b16 %v1624
      %v1721 = vunpack.c.l.b16 %v1625
      %v1722 = vunpack.c.l.b16 %v1626
      %v1723 = vunpack.c.l.b16 %v1627
      %v1724 = vunpack.c.l.b16 %v1628
      %v1725 = vunpack.c.l.b16 %v1629
      %v1726 = vunpack.c.l.b16 %v1630
      %v1727 = vunpack.c.l.b16 %v1631
      %v1728 = vunpack.c.l.b16 %v1632
      %v1729 = vunpack.c.l.b16 %v1633
      %v1730 = vunpack.c.l.b16 %v1634
      %v1731 = vunpack.c.l.b16 %v1635
      %v1732 = vunpack.c.l.b16 %v1636
      %v1733 = vunpack.c.l.b16 %v1637
      %v1734 = vunpack.c.l.b16 %v1638
      %v1735 = vunpack.c.l.b16 %v1639
      %v1736 = vunpack.c.l.b16 %v1640
      %v1737 = vunpack.c.l.b16 %v1641
      %v1738 = vunpack.c.l.b16 %v1642
      %v1739 = vunpack.c.l.b16 %v1643
      %v1740 = vunpack.c.l.b16 %v1644
      %v1741 = vunpack.c.l.b16 %v1645
      %v1742 = vunpack.c.l.b16 %v1646
      %v1743 = vunpack.c.l.b16 %v1647
      %v1744 = vunpack.c.l.b16 %v1648
      %v1745 = vunpack.c.l.b16 %v1649
      %v1746 = vunpack.c.l.b16 %v1650
      %v1747 = vunpack.c.l.b16 %v1651
      %v1748 = vunpack.c.l.b16 %v1652
      %v1749 = vunpack.c.l.b16 %v1653
      %v1750 = vunpack.c.l.b16 %v1654
      %v1751 = vunpack.c.l.b16 %v1655
      %v1752 = vunpack.c.l.b16 %v1656
      %v1753 = vpack.c.b16 %v1706, %v1705
      %v1754 = vpack.c.b16 %v1707, %v1707
      %v1755 = vpack.c.b16 %v1709, %v1708
      %v1756 = vpack.c.b16 %v1710, %v1710
      %v1757 = vpack.c.b16 %v1712, %v1711
      %v1758 = vpack.c.b16 %v1713, %v1713
      %v1759 = vpack.c.b16 %v1715, %v1714
      %v1760 = vpack.c.b16 %v1716, %v1716
      %v1761 = vpack.c.b16 %v1718, %v1717
      %v1762 = vpack.c.b16 %v1719, %v1719
      %v1763 = vpack.c.b16 %v1721, %v1720
      %v1764 = vpack.c.b16 %v1722, %v1722
      %v1765 = vpack.c.b16 %v1724, %v1723
      %v1766 = vpack.c.b16 %v1725, %v1725
      %v1767 = vpack.c.b16 %v1727, %v1726
      %v1768 = vpack.c.b16 %v1728, %v1728
      %v1769 = vpack.c.b16 %v1730, %v1729
      %v1770 = vpack.c.b16 %v1731, %v1731
      %v1771 = vpack.c.b16 %v1733, %v1732
      %v1772 = vpack.c.b16 %v1734, %v1734
      %v1773 = vpack.c.b16 %v1736, %v1735
      %v1774 = vpack.c.b16 %v1737, %v1737
      %v1775 = vpack.c.b16 %v1739, %v1738
      %v1776 = vpack.c.b16 %v1740, %v1740
      %v1777 = vpack.c.b16 %v1742, %v1741
      %v1778 = vpack.c.b16 %v1743, %v1743
      %v1779 = vpack.c.b16 %v1745, %v1744
      %v1780 = vpack.c.b16 %v1746, %v1746
      %v1781 = vpack.c.b16 %v1748, %v1747
      %v1782 = vpack.c.b16 %v1749, %v1749
      %v1783 = vpack.c.b16 %v1751, %v1750
      %v1784 = vpack.c.b16 %v1752, %v1752
      %vm1785 = vcmask 1046528
      %v1786 = vrot.slane %v1753, 1
      %v1787 = vrot.slane %v1754, 1
      %v1788 = vsel %vm1785, %v1786, %v1787
      %v1789 = vrot.slane %v1755, 1
      %v1790 = vrot.slane %v1756, 1
      %v1791 = vsel %vm1785, %v1789, %v1790
      %v1792 = vrot.slane %v1757, 1
      %v1793 = vrot.slane %v1758, 1
      %v1794 = vsel %vm1785, %v1792, %v1793
      %v1795 = vrot.slane %v1759, 1
      %v1796 = vrot.slane %v1760, 1
      %v1797 = vsel %vm1785, %v1795, %v1796
      %v1798 = vrot.slane %v1761, 1
      %v1799 = vrot.slane %v1762, 1
      %v1800 = vsel %vm1785, %v1798, %v1799
      %v1801 = vrot.slane %v1763, 1
      %v1802 = vrot.slane %v1764, 1
      %v1803 = vsel %vm1785, %v1801, %v1802
      %v1804 = vrot.slane %v1765, 1
      %v1805 = vrot.slane %v1766, 1
      %v1806 = vsel %vm1785, %v1804, %v1805
      %v1807 = vrot.slane %v1767, 1
      %v1808 = vrot.slane %v1768, 1
      %v1809 = vsel %vm1785, %v1807, %v1808
      %v1810 = vrot.slane %v1769, 1
      %v1811 = vrot.slane %v1770, 1
      %v1812 = vsel %vm1785, %v1810, %v1811
      %v1813 = vrot.slane %v1771, 1
      %v1814 = vrot.slane %v1772, 1
      %v1815 = vsel %vm1785, %v1813, %v1814
      %v1816 = vrot.slane %v1773, 1
      %v1817 = vrot.slane %v1774, 1
      %v1818 = vsel %vm1785, %v1816, %v1817
      %v1819 = vrot.slane %v1775, 1
      %v1820 = vrot.slane %v1776, 1
      %v1821 = vsel %vm1785, %v1819, %v1820
      %v1822 = vrot.slane %v1777, 1
      %v1823 = vrot.slane %v1778, 1
      %v1824 = vsel %vm1785, %v1822, %v1823
      %v1825 = vrot.slane %v1779, 1
      %v1826 = vrot.slane %v1780, 1
      %v1827 = vsel %vm1785, %v1825, %v1826
      %v1828 = vrot.slane %v1781, 1
      %v1829 = vrot.slane %v1782, 1
      %v1830 = vsel %vm1785, %v1828, %v1829
      %v1831 = vrot.slane %v1783, 1
      %v1832 = vrot.slane %v1784, 1
      %v1833 = vsel %vm1785, %v1831, %v1832
      %1850 = vst [vmem:[#allocation3 + $0x10] sm:$0xff] %v1788
      %1851 = vst [vmem:[#allocation3 + $0x58] sm:$0xff] %v1791
      %1852 = vst [vmem:[#allocation3 + $0xa0] sm:$0xff] %v1794
      %1853 = vst [vmem:[#allocation3 + $0xe8] sm:$0xff] %v1797
      %1854 = vst [vmem:[#allocation3 + $0x130] sm:$0xff] %v1800
      %1855 = vst [vmem:[#allocation3 + $0x178] sm:$0xff] %v1803
      %1856 = vst [vmem:[#allocation3 + $0x1c0] sm:$0xff] %v1806
      %1857 = vst [vmem:[#allocation3 + $0x208] sm:$0xff] %v1809
      %1858 = vst [vmem:[#allocation3 + $0x250] sm:$0xff] %v1812
      %1859 = vst [vmem:[#allocation3 + $0x298] sm:$0xff] %v1815
      %1860 = vst [vmem:[#allocation3 + $0x2e0] sm:$0xff] %v1818
      %1861 = vst [vmem:[#allocation3 + $0x328] sm:$0xff] %v1821
      %1862 = vst [vmem:[#allocation3 + $0x370] sm:$0xff] %v1824
      %1863 = vst [vmem:[#allocation3 + $0x3b8] sm:$0xff] %v1827
      %1864 = vst [vmem:[#allocation3 + $0x400] sm:$0xff] %v1830
      %1865 = vst [vmem:[#allocation3 + $0x448] sm:$0xff] %v1833
      %v1866 = vld [vmem:[%s949] sm:$0xf]
      %v1867 = vld [vmem:[%s949 + $0x4] sm:$0xf]
      %v1868 = vld [vmem:[%s949 + $0xc] sm:$0xf]
      %v1869 = vld [vmem:[%s949 + $0x10] sm:$0xf]
      %v1870 = vld [vmem:[%s949 + $0x18] sm:$0xf]
      %v1871 = vld [vmem:[%s949 + $0x1c] sm:$0xf]
      %v1872 = vld [vmem:[%s949 + $0x24] sm:$0xf]
      %v1873 = vld [vmem:[%s949 + $0x28] sm:$0xf]
      %v1874 = vld [vmem:[%s949 + $0x30] sm:$0xf]
      %v1875 = vld [vmem:[%s949 + $0x34] sm:$0xf]
      %v1876 = vld [vmem:[%s949 + $0x3c] sm:$0xf]
      %v1877 = vld [vmem:[%s949 + $0x40] sm:$0xf]
      %v1878 = vld [vmem:[%s949 + $0x48] sm:$0xf]
      %v1879 = vld [vmem:[%s949 + $0x4c] sm:$0xf]
      %v1880 = vld [vmem:[%s949 + $0x54] sm:$0xf]
      %v1881 = vld [vmem:[%s949 + $0x58] sm:$0xf]
      %v1882 = vld [vmem:[%s949 + $0x60] sm:$0xf]
      %v1883 = vld [vmem:[%s949 + $0x64] sm:$0xf]
      %v1884 = vld [vmem:[%s949 + $0x6c] sm:$0xf]
      %v1885 = vld [vmem:[%s949 + $0x70] sm:$0xf]
      %v1886 = vld [vmem:[%s949 + $0x78] sm:$0xf]
      %v1887 = vld [vmem:[%s949 + $0x7c] sm:$0xf]
      %v1888 = vld [vmem:[%s949 + $0x84] sm:$0xf]
      %v1889 = vld [vmem:[%s949 + $0x88] sm:$0xf]
      %v1890 = vld [vmem:[%s949 + $0x90] sm:$0xf]
      %v1891 = vld [vmem:[%s949 + $0x94] sm:$0xf]
      %v1892 = vld [vmem:[%s949 + $0x9c] sm:$0xf]
      %v1893 = vld [vmem:[%s949 + $0xa0] sm:$0xf]
      %v1894 = vld [vmem:[%s949 + $0xa8] sm:$0xf]
      %v1895 = vld [vmem:[%s949 + $0xac] sm:$0xf]
      %v1896 = vld [vmem:[%s949 + $0xb4] sm:$0xf]
      %v1897 = vld [vmem:[%s949 + $0xb8] sm:$0xf]
      %v1930 = vunpack.c.l.b16 %v1866
      %v1931 = vunpack.c.l.b16 %v1867
      %v1932 = vunpack.c.l.b16 %v1868
      %v1933 = vunpack.c.l.b16 %v1869
      %v1934 = vunpack.c.l.b16 %v1870
      %v1935 = vunpack.c.l.b16 %v1871
      %v1936 = vunpack.c.l.b16 %v1872
      %v1937 = vunpack.c.l.b16 %v1873
      %v1938 = vunpack.c.l.b16 %v1874
      %v1939 = vunpack.c.l.b16 %v1875
      %v1940 = vunpack.c.l.b16 %v1876
      %v1941 = vunpack.c.l.b16 %v1877
      %v1942 = vunpack.c.l.b16 %v1878
      %v1943 = vunpack.c.l.b16 %v1879
      %v1944 = vunpack.c.l.b16 %v1880
      %v1945 = vunpack.c.l.b16 %v1881
      %v1946 = vunpack.c.l.b16 %v1882
      %v1947 = vunpack.c.l.b16 %v1883
      %v1948 = vunpack.c.l.b16 %v1884
      %v1949 = vunpack.c.l.b16 %v1885
      %v1950 = vunpack.c.l.b16 %v1886
      %v1951 = vunpack.c.l.b16 %v1887
      %v1952 = vunpack.c.l.b16 %v1888
      %v1953 = vunpack.c.l.b16 %v1889
      %v1954 = vunpack.c.l.b16 %v1890
      %v1955 = vunpack.c.l.b16 %v1891
      %v1956 = vunpack.c.l.b16 %v1892
      %v1957 = vunpack.c.l.b16 %v1893
      %v1958 = vunpack.c.l.b16 %v1894
      %v1959 = vunpack.c.l.b16 %v1895
      %v1960 = vunpack.c.l.b16 %v1896
      %v1961 = vunpack.c.l.b16 %v1897
      %v1962 = vpack.c.b16 %v1931, %v1930
      %v1963 = vpack.c.b16 %v1933, %v1932
      %v1964 = vpack.c.b16 %v1935, %v1934
      %v1965 = vpack.c.b16 %v1937, %v1936
      %v1966 = vpack.c.b16 %v1939, %v1938
      %v1967 = vpack.c.b16 %v1941, %v1940
      %v1968 = vpack.c.b16 %v1943, %v1942
      %v1969 = vpack.c.b16 %v1945, %v1944
      %v1970 = vpack.c.b16 %v1947, %v1946
      %v1971 = vpack.c.b16 %v1949, %v1948
      %v1972 = vpack.c.b16 %v1951, %v1950
      %v1973 = vpack.c.b16 %v1953, %v1952
      %v1974 = vpack.c.b16 %v1955, %v1954
      %v1975 = vpack.c.b16 %v1957, %v1956
      %v1976 = vpack.c.b16 %v1959, %v1958
      %v1977 = vpack.c.b16 %v1961, %v1960
      %1994 = vst [vmem:[#allocation3 + $0x18] sm:$0xff] %v1962
      %1995 = vst [vmem:[#allocation3 + $0x60] sm:$0xff] %v1963
      %1996 = vst [vmem:[#allocation3 + $0xa8] sm:$0xff] %v1964
      %1997 = vst [vmem:[#allocation3 + $0xf0] sm:$0xff] %v1965
      %1998 = vst [vmem:[#allocation3 + $0x138] sm:$0xff] %v1966
      %1999 = vst [vmem:[#allocation3 + $0x180] sm:$0xff] %v1967
      %2000 = vst [vmem:[#allocation3 + $0x1c8] sm:$0xff] %v1968
      %2001 = vst [vmem:[#allocation3 + $0x210] sm:$0xff] %v1969
      %2002 = vst [vmem:[#allocation3 + $0x258] sm:$0xff] %v1970
      %2003 = vst [vmem:[#allocation3 + $0x2a0] sm:$0xff] %v1971
      %2004 = vst [vmem:[#allocation3 + $0x2e8] sm:$0xff] %v1972
      %2005 = vst [vmem:[#allocation3 + $0x330] sm:$0xff] %v1973
      %2006 = vst [vmem:[#allocation3 + $0x378] sm:$0xff] %v1974
      %2007 = vst [vmem:[#allocation3 + $0x3c0] sm:$0xff] %v1975
      %2008 = vst [vmem:[#allocation3 + $0x408] sm:$0xff] %v1976
      %2009 = vst [vmem:[#allocation3 + $0x450] sm:$0xff] %v1977
      %v2010 = vld [vmem:[%s949] sm:$0xf]
      %v2011 = vld [vmem:[%s949 + $0x4] sm:$0xf]
      %v2012 = vld [vmem:[%s949 + $0x8] sm:$0x1]
      %v2013 = vld [vmem:[%s949 + $0xc] sm:$0xf]
      %v2014 = vld [vmem:[%s949 + $0x10] sm:$0xf]
      %v2015 = vld [vmem:[%s949 + $0x14] sm:$0x1]
      %v2016 = vld [vmem:[%s949 + $0x18] sm:$0xf]
      %v2017 = vld [vmem:[%s949 + $0x1c] sm:$0xf]
      %v2018 = vld [vmem:[%s949 + $0x20] sm:$0x1]
      %v2019 = vld [vmem:[%s949 + $0x24] sm:$0xf]
      %v2020 = vld [vmem:[%s949 + $0x28] sm:$0xf]
      %v2021 = vld [vmem:[%s949 + $0x2c] sm:$0x1]
      %v2022 = vld [vmem:[%s949 + $0x30] sm:$0xf]
      %v2023 = vld [vmem:[%s949 + $0x34] sm:$0xf]
      %v2024 = vld [vmem:[%s949 + $0x38] sm:$0x1]
      %v2025 = vld [vmem:[%s949 + $0x3c] sm:$0xf]
      %v2026 = vld [vmem:[%s949 + $0x40] sm:$0xf]
      %v2027 = vld [vmem:[%s949 + $0x44] sm:$0x1]
      %v2028 = vld [vmem:[%s949 + $0x48] sm:$0xf]
      %v2029 = vld [vmem:[%s949 + $0x4c] sm:$0xf]
      %v2030 = vld [vmem:[%s949 + $0x50] sm:$0x1]
      %v2031 = vld [vmem:[%s949 + $0x54] sm:$0xf]
      %v2032 = vld [vmem:[%s949 + $0x58] sm:$0xf]
      %v2033 = vld [vmem:[%s949 + $0x5c] sm:$0x1]
      %v2034 = vld [vmem:[%s949 + $0x60] sm:$0xf]
      %v2035 = vld [vmem:[%s949 + $0x64] sm:$0xf]
      %v2036 = vld [vmem:[%s949 + $0x68] sm:$0x1]
      %v2037 = vld [vmem:[%s949 + $0x6c] sm:$0xf]
      %v2038 = vld [vmem:[%s949 + $0x70] sm:$0xf]
      %v2039 = vld [vmem:[%s949 + $0x74] sm:$0x1]
      %v2040 = vld [vmem:[%s949 + $0x78] sm:$0xf]
      %v2041 = vld [vmem:[%s949 + $0x7c] sm:$0xf]
      %v2042 = vld [vmem:[%s949 + $0x80] sm:$0x1]
      %v2043 = vld [vmem:[%s949 + $0x84] sm:$0xf]
      %v2044 = vld [vmem:[%s949 + $0x88] sm:$0xf]
      %v2045 = vld [vmem:[%s949 + $0x8c] sm:$0x1]
      %v2046 = vld [vmem:[%s949 + $0x90] sm:$0xf]
      %v2047 = vld [vmem:[%s949 + $0x94] sm:$0xf]
      %v2048 = vld [vmem:[%s949 + $0x98] sm:$0x1]
      %v2049 = vld [vmem:[%s949 + $0x9c] sm:$0xf]
      %v2050 = vld [vmem:[%s949 + $0xa0] sm:$0xf]
      %v2051 = vld [vmem:[%s949 + $0xa4] sm:$0x1]
      %v2052 = vld [vmem:[%s949 + $0xa8] sm:$0xf]
      %v2053 = vld [vmem:[%s949 + $0xac] sm:$0xf]
      %v2054 = vld [vmem:[%s949 + $0xb0] sm:$0x1]
      %v2055 = vld [vmem:[%s949 + $0xb4] sm:$0xf]
      %v2056 = vld [vmem:[%s949 + $0xb8] sm:$0xf]
      %v2057 = vld [vmem:[%s949 + $0xbc] sm:$0x1]
      %v2106 = vunpack.c.l.b16 %v2010
      %v2107 = vunpack.c.l.b16 %v2011
      %v2108 = vunpack.c.l.b16 %v2012
      %v2109 = vunpack.c.l.b16 %v2013
      %v2110 = vunpack.c.l.b16 %v2014
      %v2111 = vunpack.c.l.b16 %v2015
      %v2112 = vunpack.c.l.b16 %v2016
      %v2113 = vunpack.c.l.b16 %v2017
      %v2114 = vunpack.c.l.b16 %v2018
      %v2115 = vunpack.c.l.b16 %v2019
      %v2116 = vunpack.c.l.b16 %v2020
      %v2117 = vunpack.c.l.b16 %v2021
      %v2118 = vunpack.c.l.b16 %v2022
      %v2119 = vunpack.c.l.b16 %v2023
      %v2120 = vunpack.c.l.b16 %v2024
      %v2121 = vunpack.c.l.b16 %v2025
      %v2122 = vunpack.c.l.b16 %v2026
      %v2123 = vunpack.c.l.b16 %v2027
      %v2124 = vunpack.c.l.b16 %v2028
      %v2125 = vunpack.c.l.b16 %v2029
      %v2126 = vunpack.c.l.b16 %v2030
      %v2127 = vunpack.c.l.b16 %v2031
      %v2128 = vunpack.c.l.b16 %v2032
      %v2129 = vunpack.c.l.b16 %v2033
      %v2130 = vunpack.c.l.b16 %v2034
      %v2131 = vunpack.c.l.b16 %v2035
      %v2132 = vunpack.c.l.b16 %v2036
      %v2133 = vunpack.c.l.b16 %v2037
      %v2134 = vunpack.c.l.b16 %v2038
      %v2135 = vunpack.c.l.b16 %v2039
      %v2136 = vunpack.c.l.b16 %v2040
      %v2137 = vunpack.c.l.b16 %v2041
      %v2138 = vunpack.c.l.b16 %v2042
      %v2139 = vunpack.c.l.b16 %v2043
      %v2140 = vunpack.c.l.b16 %v2044
      %v2141 = vunpack.c.l.b16 %v2045
      %v2142 = vunpack.c.l.b16 %v2046
      %v2143 = vunpack.c.l.b16 %v2047
      %v2144 = vunpack.c.l.b16 %v2048
      %v2145 = vunpack.c.l.b16 %v2049
      %v2146 = vunpack.c.l.b16 %v2050
      %v2147 = vunpack.c.l.b16 %v2051
      %v2148 = vunpack.c.l.b16 %v2052
      %v2149 = vunpack.c.l.b16 %v2053
      %v2150 = vunpack.c.l.b16 %v2054
      %v2151 = vunpack.c.l.b16 %v2055
      %v2152 = vunpack.c.l.b16 %v2056
      %v2153 = vunpack.c.l.b16 %v2057
      %v2154 = vpack.c.b16 %v2107, %v2106
      %v2155 = vpack.c.b16 %v2108, %v2108
      %v2156 = vpack.c.b16 %v2110, %v2109
      %v2157 = vpack.c.b16 %v2111, %v2111
      %v2158 = vpack.c.b16 %v2113, %v2112
      %v2159 = vpack.c.b16 %v2114, %v2114
      %v2160 = vpack.c.b16 %v2116, %v2115
      %v2161 = vpack.c.b16 %v2117, %v2117
      %v2162 = vpack.c.b16 %v2119, %v2118
      %v2163 = vpack.c.b16 %v2120, %v2120
      %v2164 = vpack.c.b16 %v2122, %v2121
      %v2165 = vpack.c.b16 %v2123, %v2123
      %v2166 = vpack.c.b16 %v2125, %v2124
      %v2167 = vpack.c.b16 %v2126, %v2126
      %v2168 = vpack.c.b16 %v2128, %v2127
      %v2169 = vpack.c.b16 %v2129, %v2129
      %v2170 = vpack.c.b16 %v2131, %v2130
      %v2171 = vpack.c.b16 %v2132, %v2132
      %v2172 = vpack.c.b16 %v2134, %v2133
      %v2173 = vpack.c.b16 %v2135, %v2135
      %v2174 = vpack.c.b16 %v2137, %v2136
      %v2175 = vpack.c.b16 %v2138, %v2138
      %v2176 = vpack.c.b16 %v2140, %v2139
      %v2177 = vpack.c.b16 %v2141, %v2141
      %v2178 = vpack.c.b16 %v2143, %v2142
      %v2179 = vpack.c.b16 %v2144, %v2144
      %v2180 = vpack.c.b16 %v2146, %v2145
      %v2181 = vpack.c.b16 %v2147, %v2147
      %v2182 = vpack.c.b16 %v2149, %v2148
      %v2183 = vpack.c.b16 %v2150, %v2150
      %v2184 = vpack.c.b16 %v2152, %v2151
      %v2185 = vpack.c.b16 %v2153, %v2153
      %v2187 = vshrl.u32 %v2154, 16
      %v2189 = vshll.u32 %v2154, 16
      %v2191 = vrot.slane %v2189, 1
      %v2192 = vor.u32 %v2187, %v2191
      %v2194 = vshll.u32 %v2155, 16
      %v2196 = vrot.slane %v2194, 1
      %v2197 = vsel %vm1384, %v2192, %v2196
      %v2199 = vshrl.u32 %v2156, 16
      %v2201 = vshll.u32 %v2156, 16
      %v2203 = vrot.slane %v2201, 1
      %v2204 = vor.u32 %v2199, %v2203
      %v2206 = vshll.u32 %v2157, 16
      %v2208 = vrot.slane %v2206, 1
      %v2209 = vsel %vm1384, %v2204, %v2208
      %v2211 = vshrl.u32 %v2158, 16
      %v2213 = vshll.u32 %v2158, 16
      %v2215 = vrot.slane %v2213, 1
      %v2216 = vor.u32 %v2211, %v2215
      %v2218 = vshll.u32 %v2159, 16
      %v2220 = vrot.slane %v2218, 1
      %v2221 = vsel %vm1384, %v2216, %v2220
      %v2223 = vshrl.u32 %v2160, 16
      %v2225 = vshll.u32 %v2160, 16
      %v2227 = vrot.slane %v2225, 1
      %v2228 = vor.u32 %v2223, %v2227
      %v2230 = vshll.u32 %v2161, 16
      %v2232 = vrot.slane %v2230, 1
      %v2233 = vsel %vm1384, %v2228, %v2232
      %v2235 = vshrl.u32 %v2162, 16
      %v2237 = vshll.u32 %v2162, 16
      %v2239 = vrot.slane %v2237, 1
      %v2240 = vor.u32 %v2235, %v2239
      %v2242 = vshll.u32 %v2163, 16
      %v2244 = vrot.slane %v2242, 1
      %v2245 = vsel %vm1384, %v2240, %v2244
      %v2247 = vshrl.u32 %v2164, 16
      %v2249 = vshll.u32 %v2164, 16
      %v2251 = vrot.slane %v2249, 1
      %v2252 = vor.u32 %v2247, %v2251
      %v2254 = vshll.u32 %v2165, 16
      %v2256 = vrot.slane %v2254, 1
      %v2257 = vsel %vm1384, %v2252, %v2256
      %v2259 = vshrl.u32 %v2166, 16
      %v2261 = vshll.u32 %v2166, 16
      %v2263 = vrot.slane %v2261, 1
      %v2264 = vor.u32 %v2259, %v2263
      %v2266 = vshll.u32 %v2167, 16
      %v2268 = vrot.slane %v2266, 1
      %v2269 = vsel %vm1384, %v2264, %v2268
      %v2271 = vshrl.u32 %v2168, 16
      %v2273 = vshll.u32 %v2168, 16
      %v2275 = vrot.slane %v2273, 1
      %v2276 = vor.u32 %v2271, %v2275
      %v2278 = vshll.u32 %v2169, 16
      %v2280 = vrot.slane %v2278, 1
      %v2281 = vsel %vm1384, %v2276, %v2280
      %v2283 = vshrl.u32 %v2170, 16
      %v2285 = vshll.u32 %v2170, 16
      %v2287 = vrot.slane %v2285, 1
      %v2288 = vor.u32 %v2283, %v2287
      %v2290 = vshll.u32 %v2171, 16
      %v2292 = vrot.slane %v2290, 1
      %v2293 = vsel %vm1384, %v2288, %v2292
      %v2295 = vshrl.u32 %v2172, 16
      %v2297 = vshll.u32 %v2172, 16
      %v2299 = vrot.slane %v2297, 1
      %v2300 = vor.u32 %v2295, %v2299
      %v2302 = vshll.u32 %v2173, 16
      %v2304 = vrot.slane %v2302, 1
      %v2305 = vsel %vm1384, %v2300, %v2304
      %v2307 = vshrl.u32 %v2174, 16
      %v2309 = vshll.u32 %v2174, 16
      %v2311 = vrot.slane %v2309, 1
      %v2312 = vor.u32 %v2307, %v2311
      %v2314 = vshll.u32 %v2175, 16
      %v2316 = vrot.slane %v2314, 1
      %v2317 = vsel %vm1384, %v2312, %v2316
      %v2319 = vshrl.u32 %v2176, 16
      %v2321 = vshll.u32 %v2176, 16
      %v2323 = vrot.slane %v2321, 1
      %v2324 = vor.u32 %v2319, %v2323
      %v2326 = vshll.u32 %v2177, 16
      %v2328 = vrot.slane %v2326, 1
      %v2329 = vsel %vm1384, %v2324, %v2328
      %v2331 = vshrl.u32 %v2178, 16
      %v2333 = vshll.u32 %v2178, 16
      %v2335 = vrot.slane %v2333, 1
      %v2336 = vor.u32 %v2331, %v2335
      %v2338 = vshll.u32 %v2179, 16
      %v2340 = vrot.slane %v2338, 1
      %v2341 = vsel %vm1384, %v2336, %v2340
      %v2343 = vshrl.u32 %v2180, 16
      %v2345 = vshll.u32 %v2180, 16
      %v2347 = vrot.slane %v2345, 1
      %v2348 = vor.u32 %v2343, %v2347
      %v2350 = vshll.u32 %v2181, 16
      %v2352 = vrot.slane %v2350, 1
      %v2353 = vsel %vm1384, %v2348, %v2352
      %v2355 = vshrl.u32 %v2182, 16
      %v2357 = vshll.u32 %v2182, 16
      %v2359 = vrot.slane %v2357, 1
      %v2360 = vor.u32 %v2355, %v2359
      %v2362 = vshll.u32 %v2183, 16
      %v2364 = vrot.slane %v2362, 1
      %v2365 = vsel %vm1384, %v2360, %v2364
      %v2367 = vshrl.u32 %v2184, 16
      %v2369 = vshll.u32 %v2184, 16
      %v2371 = vrot.slane %v2369, 1
      %v2372 = vor.u32 %v2367, %v2371
      %v2374 = vshll.u32 %v2185, 16
      %v2376 = vrot.slane %v2374, 1
      %v2377 = vsel %vm1384, %v2372, %v2376
      %2394 = vst [vmem:[#allocation3 + $0x20] sm:$0xff] %v2197
      %2395 = vst [vmem:[#allocation3 + $0x68] sm:$0xff] %v2209
      %2396 = vst [vmem:[#allocation3 + $0xb0] sm:$0xff] %v2221
      %2397 = vst [vmem:[#allocation3 + $0xf8] sm:$0xff] %v2233
      %2398 = vst [vmem:[#allocation3 + $0x140] sm:$0xff] %v2245
      %2399 = vst [vmem:[#allocation3 + $0x188] sm:$0xff] %v2257
      %2400 = vst [vmem:[#allocation3 + $0x1d0] sm:$0xff] %v2269
      %2401 = vst [vmem:[#allocation3 + $0x218] sm:$0xff] %v2281
      %2402 = vst [vmem:[#allocation3 + $0x260] sm:$0xff] %v2293
      %2403 = vst [vmem:[#allocation3 + $0x2a8] sm:$0xff] %v2305
      %2404 = vst [vmem:[#allocation3 + $0x2f0] sm:$0xff] %v2317
      %2405 = vst [vmem:[#allocation3 + $0x338] sm:$0xff] %v2329
      %2406 = vst [vmem:[#allocation3 + $0x380] sm:$0xff] %v2341
      %2407 = vst [vmem:[#allocation3 + $0x3c8] sm:$0xff] %v2353
      %2408 = vst [vmem:[#allocation3 + $0x410] sm:$0xff] %v2365
      %2409 = vst [vmem:[#allocation3 + $0x458] sm:$0xff] %v2377
      %v2410 = vld [vmem:[%s949] sm:$0xe]
      %v2411 = vld [vmem:[%s949 + $0x4] sm:$0xf]
      %v2412 = vld [vmem:[%s949 + $0x8] sm:$0x1]
      %v2413 = vld [vmem:[%s949 + $0xc] sm:$0xe]
      %v2414 = vld [vmem:[%s949 + $0x10] sm:$0xf]
      %v2415 = vld [vmem:[%s949 + $0x14] sm:$0x1]
      %v2416 = vld [vmem:[%s949 + $0x18] sm:$0xe]
      %v2417 = vld [vmem:[%s949 + $0x1c] sm:$0xf]
      %v2418 = vld [vmem:[%s949 + $0x20] sm:$0x1]
      %v2419 = vld [vmem:[%s949 + $0x24] sm:$0xe]
      %v2420 = vld [vmem:[%s949 + $0x28] sm:$0xf]
      %v2421 = vld [vmem:[%s949 + $0x2c] sm:$0x1]
      %v2422 = vld [vmem:[%s949 + $0x30] sm:$0xe]
      %v2423 = vld [vmem:[%s949 + $0x34] sm:$0xf]
      %v2424 = vld [vmem:[%s949 + $0x38] sm:$0x1]
      %v2425 = vld [vmem:[%s949 + $0x3c] sm:$0xe]
      %v2426 = vld [vmem:[%s949 + $0x40] sm:$0xf]
      %v2427 = vld [vmem:[%s949 + $0x44] sm:$0x1]
      %v2428 = vld [vmem:[%s949 + $0x48] sm:$0xe]
      %v2429 = vld [vmem:[%s949 + $0x4c] sm:$0xf]
      %v2430 = vld [vmem:[%s949 + $0x50] sm:$0x1]
      %v2431 = vld [vmem:[%s949 + $0x54] sm:$0xe]
      %v2432 = vld [vmem:[%s949 + $0x58] sm:$0xf]
      %v2433 = vld [vmem:[%s949 + $0x5c] sm:$0x1]
      %v2434 = vld [vmem:[%s949 + $0x60] sm:$0xe]
      %v2435 = vld [vmem:[%s949 + $0x64] sm:$0xf]
      %v2436 = vld [vmem:[%s949 + $0x68] sm:$0x1]
      %v2437 = vld [vmem:[%s949 + $0x6c] sm:$0xe]
      %v2438 = vld [vmem:[%s949 + $0x70] sm:$0xf]
      %v2439 = vld [vmem:[%s949 + $0x74] sm:$0x1]
      %v2440 = vld [vmem:[%s949 + $0x78] sm:$0xe]
      %v2441 = vld [vmem:[%s949 + $0x7c] sm:$0xf]
      %v2442 = vld [vmem:[%s949 + $0x80] sm:$0x1]
      %v2443 = vld [vmem:[%s949 + $0x84] sm:$0xe]
      %v2444 = vld [vmem:[%s949 + $0x88] sm:$0xf]
      %v2445 = vld [vmem:[%s949 + $0x8c] sm:$0x1]
      %v2446 = vld [vmem:[%s949 + $0x90] sm:$0xe]
      %v2447 = vld [vmem:[%s949 + $0x94] sm:$0xf]
      %v2448 = vld [vmem:[%s949 + $0x98] sm:$0x1]
      %v2449 = vld [vmem:[%s949 + $0x9c] sm:$0xe]
      %v2450 = vld [vmem:[%s949 + $0xa0] sm:$0xf]
      %v2451 = vld [vmem:[%s949 + $0xa4] sm:$0x1]
      %v2452 = vld [vmem:[%s949 + $0xa8] sm:$0xe]
      %v2453 = vld [vmem:[%s949 + $0xac] sm:$0xf]
      %v2454 = vld [vmem:[%s949 + $0xb0] sm:$0x1]
      %v2455 = vld [vmem:[%s949 + $0xb4] sm:$0xe]
      %v2456 = vld [vmem:[%s949 + $0xb8] sm:$0xf]
      %v2457 = vld [vmem:[%s949 + $0xbc] sm:$0x1]
      %v2506 = vunpack.c.l.b16 %v2410
      %v2507 = vunpack.c.l.b16 %v2411
      %v2508 = vunpack.c.l.b16 %v2412
      %v2509 = vunpack.c.l.b16 %v2413
      %v2510 = vunpack.c.l.b16 %v2414
      %v2511 = vunpack.c.l.b16 %v2415
      %v2512 = vunpack.c.l.b16 %v2416
      %v2513 = vunpack.c.l.b16 %v2417
      %v2514 = vunpack.c.l.b16 %v2418
      %v2515 = vunpack.c.l.b16 %v2419
      %v2516 = vunpack.c.l.b16 %v2420
      %v2517 = vunpack.c.l.b16 %v2421
      %v2518 = vunpack.c.l.b16 %v2422
      %v2519 = vunpack.c.l.b16 %v2423
      %v2520 = vunpack.c.l.b16 %v2424
      %v2521 = vunpack.c.l.b16 %v2425
      %v2522 = vunpack.c.l.b16 %v2426
      %v2523 = vunpack.c.l.b16 %v2427
      %v2524 = vunpack.c.l.b16 %v2428
      %v2525 = vunpack.c.l.b16 %v2429
      %v2526 = vunpack.c.l.b16 %v2430
      %v2527 = vunpack.c.l.b16 %v2431
      %v2528 = vunpack.c.l.b16 %v2432
      %v2529 = vunpack.c.l.b16 %v2433
      %v2530 = vunpack.c.l.b16 %v2434
      %v2531 = vunpack.c.l.b16 %v2435
      %v2532 = vunpack.c.l.b16 %v2436
      %v2533 = vunpack.c.l.b16 %v2437
      %v2534 = vunpack.c.l.b16 %v2438
      %v2535 = vunpack.c.l.b16 %v2439
      %v2536 = vunpack.c.l.b16 %v2440
      %v2537 = vunpack.c.l.b16 %v2441
      %v2538 = vunpack.c.l.b16 %v2442
      %v2539 = vunpack.c.l.b16 %v2443
      %v2540 = vunpack.c.l.b16 %v2444
      %v2541 = vunpack.c.l.b16 %v2445
      %v2542 = vunpack.c.l.b16 %v2446
      %v2543 = vunpack.c.l.b16 %v2447
      %v2544 = vunpack.c.l.b16 %v2448
      %v2545 = vunpack.c.l.b16 %v2449
      %v2546 = vunpack.c.l.b16 %v2450
      %v2547 = vunpack.c.l.b16 %v2451
      %v2548 = vunpack.c.l.b16 %v2452
      %v2549 = vunpack.c.l.b16 %v2453
      %v2550 = vunpack.c.l.b16 %v2454
      %v2551 = vunpack.c.l.b16 %v2455
      %v2552 = vunpack.c.l.b16 %v2456
      %v2553 = vunpack.c.l.b16 %v2457
      %v2554 = vpack.c.b16 %v2507, %v2506
      %v2555 = vpack.c.b16 %v2508, %v2508
      %v2556 = vpack.c.b16 %v2510, %v2509
      %v2557 = vpack.c.b16 %v2511, %v2511
      %v2558 = vpack.c.b16 %v2513, %v2512
      %v2559 = vpack.c.b16 %v2514, %v2514
      %v2560 = vpack.c.b16 %v2516, %v2515
      %v2561 = vpack.c.b16 %v2517, %v2517
      %v2562 = vpack.c.b16 %v2519, %v2518
      %v2563 = vpack.c.b16 %v2520, %v2520
      %v2564 = vpack.c.b16 %v2522, %v2521
      %v2565 = vpack.c.b16 %v2523, %v2523
      %v2566 = vpack.c.b16 %v2525, %v2524
      %v2567 = vpack.c.b16 %v2526, %v2526
      %v2568 = vpack.c.b16 %v2528, %v2527
      %v2569 = vpack.c.b16 %v2529, %v2529
      %v2570 = vpack.c.b16 %v2531, %v2530
      %v2571 = vpack.c.b16 %v2532, %v2532
      %v2572 = vpack.c.b16 %v2534, %v2533
      %v2573 = vpack.c.b16 %v2535, %v2535
      %v2574 = vpack.c.b16 %v2537, %v2536
      %v2575 = vpack.c.b16 %v2538, %v2538
      %v2576 = vpack.c.b16 %v2540, %v2539
      %v2577 = vpack.c.b16 %v2541, %v2541
      %v2578 = vpack.c.b16 %v2543, %v2542
      %v2579 = vpack.c.b16 %v2544, %v2544
      %v2580 = vpack.c.b16 %v2546, %v2545
      %v2581 = vpack.c.b16 %v2547, %v2547
      %v2582 = vpack.c.b16 %v2549, %v2548
      %v2583 = vpack.c.b16 %v2550, %v2550
      %v2584 = vpack.c.b16 %v2552, %v2551
      %v2585 = vpack.c.b16 %v2553, %v2553
      %v2586 = vrot.slane %v2554, 1
      %v2587 = vrot.slane %v2555, 1
      %v2588 = vsel %vm1785, %v2586, %v2587
      %v2589 = vrot.slane %v2556, 1
      %v2590 = vrot.slane %v2557, 1
      %v2591 = vsel %vm1785, %v2589, %v2590
      %v2592 = vrot.slane %v2558, 1
      %v2593 = vrot.slane %v2559, 1
      %v2594 = vsel %vm1785, %v2592, %v2593
      %v2595 = vrot.slane %v2560, 1
      %v2596 = vrot.slane %v2561, 1
      %v2597 = vsel %vm1785, %v2595, %v2596
      %v2598 = vrot.slane %v2562, 1
      %v2599 = vrot.slane %v2563, 1
      %v2600 = vsel %vm1785, %v2598, %v2599
      %v2601 = vrot.slane %v2564, 1
      %v2602 = vrot.slane %v2565, 1
      %v2603 = vsel %vm1785, %v2601, %v2602
      %v2604 = vrot.slane %v2566, 1
      %v2605 = vrot.slane %v2567, 1
      %v2606 = vsel %vm1785, %v2604, %v2605
      %v2607 = vrot.slane %v2568, 1
      %v2608 = vrot.slane %v2569, 1
      %v2609 = vsel %vm1785, %v2607, %v2608
      %v2610 = vrot.slane %v2570, 1
      %v2611 = vrot.slane %v2571, 1
      %v2612 = vsel %vm1785, %v2610, %v2611
      %v2613 = vrot.slane %v2572, 1
      %v2614 = vrot.slane %v2573, 1
      %v2615 = vsel %vm1785, %v2613, %v2614
      %v2616 = vrot.slane %v2574, 1
      %v2617 = vrot.slane %v2575, 1
      %v2618 = vsel %vm1785, %v2616, %v2617
      %v2619 = vrot.slane %v2576, 1
      %v2620 = vrot.slane %v2577, 1
      %v2621 = vsel %vm1785, %v2619, %v2620
      %v2622 = vrot.slane %v2578, 1
      %v2623 = vrot.slane %v2579, 1
      %v2624 = vsel %vm1785, %v2622, %v2623
      %v2625 = vrot.slane %v2580, 1
      %v2626 = vrot.slane %v2581, 1
      %v2627 = vsel %vm1785, %v2625, %v2626
      %v2628 = vrot.slane %v2582, 1
      %v2629 = vrot.slane %v2583, 1
      %v2630 = vsel %vm1785, %v2628, %v2629
      %v2631 = vrot.slane %v2584, 1
      %v2632 = vrot.slane %v2585, 1
      %v2633 = vsel %vm1785, %v2631, %v2632
      %2650 = vst [vmem:[#allocation3 + $0x28] sm:$0xff] %v2588
      %2651 = vst [vmem:[#allocation3 + $0x70] sm:$0xff] %v2591
      %2652 = vst [vmem:[#allocation3 + $0xb8] sm:$0xff] %v2594
      %2653 = vst [vmem:[#allocation3 + $0x100] sm:$0xff] %v2597
      %2654 = vst [vmem:[#allocation3 + $0x148] sm:$0xff] %v2600
      %2655 = vst [vmem:[#allocation3 + $0x190] sm:$0xff] %v2603
      %2656 = vst [vmem:[#allocation3 + $0x1d8] sm:$0xff] %v2606
      %2657 = vst [vmem:[#allocation3 + $0x220] sm:$0xff] %v2609
      %2658 = vst [vmem:[#allocation3 + $0x268] sm:$0xff] %v2612
      %2659 = vst [vmem:[#allocation3 + $0x2b0] sm:$0xff] %v2615
      %2660 = vst [vmem:[#allocation3 + $0x2f8] sm:$0xff] %v2618
      %2661 = vst [vmem:[#allocation3 + $0x340] sm:$0xff] %v2621
      %2662 = vst [vmem:[#allocation3 + $0x388] sm:$0xff] %v2624
      %2663 = vst [vmem:[#allocation3 + $0x3d0] sm:$0xff] %v2627
      %2664 = vst [vmem:[#allocation3 + $0x418] sm:$0xff] %v2630
      %2665 = vst [vmem:[#allocation3 + $0x460] sm:$0xff] %v2633
      %s2666 = scalar_lea.vmem [#allocation2], 24
      %v2667 = vld [vmem:[%s2666] sm:$0xf]
      %v2668 = vld [vmem:[%s2666 + $0x4] sm:$0xf]
      %v2669 = vld [vmem:[%s2666 + $0xc] sm:$0xf]
      %v2670 = vld [vmem:[%s2666 + $0x10] sm:$0xf]
      %v2671 = vld [vmem:[%s2666 + $0x18] sm:$0xf]
      %v2672 = vld [vmem:[%s2666 + $0x1c] sm:$0xf]
      %v2673 = vld [vmem:[%s2666 + $0x24] sm:$0xf]
      %v2674 = vld [vmem:[%s2666 + $0x28] sm:$0xf]
      %v2675 = vld [vmem:[%s2666 + $0x30] sm:$0xf]
      %v2676 = vld [vmem:[%s2666 + $0x34] sm:$0xf]
      %v2677 = vld [vmem:[%s2666 + $0x3c] sm:$0xf]
      %v2678 = vld [vmem:[%s2666 + $0x40] sm:$0xf]
      %v2679 = vld [vmem:[%s2666 + $0x48] sm:$0xf]
      %v2680 = vld [vmem:[%s2666 + $0x4c] sm:$0xf]
      %v2681 = vld [vmem:[%s2666 + $0x54] sm:$0xf]
      %v2682 = vld [vmem:[%s2666 + $0x58] sm:$0xf]
      %v2683 = vld [vmem:[%s2666 + $0x60] sm:$0xf]
      %v2684 = vld [vmem:[%s2666 + $0x64] sm:$0xf]
      %v2685 = vld [vmem:[%s2666 + $0x6c] sm:$0xf]
      %v2686 = vld [vmem:[%s2666 + $0x70] sm:$0xf]
      %v2687 = vld [vmem:[%s2666 + $0x78] sm:$0xf]
      %v2688 = vld [vmem:[%s2666 + $0x7c] sm:$0xf]
      %v2689 = vld [vmem:[%s2666 + $0x84] sm:$0xf]
      %v2690 = vld [vmem:[%s2666 + $0x88] sm:$0xf]
      %v2691 = vld [vmem:[%s2666 + $0x90] sm:$0xf]
      %v2692 = vld [vmem:[%s2666 + $0x94] sm:$0xf]
      %v2693 = vld [vmem:[%s2666 + $0x9c] sm:$0xf]
      %v2694 = vld [vmem:[%s2666 + $0xa0] sm:$0xf]
      %v2695 = vld [vmem:[%s2666 + $0xa8] sm:$0xf]
      %v2696 = vld [vmem:[%s2666 + $0xac] sm:$0xf]
      %v2697 = vld [vmem:[%s2666 + $0xb4] sm:$0xf]
      %v2698 = vld [vmem:[%s2666 + $0xb8] sm:$0xf]
      %v2731 = vunpack.c.l.b16 %v2667
      %v2732 = vunpack.c.l.b16 %v2668
      %v2733 = vunpack.c.l.b16 %v2669
      %v2734 = vunpack.c.l.b16 %v2670
      %v2735 = vunpack.c.l.b16 %v2671
      %v2736 = vunpack.c.l.b16 %v2672
      %v2737 = vunpack.c.l.b16 %v2673
      %v2738 = vunpack.c.l.b16 %v2674
      %v2739 = vunpack.c.l.b16 %v2675
      %v2740 = vunpack.c.l.b16 %v2676
      %v2741 = vunpack.c.l.b16 %v2677
      %v2742 = vunpack.c.l.b16 %v2678
      %v2743 = vunpack.c.l.b16 %v2679
      %v2744 = vunpack.c.l.b16 %v2680
      %v2745 = vunpack.c.l.b16 %v2681
      %v2746 = vunpack.c.l.b16 %v2682
      %v2747 = vunpack.c.l.b16 %v2683
      %v2748 = vunpack.c.l.b16 %v2684
      %v2749 = vunpack.c.l.b16 %v2685
      %v2750 = vunpack.c.l.b16 %v2686
      %v2751 = vunpack.c.l.b16 %v2687
      %v2752 = vunpack.c.l.b16 %v2688
      %v2753 = vunpack.c.l.b16 %v2689
      %v2754 = vunpack.c.l.b16 %v2690
      %v2755 = vunpack.c.l.b16 %v2691
      %v2756 = vunpack.c.l.b16 %v2692
      %v2757 = vunpack.c.l.b16 %v2693
      %v2758 = vunpack.c.l.b16 %v2694
      %v2759 = vunpack.c.l.b16 %v2695
      %v2760 = vunpack.c.l.b16 %v2696
      %v2761 = vunpack.c.l.b16 %v2697
      %v2762 = vunpack.c.l.b16 %v2698
      %v2763 = vpack.c.b16 %v2732, %v2731
      %v2764 = vpack.c.b16 %v2734, %v2733
      %v2765 = vpack.c.b16 %v2736, %v2735
      %v2766 = vpack.c.b16 %v2738, %v2737
      %v2767 = vpack.c.b16 %v2740, %v2739
      %v2768 = vpack.c.b16 %v2742, %v2741
      %v2769 = vpack.c.b16 %v2744, %v2743
      %v2770 = vpack.c.b16 %v2746, %v2745
      %v2771 = vpack.c.b16 %v2748, %v2747
      %v2772 = vpack.c.b16 %v2750, %v2749
      %v2773 = vpack.c.b16 %v2752, %v2751
      %v2774 = vpack.c.b16 %v2754, %v2753
      %v2775 = vpack.c.b16 %v2756, %v2755
      %v2776 = vpack.c.b16 %v2758, %v2757
      %v2777 = vpack.c.b16 %v2760, %v2759
      %v2778 = vpack.c.b16 %v2762, %v2761
      %2795 = vst [vmem:[#allocation3 + $0x30] sm:$0xff] %v2763
      %2796 = vst [vmem:[#allocation3 + $0x78] sm:$0xff] %v2764
      %2797 = vst [vmem:[#allocation3 + $0xc0] sm:$0xff] %v2765
      %2798 = vst [vmem:[#allocation3 + $0x108] sm:$0xff] %v2766
      %2799 = vst [vmem:[#allocation3 + $0x150] sm:$0xff] %v2767
      %2800 = vst [vmem:[#allocation3 + $0x198] sm:$0xff] %v2768
      %2801 = vst [vmem:[#allocation3 + $0x1e0] sm:$0xff] %v2769
      %2802 = vst [vmem:[#allocation3 + $0x228] sm:$0xff] %v2770
      %2803 = vst [vmem:[#allocation3 + $0x270] sm:$0xff] %v2771
      %2804 = vst [vmem:[#allocation3 + $0x2b8] sm:$0xff] %v2772
      %2805 = vst [vmem:[#allocation3 + $0x300] sm:$0xff] %v2773
      %2806 = vst [vmem:[#allocation3 + $0x348] sm:$0xff] %v2774
      %2807 = vst [vmem:[#allocation3 + $0x390] sm:$0xff] %v2775
      %2808 = vst [vmem:[#allocation3 + $0x3d8] sm:$0xff] %v2776
      %2809 = vst [vmem:[#allocation3 + $0x420] sm:$0xff] %v2777
      %2810 = vst [vmem:[#allocation3 + $0x468] sm:$0xff] %v2778
      %v2811 = vld [vmem:[%s2666] sm:$0xf]
      %v2812 = vld [vmem:[%s2666 + $0x4] sm:$0xf]
      %v2813 = vld [vmem:[%s2666 + $0x8] sm:$0x1]
      %v2814 = vld [vmem:[%s2666 + $0xc] sm:$0xf]
      %v2815 = vld [vmem:[%s2666 + $0x10] sm:$0xf]
      %v2816 = vld [vmem:[%s2666 + $0x14] sm:$0x1]
      %v2817 = vld [vmem:[%s2666 + $0x18] sm:$0xf]
      %v2818 = vld [vmem:[%s2666 + $0x1c] sm:$0xf]
      %v2819 = vld [vmem:[%s2666 + $0x20] sm:$0x1]
      %v2820 = vld [vmem:[%s2666 + $0x24] sm:$0xf]
      %v2821 = vld [vmem:[%s2666 + $0x28] sm:$0xf]
      %v2822 = vld [vmem:[%s2666 + $0x2c] sm:$0x1]
      %v2823 = vld [vmem:[%s2666 + $0x30] sm:$0xf]
      %v2824 = vld [vmem:[%s2666 + $0x34] sm:$0xf]
      %v2825 = vld [vmem:[%s2666 + $0x38] sm:$0x1]
      %v2826 = vld [vmem:[%s2666 + $0x3c] sm:$0xf]
      %v2827 = vld [vmem:[%s2666 + $0x40] sm:$0xf]
      %v2828 = vld [vmem:[%s2666 + $0x44] sm:$0x1]
      %v2829 = vld [vmem:[%s2666 + $0x48] sm:$0xf]
      %v2830 = vld [vmem:[%s2666 + $0x4c] sm:$0xf]
      %v2831 = vld [vmem:[%s2666 + $0x50] sm:$0x1]
      %v2832 = vld [vmem:[%s2666 + $0x54] sm:$0xf]
      %v2833 = vld [vmem:[%s2666 + $0x58] sm:$0xf]
      %v2834 = vld [vmem:[%s2666 + $0x5c] sm:$0x1]
      %v2835 = vld [vmem:[%s2666 + $0x60] sm:$0xf]
      %v2836 = vld [vmem:[%s2666 + $0x64] sm:$0xf]
      %v2837 = vld [vmem:[%s2666 + $0x68] sm:$0x1]
      %v2838 = vld [vmem:[%s2666 + $0x6c] sm:$0xf]
      %v2839 = vld [vmem:[%s2666 + $0x70] sm:$0xf]
      %v2840 = vld [vmem:[%s2666 + $0x74] sm:$0x1]
      %v2841 = vld [vmem:[%s2666 + $0x78] sm:$0xf]
      %v2842 = vld [vmem:[%s2666 + $0x7c] sm:$0xf]
      %v2843 = vld [vmem:[%s2666 + $0x80] sm:$0x1]
      %v2844 = vld [vmem:[%s2666 + $0x84] sm:$0xf]
      %v2845 = vld [vmem:[%s2666 + $0x88] sm:$0xf]
      %v2846 = vld [vmem:[%s2666 + $0x8c] sm:$0x1]
      %v2847 = vld [vmem:[%s2666 + $0x90] sm:$0xf]
      %v2848 = vld [vmem:[%s2666 + $0x94] sm:$0xf]
      %v2849 = vld [vmem:[%s2666 + $0x98] sm:$0x1]
      %v2850 = vld [vmem:[%s2666 + $0x9c] sm:$0xf]
      %v2851 = vld [vmem:[%s2666 + $0xa0] sm:$0xf]
      %v2852 = vld [vmem:[%s2666 + $0xa4] sm:$0x1]
      %v2853 = vld [vmem:[%s2666 + $0xa8] sm:$0xf]
      %v2854 = vld [vmem:[%s2666 + $0xac] sm:$0xf]
      %v2855 = vld [vmem:[%s2666 + $0xb0] sm:$0x1]
      %v2856 = vld [vmem:[%s2666 + $0xb4] sm:$0xf]
      %v2857 = vld [vmem:[%s2666 + $0xb8] sm:$0xf]
      %v2858 = vld [vmem:[%s2666 + $0xbc] sm:$0x1]
      %v2907 = vunpack.c.l.b16 %v2811
      %v2908 = vunpack.c.l.b16 %v2812
      %v2909 = vunpack.c.l.b16 %v2813
      %v2910 = vunpack.c.l.b16 %v2814
      %v2911 = vunpack.c.l.b16 %v2815
      %v2912 = vunpack.c.l.b16 %v2816
      %v2913 = vunpack.c.l.b16 %v2817
      %v2914 = vunpack.c.l.b16 %v2818
      %v2915 = vunpack.c.l.b16 %v2819
      %v2916 = vunpack.c.l.b16 %v2820
      %v2917 = vunpack.c.l.b16 %v2821
      %v2918 = vunpack.c.l.b16 %v2822
      %v2919 = vunpack.c.l.b16 %v2823
      %v2920 = vunpack.c.l.b16 %v2824
      %v2921 = vunpack.c.l.b16 %v2825
      %v2922 = vunpack.c.l.b16 %v2826
      %v2923 = vunpack.c.l.b16 %v2827
      %v2924 = vunpack.c.l.b16 %v2828
      %v2925 = vunpack.c.l.b16 %v2829
      %v2926 = vunpack.c.l.b16 %v2830
      %v2927 = vunpack.c.l.b16 %v2831
      %v2928 = vunpack.c.l.b16 %v2832
      %v2929 = vunpack.c.l.b16 %v2833
      %v2930 = vunpack.c.l.b16 %v2834
      %v2931 = vunpack.c.l.b16 %v2835
      %v2932 = vunpack.c.l.b16 %v2836
      %v2933 = vunpack.c.l.b16 %v2837
      %v2934 = vunpack.c.l.b16 %v2838
      %v2935 = vunpack.c.l.b16 %v2839
      %v2936 = vunpack.c.l.b16 %v2840
      %v2937 = vunpack.c.l.b16 %v2841
      %v2938 = vunpack.c.l.b16 %v2842
      %v2939 = vunpack.c.l.b16 %v2843
      %v2940 = vunpack.c.l.b16 %v2844
      %v2941 = vunpack.c.l.b16 %v2845
      %v2942 = vunpack.c.l.b16 %v2846
      %v2943 = vunpack.c.l.b16 %v2847
      %v2944 = vunpack.c.l.b16 %v2848
      %v2945 = vunpack.c.l.b16 %v2849
      %v2946 = vunpack.c.l.b16 %v2850
      %v2947 = vunpack.c.l.b16 %v2851
      %v2948 = vunpack.c.l.b16 %v2852
      %v2949 = vunpack.c.l.b16 %v2853
      %v2950 = vunpack.c.l.b16 %v2854
      %v2951 = vunpack.c.l.b16 %v2855
      %v2952 = vunpack.c.l.b16 %v2856
      %v2953 = vunpack.c.l.b16 %v2857
      %v2954 = vunpack.c.l.b16 %v2858
      %v2955 = vpack.c.b16 %v2908, %v2907
      %v2956 = vpack.c.b16 %v2909, %v2909
      %v2957 = vpack.c.b16 %v2911, %v2910
      %v2958 = vpack.c.b16 %v2912, %v2912
      %v2959 = vpack.c.b16 %v2914, %v2913
      %v2960 = vpack.c.b16 %v2915, %v2915
      %v2961 = vpack.c.b16 %v2917, %v2916
      %v2962 = vpack.c.b16 %v2918, %v2918
      %v2963 = vpack.c.b16 %v2920, %v2919
      %v2964 = vpack.c.b16 %v2921, %v2921
      %v2965 = vpack.c.b16 %v2923, %v2922
      %v2966 = vpack.c.b16 %v2924, %v2924
      %v2967 = vpack.c.b16 %v2926, %v2925
      %v2968 = vpack.c.b16 %v2927, %v2927
      %v2969 = vpack.c.b16 %v2929, %v2928
      %v2970 = vpack.c.b16 %v2930, %v2930
      %v2971 = vpack.c.b16 %v2932, %v2931
      %v2972 = vpack.c.b16 %v2933, %v2933
      %v2973 = vpack.c.b16 %v2935, %v2934
      %v2974 = vpack.c.b16 %v2936, %v2936
      %v2975 = vpack.c.b16 %v2938, %v2937
      %v2976 = vpack.c.b16 %v2939, %v2939
      %v2977 = vpack.c.b16 %v2941, %v2940
      %v2978 = vpack.c.b16 %v2942, %v2942
      %v2979 = vpack.c.b16 %v2944, %v2943
      %v2980 = vpack.c.b16 %v2945, %v2945
      %v2981 = vpack.c.b16 %v2947, %v2946
      %v2982 = vpack.c.b16 %v2948, %v2948
      %v2983 = vpack.c.b16 %v2950, %v2949
      %v2984 = vpack.c.b16 %v2951, %v2951
      %v2985 = vpack.c.b16 %v2953, %v2952
      %v2986 = vpack.c.b16 %v2954, %v2954
      %v2988 = vshrl.u32 %v2955, 16
      %v2990 = vshll.u32 %v2955, 16
      %v2992 = vrot.slane %v2990, 1
      %v2993 = vor.u32 %v2988, %v2992
      %v2995 = vshll.u32 %v2956, 16
      %v2997 = vrot.slane %v2995, 1
      %v2998 = vsel %vm1384, %v2993, %v2997
      %v3000 = vshrl.u32 %v2957, 16
      %v3002 = vshll.u32 %v2957, 16
      %v3004 = vrot.slane %v3002, 1
      %v3005 = vor.u32 %v3000, %v3004
      %v3007 = vshll.u32 %v2958, 16
      %v3009 = vrot.slane %v3007, 1
      %v3010 = vsel %vm1384, %v3005, %v3009
      %v3012 = vshrl.u32 %v2959, 16
      %v3014 = vshll.u32 %v2959, 16
      %v3016 = vrot.slane %v3014, 1
      %v3017 = vor.u32 %v3012, %v3016
      %v3019 = vshll.u32 %v2960, 16
      %v3021 = vrot.slane %v3019, 1
      %v3022 = vsel %vm1384, %v3017, %v3021
      %v3024 = vshrl.u32 %v2961, 16
      %v3026 = vshll.u32 %v2961, 16
      %v3028 = vrot.slane %v3026, 1
      %v3029 = vor.u32 %v3024, %v3028
      %v3031 = vshll.u32 %v2962, 16
      %v3033 = vrot.slane %v3031, 1
      %v3034 = vsel %vm1384, %v3029, %v3033
      %v3036 = vshrl.u32 %v2963, 16
      %v3038 = vshll.u32 %v2963, 16
      %v3040 = vrot.slane %v3038, 1
      %v3041 = vor.u32 %v3036, %v3040
      %v3043 = vshll.u32 %v2964, 16
      %v3045 = vrot.slane %v3043, 1
      %v3046 = vsel %vm1384, %v3041, %v3045
      %v3048 = vshrl.u32 %v2965, 16
      %v3050 = vshll.u32 %v2965, 16
      %v3052 = vrot.slane %v3050, 1
      %v3053 = vor.u32 %v3048, %v3052
      %v3055 = vshll.u32 %v2966, 16
      %v3057 = vrot.slane %v3055, 1
      %v3058 = vsel %vm1384, %v3053, %v3057
      %v3060 = vshrl.u32 %v2967, 16
      %v3062 = vshll.u32 %v2967, 16
      %v3064 = vrot.slane %v3062, 1
      %v3065 = vor.u32 %v3060, %v3064
      %v3067 = vshll.u32 %v2968, 16
      %v3069 = vrot.slane %v3067, 1
      %v3070 = vsel %vm1384, %v3065, %v3069
      %v3072 = vshrl.u32 %v2969, 16
      %v3074 = vshll.u32 %v2969, 16
      %v3076 = vrot.slane %v3074, 1
      %v3077 = vor.u32 %v3072, %v3076
      %v3079 = vshll.u32 %v2970, 16
      %v3081 = vrot.slane %v3079, 1
      %v3082 = vsel %vm1384, %v3077, %v3081
      %v3084 = vshrl.u32 %v2971, 16
      %v3086 = vshll.u32 %v2971, 16
      %v3088 = vrot.slane %v3086, 1
      %v3089 = vor.u32 %v3084, %v3088
      %v3091 = vshll.u32 %v2972, 16
      %v3093 = vrot.slane %v3091, 1
      %v3094 = vsel %vm1384, %v3089, %v3093
      %v3096 = vshrl.u32 %v2973, 16
      %v3098 = vshll.u32 %v2973, 16
      %v3100 = vrot.slane %v3098, 1
      %v3101 = vor.u32 %v3096, %v3100
      %v3103 = vshll.u32 %v2974, 16
      %v3105 = vrot.slane %v3103, 1
      %v3106 = vsel %vm1384, %v3101, %v3105
      %v3108 = vshrl.u32 %v2975, 16
      %v3110 = vshll.u32 %v2975, 16
      %v3112 = vrot.slane %v3110, 1
      %v3113 = vor.u32 %v3108, %v3112
      %v3115 = vshll.u32 %v2976, 16
      %v3117 = vrot.slane %v3115, 1
      %v3118 = vsel %vm1384, %v3113, %v3117
      %v3120 = vshrl.u32 %v2977, 16
      %v3122 = vshll.u32 %v2977, 16
      %v3124 = vrot.slane %v3122, 1
      %v3125 = vor.u32 %v3120, %v3124
      %v3127 = vshll.u32 %v2978, 16
      %v3129 = vrot.slane %v3127, 1
      %v3130 = vsel %vm1384, %v3125, %v3129
      %v3132 = vshrl.u32 %v2979, 16
      %v3134 = vshll.u32 %v2979, 16
      %v3136 = vrot.slane %v3134, 1
      %v3137 = vor.u32 %v3132, %v3136
      %v3139 = vshll.u32 %v2980, 16
      %v3141 = vrot.slane %v3139, 1
      %v3142 = vsel %vm1384, %v3137, %v3141
      %v3144 = vshrl.u32 %v2981, 16
      %v3146 = vshll.u32 %v2981, 16
      %v3148 = vrot.slane %v3146, 1
      %v3149 = vor.u32 %v3144, %v3148
      %v3151 = vshll.u32 %v2982, 16
      %v3153 = vrot.slane %v3151, 1
      %v3154 = vsel %vm1384, %v3149, %v3153
      %v3156 = vshrl.u32 %v2983, 16
      %v3158 = vshll.u32 %v2983, 16
      %v3160 = vrot.slane %v3158, 1
      %v3161 = vor.u32 %v3156, %v3160
      %v3163 = vshll.u32 %v2984, 16
      %v3165 = vrot.slane %v3163, 1
      %v3166 = vsel %vm1384, %v3161, %v3165
      %v3168 = vshrl.u32 %v2985, 16
      %v3170 = vshll.u32 %v2985, 16
      %v3172 = vrot.slane %v3170, 1
      %v3173 = vor.u32 %v3168, %v3172
      %v3175 = vshll.u32 %v2986, 16
      %v3177 = vrot.slane %v3175, 1
      %v3178 = vsel %vm1384, %v3173, %v3177
      %3195 = vst [vmem:[#allocation3 + $0x38] sm:$0xff] %v2998
      %3196 = vst [vmem:[#allocation3 + $0x80] sm:$0xff] %v3010
      %3197 = vst [vmem:[#allocation3 + $0xc8] sm:$0xff] %v3022
      %3198 = vst [vmem:[#allocation3 + $0x110] sm:$0xff] %v3034
      %3199 = vst [vmem:[#allocation3 + $0x158] sm:$0xff] %v3046
      %3200 = vst [vmem:[#allocation3 + $0x1a0] sm:$0xff] %v3058
      %3201 = vst [vmem:[#allocation3 + $0x1e8] sm:$0xff] %v3070
      %3202 = vst [vmem:[#allocation3 + $0x230] sm:$0xff] %v3082
      %3203 = vst [vmem:[#allocation3 + $0x278] sm:$0xff] %v3094
      %3204 = vst [vmem:[#allocation3 + $0x2c0] sm:$0xff] %v3106
      %3205 = vst [vmem:[#allocation3 + $0x308] sm:$0xff] %v3118
      %3206 = vst [vmem:[#allocation3 + $0x350] sm:$0xff] %v3130
      %3207 = vst [vmem:[#allocation3 + $0x398] sm:$0xff] %v3142
      %3208 = vst [vmem:[#allocation3 + $0x3e0] sm:$0xff] %v3154
      %3209 = vst [vmem:[#allocation3 + $0x428] sm:$0xff] %v3166
      %3210 = vst [vmem:[#allocation3 + $0x470] sm:$0xff] %v3178
      %v3211 = vld [vmem:[%s2666] sm:$0xe]
      %v3212 = vld [vmem:[%s2666 + $0x4] sm:$0xf]
      %v3213 = vld [vmem:[%s2666 + $0x8] sm:$0x1]
      %v3214 = vld [vmem:[%s2666 + $0xc] sm:$0xe]
      %v3215 = vld [vmem:[%s2666 + $0x10] sm:$0xf]
      %v3216 = vld [vmem:[%s2666 + $0x14] sm:$0x1]
      %v3217 = vld [vmem:[%s2666 + $0x18] sm:$0xe]
      %v3218 = vld [vmem:[%s2666 + $0x1c] sm:$0xf]
      %v3219 = vld [vmem:[%s2666 + $0x20] sm:$0x1]
      %v3220 = vld [vmem:[%s2666 + $0x24] sm:$0xe]
      %v3221 = vld [vmem:[%s2666 + $0x28] sm:$0xf]
      %v3222 = vld [vmem:[%s2666 + $0x2c] sm:$0x1]
      %v3223 = vld [vmem:[%s2666 + $0x30] sm:$0xe]
      %v3224 = vld [vmem:[%s2666 + $0x34] sm:$0xf]
      %v3225 = vld [vmem:[%s2666 + $0x38] sm:$0x1]
      %v3226 = vld [vmem:[%s2666 + $0x3c] sm:$0xe]
      %v3227 = vld [vmem:[%s2666 + $0x40] sm:$0xf]
      %v3228 = vld [vmem:[%s2666 + $0x44] sm:$0x1]
      %v3229 = vld [vmem:[%s2666 + $0x48] sm:$0xe]
      %v3230 = vld [vmem:[%s2666 + $0x4c] sm:$0xf]
      %v3231 = vld [vmem:[%s2666 + $0x50] sm:$0x1]
      %v3232 = vld [vmem:[%s2666 + $0x54] sm:$0xe]
      %v3233 = vld [vmem:[%s2666 + $0x58] sm:$0xf]
      %v3234 = vld [vmem:[%s2666 + $0x5c] sm:$0x1]
      %v3235 = vld [vmem:[%s2666 + $0x60] sm:$0xe]
      %v3236 = vld [vmem:[%s2666 + $0x64] sm:$0xf]
      %v3237 = vld [vmem:[%s2666 + $0x68] sm:$0x1]
      %v3238 = vld [vmem:[%s2666 + $0x6c] sm:$0xe]
      %v3239 = vld [vmem:[%s2666 + $0x70] sm:$0xf]
      %v3240 = vld [vmem:[%s2666 + $0x74] sm:$0x1]
      %v3241 = vld [vmem:[%s2666 + $0x78] sm:$0xe]
      %v3242 = vld [vmem:[%s2666 + $0x7c] sm:$0xf]
      %v3243 = vld [vmem:[%s2666 + $0x80] sm:$0x1]
      %v3244 = vld [vmem:[%s2666 + $0x84] sm:$0xe]
      %v3245 = vld [vmem:[%s2666 + $0x88] sm:$0xf]
      %v3246 = vld [vmem:[%s2666 + $0x8c] sm:$0x1]
      %v3247 = vld [vmem:[%s2666 + $0x90] sm:$0xe]
      %v3248 = vld [vmem:[%s2666 + $0x94] sm:$0xf]
      %v3249 = vld [vmem:[%s2666 + $0x98] sm:$0x1]
      %v3250 = vld [vmem:[%s2666 + $0x9c] sm:$0xe]
      %v3251 = vld [vmem:[%s2666 + $0xa0] sm:$0xf]
      %v3252 = vld [vmem:[%s2666 + $0xa4] sm:$0x1]
      %v3253 = vld [vmem:[%s2666 + $0xa8] sm:$0xe]
      %v3254 = vld [vmem:[%s2666 + $0xac] sm:$0xf]
      %v3255 = vld [vmem:[%s2666 + $0xb0] sm:$0x1]
      %v3256 = vld [vmem:[%s2666 + $0xb4] sm:$0xe]
      %v3257 = vld [vmem:[%s2666 + $0xb8] sm:$0xf]
      %v3258 = vld [vmem:[%s2666 + $0xbc] sm:$0x1]
      %v3307 = vunpack.c.l.b16 %v3211
      %v3308 = vunpack.c.l.b16 %v3212
      %v3309 = vunpack.c.l.b16 %v3213
      %v3310 = vunpack.c.l.b16 %v3214
      %v3311 = vunpack.c.l.b16 %v3215
      %v3312 = vunpack.c.l.b16 %v3216
      %v3313 = vunpack.c.l.b16 %v3217
      %v3314 = vunpack.c.l.b16 %v3218
      %v3315 = vunpack.c.l.b16 %v3219
      %v3316 = vunpack.c.l.b16 %v3220
      %v3317 = vunpack.c.l.b16 %v3221
      %v3318 = vunpack.c.l.b16 %v3222
      %v3319 = vunpack.c.l.b16 %v3223
      %v3320 = vunpack.c.l.b16 %v3224
      %v3321 = vunpack.c.l.b16 %v3225
      %v3322 = vunpack.c.l.b16 %v3226
      %v3323 = vunpack.c.l.b16 %v3227
      %v3324 = vunpack.c.l.b16 %v3228
      %v3325 = vunpack.c.l.b16 %v3229
      %v3326 = vunpack.c.l.b16 %v3230
      %v3327 = vunpack.c.l.b16 %v3231
      %v3328 = vunpack.c.l.b16 %v3232
      %v3329 = vunpack.c.l.b16 %v3233
      %v3330 = vunpack.c.l.b16 %v3234
      %v3331 = vunpack.c.l.b16 %v3235
      %v3332 = vunpack.c.l.b16 %v3236
      %v3333 = vunpack.c.l.b16 %v3237
      %v3334 = vunpack.c.l.b16 %v3238
      %v3335 = vunpack.c.l.b16 %v3239
      %v3336 = vunpack.c.l.b16 %v3240
      %v3337 = vunpack.c.l.b16 %v3241
      %v3338 = vunpack.c.l.b16 %v3242
      %v3339 = vunpack.c.l.b16 %v3243
      %v3340 = vunpack.c.l.b16 %v3244
      %v3341 = vunpack.c.l.b16 %v3245
      %v3342 = vunpack.c.l.b16 %v3246
      %v3343 = vunpack.c.l.b16 %v3247
      %v3344 = vunpack.c.l.b16 %v3248
      %v3345 = vunpack.c.l.b16 %v3249
      %v3346 = vunpack.c.l.b16 %v3250
      %v3347 = vunpack.c.l.b16 %v3251
      %v3348 = vunpack.c.l.b16 %v3252
      %v3349 = vunpack.c.l.b16 %v3253
      %v3350 = vunpack.c.l.b16 %v3254
      %v3351 = vunpack.c.l.b16 %v3255
      %v3352 = vunpack.c.l.b16 %v3256
      %v3353 = vunpack.c.l.b16 %v3257
      %v3354 = vunpack.c.l.b16 %v3258
      %v3355 = vpack.c.b16 %v3308, %v3307
      %v3356 = vpack.c.b16 %v3309, %v3309
      %v3357 = vpack.c.b16 %v3311, %v3310
      %v3358 = vpack.c.b16 %v3312, %v3312
      %v3359 = vpack.c.b16 %v3314, %v3313
      %v3360 = vpack.c.b16 %v3315, %v3315
      %v3361 = vpack.c.b16 %v3317, %v3316
      %v3362 = vpack.c.b16 %v3318, %v3318
      %v3363 = vpack.c.b16 %v3320, %v3319
      %v3364 = vpack.c.b16 %v3321, %v3321
      %v3365 = vpack.c.b16 %v3323, %v3322
      %v3366 = vpack.c.b16 %v3324, %v3324
      %v3367 = vpack.c.b16 %v3326, %v3325
      %v3368 = vpack.c.b16 %v3327, %v3327
      %v3369 = vpack.c.b16 %v3329, %v3328
      %v3370 = vpack.c.b16 %v3330, %v3330
      %v3371 = vpack.c.b16 %v3332, %v3331
      %v3372 = vpack.c.b16 %v3333, %v3333
      %v3373 = vpack.c.b16 %v3335, %v3334
      %v3374 = vpack.c.b16 %v3336, %v3336
      %v3375 = vpack.c.b16 %v3338, %v3337
      %v3376 = vpack.c.b16 %v3339, %v3339
      %v3377 = vpack.c.b16 %v3341, %v3340
      %v3378 = vpack.c.b16 %v3342, %v3342
      %v3379 = vpack.c.b16 %v3344, %v3343
      %v3380 = vpack.c.b16 %v3345, %v3345
      %v3381 = vpack.c.b16 %v3347, %v3346
      %v3382 = vpack.c.b16 %v3348, %v3348
      %v3383 = vpack.c.b16 %v3350, %v3349
      %v3384 = vpack.c.b16 %v3351, %v3351
      %v3385 = vpack.c.b16 %v3353, %v3352
      %v3386 = vpack.c.b16 %v3354, %v3354
      %v3387 = vrot.slane %v3355, 1
      %v3388 = vrot.slane %v3356, 1
      %v3389 = vsel %vm1785, %v3387, %v3388
      %v3390 = vrot.slane %v3357, 1
      %v3391 = vrot.slane %v3358, 1
      %v3392 = vsel %vm1785, %v3390, %v3391
      %v3393 = vrot.slane %v3359, 1
      %v3394 = vrot.slane %v3360, 1
      %v3395 = vsel %vm1785, %v3393, %v3394
      %v3396 = vrot.slane %v3361, 1
      %v3397 = vrot.slane %v3362, 1
      %v3398 = vsel %vm1785, %v3396, %v3397
      %v3399 = vrot.slane %v3363, 1
      %v3400 = vrot.slane %v3364, 1
      %v3401 = vsel %vm1785, %v3399, %v3400
      %v3402 = vrot.slane %v3365, 1
      %v3403 = vrot.slane %v3366, 1
      %v3404 = vsel %vm1785, %v3402, %v3403
      %v3405 = vrot.slane %v3367, 1
      %v3406 = vrot.slane %v3368, 1
      %v3407 = vsel %vm1785, %v3405, %v3406
      %v3408 = vrot.slane %v3369, 1
      %v3409 = vrot.slane %v3370, 1
      %v3410 = vsel %vm1785, %v3408, %v3409
      %v3411 = vrot.slane %v3371, 1
      %v3412 = vrot.slane %v3372, 1
      %v3413 = vsel %vm1785, %v3411, %v3412
      %v3414 = vrot.slane %v3373, 1
      %v3415 = vrot.slane %v3374, 1
      %v3416 = vsel %vm1785, %v3414, %v3415
      %v3417 = vrot.slane %v3375, 1
      %v3418 = vrot.slane %v3376, 1
      %v3419 = vsel %vm1785, %v3417, %v3418
      %v3420 = vrot.slane %v3377, 1
      %v3421 = vrot.slane %v3378, 1
      %v3422 = vsel %vm1785, %v3420, %v3421
      %v3423 = vrot.slane %v3379, 1
      %v3424 = vrot.slane %v3380, 1
      %v3425 = vsel %vm1785, %v3423, %v3424
      %v3426 = vrot.slane %v3381, 1
      %v3427 = vrot.slane %v3382, 1
      %v3428 = vsel %vm1785, %v3426, %v3427
      %v3429 = vrot.slane %v3383, 1
      %v3430 = vrot.slane %v3384, 1
      %v3431 = vsel %vm1785, %v3429, %v3430
      %v3432 = vrot.slane %v3385, 1
      %v3433 = vrot.slane %v3386, 1
      %v3434 = vsel %vm1785, %v3432, %v3433
      %3451 = vst [vmem:[#allocation3 + $0x40] sm:$0xff] %v3389
      %3452 = vst [vmem:[#allocation3 + $0x88] sm:$0xff] %v3392
      %3453 = vst [vmem:[#allocation3 + $0xd0] sm:$0xff] %v3395
      %3454 = vst [vmem:[#allocation3 + $0x118] sm:$0xff] %v3398
      %3455 = vst [vmem:[#allocation3 + $0x160] sm:$0xff] %v3401
      %3456 = vst [vmem:[#allocation3 + $0x1a8] sm:$0xff] %v3404
      %3457 = vst [vmem:[#allocation3 + $0x1f0] sm:$0xff] %v3407
      %3458 = vst [vmem:[#allocation3 + $0x238] sm:$0xff] %v3410
      %3459 = vst [vmem:[#allocation3 + $0x280] sm:$0xff] %v3413
      %3460 = vst [vmem:[#allocation3 + $0x2c8] sm:$0xff] %v3416
      %3461 = vst [vmem:[#allocation3 + $0x310] sm:$0xff] %v3419
      %3462 = vst [vmem:[#allocation3 + $0x358] sm:$0xff] %v3422
      %3463 = vst [vmem:[#allocation3 + $0x3a0] sm:$0xff] %v3425
      %3464 = vst [vmem:[#allocation3 + $0x3e8] sm:$0xff] %v3428
      %3465 = vst [vmem:[#allocation3 + $0x430] sm:$0xff] %v3431
      %3466 = vst [vmem:[#allocation3 + $0x478] sm:$0xff] %v3434
      %v3467 = vld [vmem:[#allocation3] sm:$0xff]
      %v3468 = vld [vmem:[#allocation3 + $0x8] sm:$0xff]
      %v3469 = vld [vmem:[#allocation3 + $0x10] sm:$0xff]
      %v3470 = vld [vmem:[#allocation3 + $0x18] sm:$0xff]
      %v3471 = vld [vmem:[#allocation3 + $0x20] sm:$0xff]
      %v3472 = vld [vmem:[#allocation3 + $0x28] sm:$0xff]
      %v3473 = vld [vmem:[#allocation3 + $0x30] sm:$0xff]
      %v3474 = vld [vmem:[#allocation3 + $0x38] sm:$0xff]
      %v3475 = vld [vmem:[#allocation3 + $0x40] sm:$0xff]
      %v3476 = vld [vmem:[#allocation3 + $0x48] sm:$0xff]
      %v3477 = vld [vmem:[#allocation3 + $0x50] sm:$0xff]
      %v3478 = vld [vmem:[#allocation3 + $0x58] sm:$0xff]
      %v3479 = vld [vmem:[#allocation3 + $0x60] sm:$0xff]
      %v3480 = vld [vmem:[#allocation3 + $0x68] sm:$0xff]
      %v3481 = vld [vmem:[#allocation3 + $0x70] sm:$0xff]
      %v3482 = vld [vmem:[#allocation3 + $0x78] sm:$0xff]
      %v3483 = vld [vmem:[#allocation3 + $0x80] sm:$0xff]
      %v3484 = vld [vmem:[#allocation3 + $0x88] sm:$0xff]
      %v3485 = vld [vmem:[#allocation3 + $0x90] sm:$0xff]
      %v3486 = vld [vmem:[#allocation3 + $0x98] sm:$0xff]
      %v3487 = vld [vmem:[#allocation3 + $0xa0] sm:$0xff]
      %v3488 = vld [vmem:[#allocation3 + $0xa8] sm:$0xff]
      %v3489 = vld [vmem:[#allocation3 + $0xb0] sm:$0xff]
      %v3490 = vld [vmem:[#allocation3 + $0xb8] sm:$0xff]
      %v3491 = vld [vmem:[#allocation3 + $0xc0] sm:$0xff]
      %v3492 = vld [vmem:[#allocation3 + $0xc8] sm:$0xff]
      %v3493 = vld [vmem:[#allocation3 + $0xd0] sm:$0xff]
      %v3494 = vld [vmem:[#allocation3 + $0xd8] sm:$0xff]
      %v3495 = vld [vmem:[#allocation3 + $0xe0] sm:$0xff]
      %v3496 = vld [vmem:[#allocation3 + $0xe8] sm:$0xff]
      %v3497 = vld [vmem:[#allocation3 + $0xf0] sm:$0xff]
      %v3498 = vld [vmem:[#allocation3 + $0xf8] sm:$0xff]
      %v3499 = vld [vmem:[#allocation3 + $0x100] sm:$0xff]
      %v3500 = vld [vmem:[#allocation3 + $0x108] sm:$0xff]
      %v3501 = vld [vmem:[#allocation3 + $0x110] sm:$0xff]
      %v3502 = vld [vmem:[#allocation3 + $0x118] sm:$0xff]
      %v3503 = vld [vmem:[#allocation3 + $0x120] sm:$0xff]
      %v3504 = vld [vmem:[#allocation3 + $0x128] sm:$0xff]
      %v3505 = vld [vmem:[#allocation3 + $0x130] sm:$0xff]
      %v3506 = vld [vmem:[#allocation3 + $0x138] sm:$0xff]
      %v3507 = vld [vmem:[#allocation3 + $0x140] sm:$0xff]
      %v3508 = vld [vmem:[#allocation3 + $0x148] sm:$0xff]
      %v3509 = vld [vmem:[#allocation3 + $0x150] sm:$0xff]
      %v3510 = vld [vmem:[#allocation3 + $0x158] sm:$0xff]
      %v3511 = vld [vmem:[#allocation3 + $0x160] sm:$0xff]
      %v3512 = vld [vmem:[#allocation3 + $0x168] sm:$0xff]
      %v3513 = vld [vmem:[#allocation3 + $0x170] sm:$0xff]
      %v3514 = vld [vmem:[#allocation3 + $0x178] sm:$0xff]
      %v3515 = vld [vmem:[#allocation3 + $0x180] sm:$0xff]
      %v3516 = vld [vmem:[#allocation3 + $0x188] sm:$0xff]
      %v3517 = vld [vmem:[#allocation3 + $0x190] sm:$0xff]
      %v3518 = vld [vmem:[#allocation3 + $0x198] sm:$0xff]
      %v3519 = vld [vmem:[#allocation3 + $0x1a0] sm:$0xff]
      %v3520 = vld [vmem:[#allocation3 + $0x1a8] sm:$0xff]
      %v3521 = vld [vmem:[#allocation3 + $0x1b0] sm:$0xff]
      %v3522 = vld [vmem:[#allocation3 + $0x1b8] sm:$0xff]
      %v3523 = vld [vmem:[#allocation3 + $0x1c0] sm:$0xff]
      %v3524 = vld [vmem:[#allocation3 + $0x1c8] sm:$0xff]
      %v3525 = vld [vmem:[#allocation3 + $0x1d0] sm:$0xff]
      %v3526 = vld [vmem:[#allocation3 + $0x1d8] sm:$0xff]
      %v3527 = vld [vmem:[#allocation3 + $0x1e0] sm:$0xff]
      %v3528 = vld [vmem:[#allocation3 + $0x1e8] sm:$0xff]
      %v3529 = vld [vmem:[#allocation3 + $0x1f0] sm:$0xff]
      %v3530 = vld [vmem:[#allocation3 + $0x1f8] sm:$0xff]
      %v3531 = vld [vmem:[#allocation3 + $0x200] sm:$0xff]
      %v3532 = vld [vmem:[#allocation3 + $0x208] sm:$0xff]
      %v3533 = vld [vmem:[#allocation3 + $0x210] sm:$0xff]
      %v3534 = vld [vmem:[#allocation3 + $0x218] sm:$0xff]
      %v3535 = vld [vmem:[#allocation3 + $0x220] sm:$0xff]
      %v3536 = vld [vmem:[#allocation3 + $0x228] sm:$0xff]
      %v3537 = vld [vmem:[#allocation3 + $0x230] sm:$0xff]
      %v3538 = vld [vmem:[#allocation3 + $0x238] sm:$0xff]
      %v3539 = vld [vmem:[#allocation3 + $0x240] sm:$0xff]
      %v3540 = vld [vmem:[#allocation3 + $0x248] sm:$0xff]
      %v3541 = vld [vmem:[#allocation3 + $0x250] sm:$0xff]
      %v3542 = vld [vmem:[#allocation3 + $0x258] sm:$0xff]
      %v3543 = vld [vmem:[#allocation3 + $0x260] sm:$0xff]
      %v3544 = vld [vmem:[#allocation3 + $0x268] sm:$0xff]
      %v3545 = vld [vmem:[#allocation3 + $0x270] sm:$0xff]
      %v3546 = vld [vmem:[#allocation3 + $0x278] sm:$0xff]
      %v3547 = vld [vmem:[#allocation3 + $0x280] sm:$0xff]
      %v3548 = vld [vmem:[#allocation3 + $0x288] sm:$0xff]
      %v3549 = vld [vmem:[#allocation3 + $0x290] sm:$0xff]
      %v3550 = vld [vmem:[#allocation3 + $0x298] sm:$0xff]
      %v3551 = vld [vmem:[#allocation3 + $0x2a0] sm:$0xff]
      %v3552 = vld [vmem:[#allocation3 + $0x2a8] sm:$0xff]
      %v3553 = vld [vmem:[#allocation3 + $0x2b0] sm:$0xff]
      %v3554 = vld [vmem:[#allocation3 + $0x2b8] sm:$0xff]
      %v3555 = vld [vmem:[#allocation3 + $0x2c0] sm:$0xff]
      %v3556 = vld [vmem:[#allocation3 + $0x2c8] sm:$0xff]
      %v3557 = vld [vmem:[#allocation3 + $0x2d0] sm:$0xff]
      %v3558 = vld [vmem:[#allocation3 + $0x2d8] sm:$0xff]
      %v3559 = vld [vmem:[#allocation3 + $0x2e0] sm:$0xff]
      %v3560 = vld [vmem:[#allocation3 + $0x2e8] sm:$0xff]
      %v3561 = vld [vmem:[#allocation3 + $0x2f0] sm:$0xff]
      %v3562 = vld [vmem:[#allocation3 + $0x2f8] sm:$0xff]
      %v3563 = vld [vmem:[#allocation3 + $0x300] sm:$0xff]
      %v3564 = vld [vmem:[#allocation3 + $0x308] sm:$0xff]
      %v3565 = vld [vmem:[#allocation3 + $0x310] sm:$0xff]
      %v3566 = vld [vmem:[#allocation3 + $0x318] sm:$0xff]
      %v3567 = vld [vmem:[#allocation3 + $0x320] sm:$0xff]
      %v3568 = vld [vmem:[#allocation3 + $0x328] sm:$0xff]
      %v3569 = vld [vmem:[#allocation3 + $0x330] sm:$0xff]
      %v3570 = vld [vmem:[#allocation3 + $0x338] sm:$0xff]
      %v3571 = vld [vmem:[#allocation3 + $0x340] sm:$0xff]
      %v3572 = vld [vmem:[#allocation3 + $0x348] sm:$0xff]
      %v3573 = vld [vmem:[#allocation3 + $0x350] sm:$0xff]
      %v3574 = vld [vmem:[#allocation3 + $0x358] sm:$0xff]
      %v3575 = vld [vmem:[#allocation3 + $0x360] sm:$0xff]
      %v3576 = vld [vmem:[#allocation3 + $0x368] sm:$0xff]
      %v3577 = vld [vmem:[#allocation3 + $0x370] sm:$0xff]
      %v3578 = vld [vmem:[#allocation3 + $0x378] sm:$0xff]
      %v3579 = vld [vmem:[#allocation3 + $0x380] sm:$0xff]
      %v3580 = vld [vmem:[#allocation3 + $0x388] sm:$0xff]
      %v3581 = vld [vmem:[#allocation3 + $0x390] sm:$0xff]
      %v3582 = vld [vmem:[#allocation3 + $0x398] sm:$0xff]
      %v3583 = vld [vmem:[#allocation3 + $0x3a0] sm:$0xff]
      %v3584 = vld [vmem:[#allocation3 + $0x3a8] sm:$0xff]
      %v3585 = vld [vmem:[#allocation3 + $0x3b0] sm:$0xff]
      %v3586 = vld [vmem:[#allocation3 + $0x3b8] sm:$0xff]
      %v3587 = vld [vmem:[#allocation3 + $0x3c0] sm:$0xff]
      %v3588 = vld [vmem:[#allocation3 + $0x3c8] sm:$0xff]
      %v3589 = vld [vmem:[#allocation3 + $0x3d0] sm:$0xff]
      %v3590 = vld [vmem:[#allocation3 + $0x3d8] sm:$0xff]
      %v3591 = vld [vmem:[#allocation3 + $0x3e0] sm:$0xff]
      %v3592 = vld [vmem:[#allocation3 + $0x3e8] sm:$0xff]
      %v3593 = vld [vmem:[#allocation3 + $0x3f0] sm:$0xff]
      %v3594 = vld [vmem:[#allocation3 + $0x3f8] sm:$0xff]
      %v3595 = vld [vmem:[#allocation3 + $0x400] sm:$0xff]
      %v3596 = vld [vmem:[#allocation3 + $0x408] sm:$0xff]
      %v3597 = vld [vmem:[#allocation3 + $0x410] sm:$0xff]
      %v3598 = vld [vmem:[#allocation3 + $0x418] sm:$0xff]
      %v3599 = vld [vmem:[#allocation3 + $0x420] sm:$0xff]
      %v3600 = vld [vmem:[#allocation3 + $0x428] sm:$0xff]
      %v3601 = vld [vmem:[#allocation3 + $0x430] sm:$0xff]
      %v3602 = vld [vmem:[#allocation3 + $0x438] sm:$0xff]
      %v3603 = vld [vmem:[#allocation3 + $0x440] sm:$0xff]
      %v3604 = vld [vmem:[#allocation3 + $0x448] sm:$0xff]
      %v3605 = vld [vmem:[#allocation3 + $0x450] sm:$0xff]
      %v3606 = vld [vmem:[#allocation3 + $0x458] sm:$0xff]
      %v3607 = vld [vmem:[#allocation3 + $0x460] sm:$0xff]
      %v3608 = vld [vmem:[#allocation3 + $0x468] sm:$0xff]
      %v3609 = vld [vmem:[#allocation3 + $0x470] sm:$0xff]
      %v3610 = vld [vmem:[#allocation3 + $0x478] sm:$0xff]
      %v3611 = vld [vmem:[%s1] sm:$0xf]
      %v3612 = vld [vmem:[%s1 + $0x4] sm:$0xf]
      %v3613 = vld [vmem:[%s1 + $0x8] sm:$0xf]
      %v3614 = vld [vmem:[%s1 + $0xc] sm:$0xf]
      %v3615 = vld [vmem:[%s1 + $0x10] sm:$0xf]
      %v3616 = vld [vmem:[%s1 + $0x14] sm:$0xf]
      %v3617 = vld [vmem:[%s1 + $0x18] sm:$0xf]
      %v3618 = vld [vmem:[%s1 + $0x1c] sm:$0xf]
      %v3619 = vld [vmem:[%s1 + $0x20] sm:$0xf]
      %v3620 = vld [vmem:[%s1 + $0x24] sm:$0xf]
      %v3621 = vld [vmem:[%s1 + $0x28] sm:$0xf]
      %v3622 = vld [vmem:[%s1 + $0x2c] sm:$0xf]
      %v3623 = vld [vmem:[%s1 + $0x30] sm:$0xf]
      %v3624 = vld [vmem:[%s1 + $0x34] sm:$0xf]
      %v3625 = vld [vmem:[%s1 + $0x38] sm:$0xf]
      %v3626 = vld [vmem:[%s1 + $0x3c] sm:$0xf]
      %v3627 = vld [vmem:[%s1 + $0x40] sm:$0xf]
      %v3628 = vld [vmem:[%s1 + $0x44] sm:$0xf]
      %v3629 = vld [vmem:[%s1 + $0x48] sm:$0xf]
      %v3630 = vld [vmem:[%s1 + $0x4c] sm:$0xf]
      %v3631 = vld [vmem:[%s1 + $0x50] sm:$0xf]
      %v3632 = vld [vmem:[%s1 + $0x54] sm:$0xf]
      %v3633 = vld [vmem:[%s1 + $0x58] sm:$0xf]
      %v3634 = vld [vmem:[%s1 + $0x5c] sm:$0xf]
      %v3635 = vld [vmem:[%s1 + $0x60] sm:$0xf]
      %v3636 = vld [vmem:[%s1 + $0x64] sm:$0xf]
      %v3637 = vld [vmem:[%s1 + $0x68] sm:$0xf]
      %v3638 = vld [vmem:[%s1 + $0x6c] sm:$0xf]
      %v3639 = vld [vmem:[%s1 + $0x70] sm:$0xf]
      %v3640 = vld [vmem:[%s1 + $0x74] sm:$0xf]
      %v3641 = vld [vmem:[%s1 + $0x78] sm:$0xf]
      %v3642 = vld [vmem:[%s1 + $0x7c] sm:$0xf]
      %v3643 = vld [vmem:[%s1 + $0x80] sm:$0xf]
      %v3644 = vld [vmem:[%s1 + $0x84] sm:$0xf]
      %v3645 = vld [vmem:[%s1 + $0x88] sm:$0xf]
      %v3646 = vld [vmem:[%s1 + $0x8c] sm:$0xf]
      %v3647 = vld [vmem:[%s1 + $0x90] sm:$0xf]
      %v3648 = vld [vmem:[%s1 + $0x94] sm:$0xf]
      %v3649 = vld [vmem:[%s1 + $0x98] sm:$0xf]
      %v3650 = vld [vmem:[%s1 + $0x9c] sm:$0xf]
      %v3651 = vld [vmem:[%s1 + $0xa0] sm:$0xf]
      %v3652 = vld [vmem:[%s1 + $0xa4] sm:$0xf]
      %v3653 = vld [vmem:[%s1 + $0xa8] sm:$0xf]
      %v3654 = vld [vmem:[%s1 + $0xac] sm:$0xf]
      %v3655 = vld [vmem:[%s1 + $0xb0] sm:$0xf]
      %v3656 = vld [vmem:[%s1 + $0xb4] sm:$0xf]
      %v3657 = vld [vmem:[%s1 + $0xb8] sm:$0xf]
      %v3658 = vld [vmem:[%s1 + $0xbc] sm:$0xf]
      %v3659 = vld [vmem:[%s1 + $0xc0] sm:$0xf]
      %v3660 = vld [vmem:[%s1 + $0xc4] sm:$0xf]
      %v3661 = vld [vmem:[%s1 + $0xc8] sm:$0xf]
      %v3662 = vld [vmem:[%s1 + $0xcc] sm:$0xf]
      %v3663 = vld [vmem:[%s1 + $0xd0] sm:$0xf]
      %v3664 = vld [vmem:[%s1 + $0xd4] sm:$0xf]
      %v3665 = vld [vmem:[%s1 + $0xd8] sm:$0xf]
      %v3666 = vld [vmem:[%s1 + $0xdc] sm:$0xf]
      %v3667 = vld [vmem:[%s1 + $0xe0] sm:$0xf]
      %v3668 = vld [vmem:[%s1 + $0xe4] sm:$0xf]
      %v3669 = vld [vmem:[%s1 + $0xe8] sm:$0xf]
      %v3670 = vld [vmem:[%s1 + $0xec] sm:$0xf]
      %v3671 = vld [vmem:[%s1 + $0xf0] sm:$0xf]
      %v3672 = vld [vmem:[%s1 + $0xf4] sm:$0xf]
      %v3673 = vld [vmem:[%s1 + $0xf8] sm:$0xf]
      %v3674 = vld [vmem:[%s1 + $0xfc] sm:$0xf]
      %v3675 = vld [vmem:[%s1 + $0x100] sm:$0xf]
      %v3676 = vld [vmem:[%s1 + $0x104] sm:$0xf]
      %v3677 = vld [vmem:[%s1 + $0x108] sm:$0xf]
      %v3678 = vld [vmem:[%s1 + $0x10c] sm:$0xf]
      %v3679 = vld [vmem:[%s1 + $0x110] sm:$0xf]
      %v3680 = vld [vmem:[%s1 + $0x114] sm:$0xf]
      %v3681 = vld [vmem:[%s1 + $0x118] sm:$0xf]
      %v3682 = vld [vmem:[%s1 + $0x11c] sm:$0xf]
      %v3683 = vld [vmem:[%s1 + $0x120] sm:$0xf]
      %v3684 = vld [vmem:[%s1 + $0x124] sm:$0xf]
      %v3685 = vld [vmem:[%s1 + $0x128] sm:$0xf]
      %v3686 = vld [vmem:[%s1 + $0x12c] sm:$0xf]
      %v3687 = vld [vmem:[%s1 + $0x130] sm:$0xf]
      %v3688 = vld [vmem:[%s1 + $0x134] sm:$0xf]
      %v3689 = vld [vmem:[%s1 + $0x138] sm:$0xf]
      %v3690 = vld [vmem:[%s1 + $0x13c] sm:$0xf]
      %v3691 = vld [vmem:[%s1 + $0x140] sm:$0xf]
      %v3692 = vld [vmem:[%s1 + $0x144] sm:$0xf]
      %v3693 = vld [vmem:[%s1 + $0x148] sm:$0xf]
      %v3694 = vld [vmem:[%s1 + $0x14c] sm:$0xf]
      %v3695 = vld [vmem:[%s1 + $0x150] sm:$0xf]
      %v3696 = vld [vmem:[%s1 + $0x154] sm:$0xf]
      %v3697 = vld [vmem:[%s1 + $0x158] sm:$0xf]
      %v3698 = vld [vmem:[%s1 + $0x15c] sm:$0xf]
      %v3699 = vld [vmem:[%s1 + $0x160] sm:$0xf]
      %v3700 = vld [vmem:[%s1 + $0x164] sm:$0xf]
      %v3701 = vld [vmem:[%s1 + $0x168] sm:$0xf]
      %v3702 = vld [vmem:[%s1 + $0x16c] sm:$0xf]
      %v3703 = vld [vmem:[%s1 + $0x170] sm:$0xf]
      %v3704 = vld [vmem:[%s1 + $0x174] sm:$0xf]
      %v3705 = vld [vmem:[%s1 + $0x178] sm:$0xf]
      %v3706 = vld [vmem:[%s1 + $0x17c] sm:$0xf]
      %v3707 = vld [vmem:[%s1 + $0x180] sm:$0xf]
      %v3708 = vld [vmem:[%s1 + $0x184] sm:$0xf]
      %v3709 = vld [vmem:[%s1 + $0x188] sm:$0xf]
      %v3710 = vld [vmem:[%s1 + $0x18c] sm:$0xf]
      %v3711 = vld [vmem:[%s1 + $0x190] sm:$0xf]
      %v3712 = vld [vmem:[%s1 + $0x194] sm:$0xf]
      %v3713 = vld [vmem:[%s1 + $0x198] sm:$0xf]
      %v3714 = vld [vmem:[%s1 + $0x19c] sm:$0xf]
      %v3715 = vld [vmem:[%s1 + $0x1a0] sm:$0xf]
      %v3716 = vld [vmem:[%s1 + $0x1a4] sm:$0xf]
      %v3717 = vld [vmem:[%s1 + $0x1a8] sm:$0xf]
      %v3718 = vld [vmem:[%s1 + $0x1ac] sm:$0xf]
      %v3719 = vld [vmem:[%s1 + $0x1b0] sm:$0xf]
      %v3720 = vld [vmem:[%s1 + $0x1b4] sm:$0xf]
      %v3721 = vld [vmem:[%s1 + $0x1b8] sm:$0xf]
      %v3722 = vld [vmem:[%s1 + $0x1bc] sm:$0xf]
      %v3723 = vld [vmem:[%s1 + $0x1c0] sm:$0xf]
      %v3724 = vld [vmem:[%s1 + $0x1c4] sm:$0xf]
      %v3725 = vld [vmem:[%s1 + $0x1c8] sm:$0xf]
      %v3726 = vld [vmem:[%s1 + $0x1cc] sm:$0xf]
      %v3727 = vld [vmem:[%s1 + $0x1d0] sm:$0xf]
      %v3728 = vld [vmem:[%s1 + $0x1d4] sm:$0xf]
      %v3729 = vld [vmem:[%s1 + $0x1d8] sm:$0xf]
      %v3730 = vld [vmem:[%s1 + $0x1dc] sm:$0xf]
      %v3731 = vld [vmem:[%s1 + $0x1e0] sm:$0xf]
      %v3732 = vld [vmem:[%s1 + $0x1e4] sm:$0xf]
      %v3733 = vld [vmem:[%s1 + $0x1e8] sm:$0xf]
      %v3734 = vld [vmem:[%s1 + $0x1ec] sm:$0xf]
      %v3735 = vld [vmem:[%s1 + $0x1f0] sm:$0xf]
      %v3736 = vld [vmem:[%s1 + $0x1f4] sm:$0xf]
      %v3737 = vld [vmem:[%s1 + $0x1f8] sm:$0xf]
      %v3738 = vld [vmem:[%s1 + $0x1fc] sm:$0xf]
      %v3739 = vld [vmem:[%s1 + $0x200] sm:$0xf]
      %v3740 = vld [vmem:[%s1 + $0x204] sm:$0xf]
      %v3741 = vld [vmem:[%s1 + $0x208] sm:$0xf]
      %v3742 = vld [vmem:[%s1 + $0x20c] sm:$0xf]
      %v3743 = vld [vmem:[%s1 + $0x210] sm:$0xf]
      %v3744 = vld [vmem:[%s1 + $0x214] sm:$0xf]
      %v3745 = vld [vmem:[%s1 + $0x218] sm:$0xf]
      %v3746 = vld [vmem:[%s1 + $0x21c] sm:$0xf]
      %v3747 = vld [vmem:[%s1 + $0x220] sm:$0xf]
      %v3748 = vld [vmem:[%s1 + $0x224] sm:$0xf]
      %v3749 = vld [vmem:[%s1 + $0x228] sm:$0xf]
      %v3750 = vld [vmem:[%s1 + $0x22c] sm:$0xf]
      %v3751 = vld [vmem:[%s1 + $0x230] sm:$0xf]
      %v3752 = vld [vmem:[%s1 + $0x234] sm:$0xf]
      %v3753 = vld [vmem:[%s1 + $0x238] sm:$0xf]
      %v3754 = vld [vmem:[%s1 + $0x23c] sm:$0xf]
      %v3899 = vunpack.c.l.b16 %v3611
      %v3900 = vunpack.c.l.b16 %v3612
      %v3901 = vunpack.c.l.b16 %v3613
      %v3902 = vunpack.c.l.b16 %v3614
      %v3903 = vunpack.c.l.b16 %v3615
      %v3904 = vunpack.c.l.b16 %v3616
      %v3905 = vunpack.c.l.b16 %v3617
      %v3906 = vunpack.c.l.b16 %v3618
      %v3907 = vunpack.c.l.b16 %v3619
      %v3908 = vunpack.c.l.b16 %v3620
      %v3909 = vunpack.c.l.b16 %v3621
      %v3910 = vunpack.c.l.b16 %v3622
      %v3911 = vunpack.c.l.b16 %v3623
      %v3912 = vunpack.c.l.b16 %v3624
      %v3913 = vunpack.c.l.b16 %v3625
      %v3914 = vunpack.c.l.b16 %v3626
      %v3915 = vunpack.c.l.b16 %v3627
      %v3916 = vunpack.c.l.b16 %v3628
      %v3917 = vunpack.c.l.b16 %v3629
      %v3918 = vunpack.c.l.b16 %v3630
      %v3919 = vunpack.c.l.b16 %v3631
      %v3920 = vunpack.c.l.b16 %v3632
      %v3921 = vunpack.c.l.b16 %v3633
      %v3922 = vunpack.c.l.b16 %v3634
      %v3923 = vunpack.c.l.b16 %v3635
      %v3924 = vunpack.c.l.b16 %v3636
      %v3925 = vunpack.c.l.b16 %v3637
      %v3926 = vunpack.c.l.b16 %v3638
      %v3927 = vunpack.c.l.b16 %v3639
      %v3928 = vunpack.c.l.b16 %v3640
      %v3929 = vunpack.c.l.b16 %v3641
      %v3930 = vunpack.c.l.b16 %v3642
      %v3931 = vunpack.c.l.b16 %v3643
      %v3932 = vunpack.c.l.b16 %v3644
      %v3933 = vunpack.c.l.b16 %v3645
      %v3934 = vunpack.c.l.b16 %v3646
      %v3935 = vunpack.c.l.b16 %v3647
      %v3936 = vunpack.c.l.b16 %v3648
      %v3937 = vunpack.c.l.b16 %v3649
      %v3938 = vunpack.c.l.b16 %v3650
      %v3939 = vunpack.c.l.b16 %v3651
      %v3940 = vunpack.c.l.b16 %v3652
      %v3941 = vunpack.c.l.b16 %v3653
      %v3942 = vunpack.c.l.b16 %v3654
      %v3943 = vunpack.c.l.b16 %v3655
      %v3944 = vunpack.c.l.b16 %v3656
      %v3945 = vunpack.c.l.b16 %v3657
      %v3946 = vunpack.c.l.b16 %v3658
      %v3947 = vunpack.c.l.b16 %v3659
      %v3948 = vunpack.c.l.b16 %v3660
      %v3949 = vunpack.c.l.b16 %v3661
      %v3950 = vunpack.c.l.b16 %v3662
      %v3951 = vunpack.c.l.b16 %v3663
      %v3952 = vunpack.c.l.b16 %v3664
      %v3953 = vunpack.c.l.b16 %v3665
      %v3954 = vunpack.c.l.b16 %v3666
      %v3955 = vunpack.c.l.b16 %v3667
      %v3956 = vunpack.c.l.b16 %v3668
      %v3957 = vunpack.c.l.b16 %v3669
      %v3958 = vunpack.c.l.b16 %v3670
      %v3959 = vunpack.c.l.b16 %v3671
      %v3960 = vunpack.c.l.b16 %v3672
      %v3961 = vunpack.c.l.b16 %v3673
      %v3962 = vunpack.c.l.b16 %v3674
      %v3963 = vunpack.c.l.b16 %v3675
      %v3964 = vunpack.c.l.b16 %v3676
      %v3965 = vunpack.c.l.b16 %v3677
      %v3966 = vunpack.c.l.b16 %v3678
      %v3967 = vunpack.c.l.b16 %v3679
      %v3968 = vunpack.c.l.b16 %v3680
      %v3969 = vunpack.c.l.b16 %v3681
      %v3970 = vunpack.c.l.b16 %v3682
      %v3971 = vunpack.c.l.b16 %v3683
      %v3972 = vunpack.c.l.b16 %v3684
      %v3973 = vunpack.c.l.b16 %v3685
      %v3974 = vunpack.c.l.b16 %v3686
      %v3975 = vunpack.c.l.b16 %v3687
      %v3976 = vunpack.c.l.b16 %v3688
      %v3977 = vunpack.c.l.b16 %v3689
      %v3978 = vunpack.c.l.b16 %v3690
      %v3979 = vunpack.c.l.b16 %v3691
      %v3980 = vunpack.c.l.b16 %v3692
      %v3981 = vunpack.c.l.b16 %v3693
      %v3982 = vunpack.c.l.b16 %v3694
      %v3983 = vunpack.c.l.b16 %v3695
      %v3984 = vunpack.c.l.b16 %v3696
      %v3985 = vunpack.c.l.b16 %v3697
      %v3986 = vunpack.c.l.b16 %v3698
      %v3987 = vunpack.c.l.b16 %v3699
      %v3988 = vunpack.c.l.b16 %v3700
      %v3989 = vunpack.c.l.b16 %v3701
      %v3990 = vunpack.c.l.b16 %v3702
      %v3991 = vunpack.c.l.b16 %v3703
      %v3992 = vunpack.c.l.b16 %v3704
      %v3993 = vunpack.c.l.b16 %v3705
      %v3994 = vunpack.c.l.b16 %v3706
      %v3995 = vunpack.c.l.b16 %v3707
      %v3996 = vunpack.c.l.b16 %v3708
      %v3997 = vunpack.c.l.b16 %v3709
      %v3998 = vunpack.c.l.b16 %v3710
      %v3999 = vunpack.c.l.b16 %v3711
      %v4000 = vunpack.c.l.b16 %v3712
      %v4001 = vunpack.c.l.b16 %v3713
      %v4002 = vunpack.c.l.b16 %v3714
      %v4003 = vunpack.c.l.b16 %v3715
      %v4004 = vunpack.c.l.b16 %v3716
      %v4005 = vunpack.c.l.b16 %v3717
      %v4006 = vunpack.c.l.b16 %v3718
      %v4007 = vunpack.c.l.b16 %v3719
      %v4008 = vunpack.c.l.b16 %v3720
      %v4009 = vunpack.c.l.b16 %v3721
      %v4010 = vunpack.c.l.b16 %v3722
      %v4011 = vunpack.c.l.b16 %v3723
      %v4012 = vunpack.c.l.b16 %v3724
      %v4013 = vunpack.c.l.b16 %v3725
      %v4014 = vunpack.c.l.b16 %v3726
      %v4015 = vunpack.c.l.b16 %v3727
      %v4016 = vunpack.c.l.b16 %v3728
      %v4017 = vunpack.c.l.b16 %v3729
      %v4018 = vunpack.c.l.b16 %v3730
      %v4019 = vunpack.c.l.b16 %v3731
      %v4020 = vunpack.c.l.b16 %v3732
      %v4021 = vunpack.c.l.b16 %v3733
      %v4022 = vunpack.c.l.b16 %v3734
      %v4023 = vunpack.c.l.b16 %v3735
      %v4024 = vunpack.c.l.b16 %v3736
      %v4025 = vunpack.c.l.b16 %v3737
      %v4026 = vunpack.c.l.b16 %v3738
      %v4027 = vunpack.c.l.b16 %v3739
      %v4028 = vunpack.c.l.b16 %v3740
      %v4029 = vunpack.c.l.b16 %v3741
      %v4030 = vunpack.c.l.b16 %v3742
      %v4031 = vunpack.c.l.b16 %v3743
      %v4032 = vunpack.c.l.b16 %v3744
      %v4033 = vunpack.c.l.b16 %v3745
      %v4034 = vunpack.c.l.b16 %v3746
      %v4035 = vunpack.c.l.b16 %v3747
      %v4036 = vunpack.c.l.b16 %v3748
      %v4037 = vunpack.c.l.b16 %v3749
      %v4038 = vunpack.c.l.b16 %v3750
      %v4039 = vunpack.c.l.b16 %v3751
      %v4040 = vunpack.c.l.b16 %v3752
      %v4041 = vunpack.c.l.b16 %v3753
      %v4042 = vunpack.c.l.b16 %v3754
      %v4043 = vpack.c.b16 %v3900, %v3899
      %v4044 = vpack.c.b16 %v3902, %v3901
      %v4045 = vpack.c.b16 %v3904, %v3903
      %v4046 = vpack.c.b16 %v3906, %v3905
      %v4047 = vpack.c.b16 %v3908, %v3907
      %v4048 = vpack.c.b16 %v3910, %v3909
      %v4049 = vpack.c.b16 %v3912, %v3911
      %v4050 = vpack.c.b16 %v3914, %v3913
      %v4051 = vpack.c.b16 %v3916, %v3915
      %v4052 = vpack.c.b16 %v3918, %v3917
      %v4053 = vpack.c.b16 %v3920, %v3919
      %v4054 = vpack.c.b16 %v3922, %v3921
      %v4055 = vpack.c.b16 %v3924, %v3923
      %v4056 = vpack.c.b16 %v3926, %v3925
      %v4057 = vpack.c.b16 %v3928, %v3927
      %v4058 = vpack.c.b16 %v3930, %v3929
      %v4059 = vpack.c.b16 %v3932, %v3931
      %v4060 = vpack.c.b16 %v3934, %v3933
      %v4061 = vpack.c.b16 %v3936, %v3935
      %v4062 = vpack.c.b16 %v3938, %v3937
      %v4063 = vpack.c.b16 %v3940, %v3939
      %v4064 = vpack.c.b16 %v3942, %v3941
      %v4065 = vpack.c.b16 %v3944, %v3943
      %v4066 = vpack.c.b16 %v3946, %v3945
      %v4067 = vpack.c.b16 %v3948, %v3947
      %v4068 = vpack.c.b16 %v3950, %v3949
      %v4069 = vpack.c.b16 %v3952, %v3951
      %v4070 = vpack.c.b16 %v3954, %v3953
      %v4071 = vpack.c.b16 %v3956, %v3955
      %v4072 = vpack.c.b16 %v3958, %v3957
      %v4073 = vpack.c.b16 %v3960, %v3959
      %v4074 = vpack.c.b16 %v3962, %v3961
      %v4075 = vpack.c.b16 %v3964, %v3963
      %v4076 = vpack.c.b16 %v3966, %v3965
      %v4077 = vpack.c.b16 %v3968, %v3967
      %v4078 = vpack.c.b16 %v3970, %v3969
      %v4079 = vpack.c.b16 %v3972, %v3971
      %v4080 = vpack.c.b16 %v3974, %v3973
      %v4081 = vpack.c.b16 %v3976, %v3975
      %v4082 = vpack.c.b16 %v3978, %v3977
      %v4083 = vpack.c.b16 %v3980, %v3979
      %v4084 = vpack.c.b16 %v3982, %v3981
      %v4085 = vpack.c.b16 %v3984, %v3983
      %v4086 = vpack.c.b16 %v3986, %v3985
      %v4087 = vpack.c.b16 %v3988, %v3987
      %v4088 = vpack.c.b16 %v3990, %v3989
      %v4089 = vpack.c.b16 %v3992, %v3991
      %v4090 = vpack.c.b16 %v3994, %v3993
      %v4091 = vpack.c.b16 %v3996, %v3995
      %v4092 = vpack.c.b16 %v3998, %v3997
      %v4093 = vpack.c.b16 %v4000, %v3999
      %v4094 = vpack.c.b16 %v4002, %v4001
      %v4095 = vpack.c.b16 %v4004, %v4003
      %v4096 = vpack.c.b16 %v4006, %v4005
      %v4097 = vpack.c.b16 %v4008, %v4007
      %v4098 = vpack.c.b16 %v4010, %v4009
      %v4099 = vpack.c.b16 %v4012, %v4011
      %v4100 = vpack.c.b16 %v4014, %v4013
      %v4101 = vpack.c.b16 %v4016, %v4015
      %v4102 = vpack.c.b16 %v4018, %v4017
      %v4103 = vpack.c.b16 %v4020, %v4019
      %v4104 = vpack.c.b16 %v4022, %v4021
      %v4105 = vpack.c.b16 %v4024, %v4023
      %v4106 = vpack.c.b16 %v4026, %v4025
      %v4107 = vpack.c.b16 %v4028, %v4027
      %v4108 = vpack.c.b16 %v4030, %v4029
      %v4109 = vpack.c.b16 %v4032, %v4031
      %v4110 = vpack.c.b16 %v4034, %v4033
      %v4111 = vpack.c.b16 %v4036, %v4035
      %v4112 = vpack.c.b16 %v4038, %v4037
      %v4113 = vpack.c.b16 %v4040, %v4039
      %v4114 = vpack.c.b16 %v4042, %v4041
      %4187 = vmatprep.subr.bf16.mxu0 0
      %4188 = vmatpush1.bf16.msra.mxu0 %v4043
      %4189 = vmatprep.subr.bf16.mxu0 0
      %4190 = vmatpush1.bf16.msra.mxu0 %v4044
      %4191 = vmatprep.subr.bf16.mxu0 0
      %4192 = vmatpush1.bf16.msra.mxu0 %v4045
      %4193 = vmatprep.subr.bf16.mxu0 0
      %4194 = vmatpush1.bf16.msra.mxu0 %v4046
      %4195 = vmatprep.subr.bf16.mxu0 0
      %4196 = vmatpush1.bf16.msra.mxu0 %v4047
      %4197 = vmatprep.subr.bf16.mxu0 0
      %4198 = vmatpush1.bf16.msra.mxu0 %v4048
      %4199 = vmatprep.subr.bf16.mxu0 0
      %4200 = vmatpush1.bf16.msra.mxu0 %v4049
      %4201 = vmatprep.subr.bf16.mxu0 0
      %4202 = vmatpush1.bf16.msra.mxu0 %v4050
      %4203 = vmatprep.subr.bf16.mxu0 0
      %4204 = vmatpush1.bf16.msra.mxu0 %v4051
      %4205 = vmatprep.subr.bf16.mxu0 0
      %4206 = vmatpush1.bf16.msra.mxu0 %v4052
      %4207 = vmatprep.subr.bf16.mxu0 0
      %4208 = vmatpush1.bf16.msra.mxu0 %v4053
      %4209 = vmatprep.subr.bf16.mxu0 0
      %4210 = vmatpush1.bf16.msra.mxu0 %v4054
      %4211 = vmatprep.subr.bf16.mxu0 0
      %4212 = vmatpush1.bf16.msra.mxu0 %v4055
      %4213 = vmatprep.subr.bf16.mxu0 0
      %4214 = vmatpush1.bf16.msra.mxu0 %v4056
      %4215 = vmatprep.subr.bf16.mxu0 0
      %4216 = vmatpush1.bf16.msra.mxu0 %v4057
      %4217 = vmatprep.subr.bf16.mxu0 0
      %4218 = vmatpush1.bf16.msra.mxu0 %v4058
      %4219 = vmatprep.mubr.bf16.mxu0 %v3468
      %4220 = vmatmul.mubr.bf16.gmra.mrb[0].mxu0 %v3467
      %v4221 = vpop.f32.mrb[0].mxu0
      %v4222 = vadd.f32 0.0, %v4221
      %v4223 = vpop.f32.mrb[0].mxu0
      %v4224 = vpop.f32.mrb[0].mxu0
      %v4225 = vadd.f32 0.0, %v4224
      %v4226 = vpop.f32.mrb[0].mxu0
      %4227 = vmatprep.mubr.bf16.mxu0 %v3477
      %4228 = vmatmul.mubr.bf16.gmra.mrb[0].mxu0 %v3476
      %v4229 = vpop.f32.mrb[0].mxu0
      %v4230 = vadd.f32 0.0, %v4229
      %v4231 = vpop.f32.mrb[0].mxu0
      %v4232 = vpop.f32.mrb[0].mxu0
      %v4233 = vadd.f32 0.0, %v4232
      %v4234 = vpop.f32.mrb[0].mxu0
      %4235 = vmatprep.mubr.bf16.mxu0 %v3486
      %4236 = vmatmul.mubr.bf16.gmra.mrb[0].mxu0 %v3485
      %v4237 = vpop.f32.mrb[0].mxu0
      %v4238 = vadd.f32 0.0, %v4237
      %v4239 = vpop.f32.mrb[0].mxu0
      %v4240 = vpop.f32.mrb[0].mxu0
      %v4241 = vadd.f32 0.0, %v4240
      %v4242 = vpop.f32.mrb[0].mxu0
      %4243 = vmatprep.mubr.bf16.mxu0 %v3495
      %4244 = vmatmul.mubr.bf16.gmra.mrb[0].mxu0 %v3494
      %v4245 = vpop.f32.mrb[0].mxu0
      %v4246 = vadd.f32 0.0, %v4245
      %v4247 = vpop.f32.mrb[0].mxu0
      %v4248 = vpop.f32.mrb[0].mxu0
      %v4249 = vadd.f32 0.0, %v4248
      %v4250 = vpop.f32.mrb[0].mxu0
      %4251 = vmatprep.mubr.bf16.mxu0 %v3504
      %4252 = vmatmul.mubr.bf16.gmra.mrb[0].mxu0 %v3503
      %v4253 = vpop.f32.mrb[0].mxu0
      %v4254 = vadd.f32 0.0, %v4253
      %v4255 = vpop.f32.mrb[0].mxu0
      %v4256 = vpop.f32.mrb[0].mxu0
      %v4257 = vadd.f32 0.0, %v4256
      %v4258 = vpop.f32.mrb[0].mxu0
      %4259 = vmatprep.mubr.bf16.mxu0 %v3513
      %4260 = vmatmul.mubr.bf16.gmra.mrb[0].mxu0 %v3512
      %v4261 = vpop.f32.mrb[0].mxu0
      %v4262 = vadd.f32 0.0, %v4261
      %v4263 = vpop.f32.mrb[0].mxu0
      %v4264 = vpop.f32.mrb[0].mxu0
      %v4265 = vadd.f32 0.0, %v4264
      %v4266 = vpop.f32.mrb[0].mxu0
      %4267 = vmatprep.mubr.bf16.mxu0 %v3522
      %4268 = vmatmul.mubr.bf16.gmra.mrb[0].mxu0 %v3521
      %v4269 = vpop.f32.mrb[0].mxu0
      %v4270 = vadd.f32 0.0, %v4269
      %v4271 = vpop.f32.mrb[0].mxu0
      %v4272 = vpop.f32.mrb[0].mxu0
      %v4273 = vadd.f32 0.0, %v4272
      %v4274 = vpop.f32.mrb[0].mxu0
      %4275 = vmatprep.mubr.bf16.mxu0 %v3531
      %4276 = vmatmul.mubr.bf16.gmra.mrb[0].mxu0 %v3530
      %v4277 = vpop.f32.mrb[0].mxu0
      %v4278 = vadd.f32 0.0, %v4277
      %v4279 = vpop.f32.mrb[0].mxu0
      %v4280 = vpop.f32.mrb[0].mxu0
      %v4281 = vadd.f32 0.0, %v4280
      %v4282 = vpop.f32.mrb[0].mxu0
      %4283 = vmatprep.mubr.bf16.mxu0 %v3540
      %4284 = vmatmul.mubr.bf16.gmra.mrb[0].mxu0 %v3539
      %v4285 = vpop.f32.mrb[0].mxu0
      %v4286 = vadd.f32 0.0, %v4285
      %v4287 = vpop.f32.mrb[0].mxu0
      %v4288 = vpop.f32.mrb[0].mxu0
      %v4289 = vadd.f32 0.0, %v4288
      %v4290 = vpop.f32.mrb[0].mxu0
      %4291 = vmatprep.mubr.bf16.mxu0 %v3549
      %4292 = vmatmul.mubr.bf16.gmra.mrb[0].mxu0 %v3548
      %v4293 = vpop.f32.mrb[0].mxu0
      %v4294 = vadd.f32 0.0, %v4293
      %v4295 = vpop.f32.mrb[0].mxu0
      %v4296 = vpop.f32.mrb[0].mxu0
      %v4297 = vadd.f32 0.0, %v4296
      %v4298 = vpop.f32.mrb[0].mxu0
      %4299 = vmatprep.mubr.bf16.mxu0 %v3558
      %4300 = vmatmul.mubr.bf16.gmra.mrb[0].mxu0 %v3557
      %v4301 = vpop.f32.mrb[0].mxu0
      %v4302 = vadd.f32 0.0, %v4301
      %v4303 = vpop.f32.mrb[0].mxu0
      %v4304 = vpop.f32.mrb[0].mxu0
      %v4305 = vadd.f32 0.0, %v4304
      %v4306 = vpop.f32.mrb[0].mxu0
      %4307 = vmatprep.mubr.bf16.mxu0 %v3567
      %4308 = vmatmul.mubr.bf16.gmra.mrb[0].mxu0 %v3566
      %v4309 = vpop.f32.mrb[0].mxu0
      %v4310 = vadd.f32 0.0, %v4309
      %v4311 = vpop.f32.mrb[0].mxu0
      %v4312 = vpop.f32.mrb[0].mxu0
      %v4313 = vadd.f32 0.0, %v4312
      %v4314 = vpop.f32.mrb[0].mxu0
      %4315 = vmatprep.mubr.bf16.mxu0 %v3576
      %4316 = vmatmul.mubr.bf16.gmra.mrb[0].mxu0 %v3575
      %v4317 = vpop.f32.mrb[0].mxu0
      %v4318 = vadd.f32 0.0, %v4317
      %v4319 = vpop.f32.mrb[0].mxu0
      %v4320 = vpop.f32.mrb[0].mxu0
      %v4321 = vadd.f32 0.0, %v4320
      %v4322 = vpop.f32.mrb[0].mxu0
      %4323 = vmatprep.mubr.bf16.mxu0 %v3585
      %4324 = vmatmul.mubr.bf16.gmra.mrb[0].mxu0 %v3584
      %v4325 = vpop.f32.mrb[0].mxu0
      %v4326 = vadd.f32 0.0, %v4325
      %v4327 = vpop.f32.mrb[0].mxu0
      %v4328 = vpop.f32.mrb[0].mxu0
      %v4329 = vadd.f32 0.0, %v4328
      %v4330 = vpop.f32.mrb[0].mxu0
      %4331 = vmatprep.mubr.bf16.mxu0 %v3594
      %4332 = vmatmul.mubr.bf16.gmra.mrb[0].mxu0 %v3593
      %v4333 = vpop.f32.mrb[0].mxu0
      %v4334 = vadd.f32 0.0, %v4333
      %v4335 = vpop.f32.mrb[0].mxu0
      %v4336 = vpop.f32.mrb[0].mxu0
      %v4337 = vadd.f32 0.0, %v4336
      %v4338 = vpop.f32.mrb[0].mxu0
      %4339 = vmatprep.mubr.bf16.mxu0 %v3603
      %4340 = vmatmul.mubr.bf16.gmra.mrb[0].mxu0 %v3602
      %v4341 = vpop.f32.mrb[0].mxu0
      %v4342 = vadd.f32 0.0, %v4341
      %v4343 = vpop.f32.mrb[0].mxu0
      %v4344 = vpop.f32.mrb[0].mxu0
      %v4345 = vadd.f32 0.0, %v4344
      %v4346 = vpop.f32.mrb[0].mxu0
      %4347 = vdwg.mxu0
      %4348 = vmatprep.subr.bf16.mxu0 0
      %4349 = vmatpush1.bf16.msra.mxu0 %v4059
      %4350 = vmatprep.subr.bf16.mxu0 0
      %4351 = vmatpush1.bf16.msra.mxu0 %v4060
      %4352 = vmatprep.subr.bf16.mxu0 0
      %4353 = vmatpush1.bf16.msra.mxu0 %v4061
      %4354 = vmatprep.subr.bf16.mxu0 0
      %4355 = vmatpush1.bf16.msra.mxu0 %v4062
      %4356 = vmatprep.subr.bf16.mxu0 0
      %4357 = vmatpush1.bf16.msra.mxu0 %v4063
      %4358 = vmatprep.subr.bf16.mxu0 0
      %4359 = vmatpush1.bf16.msra.mxu0 %v4064
      %4360 = vmatprep.subr.bf16.mxu0 0
      %4361 = vmatpush1.bf16.msra.mxu0 %v4065
      %4362 = vmatprep.subr.bf16.mxu0 0
      %4363 = vmatpush1.bf16.msra.mxu0 %v4066
      %4364 = vmatprep.subr.bf16.mxu0 0
      %4365 = vmatpush1.bf16.msra.mxu0 %v4067
      %4366 = vmatprep.subr.bf16.mxu0 0
      %4367 = vmatpush1.bf16.msra.mxu0 %v4068
      %4368 = vmatprep.subr.bf16.mxu0 0
      %4369 = vmatpush1.bf16.msra.mxu0 %v4069
      %4370 = vmatprep.subr.bf16.mxu0 0
      %4371 = vmatpush1.bf16.msra.mxu0 %v4070
      %4372 = vmatprep.subr.bf16.mxu0 0
      %4373 = vmatpush1.bf16.msra.mxu0 %v4071
      %4374 = vmatprep.subr.bf16.mxu0 0
      %4375 = vmatpush1.bf16.msra.mxu0 %v4072
      %4376 = vmatprep.subr.bf16.mxu0 0
      %4377 = vmatpush1.bf16.msra.mxu0 %v4073
      %4378 = vmatprep.subr.bf16.mxu0 0
      %4379 = vmatpush1.bf16.msra.mxu0 %v4074
      %4380 = vmatprep.mubr.bf16.mxu0 %v3470
      %4381 = vmatmul.mubr.bf16.gmra.mrb[0].mxu0 %v3469
      %v4382 = vpop.f32.mrb[0].mxu0
      %v4383 = vadd.f32 %v4222, %v4382
      %v4384 = vpop.f32.mrb[0].mxu0
      %v4385 = vpop.f32.mrb[0].mxu0
      %v4386 = vadd.f32 %v4225, %v4385
      %v4387 = vpop.f32.mrb[0].mxu0
      %4388 = vmatprep.mubr.bf16.mxu0 %v3479
      %4389 = vmatmul.mubr.bf16.gmra.mrb[0].mxu0 %v3478
      %v4390 = vpop.f32.mrb[0].mxu0
      %v4391 = vadd.f32 %v4230, %v4390
      %v4392 = vpop.f32.mrb[0].mxu0
      %v4393 = vpop.f32.mrb[0].mxu0
      %v4394 = vadd.f32 %v4233, %v4393
      %v4395 = vpop.f32.mrb[0].mxu0
      %4396 = vmatprep.mubr.bf16.mxu0 %v3488
      %4397 = vmatmul.mubr.bf16.gmra.mrb[0].mxu0 %v3487
      %v4398 = vpop.f32.mrb[0].mxu0
      %v4399 = vadd.f32 %v4238, %v4398
      %v4400 = vpop.f32.mrb[0].mxu0
      %v4401 = vpop.f32.mrb[0].mxu0
      %v4402 = vadd.f32 %v4241, %v4401
      %v4403 = vpop.f32.mrb[0].mxu0
      %4404 = vmatprep.mubr.bf16.mxu0 %v3497
      %4405 = vmatmul.mubr.bf16.gmra.mrb[0].mxu0 %v3496
      %v4406 = vpop.f32.mrb[0].mxu0
      %v4407 = vadd.f32 %v4246, %v4406
      %v4408 = vpop.f32.mrb[0].mxu0
      %v4409 = vpop.f32.mrb[0].mxu0
      %v4410 = vadd.f32 %v4249, %v4409
      %v4411 = vpop.f32.mrb[0].mxu0
      %4412 = vmatprep.mubr.bf16.mxu0 %v3506
      %4413 = vmatmul.mubr.bf16.gmra.mrb[0].mxu0 %v3505
      %v4414 = vpop.f32.mrb[0].mxu0
      %v4415 = vadd.f32 %v4254, %v4414
      %v4416 = vpop.f32.mrb[0].mxu0
      %v4417 = vpop.f32.mrb[0].mxu0
      %v4418 = vadd.f32 %v4257, %v4417
      %v4419 = vpop.f32.mrb[0].mxu0
      %4420 = vmatprep.mubr.bf16.mxu0 %v3515
      %4421 = vmatmul.mubr.bf16.gmra.mrb[0].mxu0 %v3514
      %v4422 = vpop.f32.mrb[0].mxu0
      %v4423 = vadd.f32 %v4262, %v4422
      %v4424 = vpop.f32.mrb[0].mxu0
      %v4425 = vpop.f32.mrb[0].mxu0
      %v4426 = vadd.f32 %v4265, %v4425
      %v4427 = vpop.f32.mrb[0].mxu0
      %4428 = vmatprep.mubr.bf16.mxu0 %v3524
      %4429 = vmatmul.mubr.bf16.gmra.mrb[0].mxu0 %v3523
      %v4430 = vpop.f32.mrb[0].mxu0
      %v4431 = vadd.f32 %v4270, %v4430
      %v4432 = vpop.f32.mrb[0].mxu0
      %v4433 = vpop.f32.mrb[0].mxu0
      %v4434 = vadd.f32 %v4273, %v4433
      %v4435 = vpop.f32.mrb[0].mxu0
      %4436 = vmatprep.mubr.bf16.mxu0 %v3533
      %4437 = vmatmul.mubr.bf16.gmra.mrb[0].mxu0 %v3532
      %v4438 = vpop.f32.mrb[0].mxu0
      %v4439 = vadd.f32 %v4278, %v4438
      %v4440 = vpop.f32.mrb[0].mxu0
      %v4441 = vpop.f32.mrb[0].mxu0
      %v4442 = vadd.f32 %v4281, %v4441
      %v4443 = vpop.f32.mrb[0].mxu0
      %4444 = vmatprep.mubr.bf16.mxu0 %v3542
      %4445 = vmatmul.mubr.bf16.gmra.mrb[0].mxu0 %v3541
      %v4446 = vpop.f32.mrb[0].mxu0
      %v4447 = vadd.f32 %v4286, %v4446
      %v4448 = vpop.f32.mrb[0].mxu0
      %v4449 = vpop.f32.mrb[0].mxu0
      %v4450 = vadd.f32 %v4289, %v4449
      %v4451 = vpop.f32.mrb[0].mxu0
      %4452 = vmatprep.mubr.bf16.mxu0 %v3551
      %4453 = vmatmul.mubr.bf16.gmra.mrb[0].mxu0 %v3550
      %v4454 = vpop.f32.mrb[0].mxu0
      %v4455 = vadd.f32 %v4294, %v4454
      %v4456 = vpop.f32.mrb[0].mxu0
      %v4457 = vpop.f32.mrb[0].mxu0
      %v4458 = vadd.f32 %v4297, %v4457
      %v4459 = vpop.f32.mrb[0].mxu0
      %4460 = vmatprep.mubr.bf16.mxu0 %v3560
      %4461 = vmatmul.mubr.bf16.gmra.mrb[0].mxu0 %v3559
      %v4462 = vpop.f32.mrb[0].mxu0
      %v4463 = vadd.f32 %v4302, %v4462
      %v4464 = vpop.f32.mrb[0].mxu0
      %v4465 = vpop.f32.mrb[0].mxu0
      %v4466 = vadd.f32 %v4305, %v4465
      %v4467 = vpop.f32.mrb[0].mxu0
      %4468 = vmatprep.mubr.bf16.mxu0 %v3569
      %4469 = vmatmul.mubr.bf16.gmra.mrb[0].mxu0 %v3568
      %v4470 = vpop.f32.mrb[0].mxu0
      %v4471 = vadd.f32 %v4310, %v4470
      %v4472 = vpop.f32.mrb[0].mxu0
      %v4473 = vpop.f32.mrb[0].mxu0
      %v4474 = vadd.f32 %v4313, %v4473
      %v4475 = vpop.f32.mrb[0].mxu0
      %4476 = vmatprep.mubr.bf16.mxu0 %v3578
      %4477 = vmatmul.mubr.bf16.gmra.mrb[0].mxu0 %v3577
      %v4478 = vpop.f32.mrb[0].mxu0
      %v4479 = vadd.f32 %v4318, %v4478
      %v4480 = vpop.f32.mrb[0].mxu0
      %v4481 = vpop.f32.mrb[0].mxu0
      %v4482 = vadd.f32 %v4321, %v4481
      %v4483 = vpop.f32.mrb[0].mxu0
      %4484 = vmatprep.mubr.bf16.mxu0 %v3587
      %4485 = vmatmul.mubr.bf16.gmra.mrb[0].mxu0 %v3586
      %v4486 = vpop.f32.mrb[0].mxu0
      %v4487 = vadd.f32 %v4326, %v4486
      %v4488 = vpop.f32.mrb[0].mxu0
      %v4489 = vpop.f32.mrb[0].mxu0
      %v4490 = vadd.f32 %v4329, %v4489
      %v4491 = vpop.f32.mrb[0].mxu0
      %4492 = vmatprep.mubr.bf16.mxu0 %v3596
      %4493 = vmatmul.mubr.bf16.gmra.mrb[0].mxu0 %v3595
      %v4494 = vpop.f32.mrb[0].mxu0
      %v4495 = vadd.f32 %v4334, %v4494
      %v4496 = vpop.f32.mrb[0].mxu0
      %v4497 = vpop.f32.mrb[0].mxu0
      %v4498 = vadd.f32 %v4337, %v4497
      %v4499 = vpop.f32.mrb[0].mxu0
      %4500 = vmatprep.mubr.bf16.mxu0 %v3605
      %4501 = vmatmul.mubr.bf16.gmra.mrb[0].mxu0 %v3604
      %v4502 = vpop.f32.mrb[0].mxu0
      %v4503 = vadd.f32 %v4342, %v4502
      %v4504 = vpop.f32.mrb[0].mxu0
      %v4505 = vpop.f32.mrb[0].mxu0
      %v4506 = vadd.f32 %v4345, %v4505
      %v4507 = vpop.f32.mrb[0].mxu0
      %4508 = vdwg.mxu0
      %4509 = vmatprep.subr.bf16.mxu0 0
      %4510 = vmatpush1.bf16.msra.mxu0 %v4075
      %4511 = vmatprep.subr.bf16.mxu0 0
      %4512 = vmatpush1.bf16.msra.mxu0 %v4076
      %4513 = vmatprep.subr.bf16.mxu0 0
      %4514 = vmatpush1.bf16.msra.mxu0 %v4077
      %4515 = vmatprep.subr.bf16.mxu0 0
      %4516 = vmatpush1.bf16.msra.mxu0 %v4078
      %4517 = vmatprep.subr.bf16.mxu0 0
      %4518 = vmatpush1.bf16.msra.mxu0 %v4079
      %4519 = vmatprep.subr.bf16.mxu0 0
      %4520 = vmatpush1.bf16.msra.mxu0 %v4080
      %4521 = vmatprep.subr.bf16.mxu0 0
      %4522 = vmatpush1.bf16.msra.mxu0 %v4081
      %4523 = vmatprep.subr.bf16.mxu0 0
      %4524 = vmatpush1.bf16.msra.mxu0 %v4082
      %4525 = vmatprep.subr.bf16.mxu0 0
      %4526 = vmatpush1.bf16.msra.mxu0 %v4083
      %4527 = vmatprep.subr.bf16.mxu0 0
      %4528 = vmatpush1.bf16.msra.mxu0 %v4084
      %4529 = vmatprep.subr.bf16.mxu0 0
      %4530 = vmatpush1.bf16.msra.mxu0 %v4085
      %4531 = vmatprep.subr.bf16.mxu0 0
      %4532 = vmatpush1.bf16.msra.mxu0 %v4086
      %4533 = vmatprep.subr.bf16.mxu0 0
      %4534 = vmatpush1.bf16.msra.mxu0 %v4087
      %4535 = vmatprep.subr.bf16.mxu0 0
      %4536 = vmatpush1.bf16.msra.mxu0 %v4088
      %4537 = vmatprep.subr.bf16.mxu0 0
      %4538 = vmatpush1.bf16.msra.mxu0 %v4089
      %4539 = vmatprep.subr.bf16.mxu0 0
      %4540 = vmatpush1.bf16.msra.mxu0 %v4090
      %4541 = vmatprep.mubr.bf16.mxu0 %v3472
      %4542 = vmatmul.mubr.bf16.gmra.mrb[0].mxu0 %v3471
      %v4543 = vpop.f32.mrb[0].mxu0
      %v4544 = vadd.f32 %v4383, %v4543
      %v4545 = vpop.f32.mrb[0].mxu0
      %v4546 = vpop.f32.mrb[0].mxu0
      %v4547 = vadd.f32 %v4386, %v4546
      %v4548 = vpop.f32.mrb[0].mxu0
      %4549 = vmatprep.mubr.bf16.mxu0 %v3481
      %4550 = vmatmul.mubr.bf16.gmra.mrb[0].mxu0 %v3480
      %v4551 = vpop.f32.mrb[0].mxu0
      %v4552 = vadd.f32 %v4391, %v4551
      %v4553 = vpop.f32.mrb[0].mxu0
      %v4554 = vpop.f32.mrb[0].mxu0
      %v4555 = vadd.f32 %v4394, %v4554
      %v4556 = vpop.f32.mrb[0].mxu0
      %4557 = vmatprep.mubr.bf16.mxu0 %v3490
      %4558 = vmatmul.mubr.bf16.gmra.mrb[0].mxu0 %v3489
      %v4559 = vpop.f32.mrb[0].mxu0
      %v4560 = vadd.f32 %v4399, %v4559
      %v4561 = vpop.f32.mrb[0].mxu0
      %v4562 = vpop.f32.mrb[0].mxu0
      %v4563 = vadd.f32 %v4402, %v4562
      %v4564 = vpop.f32.mrb[0].mxu0
      %4565 = vmatprep.mubr.bf16.mxu0 %v3499
      %4566 = vmatmul.mubr.bf16.gmra.mrb[0].mxu0 %v3498
      %v4567 = vpop.f32.mrb[0].mxu0
      %v4568 = vadd.f32 %v4407, %v4567
      %v4569 = vpop.f32.mrb[0].mxu0
      %v4570 = vpop.f32.mrb[0].mxu0
      %v4571 = vadd.f32 %v4410, %v4570
      %v4572 = vpop.f32.mrb[0].mxu0
      %4573 = vmatprep.mubr.bf16.mxu0 %v3508
      %4574 = vmatmul.mubr.bf16.gmra.mrb[0].mxu0 %v3507
      %v4575 = vpop.f32.mrb[0].mxu0
      %v4576 = vadd.f32 %v4415, %v4575
      %v4577 = vpop.f32.mrb[0].mxu0
      %v4578 = vpop.f32.mrb[0].mxu0
      %v4579 = vadd.f32 %v4418, %v4578
      %v4580 = vpop.f32.mrb[0].mxu0
      %4581 = vmatprep.mubr.bf16.mxu0 %v3517
      %4582 = vmatmul.mubr.bf16.gmra.mrb[0].mxu0 %v3516
      %v4583 = vpop.f32.mrb[0].mxu0
      %v4584 = vadd.f32 %v4423, %v4583
      %v4585 = vpop.f32.mrb[0].mxu0
      %v4586 = vpop.f32.mrb[0].mxu0
      %v4587 = vadd.f32 %v4426, %v4586
      %v4588 = vpop.f32.mrb[0].mxu0
      %4589 = vmatprep.mubr.bf16.mxu0 %v3526
      %4590 = vmatmul.mubr.bf16.gmra.mrb[0].mxu0 %v3525
      %v4591 = vpop.f32.mrb[0].mxu0
      %v4592 = vadd.f32 %v4431, %v4591
      %v4593 = vpop.f32.mrb[0].mxu0
      %v4594 = vpop.f32.mrb[0].mxu0
      %v4595 = vadd.f32 %v4434, %v4594
      %v4596 = vpop.f32.mrb[0].mxu0
      %4597 = vmatprep.mubr.bf16.mxu0 %v3535
      %4598 = vmatmul.mubr.bf16.gmra.mrb[0].mxu0 %v3534
      %v4599 = vpop.f32.mrb[0].mxu0
      %v4600 = vadd.f32 %v4439, %v4599
      %v4601 = vpop.f32.mrb[0].mxu0
      %v4602 = vpop.f32.mrb[0].mxu0
      %v4603 = vadd.f32 %v4442, %v4602
      %v4604 = vpop.f32.mrb[0].mxu0
      %4605 = vmatprep.mubr.bf16.mxu0 %v3544
      %4606 = vmatmul.mubr.bf16.gmra.mrb[0].mxu0 %v3543
      %v4607 = vpop.f32.mrb[0].mxu0
      %v4608 = vadd.f32 %v4447, %v4607
      %v4609 = vpop.f32.mrb[0].mxu0
      %v4610 = vpop.f32.mrb[0].mxu0
      %v4611 = vadd.f32 %v4450, %v4610
      %v4612 = vpop.f32.mrb[0].mxu0
      %4613 = vmatprep.mubr.bf16.mxu0 %v3553
      %4614 = vmatmul.mubr.bf16.gmra.mrb[0].mxu0 %v3552
      %v4615 = vpop.f32.mrb[0].mxu0
      %v4616 = vadd.f32 %v4455, %v4615
      %v4617 = vpop.f32.mrb[0].mxu0
      %v4618 = vpop.f32.mrb[0].mxu0
      %v4619 = vadd.f32 %v4458, %v4618
      %v4620 = vpop.f32.mrb[0].mxu0
      %4621 = vmatprep.mubr.bf16.mxu0 %v3562
      %4622 = vmatmul.mubr.bf16.gmra.mrb[0].mxu0 %v3561
      %v4623 = vpop.f32.mrb[0].mxu0
      %v4624 = vadd.f32 %v4463, %v4623
      %v4625 = vpop.f32.mrb[0].mxu0
      %v4626 = vpop.f32.mrb[0].mxu0
      %v4627 = vadd.f32 %v4466, %v4626
      %v4628 = vpop.f32.mrb[0].mxu0
      %4629 = vmatprep.mubr.bf16.mxu0 %v3571
      %4630 = vmatmul.mubr.bf16.gmra.mrb[0].mxu0 %v3570
      %v4631 = vpop.f32.mrb[0].mxu0
      %v4632 = vadd.f32 %v4471, %v4631
      %v4633 = vpop.f32.mrb[0].mxu0
      %v4634 = vpop.f32.mrb[0].mxu0
      %v4635 = vadd.f32 %v4474, %v4634
      %v4636 = vpop.f32.mrb[0].mxu0
      %4637 = vmatprep.mubr.bf16.mxu0 %v3580
      %4638 = vmatmul.mubr.bf16.gmra.mrb[0].mxu0 %v3579
      %v4639 = vpop.f32.mrb[0].mxu0
      %v4640 = vadd.f32 %v4479, %v4639
      %v4641 = vpop.f32.mrb[0].mxu0
      %v4642 = vpop.f32.mrb[0].mxu0
      %v4643 = vadd.f32 %v4482, %v4642
      %v4644 = vpop.f32.mrb[0].mxu0
      %4645 = vmatprep.mubr.bf16.mxu0 %v3589
      %4646 = vmatmul.mubr.bf16.gmra.mrb[0].mxu0 %v3588
      %v4647 = vpop.f32.mrb[0].mxu0
      %v4648 = vadd.f32 %v4487, %v4647
      %v4649 = vpop.f32.mrb[0].mxu0
      %v4650 = vpop.f32.mrb[0].mxu0
      %v4651 = vadd.f32 %v4490, %v4650
      %v4652 = vpop.f32.mrb[0].mxu0
      %4653 = vmatprep.mubr.bf16.mxu0 %v3598
      %4654 = vmatmul.mubr.bf16.gmra.mrb[0].mxu0 %v3597
      %v4655 = vpop.f32.mrb[0].mxu0
      %v4656 = vadd.f32 %v4495, %v4655
      %v4657 = vpop.f32.mrb[0].mxu0
      %v4658 = vpop.f32.mrb[0].mxu0
      %v4659 = vadd.f32 %v4498, %v4658
      %v4660 = vpop.f32.mrb[0].mxu0
      %4661 = vmatprep.mubr.bf16.mxu0 %v3607
      %4662 = vmatmul.mubr.bf16.gmra.mrb[0].mxu0 %v3606
      %v4663 = vpop.f32.mrb[0].mxu0
      %v4664 = vadd.f32 %v4503, %v4663
      %v4665 = vpop.f32.mrb[0].mxu0
      %v4666 = vpop.f32.mrb[0].mxu0
      %v4667 = vadd.f32 %v4506, %v4666
      %v4668 = vpop.f32.mrb[0].mxu0
      %4669 = vdwg.mxu0
      %4670 = vmatprep.subr.bf16.mxu0 0
      %4671 = vmatpush1.bf16.msra.mxu0 %v4091
      %4672 = vmatprep.subr.bf16.mxu0 0
      %4673 = vmatpush1.bf16.msra.mxu0 %v4092
      %4674 = vmatprep.subr.bf16.mxu0 0
      %4675 = vmatpush1.bf16.msra.mxu0 %v4093
      %4676 = vmatprep.subr.bf16.mxu0 0
      %4677 = vmatpush1.bf16.msra.mxu0 %v4094
      %4678 = vmatprep.subr.bf16.mxu0 0
      %4679 = vmatpush1.bf16.msra.mxu0 %v4095
      %4680 = vmatprep.subr.bf16.mxu0 0
      %4681 = vmatpush1.bf16.msra.mxu0 %v4096
      %4682 = vmatprep.subr.bf16.mxu0 0
      %4683 = vmatpush1.bf16.msra.mxu0 %v4097
      %4684 = vmatprep.subr.bf16.mxu0 0
      %4685 = vmatpush1.bf16.msra.mxu0 %v4098
      %4686 = vmatprep.subr.bf16.mxu0 0
      %4687 = vmatpush1.bf16.msra.mxu0 %v4099
      %4688 = vmatprep.subr.bf16.mxu0 0
      %4689 = vmatpush1.bf16.msra.mxu0 %v4100
      %4690 = vmatprep.subr.bf16.mxu0 0
      %4691 = vmatpush1.bf16.msra.mxu0 %v4101
      %4692 = vmatprep.subr.bf16.mxu0 0
      %4693 = vmatpush1.bf16.msra.mxu0 %v4102
      %4694 = vmatprep.subr.bf16.mxu0 0
      %4695 = vmatpush1.bf16.msra.mxu0 %v4103
      %4696 = vmatprep.subr.bf16.mxu0 0
      %4697 = vmatpush1.bf16.msra.mxu0 %v4104
      %4698 = vmatprep.subr.bf16.mxu0 0
      %4699 = vmatpush1.bf16.msra.mxu0 %v4105
      %4700 = vmatprep.subr.bf16.mxu0 0
      %4701 = vmatpush1.bf16.msra.mxu0 %v4106
      %4702 = vmatprep.mubr.bf16.mxu0 %v3474
      %4703 = vmatmul.mubr.bf16.gmra.mrb[0].mxu0 %v3473
      %v4704 = vpop.f32.mrb[0].mxu0
      %v4705 = vadd.f32 %v4544, %v4704
      %v4706 = vpop.f32.mrb[0].mxu0
      %v4707 = vpop.f32.mrb[0].mxu0
      %v4708 = vadd.f32 %v4547, %v4707
      %v4709 = vpop.f32.mrb[0].mxu0
      %4710 = vmatprep.mubr.bf16.mxu0 %v3483
      %4711 = vmatmul.mubr.bf16.gmra.mrb[0].mxu0 %v3482
      %v4712 = vpop.f32.mrb[0].mxu0
      %v4713 = vadd.f32 %v4552, %v4712
      %v4714 = vpop.f32.mrb[0].mxu0
      %v4715 = vpop.f32.mrb[0].mxu0
      %v4716 = vadd.f32 %v4555, %v4715
      %v4717 = vpop.f32.mrb[0].mxu0
      %4718 = vmatprep.mubr.bf16.mxu0 %v3492
      %4719 = vmatmul.mubr.bf16.gmra.mrb[0].mxu0 %v3491
      %v4720 = vpop.f32.mrb[0].mxu0
      %v4721 = vadd.f32 %v4560, %v4720
      %v4722 = vpop.f32.mrb[0].mxu0
      %v4723 = vpop.f32.mrb[0].mxu0
      %v4724 = vadd.f32 %v4563, %v4723
      %v4725 = vpop.f32.mrb[0].mxu0
      %4726 = vmatprep.mubr.bf16.mxu0 %v3501
      %4727 = vmatmul.mubr.bf16.gmra.mrb[0].mxu0 %v3500
      %v4728 = vpop.f32.mrb[0].mxu0
      %v4729 = vadd.f32 %v4568, %v4728
      %v4730 = vpop.f32.mrb[0].mxu0
      %v4731 = vpop.f32.mrb[0].mxu0
      %v4732 = vadd.f32 %v4571, %v4731
      %v4733 = vpop.f32.mrb[0].mxu0
      %4734 = vmatprep.mubr.bf16.mxu0 %v3510
      %4735 = vmatmul.mubr.bf16.gmra.mrb[0].mxu0 %v3509
      %v4736 = vpop.f32.mrb[0].mxu0
      %v4737 = vadd.f32 %v4576, %v4736
      %v4738 = vpop.f32.mrb[0].mxu0
      %v4739 = vpop.f32.mrb[0].mxu0
      %v4740 = vadd.f32 %v4579, %v4739
      %v4741 = vpop.f32.mrb[0].mxu0
      %4742 = vmatprep.mubr.bf16.mxu0 %v3519
      %4743 = vmatmul.mubr.bf16.gmra.mrb[0].mxu0 %v3518
      %v4744 = vpop.f32.mrb[0].mxu0
      %v4745 = vadd.f32 %v4584, %v4744
      %v4746 = vpop.f32.mrb[0].mxu0
      %v4747 = vpop.f32.mrb[0].mxu0
      %v4748 = vadd.f32 %v4587, %v4747
      %v4749 = vpop.f32.mrb[0].mxu0
      %4750 = vmatprep.mubr.bf16.mxu0 %v3528
      %4751 = vmatmul.mubr.bf16.gmra.mrb[0].mxu0 %v3527
      %v4752 = vpop.f32.mrb[0].mxu0
      %v4753 = vadd.f32 %v4592, %v4752
      %v4754 = vpop.f32.mrb[0].mxu0
      %v4755 = vpop.f32.mrb[0].mxu0
      %v4756 = vadd.f32 %v4595, %v4755
      %v4757 = vpop.f32.mrb[0].mxu0
      %4758 = vmatprep.mubr.bf16.mxu0 %v3537
      %4759 = vmatmul.mubr.bf16.gmra.mrb[0].mxu0 %v3536
      %v4760 = vpop.f32.mrb[0].mxu0
      %v4761 = vadd.f32 %v4600, %v4760
      %v4762 = vpop.f32.mrb[0].mxu0
      %v4763 = vpop.f32.mrb[0].mxu0
      %v4764 = vadd.f32 %v4603, %v4763
      %v4765 = vpop.f32.mrb[0].mxu0
      %4766 = vmatprep.mubr.bf16.mxu0 %v3546
      %4767 = vmatmul.mubr.bf16.gmra.mrb[0].mxu0 %v3545
      %v4768 = vpop.f32.mrb[0].mxu0
      %v4769 = vadd.f32 %v4608, %v4768
      %v4770 = vpop.f32.mrb[0].mxu0
      %v4771 = vpop.f32.mrb[0].mxu0
      %v4772 = vadd.f32 %v4611, %v4771
      %v4773 = vpop.f32.mrb[0].mxu0
      %4774 = vmatprep.mubr.bf16.mxu0 %v3555
      %4775 = vmatmul.mubr.bf16.gmra.mrb[0].mxu0 %v3554
      %v4776 = vpop.f32.mrb[0].mxu0
      %v4777 = vadd.f32 %v4616, %v4776
      %v4778 = vpop.f32.mrb[0].mxu0
      %v4779 = vpop.f32.mrb[0].mxu0
      %v4780 = vadd.f32 %v4619, %v4779
      %v4781 = vpop.f32.mrb[0].mxu0
      %4782 = vmatprep.mubr.bf16.mxu0 %v3564
      %4783 = vmatmul.mubr.bf16.gmra.mrb[0].mxu0 %v3563
      %v4784 = vpop.f32.mrb[0].mxu0
      %v4785 = vadd.f32 %v4624, %v4784
      %v4786 = vpop.f32.mrb[0].mxu0
      %v4787 = vpop.f32.mrb[0].mxu0
      %v4788 = vadd.f32 %v4627, %v4787
      %v4789 = vpop.f32.mrb[0].mxu0
      %4790 = vmatprep.mubr.bf16.mxu0 %v3573
      %4791 = vmatmul.mubr.bf16.gmra.mrb[0].mxu0 %v3572
      %v4792 = vpop.f32.mrb[0].mxu0
      %v4793 = vadd.f32 %v4632, %v4792
      %v4794 = vpop.f32.mrb[0].mxu0
      %v4795 = vpop.f32.mrb[0].mxu0
      %v4796 = vadd.f32 %v4635, %v4795
      %v4797 = vpop.f32.mrb[0].mxu0
      %4798 = vmatprep.mubr.bf16.mxu0 %v3582
      %4799 = vmatmul.mubr.bf16.gmra.mrb[0].mxu0 %v3581
      %v4800 = vpop.f32.mrb[0].mxu0
      %v4801 = vadd.f32 %v4640, %v4800
      %v4802 = vpop.f32.mrb[0].mxu0
      %v4803 = vpop.f32.mrb[0].mxu0
      %v4804 = vadd.f32 %v4643, %v4803
      %v4805 = vpop.f32.mrb[0].mxu0
      %4806 = vmatprep.mubr.bf16.mxu0 %v3591
      %4807 = vmatmul.mubr.bf16.gmra.mrb[0].mxu0 %v3590
      %v4808 = vpop.f32.mrb[0].mxu0
      %v4809 = vadd.f32 %v4648, %v4808
      %v4810 = vpop.f32.mrb[0].mxu0
      %v4811 = vpop.f32.mrb[0].mxu0
      %v4812 = vadd.f32 %v4651, %v4811
      %v4813 = vpop.f32.mrb[0].mxu0
      %4814 = vmatprep.mubr.bf16.mxu0 %v3600
      %4815 = vmatmul.mubr.bf16.gmra.mrb[0].mxu0 %v3599
      %v4816 = vpop.f32.mrb[0].mxu0
      %v4817 = vadd.f32 %v4656, %v4816
      %v4818 = vpop.f32.mrb[0].mxu0
      %v4819 = vpop.f32.mrb[0].mxu0
      %v4820 = vadd.f32 %v4659, %v4819
      %v4821 = vpop.f32.mrb[0].mxu0
      %4822 = vmatprep.mubr.bf16.mxu0 %v3609
      %4823 = vmatmul.mubr.bf16.gmra.mrb[0].mxu0 %v3608
      %v4824 = vpop.f32.mrb[0].mxu0
      %v4825 = vadd.f32 %v4664, %v4824
      %v4826 = vpop.f32.mrb[0].mxu0
      %v4827 = vpop.f32.mrb[0].mxu0
      %v4828 = vadd.f32 %v4667, %v4827
      %v4829 = vpop.f32.mrb[0].mxu0
      %4830 = vdwg.mxu0
      %4831 = vmatprep.subr.bf16.mxu0 0
      %4832 = vmatpush1.bf16.msra.mxu0 %v4107
      %4833 = vmatprep.subr.bf16.mxu0 0
      %4834 = vmatpush1.bf16.msra.mxu0 %v4108
      %4835 = vmatprep.subr.bf16.mxu0 0
      %4836 = vmatpush1.bf16.msra.mxu0 %v4109
      %4837 = vmatprep.subr.bf16.mxu0 0
      %4838 = vmatpush1.bf16.msra.mxu0 %v4110
      %4839 = vmatprep.subr.bf16.mxu0 0
      %4840 = vmatpush1.bf16.msra.mxu0 %v4111
      %4841 = vmatprep.subr.bf16.mxu0 0
      %4842 = vmatpush1.bf16.msra.mxu0 %v4112
      %4843 = vmatprep.subr.bf16.mxu0 0
      %4844 = vmatpush1.bf16.msra.mxu0 %v4113
      %4845 = vmatprep.subr.bf16.mxu0 0
      %4846 = vmatpush1.bf16.msra.mxu0 %v4114
      %4847 = vmatprep.subr.bf16.mxu0 0
      %4848 = vmatpush1.bf16.msra.mxu0 0
      %4849 = vmatprep.subr.bf16.mxu0 0
      %4850 = vmatpush1.bf16.msra.mxu0 0
      %4851 = vmatprep.subr.bf16.mxu0 0
      %4852 = vmatpush1.bf16.msra.mxu0 0
      %4853 = vmatprep.subr.bf16.mxu0 0
      %4854 = vmatpush1.bf16.msra.mxu0 0
      %4855 = vmatprep.subr.bf16.mxu0 0
      %4856 = vmatpush1.bf16.msra.mxu0 0
      %4857 = vmatprep.subr.bf16.mxu0 0
      %4858 = vmatpush1.bf16.msra.mxu0 0
      %4859 = vmatprep.subr.bf16.mxu0 0
      %4860 = vmatpush1.bf16.msra.mxu0 0
      %4861 = vmatprep.subr.bf16.mxu0 0
      %4862 = vmatpush1.bf16.msra.mxu0 0
      %4863 = vmatprep.mubr.bf16.mxu0 0
      %4864 = vmatmul.mubr.bf16.gmra.mrb[0].mxu0 %v3475
      %v4865 = vpop.f32.mrb[0].mxu0
      %v4866 = vadd.f32 %v4705, %v4865
      %v4867 = vpop.f32.mrb[0].mxu0
      %v4868 = vpop.f32.mrb[0].mxu0
      %v4869 = vadd.f32 %v4708, %v4868
      %v4870 = vpop.f32.mrb[0].mxu0
      %4871 = vmatprep.mubr.bf16.mxu0 0
      %4872 = vmatmul.mubr.bf16.gmra.mrb[0].mxu0 %v3484
      %v4873 = vpop.f32.mrb[0].mxu0
      %v4874 = vadd.f32 %v4713, %v4873
      %v4875 = vpop.f32.mrb[0].mxu0
      %v4876 = vpop.f32.mrb[0].mxu0
      %v4877 = vadd.f32 %v4716, %v4876
      %v4878 = vpop.f32.mrb[0].mxu0
      %4879 = vmatprep.mubr.bf16.mxu0 0
      %4880 = vmatmul.mubr.bf16.gmra.mrb[0].mxu0 %v3493
      %v4881 = vpop.f32.mrb[0].mxu0
      %v4882 = vadd.f32 %v4721, %v4881
      %v4883 = vpop.f32.mrb[0].mxu0
      %v4884 = vpop.f32.mrb[0].mxu0
      %v4885 = vadd.f32 %v4724, %v4884
      %v4886 = vpop.f32.mrb[0].mxu0
      %4887 = vmatprep.mubr.bf16.mxu0 0
      %4888 = vmatmul.mubr.bf16.gmra.mrb[0].mxu0 %v3502
      %v4889 = vpop.f32.mrb[0].mxu0
      %v4890 = vadd.f32 %v4729, %v4889
      %v4891 = vpop.f32.mrb[0].mxu0
      %v4892 = vpop.f32.mrb[0].mxu0
      %v4893 = vadd.f32 %v4732, %v4892
      %v4894 = vpop.f32.mrb[0].mxu0
      %4895 = vmatprep.mubr.bf16.mxu0 0
      %4896 = vmatmul.mubr.bf16.gmra.mrb[0].mxu0 %v3511
      %v4897 = vpop.f32.mrb[0].mxu0
      %v4898 = vadd.f32 %v4737, %v4897
      %v4899 = vpop.f32.mrb[0].mxu0
      %v4900 = vpop.f32.mrb[0].mxu0
      %v4901 = vadd.f32 %v4740, %v4900
      %v4902 = vpop.f32.mrb[0].mxu0
      %4903 = vmatprep.mubr.bf16.mxu0 0
      %4904 = vmatmul.mubr.bf16.gmra.mrb[0].mxu0 %v3520
      %v4905 = vpop.f32.mrb[0].mxu0
      %v4906 = vadd.f32 %v4745, %v4905
      %v4907 = vpop.f32.mrb[0].mxu0
      %v4908 = vpop.f32.mrb[0].mxu0
      %v4909 = vadd.f32 %v4748, %v4908
      %v4910 = vpop.f32.mrb[0].mxu0
      %4911 = vmatprep.mubr.bf16.mxu0 0
      %4912 = vmatmul.mubr.bf16.gmra.mrb[0].mxu0 %v3529
      %v4913 = vpop.f32.mrb[0].mxu0
      %v4914 = vadd.f32 %v4753, %v4913
      %v4915 = vpop.f32.mrb[0].mxu0
      %v4916 = vpop.f32.mrb[0].mxu0
      %v4917 = vadd.f32 %v4756, %v4916
      %v4918 = vpop.f32.mrb[0].mxu0
      %4919 = vmatprep.mubr.bf16.mxu0 0
      %4920 = vmatmul.mubr.bf16.gmra.mrb[0].mxu0 %v3538
      %v4921 = vpop.f32.mrb[0].mxu0
      %v4922 = vadd.f32 %v4761, %v4921
      %v4923 = vpop.f32.mrb[0].mxu0
      %v4924 = vpop.f32.mrb[0].mxu0
      %v4925 = vadd.f32 %v4764, %v4924
      %v4926 = vpop.f32.mrb[0].mxu0
      %4927 = vmatprep.mubr.bf16.mxu0 0
      %4928 = vmatmul.mubr.bf16.gmra.mrb[0].mxu0 %v3547
      %v4929 = vpop.f32.mrb[0].mxu0
      %v4930 = vadd.f32 %v4769, %v4929
      %v4931 = vpop.f32.mrb[0].mxu0
      %v4932 = vpop.f32.mrb[0].mxu0
      %v4933 = vadd.f32 %v4772, %v4932
      %v4934 = vpop.f32.mrb[0].mxu0
      %4935 = vmatprep.mubr.bf16.mxu0 0
      %4936 = vmatmul.mubr.bf16.gmra.mrb[0].mxu0 %v3556
      %v4937 = vpop.f32.mrb[0].mxu0
      %v4938 = vadd.f32 %v4777, %v4937
      %v4939 = vpop.f32.mrb[0].mxu0
      %v4940 = vpop.f32.mrb[0].mxu0
      %v4941 = vadd.f32 %v4780, %v4940
      %v4942 = vpop.f32.mrb[0].mxu0
      %4943 = vmatprep.mubr.bf16.mxu0 0
      %4944 = vmatmul.mubr.bf16.gmra.mrb[0].mxu0 %v3565
      %v4945 = vpop.f32.mrb[0].mxu0
      %v4946 = vadd.f32 %v4785, %v4945
      %v4947 = vpop.f32.mrb[0].mxu0
      %v4948 = vpop.f32.mrb[0].mxu0
      %v4949 = vadd.f32 %v4788, %v4948
      %v4950 = vpop.f32.mrb[0].mxu0
      %4951 = vmatprep.mubr.bf16.mxu0 0
      %4952 = vmatmul.mubr.bf16.gmra.mrb[0].mxu0 %v3574
      %v4953 = vpop.f32.mrb[0].mxu0
      %v4954 = vadd.f32 %v4793, %v4953
      %v4955 = vpop.f32.mrb[0].mxu0
      %v4956 = vpop.f32.mrb[0].mxu0
      %v4957 = vadd.f32 %v4796, %v4956
      %v4958 = vpop.f32.mrb[0].mxu0
      %4959 = vmatprep.mubr.bf16.mxu0 0
      %4960 = vmatmul.mubr.bf16.gmra.mrb[0].mxu0 %v3583
      %v4961 = vpop.f32.mrb[0].mxu0
      %v4962 = vadd.f32 %v4801, %v4961
      %v4963 = vpop.f32.mrb[0].mxu0
      %v4964 = vpop.f32.mrb[0].mxu0
      %v4965 = vadd.f32 %v4804, %v4964
      %v4966 = vpop.f32.mrb[0].mxu0
      %4967 = vmatprep.mubr.bf16.mxu0 0
      %4968 = vmatmul.mubr.bf16.gmra.mrb[0].mxu0 %v3592
      %v4969 = vpop.f32.mrb[0].mxu0
      %v4970 = vadd.f32 %v4809, %v4969
      %v4971 = vpop.f32.mrb[0].mxu0
      %v4972 = vpop.f32.mrb[0].mxu0
      %v4973 = vadd.f32 %v4812, %v4972
      %v4974 = vpop.f32.mrb[0].mxu0
      %4975 = vmatprep.mubr.bf16.mxu0 0
      %4976 = vmatmul.mubr.bf16.gmra.mrb[0].mxu0 %v3601
      %v4977 = vpop.f32.mrb[0].mxu0
      %v4978 = vadd.f32 %v4817, %v4977
      %v4979 = vpop.f32.mrb[0].mxu0
      %v4980 = vpop.f32.mrb[0].mxu0
      %v4981 = vadd.f32 %v4820, %v4980
      %v4982 = vpop.f32.mrb[0].mxu0
      %4983 = vmatprep.mubr.bf16.mxu0 0
      %4984 = vmatmul.mubr.bf16.gmra.mrb[0].mxu0 %v3610
      %v4985 = vpop.f32.mrb[0].mxu0
      %v4986 = vadd.f32 %v4825, %v4985
      %v4987 = vpop.f32.mrb[0].mxu0
      %v4988 = vpop.f32.mrb[0].mxu0
      %v4989 = vadd.f32 %v4828, %v4988
      %v4990 = vpop.f32.mrb[0].mxu0
      %4991 = vdwg.mxu0
      %v4992 = vadd.f32 %v4866, %v4869
      %v4993 = vadd.f32 %v4992, %v4874
      %v4994 = vadd.f32 %v4993, %v4877
      %v4995 = vadd.f32 %v4994, %v4882
      %v4996 = vadd.f32 %v4995, %v4885
      %v4997 = vadd.f32 %v4996, %v4890
      %v4998 = vadd.f32 %v4997, %v4893
      %v4999 = vadd.f32 %v4998, %v4898
      %v5000 = vadd.f32 %v4999, %v4901
      %v5001 = vadd.f32 %v5000, %v4906
      %v5002 = vadd.f32 %v5001, %v4909
      %v5003 = vadd.f32 %v5002, %v4914
      %v5004 = vadd.f32 %v5003, %v4917
      %v5005 = vadd.f32 %v5004, %v4922
      %v5006 = vadd.f32 %v5005, %v4925
      %v5007 = vadd.f32 %v5006, %v4930
      %v5008 = vadd.f32 %v5007, %v4933
      %v5009 = vadd.f32 %v5008, %v4938
      %v5010 = vadd.f32 %v5009, %v4941
      %v5011 = vadd.f32 %v5010, %v4946
      %v5012 = vadd.f32 %v5011, %v4949
      %v5013 = vadd.f32 %v5012, %v4954
      %v5014 = vadd.f32 %v5013, %v4957
      %v5015 = vadd.f32 %v5014, %v4962
      %v5016 = vadd.f32 %v5015, %v4965
      %v5017 = vadd.f32 %v5016, %v4970
      %v5018 = vadd.f32 %v5017, %v4973
      %v5019 = vadd.f32 %v5018, %v4978
      %v5020 = vadd.f32 %v5019, %v4981
      %v5021 = vadd.f32 %v5020, %v4986
      %v5022 = vadd.f32 %v5021, %v4989
      %v5023 = vrot.slane %v5022, 4
      %v5024 = vadd.f32 %v5022, %v5023
      %v5025 = vrot.slane %v5024, 2
      %v5026 = vadd.f32 %v5024, %v5025
      %v5027 = vrot.slane %v5026, 1
      %v5028 = vadd.f32 %v5026, %v5027
      %v5029 = vmul.f32 %v4866, %v4866
      %v5030 = vmul.f32 %v4869, %v4869
      %v5031 = vmul.f32 %v4874, %v4874
      %v5032 = vmul.f32 %v4877, %v4877
      %v5033 = vmul.f32 %v4882, %v4882
      %v5034 = vmul.f32 %v4885, %v4885
      %v5035 = vmul.f32 %v4890, %v4890
      %v5036 = vmul.f32 %v4893, %v4893
      %v5037 = vmul.f32 %v4898, %v4898
      %v5038 = vmul.f32 %v4901, %v4901
      %v5039 = vmul.f32 %v4906, %v4906
      %v5040 = vmul.f32 %v4909, %v4909
      %v5041 = vmul.f32 %v4914, %v4914
      %v5042 = vmul.f32 %v4917, %v4917
      %v5043 = vmul.f32 %v4922, %v4922
      %v5044 = vmul.f32 %v4925, %v4925
      %v5045 = vmul.f32 %v4930, %v4930
      %v5046 = vmul.f32 %v4933, %v4933
      %v5047 = vmul.f32 %v4938, %v4938
      %v5048 = vmul.f32 %v4941, %v4941
      %v5049 = vmul.f32 %v4946, %v4946
      %v5050 = vmul.f32 %v4949, %v4949
      %v5051 = vmul.f32 %v4954, %v4954
      %v5052 = vmul.f32 %v4957, %v4957
      %v5053 = vmul.f32 %v4962, %v4962
      %v5054 = vmul.f32 %v4965, %v4965
      %v5055 = vmul.f32 %v4970, %v4970
      %v5056 = vmul.f32 %v4973, %v4973
      %v5057 = vmul.f32 %v4978, %v4978
      %v5058 = vmul.f32 %v4981, %v4981
      %v5059 = vmul.f32 %v4986, %v4986
      %v5060 = vmul.f32 %v4989, %v4989
      %v5061 = vadd.f32 %v5029, %v5030
      %v5062 = vadd.f32 %v5061, %v5031
      %v5063 = vadd.f32 %v5062, %v5032
      %v5064 = vadd.f32 %v5063, %v5033
      %v5065 = vadd.f32 %v5064, %v5034
      %v5066 = vadd.f32 %v5065, %v5035
      %v5067 = vadd.f32 %v5066, %v5036
      %v5068 = vadd.f32 %v5067, %v5037
      %v5069 = vadd.f32 %v5068, %v5038
      %v5070 = vadd.f32 %v5069, %v5039
      %v5071 = vadd.f32 %v5070, %v5040
      %v5072 = vadd.f32 %v5071, %v5041
      %v5073 = vadd.f32 %v5072, %v5042
      %v5074 = vadd.f32 %v5073, %v5043
      %v5075 = vadd.f32 %v5074, %v5044
      %v5076 = vadd.f32 %v5075, %v5045
      %v5077 = vadd.f32 %v5076, %v5046
      %v5078 = vadd.f32 %v5077, %v5047
      %v5079 = vadd.f32 %v5078, %v5048
      %v5080 = vadd.f32 %v5079, %v5049
      %v5081 = vadd.f32 %v5080, %v5050
      %v5082 = vadd.f32 %v5081, %v5051
      %v5083 = vadd.f32 %v5082, %v5052
      %v5084 = vadd.f32 %v5083, %v5053
      %v5085 = vadd.f32 %v5084, %v5054
      %v5086 = vadd.f32 %v5085, %v5055
      %v5087 = vadd.f32 %v5086, %v5056
      %v5088 = vadd.f32 %v5087, %v5057
      %v5089 = vadd.f32 %v5088, %v5058
      %v5090 = vadd.f32 %v5089, %v5059
      %v5091 = vadd.f32 %v5090, %v5060
      %v5092 = vrot.slane %v5091, 4
      %v5093 = vadd.f32 %v5091, %v5092
      %v5094 = vrot.slane %v5093, 2
      %v5095 = vadd.f32 %v5093, %v5094
      %v5096 = vrot.slane %v5095, 1
      %v5097 = vadd.f32 %v5095, %v5096
      %5098 = vst [vmem:[%s235] sm:$0x1] %v5028
      %5099 = vst [vmem:[%s235 + $0x1] sm:$0x1] %v5097
      %5100 = vst [vmem:[%s231] sm:$0xff] %v4866
      %5101 = vst [vmem:[%s231 + $0x8] sm:$0xff] %v4869
      %5102 = vst [vmem:[%s231 + $0x10] sm:$0xff] %v4874
      %5103 = vst [vmem:[%s231 + $0x18] sm:$0xff] %v4877
      %5104 = vst [vmem:[%s231 + $0x20] sm:$0xff] %v4882
      %5105 = vst [vmem:[%s231 + $0x28] sm:$0xff] %v4885
      %5106 = vst [vmem:[%s231 + $0x30] sm:$0xff] %v4890
      %5107 = vst [vmem:[%s231 + $0x38] sm:$0xff] %v4893
      %5108 = vst [vmem:[%s231 + $0x40] sm:$0xff] %v4898
      %5109 = vst [vmem:[%s231 + $0x48] sm:$0xff] %v4901
      %5110 = vst [vmem:[%s231 + $0x50] sm:$0xff] %v4906
      %5111 = vst [vmem:[%s231 + $0x58] sm:$0xff] %v4909
      %5112 = vst [vmem:[%s231 + $0x60] sm:$0xff] %v4914
      %5113 = vst [vmem:[%s231 + $0x68] sm:$0xff] %v4917
      %5114 = vst [vmem:[%s231 + $0x70] sm:$0xff] %v4922
      %5115 = vst [vmem:[%s231 + $0x78] sm:$0xff] %v4925
      %5116 = vst [vmem:[%s231 + $0x80] sm:$0xff] %v4930
      %5117 = vst [vmem:[%s231 + $0x88] sm:$0xff] %v4933
      %5118 = vst [vmem:[%s231 + $0x90] sm:$0xff] %v4938
      %5119 = vst [vmem:[%s231 + $0x98] sm:$0xff] %v4941
      %5120 = vst [vmem:[%s231 + $0xa0] sm:$0xff] %v4946
      %5121 = vst [vmem:[%s231 + $0xa8] sm:$0xff] %v4949
      %5122 = vst [vmem:[%s231 + $0xb0] sm:$0xff] %v4954
      %5123 = vst [vmem:[%s231 + $0xb8] sm:$0xff] %v4957
      %5124 = vst [vmem:[%s231 + $0xc0] sm:$0xff] %v4962
      %5125 = vst [vmem:[%s231 + $0xc8] sm:$0xff] %v4965
      %5126 = vst [vmem:[%s231 + $0xd0] sm:$0xff] %v4970
      %5127 = vst [vmem:[%s231 + $0xd8] sm:$0xff] %v4973
      %5128 = vst [vmem:[%s231 + $0xe0] sm:$0xff] %v4978
      %5129 = vst [vmem:[%s231 + $0xe8] sm:$0xff] %v4981
      %5130 = vst [vmem:[%s231 + $0xf0] sm:$0xff] %v4986
      %5131 = vst [vmem:[%s231 + $0xf8] sm:$0xff] %v4989
      %p5132 = scmp.lt.s32.totalorder %s17, 1
      %s5133 = scalar_select %p5132, %s17, 1
      %s5134 = smul.addr %s5133, 32
      %s5135 = smul.addr %s5134, 8
      %s5136 = scalar_lea.vmem %s4, %s5135
      %p5137 = scmp.lt.s32.totalorder %s17, 1
      %s5138 = scalar_select %p5137, %s17, 1
      %s5139 = smul.addr %s5138, 2
      %s5140 = scalar_lea.vmem %s5, %s5139
      // Predicated region
      $region37: #{double_conv.4} parent=35 // pred_check
        %p5141 = pneg %p124
      $region38: #{double_conv.4} parent=35 // pred_check_branch
        %5143 = sbr.rel (%p5141) target = $region40
      $region39: #{double_conv.4} parent=35 // pred_region
        _
      $region40: #{double_conv.4} parent=35 // pred_fallthru
        _
      // Predicated region
      $region41: #{double_conv.4} parent=35 // pred_check
        %p5144 = pneg %p150
      $region42: #{double_conv.4} parent=35 // pred_check_branch
        %5146 = sbr.rel (%p5144) target = $region44
      $region43: #{double_conv.4} parent=35 // pred_region
        _
      $region44: #{double_conv.4} parent=35 // pred_fallthru
        _
    $region36: #{double_conv.4} parent=5 // pred_fallthru
      _
    %p5147 = scmp.le.s32.totalorder 2, %s12
    // Predicated region
    $region45: #{double_conv.4} parent=5 // pred_check
      %p5148 = pneg %p5147
    $region46: #{double_conv.4} parent=5 // pred_check_branch
      %5150 = sbr.rel (%p5148) target = $region48
    $region47: #{double_conv.4} parent=5 // pred_region
      %s5151 = ssub.s32 %s12, 2
      // Predicated region
      $region49: #{double_conv.4} parent=47 // pred_check
        %p5152 = pneg %p130
      $region50: #{double_conv.4} parent=47 // pred_check_branch
        %5154 = sbr.rel (%p5152) target = $region52
      $region51: #{double_conv.4} parent=47 // pred_region
        %p5155 = scmp.lt.s32.totalorder %s18, 1
        %s5156 = scalar_select %p5155, %s18, 1
        %s5157 = smul.addr %s5156, 32
        %s5158 = smul.addr %s5157, 8
        %s5159 = scalar_lea.vmem %s4, %s5158
      $region52: #{double_conv.4} parent=47 // pred_fallthru
        _
      // Predicated region
      $region53: #{double_conv.4} parent=47 // pred_check
        %p5160 = pneg %p156
      $region54: #{double_conv.4} parent=47 // pred_check_branch
        %5162 = sbr.rel (%p5160) target = $region56
      $region55: #{double_conv.4} parent=47 // pred_region
        %p5163 = scmp.lt.s32.totalorder %s18, 1
        %s5164 = scalar_select %p5163, %s18, 1
        %s5165 = smul.addr %s5164, 2
        %s5166 = scalar_lea.vmem %s5, %s5165
      $region56: #{double_conv.4} parent=47 // pred_fallthru
        _
    $region48: #{double_conv.4} parent=5 // pred_fallthru
      _
  $region6: #{double_conv.4} parent=0 // loop_footer
    %s16 = sadd.s32 1, %s12
  $region7: #{double_conv.4} parent=0 // loop_footer_branch
    %11 = sbr.rel target = $region3
  $region8: #{double_conv.4} parent=0 // loop_exit
    _

</llo_original>
